<compile_context>
chip_gen: v5e
topology: v5e:2x2
jax: 0.10.0
libtpu: 0.0.40
codegen_flags: <defaults>
</compile_context>

<pallas_src>
import jax
import jax.numpy as jnp
from jax.experimental import pallas as pl
from jax.experimental.pallas import tpu as pltpu


# -----------------------------------------------------------------------------
# Fused kernel: full bidirectional LSTM stack + classification head.
#
#   x_ref        : (T, B, D)        time-major inputs (f32)
#   wih0_ref     : (D, 8H)          layer-0 input weights, interleaved gate layout (bf16)
#   wihA_ref     : (L-1, H, 8H)     layers 1..: rows multiplying the fwd hidden (bf16)
#   wihB_ref     : (L-1, H, 8H)     layers 1..: rows multiplying the bwd hidden (bf16)
#   whh_ref      : (L, 2H, 8H)      per-gate block-diag recurrent weights (bf16)
#   b_ref        : (L, 1, 8H)       fused b_ih+b_hh, interleaved layout (f32)
#   bn_scale_ref : (1, 2H)          gamma / sqrt(var + eps)   (eval BN folded)
#   bn_shift_ref : (1, 2H)          beta - mean * scale
#   fcw_ref      : (2H, O)          Linear weight transposed (bf16)
#   fcb_ref      : (1, O)
#   y_ref        : (B, O)           softmax probabilities (output)
#   xp_ref       : (T, B, 8H)       scratch: pre-combined per-step gate inputs
#   outf_ref     : (T, B, H)        scratch: fwd hidden states of current layer
#   outb_ref     : (T, B, H)        scratch: bwd hidden states of current layer
#
# Gate column layout (per 8H): [i_f|i_b | f_f|f_b | o_f|o_b | g_f|g_b]
#   -> i = cols 0:2H, f = 2H:4H, o = 4H:6H (sigmoid block 0:6H), g = 6H:8H (tanh block)
# -----------------------------------------------------------------------------
def fused_lstm_classifier_kernel(
    x_ref, wih0_ref, wihA_ref, wihB_ref, whh_ref, b_ref,
    bn_scale_ref, bn_shift_ref, fcw_ref, fcb_ref,
    y_ref,
    xp_ref, outf_ref, outb_ref,
):
    T, B, D = x_ref.shape
    H = outf_ref.shape[2]
    H2 = 2 * H
    G8 = 8 * H
    L = whh_ref.shape[0]

    # Lane mask (built once): within every 2H gate block, first H lanes are fwd-direction.
    col = jax.lax.broadcasted_iota(jnp.int32, (B, G8), 1)
    fwd_mask = (col % H2) < H

    for layer in range(L):                       # static layer loop (L = 4)
        # ---- input projection for BOTH directions, hoisted out of the recurrence ----
        if layer == 0:
            xin = x_ref[...].reshape(T * B, D).astype(jnp.bfloat16)
            xp = jnp.dot(xin, wih0_ref[...], preferred_element_type=jnp.float32)
        else:
            xf = outf_ref[...].reshape(T * B, H).astype(jnp.bfloat16)
            xb = outb_ref[...].reshape(T * B, H).astype(jnp.bfloat16)
            xp = (jnp.dot(xf, wihA_ref[layer - 1], preferred_element_type=jnp.float32)
                  + jnp.dot(xb, wihB_ref[layer - 1], preferred_element_type=jnp.float32))
        xp = (xp + b_ref[layer]).reshape(T, B, G8)

        # Pre-combine per-step gate inputs: fwd lanes take time t, bwd lanes take time
        # T-1-t.  Static loop, fully off the serial recurrent critical path.
        for t in range(T):
            xp_ref[t] = jnp.where(fwd_mask, xp[t], xp[T - 1 - t])

        whh = whh_ref[layer]                     # (2H, 8H) bf16, block-diag per gate

        # ---- fused fwd/bwd recurrence; single (B,2H) h/c carry lives in vregs ----
        def step(t, carry):
            h, c = carry                                         # (B, 2H) f32
            rec = jnp.dot(h.astype(jnp.bfloat16), whh,
                          preferred_element_type=jnp.float32)    # (B, 8H)
            gates = rec + xp_ref[t]
            sg = jax.nn.sigmoid(gates[:, 0:6 * H])               # [i|f|o], both dirs
            g = jnp.tanh(gates[:, 6 * H:G8])                     # [g],     both dirs
            c = sg[:, 2 * H:4 * H] * c + sg[:, 0:2 * H] * g      # (B, 2H)
            h = sg[:, 4 * H:6 * H] * jnp.tanh(c)                 # (B, 2H)
            outf_ref[t] = h[:, 0:H]                              # fwd hidden @ t
            outb_ref[T - 1 - t] = h[:, H:H2]                     # bwd hidden @ T-1-t
            return (h, c)

        zero = jnp.zeros((B, H2), jnp.float32)
        jax.lax.fori_loop(0, T, step, (zero, zero), unroll=True)

    # ---- head: ReLU -> BatchNorm1d(eval, folded) -> Linear -> Softmax ----
    # output[:, -1] == [fwd hidden @ T-1 | bwd hidden @ T-1]
    z = jnp.concatenate([outf_ref[T - 1], outb_ref[T - 1]], axis=-1)    # (B, 2H)
    z = jnp.maximum(z, 0.0)
    z = z * bn_scale_ref[...] + bn_shift_ref[...]
    logits = jnp.dot(z.astype(jnp.bfloat16), fcw_ref[...],
                     preferred_element_type=jnp.float32) + fcb_ref[...]
    m = jnp.max(logits, axis=-1, keepdims=True)
    e = jnp.exp(logits - m)
    y_ref[...] = e / jnp.sum(e, axis=-1, keepdims=True)                 # exact softmax


# -----------------------------------------------------------------------------
# Forward wrapper: one pallas_call for the whole model, optional batch grid.
# -----------------------------------------------------------------------------
def sequence_classifier_forward(x, packed, *, block_batch=None):
    B, T, D = x.shape
    L, H2, G8 = packed["whh"].shape
    H = H2 // 2
    O = packed["fc_b"].shape[1]
    TB = B if block_batch is None else block_batch
    assert B % TB == 0 and (TB == B or TB % 8 == 0)

    x_tbd = jnp.transpose(x, (1, 0, 2)).astype(jnp.float32)             # (T, B, D)

    def full(a):
        return pl.BlockSpec(a.shape, lambda i, _n=a.ndim: (0,) * _n)

    return pl.pallas_call(
        fused_lstm_classifier_kernel,
        out_shape=jax.ShapeDtypeStruct((B, O), jnp.float32),
        grid=(B // TB,),
        in_specs=[
            pl.BlockSpec((T, TB, D), lambda i: (0, i, 0)),              # x (batch-tiled)
            full(packed["wih0"]), full(packed["wihA"]), full(packed["wihB"]),
            full(packed["whh"]), full(packed["bias"]),
            full(packed["bn_scale"]), full(packed["bn_shift"]),
            full(packed["fc_wT"]), full(packed["fc_b"]),
        ],
        out_specs=pl.BlockSpec((TB, O), lambda i: (i, 0)),
        scratch_shapes=[
            pltpu.VMEM((T, TB, G8), jnp.float32),   # xp: pre-combined gate inputs
            pltpu.VMEM((T, TB, H), jnp.float32),    # fwd hidden states
            pltpu.VMEM((T, TB, H), jnp.float32),    # bwd hidden states
        ],
        compiler_params=pltpu.CompilerParams(
            dimension_semantics=("parallel",)),      # shards batch across TCs on v7x
    )(
        x_tbd,
        packed["wih0"], packed["wihA"], packed["wihB"], packed["whh"], packed["bias"],
        packed["bn_scale"], packed["bn_shift"], packed["fc_wT"], packed["fc_b"],
    )


# -----------------------------------------------------------------------------
# Init-time packing helpers: PyTorch gate order [i|f|g|o] -> kernel layout.
# -----------------------------------------------------------------------------
def _reorder_gates(a, H):
    # columns [i|f|g|o] -> [i|f|o|g]
    return jnp.concatenate([a[:, 0:2 * H], a[:, 3 * H:4 * H], a[:, 2 * H:3 * H]], axis=1)


def _interleave_dirs(af, ab, H):
    # af, ab: (d, 4H) per-direction columns [i|f|o|g]
    # -> (d, 8H) columns [i_f|i_b | f_f|f_b | o_f|o_b | g_f|g_b]
    blocks = []
    for g in range(4):
        blocks.append(af[:, g * H:(g + 1) * H])
        blocks.append(ab[:, g * H:(g + 1) * H])
    return jnp.concatenate(blocks, axis=1)


# -----------------------------------------------------------------------------
# Parameter init (PyTorch-style shapes / uniform ranges) + one-time packing:
# transposes, gate reorder/interleave, bias fusion, block-diag W_hh, BN folding,
# bf16 weight casts all happen here (not per call).
# -----------------------------------------------------------------------------
def init_params(key, input_size, hidden_size, output_size, n_layers):
    H = hidden_size
    G = 4 * H
    k_lstm = 1.0 / float(jnp.sqrt(jnp.float32(H)))

    raw = {"lstm": []}
    wih0 = None
    wihA_list, wihB_list, whh_list, b_list = [], [], [], []
    for layer in range(n_layers):
        d_in = input_size if layer == 0 else 2 * H
        per_dir = []
        for _direction in range(2):
            key, k1, k2, k3, k4 = jax.random.split(key, 5)
            w_ih = jax.random.uniform(k1, (G, d_in), jnp.float32, -k_lstm, k_lstm)
            w_hh = jax.random.uniform(k2, (G, H), jnp.float32, -k_lstm, k_lstm)
            b_ih = jax.random.uniform(k3, (G,), jnp.float32, -k_lstm, k_lstm)
            b_hh = jax.random.uniform(k4, (G,), jnp.float32, -k_lstm, k_lstm)
            per_dir.append((w_ih, w_hh, b_ih, b_hh))
        raw["lstm"].append(per_dir)

        (wf, uf, bif, bhf), (wb, ub, bib, bhb) = per_dir
        wih_packed = _interleave_dirs(_reorder_gates(wf.T, H),
                                      _reorder_gates(wb.T, H), H)        # (d_in, 8H)
        zH = jnp.zeros((H, G), jnp.float32)
        whh_packed = _interleave_dirs(
            jnp.concatenate([_reorder_gates(uf.T, H), zH], axis=0),
            jnp.concatenate([zH, _reorder_gates(ub.T, H)], axis=0), H)   # (2H, 8H)
        b_packed = _interleave_dirs(
            _reorder_gates((bif + bhf).reshape(1, G), H),
            _reorder_gates((bib + bhb).reshape(1, G), H), H)             # (1, 8H)

        if layer == 0:
            wih0 = wih_packed
        else:
            wihA_list.append(wih_packed[0:H, :])        # rows multiplying fwd hidden
            wihB_list.append(wih_packed[H:2 * H, :])    # rows multiplying bwd hidden
        whh_list.append(whh_packed)
        b_list.append(b_packed)

    # BatchNorm1d(2H) eval-mode defaults, folded to scale/shift
    gamma = jnp.ones((2 * H,), jnp.float32)
    beta = jnp.zeros((2 * H,), jnp.float32)
    mean = jnp.zeros((2 * H,), jnp.float32)
    var = jnp.ones((2 * H,), jnp.float32)
    eps = 1e-5
    scale = gamma * jax.lax.rsqrt(var + eps)
    raw.update(bn_gamma=gamma, bn_beta=beta, bn_mean=mean, bn_var=var)

    # Linear(2H -> O)
    k_fc = 1.0 / float(jnp.sqrt(jnp.float32(2 * H)))
    key, k1, k2 = jax.random.split(key, 3)
    fc_w = jax.random.uniform(k1, (output_size, 2 * H), jnp.float32, -k_fc, k_fc)
    fc_b = jax.random.uniform(k2, (output_size,), jnp.float32, -k_fc, k_fc)
    raw.update(fc_w=fc_w, fc_b=fc_b)

    packed = {
        "wih0": wih0.astype(jnp.bfloat16),                         # (D, 8H)
        "wihA": jnp.stack(wihA_list, 0).astype(jnp.bfloat16),      # (L-1, H, 8H)
        "wihB": jnp.stack(wihB_list, 0).astype(jnp.bfloat16),      # (L-1, H, 8H)
        "whh": jnp.stack(whh_list, 0).astype(jnp.bfloat16),        # (L, 2H, 8H)
        "bias": jnp.stack(b_list, 0),                              # (L, 1, 8H) f32
        "bn_scale": scale.reshape(1, -1),
        "bn_shift": (beta - mean * scale).reshape(1, -1),
        "fc_wT": fc_w.T.astype(jnp.bfloat16),                      # (2H, O)
        "fc_b": fc_b.reshape(1, -1),                               # (1, O)
    }
    return raw, packed


# -----------------------------------------------------------------------------
# Pure-JAX reference (f32, same math as the PyTorch module) for correctness.
# -----------------------------------------------------------------------------
def reference_forward(x, raw, n_layers):
    h = jnp.transpose(x, (1, 0, 2)).astype(jnp.float32)   # (T, B, D)
    for layer in range(n_layers):
        outs = []
        for direction, rev in ((0, False), (1, True)):
            w_ih, w_hh, b_ih, b_hh = raw["lstm"][layer][direction]
            H = w_hh.shape[1]
            xs = h[::-1] if rev else h
            B = xs.shape[1]

            def step(carry, x_t):
                hp, cp = carry
                gates = x_t @ w_ih.T + hp @ w_hh.T + b_ih + b_hh
                i = jax.nn.sigmoid(gates[:, 0:H])
                f = jax.nn.sigmoid(gates[:, H:2 * H])
                g = jnp.tanh(gates[:, 2 * H:3 * H])
                o = jax.nn.sigmoid(gates[:, 3 * H:4 * H])
                c = f * cp + i * g
                hn = o * jnp.tanh(c)
                return (hn, c), hn

            init = (jnp.zeros((B, H), jnp.float32), jnp.zeros((B, H), jnp.float32))
            _, ys = jax.lax.scan(step, init, xs)
            if rev:
                ys = ys[::-1]
            outs.append(ys)
        h = jnp.concatenate(outs, axis=-1)
    z = jnp.maximum(h[-1], 0.0)
    eps = 1e-5
    z = (z - raw["bn_mean"]) * jax.lax.rsqrt(raw["bn_var"] + eps) * raw["bn_gamma"] + raw["bn_beta"]
    logits = z @ raw["fc_w"].T + raw["fc_b"]
    return jax.nn.softmax(logits, axis=-1)


if __name__ == "__main__":
    # Small shapes consistent with the module: (batch, seq, input_size)
    batch, seq, input_size = 8, 8, 16
    hidden_size, output_size, n_layers = 32, 10, 4

    key = jax.random.PRNGKey(0)
    key, kx, kp = jax.random.split(key, 3)
    x = jax.random.normal(kx, (batch, seq, input_size), jnp.float32)
    raw, packed = init_params(kp, input_size, hidden_size, output_size, n_layers)

    fwd = jax.jit(sequence_classifier_forward)
    y = jax.block_until_ready(fwd(x, packed))

    assert y.shape == (batch, output_size)
    # exact softmax -> rows sum to ~1
    assert jnp.allclose(jnp.sum(y, axis=-1), 1.0, atol=1e-4)
    # match the pure-JAX f32 reference (kernel uses bf16 MXU operands -> looser atol)
    y_ref = reference_forward(x, raw, n_layers)
    assert jnp.allclose(y, y_ref, atol=2e-2), float(jnp.max(jnp.abs(y - y_ref)))
    print("KERNEL_OK")
</pallas_src>

<mosaic_0001>
module attributes {stable_mosaic.version = 11 : i64} {
  func.func @fused_lstm_classifier_kernel(%arg0: i32, %arg1: memref<8x8x16xf32, #tpu.memory_space<vmem>>, %arg2: memref<16x256xbf16, #tpu.memory_space<vmem>>, %arg3: memref<3x32x256xbf16, #tpu.memory_space<vmem>>, %arg4: memref<3x32x256xbf16, #tpu.memory_space<vmem>>, %arg5: memref<4x64x256xbf16, #tpu.memory_space<vmem>>, %arg6: memref<4x1x256xf32, #tpu.memory_space<vmem>>, %arg7: memref<1x64xf32, #tpu.memory_space<vmem>>, %arg8: memref<1x64xf32, #tpu.memory_space<vmem>>, %arg9: memref<64x10xbf16, #tpu.memory_space<vmem>>, %arg10: memref<1x10xf32, #tpu.memory_space<vmem>>, %arg11: memref<8x10xf32, #tpu.memory_space<vmem>>, %arg12: memref<8x8x256xf32, #tpu.memory_space<vmem>>, %arg13: memref<8x8x32xf32, #tpu.memory_space<vmem>>, %arg14: memref<8x8x32xf32, #tpu.memory_space<vmem>>) attributes {dimension_semantics = [#tpu.dimension_semantics<parallel>], iteration_bounds = array<i64: 1>, scalar_prefetch = 0 : i64, scratch_operands = 3 : i64, tpu.core_type = #tpu.core_type<tc>, window_params = [{transform_indices = @transform_0, window_bounds = array<i64: 8, 8, 16>}, {pipeline_mode = #tpu.pipeline_mode<synchronous>, transform_indices = @transform_1, window_bounds = array<i64: 16, 256>}, {pipeline_mode = #tpu.pipeline_mode<synchronous>, transform_indices = @transform_2, window_bounds = array<i64: 3, 32, 256>}, {pipeline_mode = #tpu.pipeline_mode<synchronous>, transform_indices = @transform_3, window_bounds = array<i64: 3, 32, 256>}, {pipeline_mode = #tpu.pipeline_mode<synchronous>, transform_indices = @transform_4, window_bounds = array<i64: 4, 64, 256>}, {pipeline_mode = #tpu.pipeline_mode<synchronous>, transform_indices = @transform_5, window_bounds = array<i64: 4, 1, 256>}, {pipeline_mode = #tpu.pipeline_mode<synchronous>, transform_indices = @transform_6, window_bounds = array<i64: 1, 64>}, {pipeline_mode = #tpu.pipeline_mode<synchronous>, transform_indices = @transform_7, window_bounds = array<i64: 1, 64>}, {pipeline_mode = #tpu.pipeline_mode<synchronous>, transform_indices = @transform_8, window_bounds = array<i64: 64, 10>}, {pipeline_mode = #tpu.pipeline_mode<synchronous>, transform_indices = @transform_9, window_bounds = array<i64: 1, 10>}, {transform_indices = @transform_10, window_bounds = array<i64: 8, 10>}]} {
    %0 = tpu.iota {dimensions = array<i32: 1>} : vector<8x256xi32>
    %c64_i32 = arith.constant 64 : i32
    %c0_i32 = arith.constant 0 : i32
    %1 = arith.cmpi eq, %c64_i32, %c0_i32 : i32
    %c1_i32 = arith.constant 1 : i32
    %2 = arith.select %1, %c1_i32, %c64_i32 : i32
    %3 = vector.broadcast %2 : i32 to vector<8x256xi32>
    %4 = arith.remsi %0, %3 : vector<8x256xi32>
    %c0_i32_0 = arith.constant 0 : i32
    %5 = vector.broadcast %c0_i32_0 : i32 to vector<8x256xi32>
    %6 = arith.cmpi ne, %4, %5 : vector<8x256xi32>
    %c0_i32_1 = arith.constant 0 : i32
    %7 = vector.broadcast %c0_i32_1 : i32 to vector<8x256xi32>
    %8 = arith.cmpi slt, %4, %7 : vector<8x256xi32>
    %c0_i32_2 = arith.constant 0 : i32
    %9 = arith.cmpi slt, %2, %c0_i32_2 : i32
    %10 = vector.broadcast %9 : i1 to vector<8x256xi1>
    %11 = vector.broadcast %10 : vector<8x256xi1> to vector<8x256xi1>
    %12 = arith.xori %8, %11 : vector<8x256xi1>
    %13 = arith.andi %12, %6 : vector<8x256xi1>
    %14 = vector.broadcast %2 : i32 to vector<8x256xi32>
    %15 = arith.addi %4, %14 : vector<8x256xi32>
    %16 = arith.select %13, %15, %4 : vector<8x256xi1>, vector<8x256xi32>
    %c32_i32 = arith.constant 32 : i32
    %17 = vector.broadcast %c32_i32 : i32 to vector<8x256xi32>
    %18 = arith.cmpi slt, %16, %17 : vector<8x256xi32>
    %c0 = arith.constant 0 : index
    %c0_3 = arith.constant 0 : index
    %c0_4 = arith.constant 0 : index
    %19 = vector.load %arg1[%c0, %c0_3, %c0_4] : memref<8x8x16xf32, #tpu.memory_space<vmem>>, vector<8x8x16xf32>
    %20 = vector.shape_cast %19 : vector<8x8x16xf32> to vector<64x16xf32>
    %21 = arith.truncf %20 : vector<64x16xf32> to vector<64x16xbf16>
    %c0_5 = arith.constant 0 : index
    %c0_6 = arith.constant 0 : index
    %22 = vector.load %arg2[%c0_5, %c0_6] : memref<16x256xbf16, #tpu.memory_space<vmem>>, vector<16x256xbf16>
    %cst = arith.constant dense<0.000000e+00> : vector<64x256xf32>
    %23 = tpu.matmul %21, %22, %cst {dimension_numbers = #tpu.dot_dimension_numbers<[1], [0], [0], [1], [0, 0, 1, 1], [], []>} : vector<64x16xbf16>, vector<16x256xbf16>, vector<64x256xf32> -> vector<64x256xf32>
    %c0_7 = arith.constant 0 : index
    %c0_8 = arith.constant 0 : index
    %c0_9 = arith.constant 0 : index
    %24 = vector.load %arg6[%c0_7, %c0_8, %c0_9] : memref<4x1x256xf32, #tpu.memory_space<vmem>>, vector<1x1x256xf32>
    %25 = vector.shape_cast %24 : vector<1x1x256xf32> to vector<1x256xf32>
    %26 = vector.broadcast %25 : vector<1x256xf32> to vector<64x256xf32>
    %27 = arith.addf %23, %26 : vector<64x256xf32>
    %28 = vector.shape_cast %27 : vector<64x256xf32> to vector<8x8x256xf32>
    %29 = vector.extract_strided_slice %28 {offsets = [0, 0, 0], sizes = [1, 8, 256], strides = [1, 1, 1]} : vector<8x8x256xf32> to vector<1x8x256xf32>
    %30 = vector.shape_cast %29 : vector<1x8x256xf32> to vector<8x256xf32>
    %31 = vector.extract_strided_slice %28 {offsets = [7, 0, 0], sizes = [1, 8, 256], strides = [1, 1, 1]} : vector<8x8x256xf32> to vector<1x8x256xf32>
    %32 = vector.shape_cast %31 : vector<1x8x256xf32> to vector<8x256xf32>
    %33 = arith.select %18, %30, %32 : vector<8x256xi1>, vector<8x256xf32>
    %c0_10 = arith.constant 0 : index
    %c0_11 = arith.constant 0 : index
    %c0_12 = arith.constant 0 : index
    %34 = vector.load %arg12[%c0_10, %c0_11, %c0_12] : memref<8x8x256xf32, #tpu.memory_space<vmem>>, vector<1x8x256xf32>
    %35 = vector.shape_cast %34 : vector<1x8x256xf32> to vector<8x256xf32>
    %36 = vector.shape_cast %33 : vector<8x256xf32> to vector<1x8x256xf32>
    tpu.vector_store %arg12[%c0_10, %c0_11, %c0_12], %36 {strides = array<i32>} : memref<8x8x256xf32, #tpu.memory_space<vmem>>, vector<1x8x256xf32>,
    %37 = vector.extract_strided_slice %28 {offsets = [1, 0, 0], sizes = [1, 8, 256], strides = [1, 1, 1]} : vector<8x8x256xf32> to vector<1x8x256xf32>
    %38 = vector.shape_cast %37 : vector<1x8x256xf32> to vector<8x256xf32>
    %39 = vector.extract_strided_slice %28 {offsets = [6, 0, 0], sizes = [1, 8, 256], strides = [1, 1, 1]} : vector<8x8x256xf32> to vector<1x8x256xf32>
    %40 = vector.shape_cast %39 : vector<1x8x256xf32> to vector<8x256xf32>
    %41 = arith.select %18, %38, %40 : vector<8x256xi1>, vector<8x256xf32>
    %c1 = arith.constant 1 : index
    %c0_13 = arith.constant 0 : index
    %c0_14 = arith.constant 0 : index
    %42 = vector.load %arg12[%c1, %c0_13, %c0_14] : memref<8x8x256xf32, #tpu.memory_space<vmem>>, vector<1x8x256xf32>
    %43 = vector.shape_cast %42 : vector<1x8x256xf32> to vector<8x256xf32>
    %44 = vector.shape_cast %41 : vector<8x256xf32> to vector<1x8x256xf32>
    tpu.vector_store %arg12[%c1, %c0_13, %c0_14], %44 {strides = array<i32>} : memref<8x8x256xf32, #tpu.memory_space<vmem>>, vector<1x8x256xf32>,
    %45 = vector.extract_strided_slice %28 {offsets = [2, 0, 0], sizes = [1, 8, 256], strides = [1, 1, 1]} : vector<8x8x256xf32> to vector<1x8x256xf32>
    %46 = vector.shape_cast %45 : vector<1x8x256xf32> to vector<8x256xf32>
    %47 = vector.extract_strided_slice %28 {offsets = [5, 0, 0], sizes = [1, 8, 256], strides = [1, 1, 1]} : vector<8x8x256xf32> to vector<1x8x256xf32>
    %48 = vector.shape_cast %47 : vector<1x8x256xf32> to vector<8x256xf32>
    %49 = arith.select %18, %46, %48 : vector<8x256xi1>, vector<8x256xf32>
    %c2 = arith.constant 2 : index
    %c0_15 = arith.constant 0 : index
    %c0_16 = arith.constant 0 : index
    %50 = vector.load %arg12[%c2, %c0_15, %c0_16] : memref<8x8x256xf32, #tpu.memory_space<vmem>>, vector<1x8x256xf32>
    %51 = vector.shape_cast %50 : vector<1x8x256xf32> to vector<8x256xf32>
    %52 = vector.shape_cast %49 : vector<8x256xf32> to vector<1x8x256xf32>
    tpu.vector_store %arg12[%c2, %c0_15, %c0_16], %52 {strides = array<i32>} : memref<8x8x256xf32, #tpu.memory_space<vmem>>, vector<1x8x256xf32>,
    %53 = vector.extract_strided_slice %28 {offsets = [3, 0, 0], sizes = [1, 8, 256], strides = [1, 1, 1]} : vector<8x8x256xf32> to vector<1x8x256xf32>
    %54 = vector.shape_cast %53 : vector<1x8x256xf32> to vector<8x256xf32>
    %55 = vector.extract_strided_slice %28 {offsets = [4, 0, 0], sizes = [1, 8, 256], strides = [1, 1, 1]} : vector<8x8x256xf32> to vector<1x8x256xf32>
    %56 = vector.shape_cast %55 : vector<1x8x256xf32> to vector<8x256xf32>
    %57 = arith.select %18, %54, %56 : vector<8x256xi1>, vector<8x256xf32>
    %c3 = arith.constant 3 : index
    %c0_17 = arith.constant 0 : index
    %c0_18 = arith.constant 0 : index
    %58 = vector.load %arg12[%c3, %c0_17, %c0_18] : memref<8x8x256xf32, #tpu.memory_space<vmem>>, vector<1x8x256xf32>
    %59 = vector.shape_cast %58 : vector<1x8x256xf32> to vector<8x256xf32>
    %60 = vector.shape_cast %57 : vector<8x256xf32> to vector<1x8x256xf32>
    tpu.vector_store %arg12[%c3, %c0_17, %c0_18], %60 {strides = array<i32>} : memref<8x8x256xf32, #tpu.memory_space<vmem>>, vector<1x8x256xf32>,
    %61 = vector.extract_strided_slice %28 {offsets = [4, 0, 0], sizes = [1, 8, 256], strides = [1, 1, 1]} : vector<8x8x256xf32> to vector<1x8x256xf32>
    %62 = vector.shape_cast %61 : vector<1x8x256xf32> to vector<8x256xf32>
    %63 = vector.extract_strided_slice %28 {offsets = [3, 0, 0], sizes = [1, 8, 256], strides = [1, 1, 1]} : vector<8x8x256xf32> to vector<1x8x256xf32>
    %64 = vector.shape_cast %63 : vector<1x8x256xf32> to vector<8x256xf32>
    %65 = arith.select %18, %62, %64 : vector<8x256xi1>, vector<8x256xf32>
    %c4 = arith.constant 4 : index
    %c0_19 = arith.constant 0 : index
    %c0_20 = arith.constant 0 : index
    %66 = vector.load %arg12[%c4, %c0_19, %c0_20] : memref<8x8x256xf32, #tpu.memory_space<vmem>>, vector<1x8x256xf32>
    %67 = vector.shape_cast %66 : vector<1x8x256xf32> to vector<8x256xf32>
    %68 = vector.shape_cast %65 : vector<8x256xf32> to vector<1x8x256xf32>
    tpu.vector_store %arg12[%c4, %c0_19, %c0_20], %68 {strides = array<i32>} : memref<8x8x256xf32, #tpu.memory_space<vmem>>, vector<1x8x256xf32>,
    %69 = vector.extract_strided_slice %28 {offsets = [5, 0, 0], sizes = [1, 8, 256], strides = [1, 1, 1]} : vector<8x8x256xf32> to vector<1x8x256xf32>
    %70 = vector.shape_cast %69 : vector<1x8x256xf32> to vector<8x256xf32>
    %71 = vector.extract_strided_slice %28 {offsets = [2, 0, 0], sizes = [1, 8, 256], strides = [1, 1, 1]} : vector<8x8x256xf32> to vector<1x8x256xf32>
    %72 = vector.shape_cast %71 : vector<1x8x256xf32> to vector<8x256xf32>
    %73 = arith.select %18, %70, %72 : vector<8x256xi1>, vector<8x256xf32>
    %c5 = arith.constant 5 : index
    %c0_21 = arith.constant 0 : index
    %c0_22 = arith.constant 0 : index
    %74 = vector.load %arg12[%c5, %c0_21, %c0_22] : memref<8x8x256xf32, #tpu.memory_space<vmem>>, vector<1x8x256xf32>
    %75 = vector.shape_cast %74 : vector<1x8x256xf32> to vector<8x256xf32>
    %76 = vector.shape_cast %73 : vector<8x256xf32> to vector<1x8x256xf32>
    tpu.vector_store %arg12[%c5, %c0_21, %c0_22], %76 {strides = array<i32>} : memref<8x8x256xf32, #tpu.memory_space<vmem>>, vector<1x8x256xf32>,
    %77 = vector.extract_strided_slice %28 {offsets = [6, 0, 0], sizes = [1, 8, 256], strides = [1, 1, 1]} : vector<8x8x256xf32> to vector<1x8x256xf32>
    %78 = vector.shape_cast %77 : vector<1x8x256xf32> to vector<8x256xf32>
    %79 = vector.extract_strided_slice %28 {offsets = [1, 0, 0], sizes = [1, 8, 256], strides = [1, 1, 1]} : vector<8x8x256xf32> to vector<1x8x256xf32>
    %80 = vector.shape_cast %79 : vector<1x8x256xf32> to vector<8x256xf32>
    %81 = arith.select %18, %78, %80 : vector<8x256xi1>, vector<8x256xf32>
    %c6 = arith.constant 6 : index
    %c0_23 = arith.constant 0 : index
    %c0_24 = arith.constant 0 : index
    %82 = vector.load %arg12[%c6, %c0_23, %c0_24] : memref<8x8x256xf32, #tpu.memory_space<vmem>>, vector<1x8x256xf32>
    %83 = vector.shape_cast %82 : vector<1x8x256xf32> to vector<8x256xf32>
    %84 = vector.shape_cast %81 : vector<8x256xf32> to vector<1x8x256xf32>
    tpu.vector_store %arg12[%c6, %c0_23, %c0_24], %84 {strides = array<i32>} : memref<8x8x256xf32, #tpu.memory_space<vmem>>, vector<1x8x256xf32>,
    %85 = vector.extract_strided_slice %28 {offsets = [7, 0, 0], sizes = [1, 8, 256], strides = [1, 1, 1]} : vector<8x8x256xf32> to vector<1x8x256xf32>
    %86 = vector.shape_cast %85 : vector<1x8x256xf32> to vector<8x256xf32>
    %87 = vector.extract_strided_slice %28 {offsets = [0, 0, 0], sizes = [1, 8, 256], strides = [1, 1, 1]} : vector<8x8x256xf32> to vector<1x8x256xf32>
    %88 = vector.shape_cast %87 : vector<1x8x256xf32> to vector<8x256xf32>
    %89 = arith.select %18, %86, %88 : vector<8x256xi1>, vector<8x256xf32>
    %c7 = arith.constant 7 : index
    %c0_25 = arith.constant 0 : index
    %c0_26 = arith.constant 0 : index
    %90 = vector.load %arg12[%c7, %c0_25, %c0_26] : memref<8x8x256xf32, #tpu.memory_space<vmem>>, vector<1x8x256xf32>
    %91 = vector.shape_cast %90 : vector<1x8x256xf32> to vector<8x256xf32>
    %92 = vector.shape_cast %89 : vector<8x256xf32> to vector<1x8x256xf32>
    tpu.vector_store %arg12[%c7, %c0_25, %c0_26], %92 {strides = array<i32>} : memref<8x8x256xf32, #tpu.memory_space<vmem>>, vector<1x8x256xf32>,
    %c0_27 = arith.constant 0 : index
    %c0_28 = arith.constant 0 : index
    %c0_29 = arith.constant 0 : index
    %93 = vector.load %arg5[%c0_27, %c0_28, %c0_29] : memref<4x64x256xbf16, #tpu.memory_space<vmem>>, vector<1x64x256xbf16>
    %94 = vector.shape_cast %93 : vector<1x64x256xbf16> to vector<64x256xbf16>
    %cst_30 = arith.constant 0.000000e+00 : f32
    %95 = vector.broadcast %cst_30 : f32 to vector<8x64xf32>
    %c0_i32_31 = arith.constant 0 : i32
    %96 = arith.truncf %95 : vector<8x64xf32> to vector<8x64xbf16>
    %cst_32 = arith.constant dense<0.000000e+00> : vector<8x256xf32>
    %97 = tpu.matmul %96, %94, %cst_32 {dimension_numbers = #tpu.dot_dimension_numbers<[1], [0], [0], [1], [0, 0, 1, 1], [], []>} : vector<8x64xbf16>, vector<64x256xbf16>, vector<8x256xf32> -> vector<8x256xf32>
    %98 = arith.index_cast %c0_i32_31 : i32 to index
    %c0_33 = arith.constant 0 : index
    %c0_34 = arith.constant 0 : index
    %99 = vector.load %arg12[%98, %c0_33, %c0_34] : memref<8x8x256xf32, #tpu.memory_space<vmem>>, vector<1x8x256xf32>
    %100 = vector.shape_cast %99 : vector<1x8x256xf32> to vector<8x256xf32>
    %101 = arith.addf %97, %100 : vector<8x256xf32>
    %102 = vector.extract_strided_slice %101 {offsets = [0, 0], sizes = [8, 192], strides = [1, 1]} : vector<8x256xf32> to vector<8x192xf32>
    %103 = arith.negf %102 : vector<8x192xf32>
    %104 = math.exp %103 : vector<8x192xf32>
    %cst_35 = arith.constant 1.000000e+00 : f32
    %105 = vector.broadcast %cst_35 : f32 to vector<8x192xf32>
    %106 = arith.addf %105, %104 : vector<8x192xf32>
    %107 = arith.divf %105, %106 : vector<8x192xf32>
    %108 = vector.extract_strided_slice %101 {offsets = [0, 192], sizes = [8, 64], strides = [1, 1]} : vector<8x256xf32> to vector<8x64xf32>
    %109 = math.tanh %108 : vector<8x64xf32>
    %110 = vector.extract_strided_slice %107 {offsets = [0, 64], sizes = [8, 64], strides = [1, 1]} : vector<8x192xf32> to vector<8x64xf32>
    %111 = arith.mulf %110, %95 : vector<8x64xf32>
    %112 = vector.extract_strided_slice %107 {offsets = [0, 0], sizes = [8, 64], strides = [1, 1]} : vector<8x192xf32> to vector<8x64xf32>
    %113 = arith.mulf %112, %109 : vector<8x64xf32>
    %114 = arith.addf %111, %113 : vector<8x64xf32>
    %115 = vector.extract_strided_slice %107 {offsets = [0, 128], sizes = [8, 64], strides = [1, 1]} : vector<8x192xf32> to vector<8x64xf32>
    %116 = math.tanh %114 : vector<8x64xf32>
    %117 = arith.mulf %115, %116 : vector<8x64xf32>
    %118 = vector.extract_strided_slice %117 {offsets = [0, 0], sizes = [8, 32], strides = [1, 1]} : vector<8x64xf32> to vector<8x32xf32>
    %119 = arith.index_cast %c0_i32_31 : i32 to index
    %c0_36 = arith.constant 0 : index
    %c0_37 = arith.constant 0 : index
    %120 = vector.load %arg13[%119, %c0_36, %c0_37] : memref<8x8x32xf32, #tpu.memory_space<vmem>>, vector<1x8x32xf32>
    %121 = vector.shape_cast %120 : vector<1x8x32xf32> to vector<8x32xf32>
    %122 = vector.shape_cast %118 : vector<8x32xf32> to vector<1x8x32xf32>
    tpu.vector_store %arg13[%119, %c0_36, %c0_37], %122 {strides = array<i32>} : memref<8x8x32xf32, #tpu.memory_space<vmem>>, vector<1x8x32xf32>,
    %123 = vector.extract_strided_slice %117 {offsets = [0, 32], sizes = [8, 32], strides = [1, 1]} : vector<8x64xf32> to vector<8x32xf32>
    %c7_i32 = arith.constant 7 : i32
    %124 = arith.subi %c7_i32, %c0_i32_31 : i32
    %125 = arith.index_cast %124 : i32 to index
    %c0_38 = arith.constant 0 : index
    %c0_39 = arith.constant 0 : index
    %126 = vector.load %arg14[%125, %c0_38, %c0_39] : memref<8x8x32xf32, #tpu.memory_space<vmem>>, vector<1x8x32xf32>
    %127 = vector.shape_cast %126 : vector<1x8x32xf32> to vector<8x32xf32>
    %128 = vector.shape_cast %123 : vector<8x32xf32> to vector<1x8x32xf32>
    tpu.vector_store %arg14[%125, %c0_38, %c0_39], %128 {strides = array<i32>} : memref<8x8x32xf32, #tpu.memory_space<vmem>>, vector<1x8x32xf32>,
    %c1_i32_40 = arith.constant 1 : i32
    %129 = arith.truncf %117 : vector<8x64xf32> to vector<8x64xbf16>
    %cst_41 = arith.constant dense<0.000000e+00> : vector<8x256xf32>
    %130 = tpu.matmul %129, %94, %cst_41 {dimension_numbers = #tpu.dot_dimension_numbers<[1], [0], [0], [1], [0, 0, 1, 1], [], []>} : vector<8x64xbf16>, vector<64x256xbf16>, vector<8x256xf32> -> vector<8x256xf32>
    %131 = arith.index_cast %c1_i32_40 : i32 to index
    %c0_42 = arith.constant 0 : index
    %c0_43 = arith.constant 0 : index
    %132 = vector.load %arg12[%131, %c0_42, %c0_43] : memref<8x8x256xf32, #tpu.memory_space<vmem>>, vector<1x8x256xf32>
    %133 = vector.shape_cast %132 : vector<1x8x256xf32> to vector<8x256xf32>
    %134 = arith.addf %130, %133 : vector<8x256xf32>
    %135 = vector.extract_strided_slice %134 {offsets = [0, 0], sizes = [8, 192], strides = [1, 1]} : vector<8x256xf32> to vector<8x192xf32>
    %136 = arith.negf %135 : vector<8x192xf32>
    %137 = math.exp %136 : vector<8x192xf32>
    %cst_44 = arith.constant 1.000000e+00 : f32
    %138 = vector.broadcast %cst_44 : f32 to vector<8x192xf32>
    %139 = arith.addf %138, %137 : vector<8x192xf32>
    %140 = arith.divf %138, %139 : vector<8x192xf32>
    %141 = vector.extract_strided_slice %134 {offsets = [0, 192], sizes = [8, 64], strides = [1, 1]} : vector<8x256xf32> to vector<8x64xf32>
    %142 = math.tanh %141 : vector<8x64xf32>
    %143 = vector.extract_strided_slice %140 {offsets = [0, 64], sizes = [8, 64], strides = [1, 1]} : vector<8x192xf32> to vector<8x64xf32>
    %144 = arith.mulf %143, %114 : vector<8x64xf32>
    %145 = vector.extract_strided_slice %140 {offsets = [0, 0], sizes = [8, 64], strides = [1, 1]} : vector<8x192xf32> to vector<8x64xf32>
    %146 = arith.mulf %145, %142 : vector<8x64xf32>
    %147 = arith.addf %144, %146 : vector<8x64xf32>
    %148 = vector.extract_strided_slice %140 {offsets = [0, 128], sizes = [8, 64], strides = [1, 1]} : vector<8x192xf32> to vector<8x64xf32>
    %149 = math.tanh %147 : vector<8x64xf32>
    %150 = arith.mulf %148, %149 : vector<8x64xf32>
    %151 = vector.extract_strided_slice %150 {offsets = [0, 0], sizes = [8, 32], strides = [1, 1]} : vector<8x64xf32> to vector<8x32xf32>
    %152 = arith.index_cast %c1_i32_40 : i32 to index
    %c0_45 = arith.constant 0 : index
    %c0_46 = arith.constant 0 : index
    %153 = vector.load %arg13[%152, %c0_45, %c0_46] : memref<8x8x32xf32, #tpu.memory_space<vmem>>, vector<1x8x32xf32>
    %154 = vector.shape_cast %153 : vector<1x8x32xf32> to vector<8x32xf32>
    %155 = vector.shape_cast %151 : vector<8x32xf32> to vector<1x8x32xf32>
    tpu.vector_store %arg13[%152, %c0_45, %c0_46], %155 {strides = array<i32>} : memref<8x8x32xf32, #tpu.memory_space<vmem>>, vector<1x8x32xf32>,
    %156 = vector.extract_strided_slice %150 {offsets = [0, 32], sizes = [8, 32], strides = [1, 1]} : vector<8x64xf32> to vector<8x32xf32>
    %c7_i32_47 = arith.constant 7 : i32
    %157 = arith.subi %c7_i32_47, %c1_i32_40 : i32
    %158 = arith.index_cast %157 : i32 to index
    %c0_48 = arith.constant 0 : index
    %c0_49 = arith.constant 0 : index
    %159 = vector.load %arg14[%158, %c0_48, %c0_49] : memref<8x8x32xf32, #tpu.memory_space<vmem>>, vector<1x8x32xf32>
    %160 = vector.shape_cast %159 : vector<1x8x32xf32> to vector<8x32xf32>
    %161 = vector.shape_cast %156 : vector<8x32xf32> to vector<1x8x32xf32>
    tpu.vector_store %arg14[%158, %c0_48, %c0_49], %161 {strides = array<i32>} : memref<8x8x32xf32, #tpu.memory_space<vmem>>, vector<1x8x32xf32>,
    %c2_i32 = arith.constant 2 : i32
    %162 = arith.truncf %150 : vector<8x64xf32> to vector<8x64xbf16>
    %cst_50 = arith.constant dense<0.000000e+00> : vector<8x256xf32>
    %163 = tpu.matmul %162, %94, %cst_50 {dimension_numbers = #tpu.dot_dimension_numbers<[1], [0], [0], [1], [0, 0, 1, 1], [], []>} : vector<8x64xbf16>, vector<64x256xbf16>, vector<8x256xf32> -> vector<8x256xf32>
    %164 = arith.index_cast %c2_i32 : i32 to index
    %c0_51 = arith.constant 0 : index
    %c0_52 = arith.constant 0 : index
    %165 = vector.load %arg12[%164, %c0_51, %c0_52] : memref<8x8x256xf32, #tpu.memory_space<vmem>>, vector<1x8x256xf32>
    %166 = vector.shape_cast %165 : vector<1x8x256xf32> to vector<8x256xf32>
    %167 = arith.addf %163, %166 : vector<8x256xf32>
    %168 = vector.extract_strided_slice %167 {offsets = [0, 0], sizes = [8, 192], strides = [1, 1]} : vector<8x256xf32> to vector<8x192xf32>
    %169 = arith.negf %168 : vector<8x192xf32>
    %170 = math.exp %169 : vector<8x192xf32>
    %cst_53 = arith.constant 1.000000e+00 : f32
    %171 = vector.broadcast %cst_53 : f32 to vector<8x192xf32>
    %172 = arith.addf %171, %170 : vector<8x192xf32>
    %173 = arith.divf %171, %172 : vector<8x192xf32>
    %174 = vector.extract_strided_slice %167 {offsets = [0, 192], sizes = [8, 64], strides = [1, 1]} : vector<8x256xf32> to vector<8x64xf32>
    %175 = math.tanh %174 : vector<8x64xf32>
    %176 = vector.extract_strided_slice %173 {offsets = [0, 64], sizes = [8, 64], strides = [1, 1]} : vector<8x192xf32> to vector<8x64xf32>
    %177 = arith.mulf %176, %147 : vector<8x64xf32>
    %178 = vector.extract_strided_slice %173 {offsets = [0, 0], sizes = [8, 64], strides = [1, 1]} : vector<8x192xf32> to vector<8x64xf32>
    %179 = arith.mulf %178, %175 : vector<8x64xf32>
    %180 = arith.addf %177, %179 : vector<8x64xf32>
    %181 = vector.extract_strided_slice %173 {offsets = [0, 128], sizes = [8, 64], strides = [1, 1]} : vector<8x192xf32> to vector<8x64xf32>
    %182 = math.tanh %180 : vector<8x64xf32>
    %183 = arith.mulf %181, %182 : vector<8x64xf32>
    %184 = vector.extract_strided_slice %183 {offsets = [0, 0], sizes = [8, 32], strides = [1, 1]} : vector<8x64xf32> to vector<8x32xf32>
    %185 = arith.index_cast %c2_i32 : i32 to index
    %c0_54 = arith.constant 0 : index
    %c0_55 = arith.constant 0 : index
    %186 = vector.load %arg13[%185, %c0_54, %c0_55] : memref<8x8x32xf32, #tpu.memory_space<vmem>>, vector<1x8x32xf32>
    %187 = vector.shape_cast %186 : vector<1x8x32xf32> to vector<8x32xf32>
    %188 = vector.shape_cast %184 : vector<8x32xf32> to vector<1x8x32xf32>
    tpu.vector_store %arg13[%185, %c0_54, %c0_55], %188 {strides = array<i32>} : memref<8x8x32xf32, #tpu.memory_space<vmem>>, vector<1x8x32xf32>,
    %189 = vector.extract_strided_slice %183 {offsets = [0, 32], sizes = [8, 32], strides = [1, 1]} : vector<8x64xf32> to vector<8x32xf32>
    %c7_i32_56 = arith.constant 7 : i32
    %190 = arith.subi %c7_i32_56, %c2_i32 : i32
    %191 = arith.index_cast %190 : i32 to index
    %c0_57 = arith.constant 0 : index
    %c0_58 = arith.constant 0 : index
    %192 = vector.load %arg14[%191, %c0_57, %c0_58] : memref<8x8x32xf32, #tpu.memory_space<vmem>>, vector<1x8x32xf32>
    %193 = vector.shape_cast %192 : vector<1x8x32xf32> to vector<8x32xf32>
    %194 = vector.shape_cast %189 : vector<8x32xf32> to vector<1x8x32xf32>
    tpu.vector_store %arg14[%191, %c0_57, %c0_58], %194 {strides = array<i32>} : memref<8x8x32xf32, #tpu.memory_space<vmem>>, vector<1x8x32xf32>,
    %c3_i32 = arith.constant 3 : i32
    %195 = arith.truncf %183 : vector<8x64xf32> to vector<8x64xbf16>
    %cst_59 = arith.constant dense<0.000000e+00> : vector<8x256xf32>
    %196 = tpu.matmul %195, %94, %cst_59 {dimension_numbers = #tpu.dot_dimension_numbers<[1], [0], [0], [1], [0, 0, 1, 1], [], []>} : vector<8x64xbf16>, vector<64x256xbf16>, vector<8x256xf32> -> vector<8x256xf32>
    %197 = arith.index_cast %c3_i32 : i32 to index
    %c0_60 = arith.constant 0 : index
    %c0_61 = arith.constant 0 : index
    %198 = vector.load %arg12[%197, %c0_60, %c0_61] : memref<8x8x256xf32, #tpu.memory_space<vmem>>, vector<1x8x256xf32>
    %199 = vector.shape_cast %198 : vector<1x8x256xf32> to vector<8x256xf32>
    %200 = arith.addf %196, %199 : vector<8x256xf32>
    %201 = vector.extract_strided_slice %200 {offsets = [0, 0], sizes = [8, 192], strides = [1, 1]} : vector<8x256xf32> to vector<8x192xf32>
    %202 = arith.negf %201 : vector<8x192xf32>
    %203 = math.exp %202 : vector<8x192xf32>
    %cst_62 = arith.constant 1.000000e+00 : f32
    %204 = vector.broadcast %cst_62 : f32 to vector<8x192xf32>
    %205 = arith.addf %204, %203 : vector<8x192xf32>
    %206 = arith.divf %204, %205 : vector<8x192xf32>
    %207 = vector.extract_strided_slice %200 {offsets = [0, 192], sizes = [8, 64], strides = [1, 1]} : vector<8x256xf32> to vector<8x64xf32>
    %208 = math.tanh %207 : vector<8x64xf32>
    %209 = vector.extract_strided_slice %206 {offsets = [0, 64], sizes = [8, 64], strides = [1, 1]} : vector<8x192xf32> to vector<8x64xf32>
    %210 = arith.mulf %209, %180 : vector<8x64xf32>
    %211 = vector.extract_strided_slice %206 {offsets = [0, 0], sizes = [8, 64], strides = [1, 1]} : vector<8x192xf32> to vector<8x64xf32>
    %212 = arith.mulf %211, %208 : vector<8x64xf32>
    %213 = arith.addf %210, %212 : vector<8x64xf32>
    %214 = vector.extract_strided_slice %206 {offsets = [0, 128], sizes = [8, 64], strides = [1, 1]} : vector<8x192xf32> to vector<8x64xf32>
    %215 = math.tanh %213 : vector<8x64xf32>
    %216 = arith.mulf %214, %215 : vector<8x64xf32>
    %217 = vector.extract_strided_slice %216 {offsets = [0, 0], sizes = [8, 32], strides = [1, 1]} : vector<8x64xf32> to vector<8x32xf32>
    %218 = arith.index_cast %c3_i32 : i32 to index
    %c0_63 = arith.constant 0 : index
    %c0_64 = arith.constant 0 : index
    %219 = vector.load %arg13[%218, %c0_63, %c0_64] : memref<8x8x32xf32, #tpu.memory_space<vmem>>, vector<1x8x32xf32>
    %220 = vector.shape_cast %219 : vector<1x8x32xf32> to vector<8x32xf32>
    %221 = vector.shape_cast %217 : vector<8x32xf32> to vector<1x8x32xf32>
    tpu.vector_store %arg13[%218, %c0_63, %c0_64], %221 {strides = array<i32>} : memref<8x8x32xf32, #tpu.memory_space<vmem>>, vector<1x8x32xf32>,
    %222 = vector.extract_strided_slice %216 {offsets = [0, 32], sizes = [8, 32], strides = [1, 1]} : vector<8x64xf32> to vector<8x32xf32>
    %c7_i32_65 = arith.constant 7 : i32
    %223 = arith.subi %c7_i32_65, %c3_i32 : i32
    %224 = arith.index_cast %223 : i32 to index
    %c0_66 = arith.constant 0 : index
    %c0_67 = arith.constant 0 : index
    %225 = vector.load %arg14[%224, %c0_66, %c0_67] : memref<8x8x32xf32, #tpu.memory_space<vmem>>, vector<1x8x32xf32>
    %226 = vector.shape_cast %225 : vector<1x8x32xf32> to vector<8x32xf32>
    %227 = vector.shape_cast %222 : vector<8x32xf32> to vector<1x8x32xf32>
    tpu.vector_store %arg14[%224, %c0_66, %c0_67], %227 {strides = array<i32>} : memref<8x8x32xf32, #tpu.memory_space<vmem>>, vector<1x8x32xf32>,
    %c4_i32 = arith.constant 4 : i32
    %228 = arith.truncf %216 : vector<8x64xf32> to vector<8x64xbf16>
    %cst_68 = arith.constant dense<0.000000e+00> : vector<8x256xf32>
    %229 = tpu.matmul %228, %94, %cst_68 {dimension_numbers = #tpu.dot_dimension_numbers<[1], [0], [0], [1], [0, 0, 1, 1], [], []>} : vector<8x64xbf16>, vector<64x256xbf16>, vector<8x256xf32> -> vector<8x256xf32>
    %230 = arith.index_cast %c4_i32 : i32 to index
    %c0_69 = arith.constant 0 : index
    %c0_70 = arith.constant 0 : index
    %231 = vector.load %arg12[%230, %c0_69, %c0_70] : memref<8x8x256xf32, #tpu.memory_space<vmem>>, vector<1x8x256xf32>
    %232 = vector.shape_cast %231 : vector<1x8x256xf32> to vector<8x256xf32>
    %233 = arith.addf %229, %232 : vector<8x256xf32>
    %234 = vector.extract_strided_slice %233 {offsets = [0, 0], sizes = [8, 192], strides = [1, 1]} : vector<8x256xf32> to vector<8x192xf32>
    %235 = arith.negf %234 : vector<8x192xf32>
    %236 = math.exp %235 : vector<8x192xf32>
    %cst_71 = arith.constant 1.000000e+00 : f32
    %237 = vector.broadcast %cst_71 : f32 to vector<8x192xf32>
    %238 = arith.addf %237, %236 : vector<8x192xf32>
    %239 = arith.divf %237, %238 : vector<8x192xf32>
    %240 = vector.extract_strided_slice %233 {offsets = [0, 192], sizes = [8, 64], strides = [1, 1]} : vector<8x256xf32> to vector<8x64xf32>
    %241 = math.tanh %240 : vector<8x64xf32>
    %242 = vector.extract_strided_slice %239 {offsets = [0, 64], sizes = [8, 64], strides = [1, 1]} : vector<8x192xf32> to vector<8x64xf32>
    %243 = arith.mulf %242, %213 : vector<8x64xf32>
    %244 = vector.extract_strided_slice %239 {offsets = [0, 0], sizes = [8, 64], strides = [1, 1]} : vector<8x192xf32> to vector<8x64xf32>
    %245 = arith.mulf %244, %241 : vector<8x64xf32>
    %246 = arith.addf %243, %245 : vector<8x64xf32>
    %247 = vector.extract_strided_slice %239 {offsets = [0, 128], sizes = [8, 64], strides = [1, 1]} : vector<8x192xf32> to vector<8x64xf32>
    %248 = math.tanh %246 : vector<8x64xf32>
    %249 = arith.mulf %247, %248 : vector<8x64xf32>
    %250 = vector.extract_strided_slice %249 {offsets = [0, 0], sizes = [8, 32], strides = [1, 1]} : vector<8x64xf32> to vector<8x32xf32>
    %251 = arith.index_cast %c4_i32 : i32 to index
    %c0_72 = arith.constant 0 : index
    %c0_73 = arith.constant 0 : index
    %252 = vector.load %arg13[%251, %c0_72, %c0_73] : memref<8x8x32xf32, #tpu.memory_space<vmem>>, vector<1x8x32xf32>
    %253 = vector.shape_cast %252 : vector<1x8x32xf32> to vector<8x32xf32>
    %254 = vector.shape_cast %250 : vector<8x32xf32> to vector<1x8x32xf32>
    tpu.vector_store %arg13[%251, %c0_72, %c0_73], %254 {strides = array<i32>} : memref<8x8x32xf32, #tpu.memory_space<vmem>>, vector<1x8x32xf32>,
    %255 = vector.extract_strided_slice %249 {offsets = [0, 32], sizes = [8, 32], strides = [1, 1]} : vector<8x64xf32> to vector<8x32xf32>
    %c7_i32_74 = arith.constant 7 : i32
    %256 = arith.subi %c7_i32_74, %c4_i32 : i32
    %257 = arith.index_cast %256 : i32 to index
    %c0_75 = arith.constant 0 : index
    %c0_76 = arith.constant 0 : index
    %258 = vector.load %arg14[%257, %c0_75, %c0_76] : memref<8x8x32xf32, #tpu.memory_space<vmem>>, vector<1x8x32xf32>
    %259 = vector.shape_cast %258 : vector<1x8x32xf32> to vector<8x32xf32>
    %260 = vector.shape_cast %255 : vector<8x32xf32> to vector<1x8x32xf32>
    tpu.vector_store %arg14[%257, %c0_75, %c0_76], %260 {strides = array<i32>} : memref<8x8x32xf32, #tpu.memory_space<vmem>>, vector<1x8x32xf32>,
    %c5_i32 = arith.constant 5 : i32
    %261 = arith.truncf %249 : vector<8x64xf32> to vector<8x64xbf16>
    %cst_77 = arith.constant dense<0.000000e+00> : vector<8x256xf32>
    %262 = tpu.matmul %261, %94, %cst_77 {dimension_numbers = #tpu.dot_dimension_numbers<[1], [0], [0], [1], [0, 0, 1, 1], [], []>} : vector<8x64xbf16>, vector<64x256xbf16>, vector<8x256xf32> -> vector<8x256xf32>
    %263 = arith.index_cast %c5_i32 : i32 to index
    %c0_78 = arith.constant 0 : index
    %c0_79 = arith.constant 0 : index
    %264 = vector.load %arg12[%263, %c0_78, %c0_79] : memref<8x8x256xf32, #tpu.memory_space<vmem>>, vector<1x8x256xf32>
    %265 = vector.shape_cast %264 : vector<1x8x256xf32> to vector<8x256xf32>
    %266 = arith.addf %262, %265 : vector<8x256xf32>
    %267 = vector.extract_strided_slice %266 {offsets = [0, 0], sizes = [8, 192], strides = [1, 1]} : vector<8x256xf32> to vector<8x192xf32>
    %268 = arith.negf %267 : vector<8x192xf32>
    %269 = math.exp %268 : vector<8x192xf32>
    %cst_80 = arith.constant 1.000000e+00 : f32
    %270 = vector.broadcast %cst_80 : f32 to vector<8x192xf32>
    %271 = arith.addf %270, %269 : vector<8x192xf32>
    %272 = arith.divf %270, %271 : vector<8x192xf32>
    %273 = vector.extract_strided_slice %266 {offsets = [0, 192], sizes = [8, 64], strides = [1, 1]} : vector<8x256xf32> to vector<8x64xf32>
    %274 = math.tanh %273 : vector<8x64xf32>
    %275 = vector.extract_strided_slice %272 {offsets = [0, 64], sizes = [8, 64], strides = [1, 1]} : vector<8x192xf32> to vector<8x64xf32>
    %276 = arith.mulf %275, %246 : vector<8x64xf32>
    %277 = vector.extract_strided_slice %272 {offsets = [0, 0], sizes = [8, 64], strides = [1, 1]} : vector<8x192xf32> to vector<8x64xf32>
    %278 = arith.mulf %277, %274 : vector<8x64xf32>
    %279 = arith.addf %276, %278 : vector<8x64xf32>
    %280 = vector.extract_strided_slice %272 {offsets = [0, 128], sizes = [8, 64], strides = [1, 1]} : vector<8x192xf32> to vector<8x64xf32>
    %281 = math.tanh %279 : vector<8x64xf32>
    %282 = arith.mulf %280, %281 : vector<8x64xf32>
    %283 = vector.extract_strided_slice %282 {offsets = [0, 0], sizes = [8, 32], strides = [1, 1]} : vector<8x64xf32> to vector<8x32xf32>
    %284 = arith.index_cast %c5_i32 : i32 to index
    %c0_81 = arith.constant 0 : index
    %c0_82 = arith.constant 0 : index
    %285 = vector.load %arg13[%284, %c0_81, %c0_82] : memref<8x8x32xf32, #tpu.memory_space<vmem>>, vector<1x8x32xf32>
    %286 = vector.shape_cast %285 : vector<1x8x32xf32> to vector<8x32xf32>
    %287 = vector.shape_cast %283 : vector<8x32xf32> to vector<1x8x32xf32>
    tpu.vector_store %arg13[%284, %c0_81, %c0_82], %287 {strides = array<i32>} : memref<8x8x32xf32, #tpu.memory_space<vmem>>, vector<1x8x32xf32>,
    %288 = vector.extract_strided_slice %282 {offsets = [0, 32], sizes = [8, 32], strides = [1, 1]} : vector<8x64xf32> to vector<8x32xf32>
    %c7_i32_83 = arith.constant 7 : i32
    %289 = arith.subi %c7_i32_83, %c5_i32 : i32
    %290 = arith.index_cast %289 : i32 to index
    %c0_84 = arith.constant 0 : index
    %c0_85 = arith.constant 0 : index
    %291 = vector.load %arg14[%290, %c0_84, %c0_85] : memref<8x8x32xf32, #tpu.memory_space<vmem>>, vector<1x8x32xf32>
    %292 = vector.shape_cast %291 : vector<1x8x32xf32> to vector<8x32xf32>
    %293 = vector.shape_cast %288 : vector<8x32xf32> to vector<1x8x32xf32>
    tpu.vector_store %arg14[%290, %c0_84, %c0_85], %293 {strides = array<i32>} : memref<8x8x32xf32, #tpu.memory_space<vmem>>, vector<1x8x32xf32>,
    %c6_i32 = arith.constant 6 : i32
    %294 = arith.truncf %282 : vector<8x64xf32> to vector<8x64xbf16>
    %cst_86 = arith.constant dense<0.000000e+00> : vector<8x256xf32>
    %295 = tpu.matmul %294, %94, %cst_86 {dimension_numbers = #tpu.dot_dimension_numbers<[1], [0], [0], [1], [0, 0, 1, 1], [], []>} : vector<8x64xbf16>, vector<64x256xbf16>, vector<8x256xf32> -> vector<8x256xf32>
    %296 = arith.index_cast %c6_i32 : i32 to index
    %c0_87 = arith.constant 0 : index
    %c0_88 = arith.constant 0 : index
    %297 = vector.load %arg12[%296, %c0_87, %c0_88] : memref<8x8x256xf32, #tpu.memory_space<vmem>>, vector<1x8x256xf32>
    %298 = vector.shape_cast %297 : vector<1x8x256xf32> to vector<8x256xf32>
    %299 = arith.addf %295, %298 : vector<8x256xf32>
    %300 = vector.extract_strided_slice %299 {offsets = [0, 0], sizes = [8, 192], strides = [1, 1]} : vector<8x256xf32> to vector<8x192xf32>
    %301 = arith.negf %300 : vector<8x192xf32>
    %302 = math.exp %301 : vector<8x192xf32>
    %cst_89 = arith.constant 1.000000e+00 : f32
    %303 = vector.broadcast %cst_89 : f32 to vector<8x192xf32>
    %304 = arith.addf %303, %302 : vector<8x192xf32>
    %305 = arith.divf %303, %304 : vector<8x192xf32>
    %306 = vector.extract_strided_slice %299 {offsets = [0, 192], sizes = [8, 64], strides = [1, 1]} : vector<8x256xf32> to vector<8x64xf32>
    %307 = math.tanh %306 : vector<8x64xf32>
    %308 = vector.extract_strided_slice %305 {offsets = [0, 64], sizes = [8, 64], strides = [1, 1]} : vector<8x192xf32> to vector<8x64xf32>
    %309 = arith.mulf %308, %279 : vector<8x64xf32>
    %310 = vector.extract_strided_slice %305 {offsets = [0, 0], sizes = [8, 64], strides = [1, 1]} : vector<8x192xf32> to vector<8x64xf32>
    %311 = arith.mulf %310, %307 : vector<8x64xf32>
    %312 = arith.addf %309, %311 : vector<8x64xf32>
    %313 = vector.extract_strided_slice %305 {offsets = [0, 128], sizes = [8, 64], strides = [1, 1]} : vector<8x192xf32> to vector<8x64xf32>
    %314 = math.tanh %312 : vector<8x64xf32>
    %315 = arith.mulf %313, %314 : vector<8x64xf32>
    %316 = vector.extract_strided_slice %315 {offsets = [0, 0], sizes = [8, 32], strides = [1, 1]} : vector<8x64xf32> to vector<8x32xf32>
    %317 = arith.index_cast %c6_i32 : i32 to index
    %c0_90 = arith.constant 0 : index
    %c0_91 = arith.constant 0 : index
    %318 = vector.load %arg13[%317, %c0_90, %c0_91] : memref<8x8x32xf32, #tpu.memory_space<vmem>>, vector<1x8x32xf32>
    %319 = vector.shape_cast %318 : vector<1x8x32xf32> to vector<8x32xf32>
    %320 = vector.shape_cast %316 : vector<8x32xf32> to vector<1x8x32xf32>
    tpu.vector_store %arg13[%317, %c0_90, %c0_91], %320 {strides = array<i32>} : memref<8x8x32xf32, #tpu.memory_space<vmem>>, vector<1x8x32xf32>,
    %321 = vector.extract_strided_slice %315 {offsets = [0, 32], sizes = [8, 32], strides = [1, 1]} : vector<8x64xf32> to vector<8x32xf32>
    %c7_i32_92 = arith.constant 7 : i32
    %322 = arith.subi %c7_i32_92, %c6_i32 : i32
    %323 = arith.index_cast %322 : i32 to index
    %c0_93 = arith.constant 0 : index
    %c0_94 = arith.constant 0 : index
    %324 = vector.load %arg14[%323, %c0_93, %c0_94] : memref<8x8x32xf32, #tpu.memory_space<vmem>>, vector<1x8x32xf32>
    %325 = vector.shape_cast %324 : vector<1x8x32xf32> to vector<8x32xf32>
    %326 = vector.shape_cast %321 : vector<8x32xf32> to vector<1x8x32xf32>
    tpu.vector_store %arg14[%323, %c0_93, %c0_94], %326 {strides = array<i32>} : memref<8x8x32xf32, #tpu.memory_space<vmem>>, vector<1x8x32xf32>,
    %c7_i32_95 = arith.constant 7 : i32
    %327 = arith.truncf %315 : vector<8x64xf32> to vector<8x64xbf16>
    %cst_96 = arith.constant dense<0.000000e+00> : vector<8x256xf32>
    %328 = tpu.matmul %327, %94, %cst_96 {dimension_numbers = #tpu.dot_dimension_numbers<[1], [0], [0], [1], [0, 0, 1, 1], [], []>} : vector<8x64xbf16>, vector<64x256xbf16>, vector<8x256xf32> -> vector<8x256xf32>
    %329 = arith.index_cast %c7_i32_95 : i32 to index
    %c0_97 = arith.constant 0 : index
    %c0_98 = arith.constant 0 : index
    %330 = vector.load %arg12[%329, %c0_97, %c0_98] : memref<8x8x256xf32, #tpu.memory_space<vmem>>, vector<1x8x256xf32>
    %331 = vector.shape_cast %330 : vector<1x8x256xf32> to vector<8x256xf32>
    %332 = arith.addf %328, %331 : vector<8x256xf32>
    %333 = vector.extract_strided_slice %332 {offsets = [0, 0], sizes = [8, 192], strides = [1, 1]} : vector<8x256xf32> to vector<8x192xf32>
    %334 = arith.negf %333 : vector<8x192xf32>
    %335 = math.exp %334 : vector<8x192xf32>
    %cst_99 = arith.constant 1.000000e+00 : f32
    %336 = vector.broadcast %cst_99 : f32 to vector<8x192xf32>
    %337 = arith.addf %336, %335 : vector<8x192xf32>
    %338 = arith.divf %336, %337 : vector<8x192xf32>
    %339 = vector.extract_strided_slice %332 {offsets = [0, 192], sizes = [8, 64], strides = [1, 1]} : vector<8x256xf32> to vector<8x64xf32>
    %340 = math.tanh %339 : vector<8x64xf32>
    %341 = vector.extract_strided_slice %338 {offsets = [0, 64], sizes = [8, 64], strides = [1, 1]} : vector<8x192xf32> to vector<8x64xf32>
    %342 = arith.mulf %341, %312 : vector<8x64xf32>
    %343 = vector.extract_strided_slice %338 {offsets = [0, 0], sizes = [8, 64], strides = [1, 1]} : vector<8x192xf32> to vector<8x64xf32>
    %344 = arith.mulf %343, %340 : vector<8x64xf32>
    %345 = arith.addf %342, %344 : vector<8x64xf32>
    %346 = vector.extract_strided_slice %338 {offsets = [0, 128], sizes = [8, 64], strides = [1, 1]} : vector<8x192xf32> to vector<8x64xf32>
    %347 = math.tanh %345 : vector<8x64xf32>
    %348 = arith.mulf %346, %347 : vector<8x64xf32>
    %349 = vector.extract_strided_slice %348 {offsets = [0, 0], sizes = [8, 32], strides = [1, 1]} : vector<8x64xf32> to vector<8x32xf32>
    %350 = arith.index_cast %c7_i32_95 : i32 to index
    %c0_100 = arith.constant 0 : index
    %c0_101 = arith.constant 0 : index
    %351 = vector.load %arg13[%350, %c0_100, %c0_101] : memref<8x8x32xf32, #tpu.memory_space<vmem>>, vector<1x8x32xf32>
    %352 = vector.shape_cast %351 : vector<1x8x32xf32> to vector<8x32xf32>
    %353 = vector.shape_cast %349 : vector<8x32xf32> to vector<1x8x32xf32>
    tpu.vector_store %arg13[%350, %c0_100, %c0_101], %353 {strides = array<i32>} : memref<8x8x32xf32, #tpu.memory_space<vmem>>, vector<1x8x32xf32>,
    %354 = vector.extract_strided_slice %348 {offsets = [0, 32], sizes = [8, 32], strides = [1, 1]} : vector<8x64xf32> to vector<8x32xf32>
    %c7_i32_102 = arith.constant 7 : i32
    %355 = arith.subi %c7_i32_102, %c7_i32_95 : i32
    %356 = arith.index_cast %355 : i32 to index
    %c0_103 = arith.constant 0 : index
    %c0_104 = arith.constant 0 : index
    %357 = vector.load %arg14[%356, %c0_103, %c0_104] : memref<8x8x32xf32, #tpu.memory_space<vmem>>, vector<1x8x32xf32>
    %358 = vector.shape_cast %357 : vector<1x8x32xf32> to vector<8x32xf32>
    %359 = vector.shape_cast %354 : vector<8x32xf32> to vector<1x8x32xf32>
    tpu.vector_store %arg14[%356, %c0_103, %c0_104], %359 {strides = array<i32>} : memref<8x8x32xf32, #tpu.memory_space<vmem>>, vector<1x8x32xf32>,
    %c8_i32 = arith.constant 8 : i32
    %c0_105 = arith.constant 0 : index
    %c0_106 = arith.constant 0 : index
    %c0_107 = arith.constant 0 : index
    %360 = vector.load %arg13[%c0_105, %c0_106, %c0_107] : memref<8x8x32xf32, #tpu.memory_space<vmem>>, vector<8x8x32xf32>
    %361 = vector.shape_cast %360 : vector<8x8x32xf32> to vector<64x32xf32>
    %362 = arith.truncf %361 : vector<64x32xf32> to vector<64x32xbf16>
    %c0_108 = arith.constant 0 : index
    %c0_109 = arith.constant 0 : index
    %c0_110 = arith.constant 0 : index
    %363 = vector.load %arg14[%c0_108, %c0_109, %c0_110] : memref<8x8x32xf32, #tpu.memory_space<vmem>>, vector<8x8x32xf32>
    %364 = vector.shape_cast %363 : vector<8x8x32xf32> to vector<64x32xf32>
    %365 = arith.truncf %364 : vector<64x32xf32> to vector<64x32xbf16>
    %c0_111 = arith.constant 0 : index
    %c0_112 = arith.constant 0 : index
    %c0_113 = arith.constant 0 : index
    %366 = vector.load %arg3[%c0_111, %c0_112, %c0_113] : memref<3x32x256xbf16, #tpu.memory_space<vmem>>, vector<1x32x256xbf16>
    %367 = vector.shape_cast %366 : vector<1x32x256xbf16> to vector<32x256xbf16>
    %cst_114 = arith.constant dense<0.000000e+00> : vector<64x256xf32>
    %368 = tpu.matmul %362, %367, %cst_114 {dimension_numbers = #tpu.dot_dimension_numbers<[1], [0], [0], [1], [0, 0, 1, 1], [], []>} : vector<64x32xbf16>, vector<32x256xbf16>, vector<64x256xf32> -> vector<64x256xf32>
    %c0_115 = arith.constant 0 : index
    %c0_116 = arith.constant 0 : index
    %c0_117 = arith.constant 0 : index
    %369 = vector.load %arg4[%c0_115, %c0_116, %c0_117] : memref<3x32x256xbf16, #tpu.memory_space<vmem>>, vector<1x32x256xbf16>
    %370 = vector.shape_cast %369 : vector<1x32x256xbf16> to vector<32x256xbf16>
    %cst_118 = arith.constant dense<0.000000e+00> : vector<64x256xf32>
    %371 = tpu.matmul %365, %370, %cst_118 {dimension_numbers = #tpu.dot_dimension_numbers<[1], [0], [0], [1], [0, 0, 1, 1], [], []>} : vector<64x32xbf16>, vector<32x256xbf16>, vector<64x256xf32> -> vector<64x256xf32>
    %372 = arith.addf %368, %371 : vector<64x256xf32>
    %c1_119 = arith.constant 1 : index
    %c0_120 = arith.constant 0 : index
    %c0_121 = arith.constant 0 : index
    %373 = vector.load %arg6[%c1_119, %c0_120, %c0_121] : memref<4x1x256xf32, #tpu.memory_space<vmem>>, vector<1x1x256xf32>
    %374 = vector.shape_cast %373 : vector<1x1x256xf32> to vector<1x256xf32>
    %375 = vector.broadcast %374 : vector<1x256xf32> to vector<64x256xf32>
    %376 = arith.addf %372, %375 : vector<64x256xf32>
    %377 = vector.shape_cast %376 : vector<64x256xf32> to vector<8x8x256xf32>
    %378 = vector.extract_strided_slice %377 {offsets = [0, 0, 0], sizes = [1, 8, 256], strides = [1, 1, 1]} : vector<8x8x256xf32> to vector<1x8x256xf32>
    %379 = vector.shape_cast %378 : vector<1x8x256xf32> to vector<8x256xf32>
    %380 = vector.extract_strided_slice %377 {offsets = [7, 0, 0], sizes = [1, 8, 256], strides = [1, 1, 1]} : vector<8x8x256xf32> to vector<1x8x256xf32>
    %381 = vector.shape_cast %380 : vector<1x8x256xf32> to vector<8x256xf32>
    %382 = arith.select %18, %379, %381 : vector<8x256xi1>, vector<8x256xf32>
    %c0_122 = arith.constant 0 : index
    %c0_123 = arith.constant 0 : index
    %c0_124 = arith.constant 0 : index
    %383 = vector.load %arg12[%c0_122, %c0_123, %c0_124] : memref<8x8x256xf32, #tpu.memory_space<vmem>>, vector<1x8x256xf32>
    %384 = vector.shape_cast %383 : vector<1x8x256xf32> to vector<8x256xf32>
    %385 = vector.shape_cast %382 : vector<8x256xf32> to vector<1x8x256xf32>
    tpu.vector_store %arg12[%c0_122, %c0_123, %c0_124], %385 {strides = array<i32>} : memref<8x8x256xf32, #tpu.memory_space<vmem>>, vector<1x8x256xf32>,
    %386 = vector.extract_strided_slice %377 {offsets = [1, 0, 0], sizes = [1, 8, 256], strides = [1, 1, 1]} : vector<8x8x256xf32> to vector<1x8x256xf32>
    %387 = vector.shape_cast %386 : vector<1x8x256xf32> to vector<8x256xf32>
    %388 = vector.extract_strided_slice %377 {offsets = [6, 0, 0], sizes = [1, 8, 256], strides = [1, 1, 1]} : vector<8x8x256xf32> to vector<1x8x256xf32>
    %389 = vector.shape_cast %388 : vector<1x8x256xf32> to vector<8x256xf32>
    %390 = arith.select %18, %387, %389 : vector<8x256xi1>, vector<8x256xf32>
    %c1_125 = arith.constant 1 : index
    %c0_126 = arith.constant 0 : index
    %c0_127 = arith.constant 0 : index
    %391 = vector.load %arg12[%c1_125, %c0_126, %c0_127] : memref<8x8x256xf32, #tpu.memory_space<vmem>>, vector<1x8x256xf32>
    %392 = vector.shape_cast %391 : vector<1x8x256xf32> to vector<8x256xf32>
    %393 = vector.shape_cast %390 : vector<8x256xf32> to vector<1x8x256xf32>
    tpu.vector_store %arg12[%c1_125, %c0_126, %c0_127], %393 {strides = array<i32>} : memref<8x8x256xf32, #tpu.memory_space<vmem>>, vector<1x8x256xf32>,
    %394 = vector.extract_strided_slice %377 {offsets = [2, 0, 0], sizes = [1, 8, 256], strides = [1, 1, 1]} : vector<8x8x256xf32> to vector<1x8x256xf32>
    %395 = vector.shape_cast %394 : vector<1x8x256xf32> to vector<8x256xf32>
    %396 = vector.extract_strided_slice %377 {offsets = [5, 0, 0], sizes = [1, 8, 256], strides = [1, 1, 1]} : vector<8x8x256xf32> to vector<1x8x256xf32>
    %397 = vector.shape_cast %396 : vector<1x8x256xf32> to vector<8x256xf32>
    %398 = arith.select %18, %395, %397 : vector<8x256xi1>, vector<8x256xf32>
    %c2_128 = arith.constant 2 : index
    %c0_129 = arith.constant 0 : index
    %c0_130 = arith.constant 0 : index
    %399 = vector.load %arg12[%c2_128, %c0_129, %c0_130] : memref<8x8x256xf32, #tpu.memory_space<vmem>>, vector<1x8x256xf32>
    %400 = vector.shape_cast %399 : vector<1x8x256xf32> to vector<8x256xf32>
    %401 = vector.shape_cast %398 : vector<8x256xf32> to vector<1x8x256xf32>
    tpu.vector_store %arg12[%c2_128, %c0_129, %c0_130], %401 {strides = array<i32>} : memref<8x8x256xf32, #tpu.memory_space<vmem>>, vector<1x8x256xf32>,
    %402 = vector.extract_strided_slice %377 {offsets = [3, 0, 0], sizes = [1, 8, 256], strides = [1, 1, 1]} : vector<8x8x256xf32> to vector<1x8x256xf32>
    %403 = vector.shape_cast %402 : vector<1x8x256xf32> to vector<8x256xf32>
    %404 = vector.extract_strided_slice %377 {offsets = [4, 0, 0], sizes = [1, 8, 256], strides = [1, 1, 1]} : vector<8x8x256xf32> to vector<1x8x256xf32>
    %405 = vector.shape_cast %404 : vector<1x8x256xf32> to vector<8x256xf32>
    %406 = arith.select %18, %403, %405 : vector<8x256xi1>, vector<8x256xf32>
    %c3_131 = arith.constant 3 : index
    %c0_132 = arith.constant 0 : index
    %c0_133 = arith.constant 0 : index
    %407 = vector.load %arg12[%c3_131, %c0_132, %c0_133] : memref<8x8x256xf32, #tpu.memory_space<vmem>>, vector<1x8x256xf32>
    %408 = vector.shape_cast %407 : vector<1x8x256xf32> to vector<8x256xf32>
    %409 = vector.shape_cast %406 : vector<8x256xf32> to vector<1x8x256xf32>
    tpu.vector_store %arg12[%c3_131, %c0_132, %c0_133], %409 {strides = array<i32>} : memref<8x8x256xf32, #tpu.memory_space<vmem>>, vector<1x8x256xf32>,
    %410 = vector.extract_strided_slice %377 {offsets = [4, 0, 0], sizes = [1, 8, 256], strides = [1, 1, 1]} : vector<8x8x256xf32> to vector<1x8x256xf32>
    %411 = vector.shape_cast %410 : vector<1x8x256xf32> to vector<8x256xf32>
    %412 = vector.extract_strided_slice %377 {offsets = [3, 0, 0], sizes = [1, 8, 256], strides = [1, 1, 1]} : vector<8x8x256xf32> to vector<1x8x256xf32>
    %413 = vector.shape_cast %412 : vector<1x8x256xf32> to vector<8x256xf32>
    %414 = arith.select %18, %411, %413 : vector<8x256xi1>, vector<8x256xf32>
    %c4_134 = arith.constant 4 : index
    %c0_135 = arith.constant 0 : index
    %c0_136 = arith.constant 0 : index
    %415 = vector.load %arg12[%c4_134, %c0_135, %c0_136] : memref<8x8x256xf32, #tpu.memory_space<vmem>>, vector<1x8x256xf32>
    %416 = vector.shape_cast %415 : vector<1x8x256xf32> to vector<8x256xf32>
    %417 = vector.shape_cast %414 : vector<8x256xf32> to vector<1x8x256xf32>
    tpu.vector_store %arg12[%c4_134, %c0_135, %c0_136], %417 {strides = array<i32>} : memref<8x8x256xf32, #tpu.memory_space<vmem>>, vector<1x8x256xf32>,
    %418 = vector.extract_strided_slice %377 {offsets = [5, 0, 0], sizes = [1, 8, 256], strides = [1, 1, 1]} : vector<8x8x256xf32> to vector<1x8x256xf32>
    %419 = vector.shape_cast %418 : vector<1x8x256xf32> to vector<8x256xf32>
    %420 = vector.extract_strided_slice %377 {offsets = [2, 0, 0], sizes = [1, 8, 256], strides = [1, 1, 1]} : vector<8x8x256xf32> to vector<1x8x256xf32>
    %421 = vector.shape_cast %420 : vector<1x8x256xf32> to vector<8x256xf32>
    %422 = arith.select %18, %419, %421 : vector<8x256xi1>, vector<8x256xf32>
    %c5_137 = arith.constant 5 : index
    %c0_138 = arith.constant 0 : index
    %c0_139 = arith.constant 0 : index
    %423 = vector.load %arg12[%c5_137, %c0_138, %c0_139] : memref<8x8x256xf32, #tpu.memory_space<vmem>>, vector<1x8x256xf32>
    %424 = vector.shape_cast %423 : vector<1x8x256xf32> to vector<8x256xf32>
    %425 = vector.shape_cast %422 : vector<8x256xf32> to vector<1x8x256xf32>
    tpu.vector_store %arg12[%c5_137, %c0_138, %c0_139], %425 {strides = array<i32>} : memref<8x8x256xf32, #tpu.memory_space<vmem>>, vector<1x8x256xf32>,
    %426 = vector.extract_strided_slice %377 {offsets = [6, 0, 0], sizes = [1, 8, 256], strides = [1, 1, 1]} : vector<8x8x256xf32> to vector<1x8x256xf32>
    %427 = vector.shape_cast %426 : vector<1x8x256xf32> to vector<8x256xf32>
    %428 = vector.extract_strided_slice %377 {offsets = [1, 0, 0], sizes = [1, 8, 256], strides = [1, 1, 1]} : vector<8x8x256xf32> to vector<1x8x256xf32>
    %429 = vector.shape_cast %428 : vector<1x8x256xf32> to vector<8x256xf32>
    %430 = arith.select %18, %427, %429 : vector<8x256xi1>, vector<8x256xf32>
    %c6_140 = arith.constant 6 : index
    %c0_141 = arith.constant 0 : index
    %c0_142 = arith.constant 0 : index
    %431 = vector.load %arg12[%c6_140, %c0_141, %c0_142] : memref<8x8x256xf32, #tpu.memory_space<vmem>>, vector<1x8x256xf32>
    %432 = vector.shape_cast %431 : vector<1x8x256xf32> to vector<8x256xf32>
    %433 = vector.shape_cast %430 : vector<8x256xf32> to vector<1x8x256xf32>
    tpu.vector_store %arg12[%c6_140, %c0_141, %c0_142], %433 {strides = array<i32>} : memref<8x8x256xf32, #tpu.memory_space<vmem>>, vector<1x8x256xf32>,
    %434 = vector.extract_strided_slice %377 {offsets = [7, 0, 0], sizes = [1, 8, 256], strides = [1, 1, 1]} : vector<8x8x256xf32> to vector<1x8x256xf32>
    %435 = vector.shape_cast %434 : vector<1x8x256xf32> to vector<8x256xf32>
    %436 = vector.extract_strided_slice %377 {offsets = [0, 0, 0], sizes = [1, 8, 256], strides = [1, 1, 1]} : vector<8x8x256xf32> to vector<1x8x256xf32>
    %437 = vector.shape_cast %436 : vector<1x8x256xf32> to vector<8x256xf32>
    %438 = arith.select %18, %435, %437 : vector<8x256xi1>, vector<8x256xf32>
    %c7_143 = arith.constant 7 : index
    %c0_144 = arith.constant 0 : index
    %c0_145 = arith.constant 0 : index
    %439 = vector.load %arg12[%c7_143, %c0_144, %c0_145] : memref<8x8x256xf32, #tpu.memory_space<vmem>>, vector<1x8x256xf32>
    %440 = vector.shape_cast %439 : vector<1x8x256xf32> to vector<8x256xf32>
    %441 = vector.shape_cast %438 : vector<8x256xf32> to vector<1x8x256xf32>
    tpu.vector_store %arg12[%c7_143, %c0_144, %c0_145], %441 {strides = array<i32>} : memref<8x8x256xf32, #tpu.memory_space<vmem>>, vector<1x8x256xf32>,
    %c1_146 = arith.constant 1 : index
    %c0_147 = arith.constant 0 : index
    %c0_148 = arith.constant 0 : index
    %442 = vector.load %arg5[%c1_146, %c0_147, %c0_148] : memref<4x64x256xbf16, #tpu.memory_space<vmem>>, vector<1x64x256xbf16>
    %443 = vector.shape_cast %442 : vector<1x64x256xbf16> to vector<64x256xbf16>
    %cst_149 = arith.constant 0.000000e+00 : f32
    %444 = vector.broadcast %cst_149 : f32 to vector<8x64xf32>
    %c0_i32_150 = arith.constant 0 : i32
    %445 = arith.truncf %444 : vector<8x64xf32> to vector<8x64xbf16>
    %cst_151 = arith.constant dense<0.000000e+00> : vector<8x256xf32>
    %446 = tpu.matmul %445, %443, %cst_151 {dimension_numbers = #tpu.dot_dimension_numbers<[1], [0], [0], [1], [0, 0, 1, 1], [], []>} : vector<8x64xbf16>, vector<64x256xbf16>, vector<8x256xf32> -> vector<8x256xf32>
    %447 = arith.index_cast %c0_i32_150 : i32 to index
    %c0_152 = arith.constant 0 : index
    %c0_153 = arith.constant 0 : index
    %448 = vector.load %arg12[%447, %c0_152, %c0_153] : memref<8x8x256xf32, #tpu.memory_space<vmem>>, vector<1x8x256xf32>
    %449 = vector.shape_cast %448 : vector<1x8x256xf32> to vector<8x256xf32>
    %450 = arith.addf %446, %449 : vector<8x256xf32>
    %451 = vector.extract_strided_slice %450 {offsets = [0, 0], sizes = [8, 192], strides = [1, 1]} : vector<8x256xf32> to vector<8x192xf32>
    %452 = arith.negf %451 : vector<8x192xf32>
    %453 = math.exp %452 : vector<8x192xf32>
    %cst_154 = arith.constant 1.000000e+00 : f32
    %454 = vector.broadcast %cst_154 : f32 to vector<8x192xf32>
    %455 = arith.addf %454, %453 : vector<8x192xf32>
    %456 = arith.divf %454, %455 : vector<8x192xf32>
    %457 = vector.extract_strided_slice %450 {offsets = [0, 192], sizes = [8, 64], strides = [1, 1]} : vector<8x256xf32> to vector<8x64xf32>
    %458 = math.tanh %457 : vector<8x64xf32>
    %459 = vector.extract_strided_slice %456 {offsets = [0, 64], sizes = [8, 64], strides = [1, 1]} : vector<8x192xf32> to vector<8x64xf32>
    %460 = arith.mulf %459, %444 : vector<8x64xf32>
    %461 = vector.extract_strided_slice %456 {offsets = [0, 0], sizes = [8, 64], strides = [1, 1]} : vector<8x192xf32> to vector<8x64xf32>
    %462 = arith.mulf %461, %458 : vector<8x64xf32>
    %463 = arith.addf %460, %462 : vector<8x64xf32>
    %464 = vector.extract_strided_slice %456 {offsets = [0, 128], sizes = [8, 64], strides = [1, 1]} : vector<8x192xf32> to vector<8x64xf32>
    %465 = math.tanh %463 : vector<8x64xf32>
    %466 = arith.mulf %464, %465 : vector<8x64xf32>
    %467 = vector.extract_strided_slice %466 {offsets = [0, 0], sizes = [8, 32], strides = [1, 1]} : vector<8x64xf32> to vector<8x32xf32>
    %468 = arith.index_cast %c0_i32_150 : i32 to index
    %c0_155 = arith.constant 0 : index
    %c0_156 = arith.constant 0 : index
    %469 = vector.load %arg13[%468, %c0_155, %c0_156] : memref<8x8x32xf32, #tpu.memory_space<vmem>>, vector<1x8x32xf32>
    %470 = vector.shape_cast %469 : vector<1x8x32xf32> to vector<8x32xf32>
    %471 = vector.shape_cast %467 : vector<8x32xf32> to vector<1x8x32xf32>
    tpu.vector_store %arg13[%468, %c0_155, %c0_156], %471 {strides = array<i32>} : memref<8x8x32xf32, #tpu.memory_space<vmem>>, vector<1x8x32xf32>,
    %472 = vector.extract_strided_slice %466 {offsets = [0, 32], sizes = [8, 32], strides = [1, 1]} : vector<8x64xf32> to vector<8x32xf32>
    %c7_i32_157 = arith.constant 7 : i32
    %473 = arith.subi %c7_i32_157, %c0_i32_150 : i32
    %474 = arith.index_cast %473 : i32 to index
    %c0_158 = arith.constant 0 : index
    %c0_159 = arith.constant 0 : index
    %475 = vector.load %arg14[%474, %c0_158, %c0_159] : memref<8x8x32xf32, #tpu.memory_space<vmem>>, vector<1x8x32xf32>
    %476 = vector.shape_cast %475 : vector<1x8x32xf32> to vector<8x32xf32>
    %477 = vector.shape_cast %472 : vector<8x32xf32> to vector<1x8x32xf32>
    tpu.vector_store %arg14[%474, %c0_158, %c0_159], %477 {strides = array<i32>} : memref<8x8x32xf32, #tpu.memory_space<vmem>>, vector<1x8x32xf32>,
    %c1_i32_160 = arith.constant 1 : i32
    %478 = arith.truncf %466 : vector<8x64xf32> to vector<8x64xbf16>
    %cst_161 = arith.constant dense<0.000000e+00> : vector<8x256xf32>
    %479 = tpu.matmul %478, %443, %cst_161 {dimension_numbers = #tpu.dot_dimension_numbers<[1], [0], [0], [1], [0, 0, 1, 1], [], []>} : vector<8x64xbf16>, vector<64x256xbf16>, vector<8x256xf32> -> vector<8x256xf32>
    %480 = arith.index_cast %c1_i32_160 : i32 to index
    %c0_162 = arith.constant 0 : index
    %c0_163 = arith.constant 0 : index
    %481 = vector.load %arg12[%480, %c0_162, %c0_163] : memref<8x8x256xf32, #tpu.memory_space<vmem>>, vector<1x8x256xf32>
    %482 = vector.shape_cast %481 : vector<1x8x256xf32> to vector<8x256xf32>
    %483 = arith.addf %479, %482 : vector<8x256xf32>
    %484 = vector.extract_strided_slice %483 {offsets = [0, 0], sizes = [8, 192], strides = [1, 1]} : vector<8x256xf32> to vector<8x192xf32>
    %485 = arith.negf %484 : vector<8x192xf32>
    %486 = math.exp %485 : vector<8x192xf32>
    %cst_164 = arith.constant 1.000000e+00 : f32
    %487 = vector.broadcast %cst_164 : f32 to vector<8x192xf32>
    %488 = arith.addf %487, %486 : vector<8x192xf32>
    %489 = arith.divf %487, %488 : vector<8x192xf32>
    %490 = vector.extract_strided_slice %483 {offsets = [0, 192], sizes = [8, 64], strides = [1, 1]} : vector<8x256xf32> to vector<8x64xf32>
    %491 = math.tanh %490 : vector<8x64xf32>
    %492 = vector.extract_strided_slice %489 {offsets = [0, 64], sizes = [8, 64], strides = [1, 1]} : vector<8x192xf32> to vector<8x64xf32>
    %493 = arith.mulf %492, %463 : vector<8x64xf32>
    %494 = vector.extract_strided_slice %489 {offsets = [0, 0], sizes = [8, 64], strides = [1, 1]} : vector<8x192xf32> to vector<8x64xf32>
    %495 = arith.mulf %494, %491 : vector<8x64xf32>
    %496 = arith.addf %493, %495 : vector<8x64xf32>
    %497 = vector.extract_strided_slice %489 {offsets = [0, 128], sizes = [8, 64], strides = [1, 1]} : vector<8x192xf32> to vector<8x64xf32>
    %498 = math.tanh %496 : vector<8x64xf32>
    %499 = arith.mulf %497, %498 : vector<8x64xf32>
    %500 = vector.extract_strided_slice %499 {offsets = [0, 0], sizes = [8, 32], strides = [1, 1]} : vector<8x64xf32> to vector<8x32xf32>
    %501 = arith.index_cast %c1_i32_160 : i32 to index
    %c0_165 = arith.constant 0 : index
    %c0_166 = arith.constant 0 : index
    %502 = vector.load %arg13[%501, %c0_165, %c0_166] : memref<8x8x32xf32, #tpu.memory_space<vmem>>, vector<1x8x32xf32>
    %503 = vector.shape_cast %502 : vector<1x8x32xf32> to vector<8x32xf32>
    %504 = vector.shape_cast %500 : vector<8x32xf32> to vector<1x8x32xf32>
    tpu.vector_store %arg13[%501, %c0_165, %c0_166], %504 {strides = array<i32>} : memref<8x8x32xf32, #tpu.memory_space<vmem>>, vector<1x8x32xf32>,
    %505 = vector.extract_strided_slice %499 {offsets = [0, 32], sizes = [8, 32], strides = [1, 1]} : vector<8x64xf32> to vector<8x32xf32>
    %c7_i32_167 = arith.constant 7 : i32
    %506 = arith.subi %c7_i32_167, %c1_i32_160 : i32
    %507 = arith.index_cast %506 : i32 to index
    %c0_168 = arith.constant 0 : index
    %c0_169 = arith.constant 0 : index
    %508 = vector.load %arg14[%507, %c0_168, %c0_169] : memref<8x8x32xf32, #tpu.memory_space<vmem>>, vector<1x8x32xf32>
    %509 = vector.shape_cast %508 : vector<1x8x32xf32> to vector<8x32xf32>
    %510 = vector.shape_cast %505 : vector<8x32xf32> to vector<1x8x32xf32>
    tpu.vector_store %arg14[%507, %c0_168, %c0_169], %510 {strides = array<i32>} : memref<8x8x32xf32, #tpu.memory_space<vmem>>, vector<1x8x32xf32>,
    %c2_i32_170 = arith.constant 2 : i32
    %511 = arith.truncf %499 : vector<8x64xf32> to vector<8x64xbf16>
    %cst_171 = arith.constant dense<0.000000e+00> : vector<8x256xf32>
    %512 = tpu.matmul %511, %443, %cst_171 {dimension_numbers = #tpu.dot_dimension_numbers<[1], [0], [0], [1], [0, 0, 1, 1], [], []>} : vector<8x64xbf16>, vector<64x256xbf16>, vector<8x256xf32> -> vector<8x256xf32>
    %513 = arith.index_cast %c2_i32_170 : i32 to index
    %c0_172 = arith.constant 0 : index
    %c0_173 = arith.constant 0 : index
    %514 = vector.load %arg12[%513, %c0_172, %c0_173] : memref<8x8x256xf32, #tpu.memory_space<vmem>>, vector<1x8x256xf32>
    %515 = vector.shape_cast %514 : vector<1x8x256xf32> to vector<8x256xf32>
    %516 = arith.addf %512, %515 : vector<8x256xf32>
    %517 = vector.extract_strided_slice %516 {offsets = [0, 0], sizes = [8, 192], strides = [1, 1]} : vector<8x256xf32> to vector<8x192xf32>
    %518 = arith.negf %517 : vector<8x192xf32>
    %519 = math.exp %518 : vector<8x192xf32>
    %cst_174 = arith.constant 1.000000e+00 : f32
    %520 = vector.broadcast %cst_174 : f32 to vector<8x192xf32>
    %521 = arith.addf %520, %519 : vector<8x192xf32>
    %522 = arith.divf %520, %521 : vector<8x192xf32>
    %523 = vector.extract_strided_slice %516 {offsets = [0, 192], sizes = [8, 64], strides = [1, 1]} : vector<8x256xf32> to vector<8x64xf32>
    %524 = math.tanh %523 : vector<8x64xf32>
    %525 = vector.extract_strided_slice %522 {offsets = [0, 64], sizes = [8, 64], strides = [1, 1]} : vector<8x192xf32> to vector<8x64xf32>
    %526 = arith.mulf %525, %496 : vector<8x64xf32>
    %527 = vector.extract_strided_slice %522 {offsets = [0, 0], sizes = [8, 64], strides = [1, 1]} : vector<8x192xf32> to vector<8x64xf32>
    %528 = arith.mulf %527, %524 : vector<8x64xf32>
    %529 = arith.addf %526, %528 : vector<8x64xf32>
    %530 = vector.extract_strided_slice %522 {offsets = [0, 128], sizes = [8, 64], strides = [1, 1]} : vector<8x192xf32> to vector<8x64xf32>
    %531 = math.tanh %529 : vector<8x64xf32>
    %532 = arith.mulf %530, %531 : vector<8x64xf32>
    %533 = vector.extract_strided_slice %532 {offsets = [0, 0], sizes = [8, 32], strides = [1, 1]} : vector<8x64xf32> to vector<8x32xf32>
    %534 = arith.index_cast %c2_i32_170 : i32 to index
    %c0_175 = arith.constant 0 : index
    %c0_176 = arith.constant 0 : index
    %535 = vector.load %arg13[%534, %c0_175, %c0_176] : memref<8x8x32xf32, #tpu.memory_space<vmem>>, vector<1x8x32xf32>
    %536 = vector.shape_cast %535 : vector<1x8x32xf32> to vector<8x32xf32>
    %537 = vector.shape_cast %533 : vector<8x32xf32> to vector<1x8x32xf32>
    tpu.vector_store %arg13[%534, %c0_175, %c0_176], %537 {strides = array<i32>} : memref<8x8x32xf32, #tpu.memory_space<vmem>>, vector<1x8x32xf32>,
    %538 = vector.extract_strided_slice %532 {offsets = [0, 32], sizes = [8, 32], strides = [1, 1]} : vector<8x64xf32> to vector<8x32xf32>
    %c7_i32_177 = arith.constant 7 : i32
    %539 = arith.subi %c7_i32_177, %c2_i32_170 : i32
    %540 = arith.index_cast %539 : i32 to index
    %c0_178 = arith.constant 0 : index
    %c0_179 = arith.constant 0 : index
    %541 = vector.load %arg14[%540, %c0_178, %c0_179] : memref<8x8x32xf32, #tpu.memory_space<vmem>>, vector<1x8x32xf32>
    %542 = vector.shape_cast %541 : vector<1x8x32xf32> to vector<8x32xf32>
    %543 = vector.shape_cast %538 : vector<8x32xf32> to vector<1x8x32xf32>
    tpu.vector_store %arg14[%540, %c0_178, %c0_179], %543 {strides = array<i32>} : memref<8x8x32xf32, #tpu.memory_space<vmem>>, vector<1x8x32xf32>,
    %c3_i32_180 = arith.constant 3 : i32
    %544 = arith.truncf %532 : vector<8x64xf32> to vector<8x64xbf16>
    %cst_181 = arith.constant dense<0.000000e+00> : vector<8x256xf32>
    %545 = tpu.matmul %544, %443, %cst_181 {dimension_numbers = #tpu.dot_dimension_numbers<[1], [0], [0], [1], [0, 0, 1, 1], [], []>} : vector<8x64xbf16>, vector<64x256xbf16>, vector<8x256xf32> -> vector<8x256xf32>
    %546 = arith.index_cast %c3_i32_180 : i32 to index
    %c0_182 = arith.constant 0 : index
    %c0_183 = arith.constant 0 : index
    %547 = vector.load %arg12[%546, %c0_182, %c0_183] : memref<8x8x256xf32, #tpu.memory_space<vmem>>, vector<1x8x256xf32>
    %548 = vector.shape_cast %547 : vector<1x8x256xf32> to vector<8x256xf32>
    %549 = arith.addf %545, %548 : vector<8x256xf32>
    %550 = vector.extract_strided_slice %549 {offsets = [0, 0], sizes = [8, 192], strides = [1, 1]} : vector<8x256xf32> to vector<8x192xf32>
    %551 = arith.negf %550 : vector<8x192xf32>
    %552 = math.exp %551 : vector<8x192xf32>
    %cst_184 = arith.constant 1.000000e+00 : f32
    %553 = vector.broadcast %cst_184 : f32 to vector<8x192xf32>
    %554 = arith.addf %553, %552 : vector<8x192xf32>
    %555 = arith.divf %553, %554 : vector<8x192xf32>
    %556 = vector.extract_strided_slice %549 {offsets = [0, 192], sizes = [8, 64], strides = [1, 1]} : vector<8x256xf32> to vector<8x64xf32>
    %557 = math.tanh %556 : vector<8x64xf32>
    %558 = vector.extract_strided_slice %555 {offsets = [0, 64], sizes = [8, 64], strides = [1, 1]} : vector<8x192xf32> to vector<8x64xf32>
    %559 = arith.mulf %558, %529 : vector<8x64xf32>
    %560 = vector.extract_strided_slice %555 {offsets = [0, 0], sizes = [8, 64], strides = [1, 1]} : vector<8x192xf32> to vector<8x64xf32>
    %561 = arith.mulf %560, %557 : vector<8x64xf32>
    %562 = arith.addf %559, %561 : vector<8x64xf32>
    %563 = vector.extract_strided_slice %555 {offsets = [0, 128], sizes = [8, 64], strides = [1, 1]} : vector<8x192xf32> to vector<8x64xf32>
    %564 = math.tanh %562 : vector<8x64xf32>
    %565 = arith.mulf %563, %564 : vector<8x64xf32>
    %566 = vector.extract_strided_slice %565 {offsets = [0, 0], sizes = [8, 32], strides = [1, 1]} : vector<8x64xf32> to vector<8x32xf32>
    %567 = arith.index_cast %c3_i32_180 : i32 to index
    %c0_185 = arith.constant 0 : index
    %c0_186 = arith.constant 0 : index
    %568 = vector.load %arg13[%567, %c0_185, %c0_186] : memref<8x8x32xf32, #tpu.memory_space<vmem>>, vector<1x8x32xf32>
    %569 = vector.shape_cast %568 : vector<1x8x32xf32> to vector<8x32xf32>
    %570 = vector.shape_cast %566 : vector<8x32xf32> to vector<1x8x32xf32>
    tpu.vector_store %arg13[%567, %c0_185, %c0_186], %570 {strides = array<i32>} : memref<8x8x32xf32, #tpu.memory_space<vmem>>, vector<1x8x32xf32>,
    %571 = vector.extract_strided_slice %565 {offsets = [0, 32], sizes = [8, 32], strides = [1, 1]} : vector<8x64xf32> to vector<8x32xf32>
    %c7_i32_187 = arith.constant 7 : i32
    %572 = arith.subi %c7_i32_187, %c3_i32_180 : i32
    %573 = arith.index_cast %572 : i32 to index
    %c0_188 = arith.constant 0 : index
    %c0_189 = arith.constant 0 : index
    %574 = vector.load %arg14[%573, %c0_188, %c0_189] : memref<8x8x32xf32, #tpu.memory_space<vmem>>, vector<1x8x32xf32>
    %575 = vector.shape_cast %574 : vector<1x8x32xf32> to vector<8x32xf32>
    %576 = vector.shape_cast %571 : vector<8x32xf32> to vector<1x8x32xf32>
    tpu.vector_store %arg14[%573, %c0_188, %c0_189], %576 {strides = array<i32>} : memref<8x8x32xf32, #tpu.memory_space<vmem>>, vector<1x8x32xf32>,
    %c4_i32_190 = arith.constant 4 : i32
    %577 = arith.truncf %565 : vector<8x64xf32> to vector<8x64xbf16>
    %cst_191 = arith.constant dense<0.000000e+00> : vector<8x256xf32>
    %578 = tpu.matmul %577, %443, %cst_191 {dimension_numbers = #tpu.dot_dimension_numbers<[1], [0], [0], [1], [0, 0, 1, 1], [], []>} : vector<8x64xbf16>, vector<64x256xbf16>, vector<8x256xf32> -> vector<8x256xf32>
    %579 = arith.index_cast %c4_i32_190 : i32 to index
    %c0_192 = arith.constant 0 : index
    %c0_193 = arith.constant 0 : index
    %580 = vector.load %arg12[%579, %c0_192, %c0_193] : memref<8x8x256xf32, #tpu.memory_space<vmem>>, vector<1x8x256xf32>
    %581 = vector.shape_cast %580 : vector<1x8x256xf32> to vector<8x256xf32>
    %582 = arith.addf %578, %581 : vector<8x256xf32>
    %583 = vector.extract_strided_slice %582 {offsets = [0, 0], sizes = [8, 192], strides = [1, 1]} : vector<8x256xf32> to vector<8x192xf32>
    %584 = arith.negf %583 : vector<8x192xf32>
    %585 = math.exp %584 : vector<8x192xf32>
    %cst_194 = arith.constant 1.000000e+00 : f32
    %586 = vector.broadcast %cst_194 : f32 to vector<8x192xf32>
    %587 = arith.addf %586, %585 : vector<8x192xf32>
    %588 = arith.divf %586, %587 : vector<8x192xf32>
    %589 = vector.extract_strided_slice %582 {offsets = [0, 192], sizes = [8, 64], strides = [1, 1]} : vector<8x256xf32> to vector<8x64xf32>
    %590 = math.tanh %589 : vector<8x64xf32>
    %591 = vector.extract_strided_slice %588 {offsets = [0, 64], sizes = [8, 64], strides = [1, 1]} : vector<8x192xf32> to vector<8x64xf32>
    %592 = arith.mulf %591, %562 : vector<8x64xf32>
    %593 = vector.extract_strided_slice %588 {offsets = [0, 0], sizes = [8, 64], strides = [1, 1]} : vector<8x192xf32> to vector<8x64xf32>
    %594 = arith.mulf %593, %590 : vector<8x64xf32>
    %595 = arith.addf %592, %594 : vector<8x64xf32>
    %596 = vector.extract_strided_slice %588 {offsets = [0, 128], sizes = [8, 64], strides = [1, 1]} : vector<8x192xf32> to vector<8x64xf32>
    %597 = math.tanh %595 : vector<8x64xf32>
    %598 = arith.mulf %596, %597 : vector<8x64xf32>
    %599 = vector.extract_strided_slice %598 {offsets = [0, 0], sizes = [8, 32], strides = [1, 1]} : vector<8x64xf32> to vector<8x32xf32>
    %600 = arith.index_cast %c4_i32_190 : i32 to index
    %c0_195 = arith.constant 0 : index
    %c0_196 = arith.constant 0 : index
    %601 = vector.load %arg13[%600, %c0_195, %c0_196] : memref<8x8x32xf32, #tpu.memory_space<vmem>>, vector<1x8x32xf32>
    %602 = vector.shape_cast %601 : vector<1x8x32xf32> to vector<8x32xf32>
    %603 = vector.shape_cast %599 : vector<8x32xf32> to vector<1x8x32xf32>
    tpu.vector_store %arg13[%600, %c0_195, %c0_196], %603 {strides = array<i32>} : memref<8x8x32xf32, #tpu.memory_space<vmem>>, vector<1x8x32xf32>,
    %604 = vector.extract_strided_slice %598 {offsets = [0, 32], sizes = [8, 32], strides = [1, 1]} : vector<8x64xf32> to vector<8x32xf32>
    %c7_i32_197 = arith.constant 7 : i32
    %605 = arith.subi %c7_i32_197, %c4_i32_190 : i32
    %606 = arith.index_cast %605 : i32 to index
    %c0_198 = arith.constant 0 : index
    %c0_199 = arith.constant 0 : index
    %607 = vector.load %arg14[%606, %c0_198, %c0_199] : memref<8x8x32xf32, #tpu.memory_space<vmem>>, vector<1x8x32xf32>
    %608 = vector.shape_cast %607 : vector<1x8x32xf32> to vector<8x32xf32>
    %609 = vector.shape_cast %604 : vector<8x32xf32> to vector<1x8x32xf32>
    tpu.vector_store %arg14[%606, %c0_198, %c0_199], %609 {strides = array<i32>} : memref<8x8x32xf32, #tpu.memory_space<vmem>>, vector<1x8x32xf32>,
    %c5_i32_200 = arith.constant 5 : i32
    %610 = arith.truncf %598 : vector<8x64xf32> to vector<8x64xbf16>
    %cst_201 = arith.constant dense<0.000000e+00> : vector<8x256xf32>
    %611 = tpu.matmul %610, %443, %cst_201 {dimension_numbers = #tpu.dot_dimension_numbers<[1], [0], [0], [1], [0, 0, 1, 1], [], []>} : vector<8x64xbf16>, vector<64x256xbf16>, vector<8x256xf32> -> vector<8x256xf32>
    %612 = arith.index_cast %c5_i32_200 : i32 to index
    %c0_202 = arith.constant 0 : index
    %c0_203 = arith.constant 0 : index
    %613 = vector.load %arg12[%612, %c0_202, %c0_203] : memref<8x8x256xf32, #tpu.memory_space<vmem>>, vector<1x8x256xf32>
    %614 = vector.shape_cast %613 : vector<1x8x256xf32> to vector<8x256xf32>
    %615 = arith.addf %611, %614 : vector<8x256xf32>
    %616 = vector.extract_strided_slice %615 {offsets = [0, 0], sizes = [8, 192], strides = [1, 1]} : vector<8x256xf32> to vector<8x192xf32>
    %617 = arith.negf %616 : vector<8x192xf32>
    %618 = math.exp %617 : vector<8x192xf32>
    %cst_204 = arith.constant 1.000000e+00 : f32
    %619 = vector.broadcast %cst_204 : f32 to vector<8x192xf32>
    %620 = arith.addf %619, %618 : vector<8x192xf32>
    %621 = arith.divf %619, %620 : vector<8x192xf32>
    %622 = vector.extract_strided_slice %615 {offsets = [0, 192], sizes = [8, 64], strides = [1, 1]} : vector<8x256xf32> to vector<8x64xf32>
    %623 = math.tanh %622 : vector<8x64xf32>
    %624 = vector.extract_strided_slice %621 {offsets = [0, 64], sizes = [8, 64], strides = [1, 1]} : vector<8x192xf32> to vector<8x64xf32>
    %625 = arith.mulf %624, %595 : vector<8x64xf32>
    %626 = vector.extract_strided_slice %621 {offsets = [0, 0], sizes = [8, 64], strides = [1, 1]} : vector<8x192xf32> to vector<8x64xf32>
    %627 = arith.mulf %626, %623 : vector<8x64xf32>
    %628 = arith.addf %625, %627 : vector<8x64xf32>
    %629 = vector.extract_strided_slice %621 {offsets = [0, 128], sizes = [8, 64], strides = [1, 1]} : vector<8x192xf32> to vector<8x64xf32>
    %630 = math.tanh %628 : vector<8x64xf32>
    %631 = arith.mulf %629, %630 : vector<8x64xf32>
    %632 = vector.extract_strided_slice %631 {offsets = [0, 0], sizes = [8, 32], strides = [1, 1]} : vector<8x64xf32> to vector<8x32xf32>
    %633 = arith.index_cast %c5_i32_200 : i32 to index
    %c0_205 = arith.constant 0 : index
    %c0_206 = arith.constant 0 : index
    %634 = vector.load %arg13[%633, %c0_205, %c0_206] : memref<8x8x32xf32, #tpu.memory_space<vmem>>, vector<1x8x32xf32>
    %635 = vector.shape_cast %634 : vector<1x8x32xf32> to vector<8x32xf32>
    %636 = vector.shape_cast %632 : vector<8x32xf32> to vector<1x8x32xf32>
    tpu.vector_store %arg13[%633, %c0_205, %c0_206], %636 {strides = array<i32>} : memref<8x8x32xf32, #tpu.memory_space<vmem>>, vector<1x8x32xf32>,
    %637 = vector.extract_strided_slice %631 {offsets = [0, 32], sizes = [8, 32], strides = [1, 1]} : vector<8x64xf32> to vector<8x32xf32>
    %c7_i32_207 = arith.constant 7 : i32
    %638 = arith.subi %c7_i32_207, %c5_i32_200 : i32
    %639 = arith.index_cast %638 : i32 to index
    %c0_208 = arith.constant 0 : index
    %c0_209 = arith.constant 0 : index
    %640 = vector.load %arg14[%639, %c0_208, %c0_209] : memref<8x8x32xf32, #tpu.memory_space<vmem>>, vector<1x8x32xf32>
    %641 = vector.shape_cast %640 : vector<1x8x32xf32> to vector<8x32xf32>
    %642 = vector.shape_cast %637 : vector<8x32xf32> to vector<1x8x32xf32>
    tpu.vector_store %arg14[%639, %c0_208, %c0_209], %642 {strides = array<i32>} : memref<8x8x32xf32, #tpu.memory_space<vmem>>, vector<1x8x32xf32>,
    %c6_i32_210 = arith.constant 6 : i32
    %643 = arith.truncf %631 : vector<8x64xf32> to vector<8x64xbf16>
    %cst_211 = arith.constant dense<0.000000e+00> : vector<8x256xf32>
    %644 = tpu.matmul %643, %443, %cst_211 {dimension_numbers = #tpu.dot_dimension_numbers<[1], [0], [0], [1], [0, 0, 1, 1], [], []>} : vector<8x64xbf16>, vector<64x256xbf16>, vector<8x256xf32> -> vector<8x256xf32>
    %645 = arith.index_cast %c6_i32_210 : i32 to index
    %c0_212 = arith.constant 0 : index
    %c0_213 = arith.constant 0 : index
    %646 = vector.load %arg12[%645, %c0_212, %c0_213] : memref<8x8x256xf32, #tpu.memory_space<vmem>>, vector<1x8x256xf32>
    %647 = vector.shape_cast %646 : vector<1x8x256xf32> to vector<8x256xf32>
    %648 = arith.addf %644, %647 : vector<8x256xf32>
    %649 = vector.extract_strided_slice %648 {offsets = [0, 0], sizes = [8, 192], strides = [1, 1]} : vector<8x256xf32> to vector<8x192xf32>
    %650 = arith.negf %649 : vector<8x192xf32>
    %651 = math.exp %650 : vector<8x192xf32>
    %cst_214 = arith.constant 1.000000e+00 : f32
    %652 = vector.broadcast %cst_214 : f32 to vector<8x192xf32>
    %653 = arith.addf %652, %651 : vector<8x192xf32>
    %654 = arith.divf %652, %653 : vector<8x192xf32>
    %655 = vector.extract_strided_slice %648 {offsets = [0, 192], sizes = [8, 64], strides = [1, 1]} : vector<8x256xf32> to vector<8x64xf32>
    %656 = math.tanh %655 : vector<8x64xf32>
    %657 = vector.extract_strided_slice %654 {offsets = [0, 64], sizes = [8, 64], strides = [1, 1]} : vector<8x192xf32> to vector<8x64xf32>
    %658 = arith.mulf %657, %628 : vector<8x64xf32>
    %659 = vector.extract_strided_slice %654 {offsets = [0, 0], sizes = [8, 64], strides = [1, 1]} : vector<8x192xf32> to vector<8x64xf32>
    %660 = arith.mulf %659, %656 : vector<8x64xf32>
    %661 = arith.addf %658, %660 : vector<8x64xf32>
    %662 = vector.extract_strided_slice %654 {offsets = [0, 128], sizes = [8, 64], strides = [1, 1]} : vector<8x192xf32> to vector<8x64xf32>
    %663 = math.tanh %661 : vector<8x64xf32>
    %664 = arith.mulf %662, %663 : vector<8x64xf32>
    %665 = vector.extract_strided_slice %664 {offsets = [0, 0], sizes = [8, 32], strides = [1, 1]} : vector<8x64xf32> to vector<8x32xf32>
    %666 = arith.index_cast %c6_i32_210 : i32 to index
    %c0_215 = arith.constant 0 : index
    %c0_216 = arith.constant 0 : index
    %667 = vector.load %arg13[%666, %c0_215, %c0_216] : memref<8x8x32xf32, #tpu.memory_space<vmem>>, vector<1x8x32xf32>
    %668 = vector.shape_cast %667 : vector<1x8x32xf32> to vector<8x32xf32>
    %669 = vector.shape_cast %665 : vector<8x32xf32> to vector<1x8x32xf32>
    tpu.vector_store %arg13[%666, %c0_215, %c0_216], %669 {strides = array<i32>} : memref<8x8x32xf32, #tpu.memory_space<vmem>>, vector<1x8x32xf32>,
    %670 = vector.extract_strided_slice %664 {offsets = [0, 32], sizes = [8, 32], strides = [1, 1]} : vector<8x64xf32> to vector<8x32xf32>
    %c7_i32_217 = arith.constant 7 : i32
    %671 = arith.subi %c7_i32_217, %c6_i32_210 : i32
    %672 = arith.index_cast %671 : i32 to index
    %c0_218 = arith.constant 0 : index
    %c0_219 = arith.constant 0 : index
    %673 = vector.load %arg14[%672, %c0_218, %c0_219] : memref<8x8x32xf32, #tpu.memory_space<vmem>>, vector<1x8x32xf32>
    %674 = vector.shape_cast %673 : vector<1x8x32xf32> to vector<8x32xf32>
    %675 = vector.shape_cast %670 : vector<8x32xf32> to vector<1x8x32xf32>
    tpu.vector_store %arg14[%672, %c0_218, %c0_219], %675 {strides = array<i32>} : memref<8x8x32xf32, #tpu.memory_space<vmem>>, vector<1x8x32xf32>,
    %c7_i32_220 = arith.constant 7 : i32
    %676 = arith.truncf %664 : vector<8x64xf32> to vector<8x64xbf16>
    %cst_221 = arith.constant dense<0.000000e+00> : vector<8x256xf32>
    %677 = tpu.matmul %676, %443, %cst_221 {dimension_numbers = #tpu.dot_dimension_numbers<[1], [0], [0], [1], [0, 0, 1, 1], [], []>} : vector<8x64xbf16>, vector<64x256xbf16>, vector<8x256xf32> -> vector<8x256xf32>
    %678 = arith.index_cast %c7_i32_220 : i32 to index
    %c0_222 = arith.constant 0 : index
    %c0_223 = arith.constant 0 : index
    %679 = vector.load %arg12[%678, %c0_222, %c0_223] : memref<8x8x256xf32, #tpu.memory_space<vmem>>, vector<1x8x256xf32>
    %680 = vector.shape_cast %679 : vector<1x8x256xf32> to vector<8x256xf32>
    %681 = arith.addf %677, %680 : vector<8x256xf32>
    %682 = vector.extract_strided_slice %681 {offsets = [0, 0], sizes = [8, 192], strides = [1, 1]} : vector<8x256xf32> to vector<8x192xf32>
    %683 = arith.negf %682 : vector<8x192xf32>
    %684 = math.exp %683 : vector<8x192xf32>
    %cst_224 = arith.constant 1.000000e+00 : f32
    %685 = vector.broadcast %cst_224 : f32 to vector<8x192xf32>
    %686 = arith.addf %685, %684 : vector<8x192xf32>
    %687 = arith.divf %685, %686 : vector<8x192xf32>
    %688 = vector.extract_strided_slice %681 {offsets = [0, 192], sizes = [8, 64], strides = [1, 1]} : vector<8x256xf32> to vector<8x64xf32>
    %689 = math.tanh %688 : vector<8x64xf32>
    %690 = vector.extract_strided_slice %687 {offsets = [0, 64], sizes = [8, 64], strides = [1, 1]} : vector<8x192xf32> to vector<8x64xf32>
    %691 = arith.mulf %690, %661 : vector<8x64xf32>
    %692 = vector.extract_strided_slice %687 {offsets = [0, 0], sizes = [8, 64], strides = [1, 1]} : vector<8x192xf32> to vector<8x64xf32>
    %693 = arith.mulf %692, %689 : vector<8x64xf32>
    %694 = arith.addf %691, %693 : vector<8x64xf32>
    %695 = vector.extract_strided_slice %687 {offsets = [0, 128], sizes = [8, 64], strides = [1, 1]} : vector<8x192xf32> to vector<8x64xf32>
    %696 = math.tanh %694 : vector<8x64xf32>
    %697 = arith.mulf %695, %696 : vector<8x64xf32>
    %698 = vector.extract_strided_slice %697 {offsets = [0, 0], sizes = [8, 32], strides = [1, 1]} : vector<8x64xf32> to vector<8x32xf32>
    %699 = arith.index_cast %c7_i32_220 : i32 to index
    %c0_225 = arith.constant 0 : index
    %c0_226 = arith.constant 0 : index
    %700 = vector.load %arg13[%699, %c0_225, %c0_226] : memref<8x8x32xf32, #tpu.memory_space<vmem>>, vector<1x8x32xf32>
    %701 = vector.shape_cast %700 : vector<1x8x32xf32> to vector<8x32xf32>
    %702 = vector.shape_cast %698 : vector<8x32xf32> to vector<1x8x32xf32>
    tpu.vector_store %arg13[%699, %c0_225, %c0_226], %702 {strides = array<i32>} : memref<8x8x32xf32, #tpu.memory_space<vmem>>, vector<1x8x32xf32>,
    %703 = vector.extract_strided_slice %697 {offsets = [0, 32], sizes = [8, 32], strides = [1, 1]} : vector<8x64xf32> to vector<8x32xf32>
    %c7_i32_227 = arith.constant 7 : i32
    %704 = arith.subi %c7_i32_227, %c7_i32_220 : i32
    %705 = arith.index_cast %704 : i32 to index
    %c0_228 = arith.constant 0 : index
    %c0_229 = arith.constant 0 : index
    %706 = vector.load %arg14[%705, %c0_228, %c0_229] : memref<8x8x32xf32, #tpu.memory_space<vmem>>, vector<1x8x32xf32>
    %707 = vector.shape_cast %706 : vector<1x8x32xf32> to vector<8x32xf32>
    %708 = vector.shape_cast %703 : vector<8x32xf32> to vector<1x8x32xf32>
    tpu.vector_store %arg14[%705, %c0_228, %c0_229], %708 {strides = array<i32>} : memref<8x8x32xf32, #tpu.memory_space<vmem>>, vector<1x8x32xf32>,
    %c8_i32_230 = arith.constant 8 : i32
    %c0_231 = arith.constant 0 : index
    %c0_232 = arith.constant 0 : index
    %c0_233 = arith.constant 0 : index
    %709 = vector.load %arg13[%c0_231, %c0_232, %c0_233] : memref<8x8x32xf32, #tpu.memory_space<vmem>>, vector<8x8x32xf32>
    %710 = vector.shape_cast %709 : vector<8x8x32xf32> to vector<64x32xf32>
    %711 = arith.truncf %710 : vector<64x32xf32> to vector<64x32xbf16>
    %c0_234 = arith.constant 0 : index
    %c0_235 = arith.constant 0 : index
    %c0_236 = arith.constant 0 : index
    %712 = vector.load %arg14[%c0_234, %c0_235, %c0_236] : memref<8x8x32xf32, #tpu.memory_space<vmem>>, vector<8x8x32xf32>
    %713 = vector.shape_cast %712 : vector<8x8x32xf32> to vector<64x32xf32>
    %714 = arith.truncf %713 : vector<64x32xf32> to vector<64x32xbf16>
    %c1_237 = arith.constant 1 : index
    %c0_238 = arith.constant 0 : index
    %c0_239 = arith.constant 0 : index
    %715 = vector.load %arg3[%c1_237, %c0_238, %c0_239] : memref<3x32x256xbf16, #tpu.memory_space<vmem>>, vector<1x32x256xbf16>
    %716 = vector.shape_cast %715 : vector<1x32x256xbf16> to vector<32x256xbf16>
    %cst_240 = arith.constant dense<0.000000e+00> : vector<64x256xf32>
    %717 = tpu.matmul %711, %716, %cst_240 {dimension_numbers = #tpu.dot_dimension_numbers<[1], [0], [0], [1], [0, 0, 1, 1], [], []>} : vector<64x32xbf16>, vector<32x256xbf16>, vector<64x256xf32> -> vector<64x256xf32>
    %c1_241 = arith.constant 1 : index
    %c0_242 = arith.constant 0 : index
    %c0_243 = arith.constant 0 : index
    %718 = vector.load %arg4[%c1_241, %c0_242, %c0_243] : memref<3x32x256xbf16, #tpu.memory_space<vmem>>, vector<1x32x256xbf16>
    %719 = vector.shape_cast %718 : vector<1x32x256xbf16> to vector<32x256xbf16>
    %cst_244 = arith.constant dense<0.000000e+00> : vector<64x256xf32>
    %720 = tpu.matmul %714, %719, %cst_244 {dimension_numbers = #tpu.dot_dimension_numbers<[1], [0], [0], [1], [0, 0, 1, 1], [], []>} : vector<64x32xbf16>, vector<32x256xbf16>, vector<64x256xf32> -> vector<64x256xf32>
    %721 = arith.addf %717, %720 : vector<64x256xf32>
    %c2_245 = arith.constant 2 : index
    %c0_246 = arith.constant 0 : index
    %c0_247 = arith.constant 0 : index
    %722 = vector.load %arg6[%c2_245, %c0_246, %c0_247] : memref<4x1x256xf32, #tpu.memory_space<vmem>>, vector<1x1x256xf32>
    %723 = vector.shape_cast %722 : vector<1x1x256xf32> to vector<1x256xf32>
    %724 = vector.broadcast %723 : vector<1x256xf32> to vector<64x256xf32>
    %725 = arith.addf %721, %724 : vector<64x256xf32>
    %726 = vector.shape_cast %725 : vector<64x256xf32> to vector<8x8x256xf32>
    %727 = vector.extract_strided_slice %726 {offsets = [0, 0, 0], sizes = [1, 8, 256], strides = [1, 1, 1]} : vector<8x8x256xf32> to vector<1x8x256xf32>
    %728 = vector.shape_cast %727 : vector<1x8x256xf32> to vector<8x256xf32>
    %729 = vector.extract_strided_slice %726 {offsets = [7, 0, 0], sizes = [1, 8, 256], strides = [1, 1, 1]} : vector<8x8x256xf32> to vector<1x8x256xf32>
    %730 = vector.shape_cast %729 : vector<1x8x256xf32> to vector<8x256xf32>
    %731 = arith.select %18, %728, %730 : vector<8x256xi1>, vector<8x256xf32>
    %c0_248 = arith.constant 0 : index
    %c0_249 = arith.constant 0 : index
    %c0_250 = arith.constant 0 : index
    %732 = vector.load %arg12[%c0_248, %c0_249, %c0_250] : memref<8x8x256xf32, #tpu.memory_space<vmem>>, vector<1x8x256xf32>
    %733 = vector.shape_cast %732 : vector<1x8x256xf32> to vector<8x256xf32>
    %734 = vector.shape_cast %731 : vector<8x256xf32> to vector<1x8x256xf32>
    tpu.vector_store %arg12[%c0_248, %c0_249, %c0_250], %734 {strides = array<i32>} : memref<8x8x256xf32, #tpu.memory_space<vmem>>, vector<1x8x256xf32>,
    %735 = vector.extract_strided_slice %726 {offsets = [1, 0, 0], sizes = [1, 8, 256], strides = [1, 1, 1]} : vector<8x8x256xf32> to vector<1x8x256xf32>
    %736 = vector.shape_cast %735 : vector<1x8x256xf32> to vector<8x256xf32>
    %737 = vector.extract_strided_slice %726 {offsets = [6, 0, 0], sizes = [1, 8, 256], strides = [1, 1, 1]} : vector<8x8x256xf32> to vector<1x8x256xf32>
    %738 = vector.shape_cast %737 : vector<1x8x256xf32> to vector<8x256xf32>
    %739 = arith.select %18, %736, %738 : vector<8x256xi1>, vector<8x256xf32>
    %c1_251 = arith.constant 1 : index
    %c0_252 = arith.constant 0 : index
    %c0_253 = arith.constant 0 : index
    %740 = vector.load %arg12[%c1_251, %c0_252, %c0_253] : memref<8x8x256xf32, #tpu.memory_space<vmem>>, vector<1x8x256xf32>
    %741 = vector.shape_cast %740 : vector<1x8x256xf32> to vector<8x256xf32>
    %742 = vector.shape_cast %739 : vector<8x256xf32> to vector<1x8x256xf32>
    tpu.vector_store %arg12[%c1_251, %c0_252, %c0_253], %742 {strides = array<i32>} : memref<8x8x256xf32, #tpu.memory_space<vmem>>, vector<1x8x256xf32>,
    %743 = vector.extract_strided_slice %726 {offsets = [2, 0, 0], sizes = [1, 8, 256], strides = [1, 1, 1]} : vector<8x8x256xf32> to vector<1x8x256xf32>
    %744 = vector.shape_cast %743 : vector<1x8x256xf32> to vector<8x256xf32>
    %745 = vector.extract_strided_slice %726 {offsets = [5, 0, 0], sizes = [1, 8, 256], strides = [1, 1, 1]} : vector<8x8x256xf32> to vector<1x8x256xf32>
    %746 = vector.shape_cast %745 : vector<1x8x256xf32> to vector<8x256xf32>
    %747 = arith.select %18, %744, %746 : vector<8x256xi1>, vector<8x256xf32>
    %c2_254 = arith.constant 2 : index
    %c0_255 = arith.constant 0 : index
    %c0_256 = arith.constant 0 : index
    %748 = vector.load %arg12[%c2_254, %c0_255, %c0_256] : memref<8x8x256xf32, #tpu.memory_space<vmem>>, vector<1x8x256xf32>
    %749 = vector.shape_cast %748 : vector<1x8x256xf32> to vector<8x256xf32>
    %750 = vector.shape_cast %747 : vector<8x256xf32> to vector<1x8x256xf32>
    tpu.vector_store %arg12[%c2_254, %c0_255, %c0_256], %750 {strides = array<i32>} : memref<8x8x256xf32, #tpu.memory_space<vmem>>, vector<1x8x256xf32>,
    %751 = vector.extract_strided_slice %726 {offsets = [3, 0, 0], sizes = [1, 8, 256], strides = [1, 1, 1]} : vector<8x8x256xf32> to vector<1x8x256xf32>
    %752 = vector.shape_cast %751 : vector<1x8x256xf32> to vector<8x256xf32>
    %753 = vector.extract_strided_slice %726 {offsets = [4, 0, 0], sizes = [1, 8, 256], strides = [1, 1, 1]} : vector<8x8x256xf32> to vector<1x8x256xf32>
    %754 = vector.shape_cast %753 : vector<1x8x256xf32> to vector<8x256xf32>
    %755 = arith.select %18, %752, %754 : vector<8x256xi1>, vector<8x256xf32>
    %c3_257 = arith.constant 3 : index
    %c0_258 = arith.constant 0 : index
    %c0_259 = arith.constant 0 : index
    %756 = vector.load %arg12[%c3_257, %c0_258, %c0_259] : memref<8x8x256xf32, #tpu.memory_space<vmem>>, vector<1x8x256xf32>
    %757 = vector.shape_cast %756 : vector<1x8x256xf32> to vector<8x256xf32>
    %758 = vector.shape_cast %755 : vector<8x256xf32> to vector<1x8x256xf32>
    tpu.vector_store %arg12[%c3_257, %c0_258, %c0_259], %758 {strides = array<i32>} : memref<8x8x256xf32, #tpu.memory_space<vmem>>, vector<1x8x256xf32>,
    %759 = vector.extract_strided_slice %726 {offsets = [4, 0, 0], sizes = [1, 8, 256], strides = [1, 1, 1]} : vector<8x8x256xf32> to vector<1x8x256xf32>
    %760 = vector.shape_cast %759 : vector<1x8x256xf32> to vector<8x256xf32>
    %761 = vector.extract_strided_slice %726 {offsets = [3, 0, 0], sizes = [1, 8, 256], strides = [1, 1, 1]} : vector<8x8x256xf32> to vector<1x8x256xf32>
    %762 = vector.shape_cast %761 : vector<1x8x256xf32> to vector<8x256xf32>
    %763 = arith.select %18, %760, %762 : vector<8x256xi1>, vector<8x256xf32>
    %c4_260 = arith.constant 4 : index
    %c0_261 = arith.constant 0 : index
    %c0_262 = arith.constant 0 : index
    %764 = vector.load %arg12[%c4_260, %c0_261, %c0_262] : memref<8x8x256xf32, #tpu.memory_space<vmem>>, vector<1x8x256xf32>
    %765 = vector.shape_cast %764 : vector<1x8x256xf32> to vector<8x256xf32>
    %766 = vector.shape_cast %763 : vector<8x256xf32> to vector<1x8x256xf32>
    tpu.vector_store %arg12[%c4_260, %c0_261, %c0_262], %766 {strides = array<i32>} : memref<8x8x256xf32, #tpu.memory_space<vmem>>, vector<1x8x256xf32>,
    %767 = vector.extract_strided_slice %726 {offsets = [5, 0, 0], sizes = [1, 8, 256], strides = [1, 1, 1]} : vector<8x8x256xf32> to vector<1x8x256xf32>
    %768 = vector.shape_cast %767 : vector<1x8x256xf32> to vector<8x256xf32>
    %769 = vector.extract_strided_slice %726 {offsets = [2, 0, 0], sizes = [1, 8, 256], strides = [1, 1, 1]} : vector<8x8x256xf32> to vector<1x8x256xf32>
    %770 = vector.shape_cast %769 : vector<1x8x256xf32> to vector<8x256xf32>
    %771 = arith.select %18, %768, %770 : vector<8x256xi1>, vector<8x256xf32>
    %c5_263 = arith.constant 5 : index
    %c0_264 = arith.constant 0 : index
    %c0_265 = arith.constant 0 : index
    %772 = vector.load %arg12[%c5_263, %c0_264, %c0_265] : memref<8x8x256xf32, #tpu.memory_space<vmem>>, vector<1x8x256xf32>
    %773 = vector.shape_cast %772 : vector<1x8x256xf32> to vector<8x256xf32>
    %774 = vector.shape_cast %771 : vector<8x256xf32> to vector<1x8x256xf32>
    tpu.vector_store %arg12[%c5_263, %c0_264, %c0_265], %774 {strides = array<i32>} : memref<8x8x256xf32, #tpu.memory_space<vmem>>, vector<1x8x256xf32>,
    %775 = vector.extract_strided_slice %726 {offsets = [6, 0, 0], sizes = [1, 8, 256], strides = [1, 1, 1]} : vector<8x8x256xf32> to vector<1x8x256xf32>
    %776 = vector.shape_cast %775 : vector<1x8x256xf32> to vector<8x256xf32>
    %777 = vector.extract_strided_slice %726 {offsets = [1, 0, 0], sizes = [1, 8, 256], strides = [1, 1, 1]} : vector<8x8x256xf32> to vector<1x8x256xf32>
    %778 = vector.shape_cast %777 : vector<1x8x256xf32> to vector<8x256xf32>
    %779 = arith.select %18, %776, %778 : vector<8x256xi1>, vector<8x256xf32>
    %c6_266 = arith.constant 6 : index
    %c0_267 = arith.constant 0 : index
    %c0_268 = arith.constant 0 : index
    %780 = vector.load %arg12[%c6_266, %c0_267, %c0_268] : memref<8x8x256xf32, #tpu.memory_space<vmem>>, vector<1x8x256xf32>
    %781 = vector.shape_cast %780 : vector<1x8x256xf32> to vector<8x256xf32>
    %782 = vector.shape_cast %779 : vector<8x256xf32> to vector<1x8x256xf32>
    tpu.vector_store %arg12[%c6_266, %c0_267, %c0_268], %782 {strides = array<i32>} : memref<8x8x256xf32, #tpu.memory_space<vmem>>, vector<1x8x256xf32>,
    %783 = vector.extract_strided_slice %726 {offsets = [7, 0, 0], sizes = [1, 8, 256], strides = [1, 1, 1]} : vector<8x8x256xf32> to vector<1x8x256xf32>
    %784 = vector.shape_cast %783 : vector<1x8x256xf32> to vector<8x256xf32>
    %785 = vector.extract_strided_slice %726 {offsets = [0, 0, 0], sizes = [1, 8, 256], strides = [1, 1, 1]} : vector<8x8x256xf32> to vector<1x8x256xf32>
    %786 = vector.shape_cast %785 : vector<1x8x256xf32> to vector<8x256xf32>
    %787 = arith.select %18, %784, %786 : vector<8x256xi1>, vector<8x256xf32>
    %c7_269 = arith.constant 7 : index
    %c0_270 = arith.constant 0 : index
    %c0_271 = arith.constant 0 : index
    %788 = vector.load %arg12[%c7_269, %c0_270, %c0_271] : memref<8x8x256xf32, #tpu.memory_space<vmem>>, vector<1x8x256xf32>
    %789 = vector.shape_cast %788 : vector<1x8x256xf32> to vector<8x256xf32>
    %790 = vector.shape_cast %787 : vector<8x256xf32> to vector<1x8x256xf32>
    tpu.vector_store %arg12[%c7_269, %c0_270, %c0_271], %790 {strides = array<i32>} : memref<8x8x256xf32, #tpu.memory_space<vmem>>, vector<1x8x256xf32>,
    %c2_272 = arith.constant 2 : index
    %c0_273 = arith.constant 0 : index
    %c0_274 = arith.constant 0 : index
    %791 = vector.load %arg5[%c2_272, %c0_273, %c0_274] : memref<4x64x256xbf16, #tpu.memory_space<vmem>>, vector<1x64x256xbf16>
    %792 = vector.shape_cast %791 : vector<1x64x256xbf16> to vector<64x256xbf16>
    %cst_275 = arith.constant 0.000000e+00 : f32
    %793 = vector.broadcast %cst_275 : f32 to vector<8x64xf32>
    %c0_i32_276 = arith.constant 0 : i32
    %794 = arith.truncf %793 : vector<8x64xf32> to vector<8x64xbf16>
    %cst_277 = arith.constant dense<0.000000e+00> : vector<8x256xf32>
    %795 = tpu.matmul %794, %792, %cst_277 {dimension_numbers = #tpu.dot_dimension_numbers<[1], [0], [0], [1], [0, 0, 1, 1], [], []>} : vector<8x64xbf16>, vector<64x256xbf16>, vector<8x256xf32> -> vector<8x256xf32>
    %796 = arith.index_cast %c0_i32_276 : i32 to index
    %c0_278 = arith.constant 0 : index
    %c0_279 = arith.constant 0 : index
    %797 = vector.load %arg12[%796, %c0_278, %c0_279] : memref<8x8x256xf32, #tpu.memory_space<vmem>>, vector<1x8x256xf32>
    %798 = vector.shape_cast %797 : vector<1x8x256xf32> to vector<8x256xf32>
    %799 = arith.addf %795, %798 : vector<8x256xf32>
    %800 = vector.extract_strided_slice %799 {offsets = [0, 0], sizes = [8, 192], strides = [1, 1]} : vector<8x256xf32> to vector<8x192xf32>
    %801 = arith.negf %800 : vector<8x192xf32>
    %802 = math.exp %801 : vector<8x192xf32>
    %cst_280 = arith.constant 1.000000e+00 : f32
    %803 = vector.broadcast %cst_280 : f32 to vector<8x192xf32>
    %804 = arith.addf %803, %802 : vector<8x192xf32>
    %805 = arith.divf %803, %804 : vector<8x192xf32>
    %806 = vector.extract_strided_slice %799 {offsets = [0, 192], sizes = [8, 64], strides = [1, 1]} : vector<8x256xf32> to vector<8x64xf32>
    %807 = math.tanh %806 : vector<8x64xf32>
    %808 = vector.extract_strided_slice %805 {offsets = [0, 64], sizes = [8, 64], strides = [1, 1]} : vector<8x192xf32> to vector<8x64xf32>
    %809 = arith.mulf %808, %793 : vector<8x64xf32>
    %810 = vector.extract_strided_slice %805 {offsets = [0, 0], sizes = [8, 64], strides = [1, 1]} : vector<8x192xf32> to vector<8x64xf32>
    %811 = arith.mulf %810, %807 : vector<8x64xf32>
    %812 = arith.addf %809, %811 : vector<8x64xf32>
    %813 = vector.extract_strided_slice %805 {offsets = [0, 128], sizes = [8, 64], strides = [1, 1]} : vector<8x192xf32> to vector<8x64xf32>
    %814 = math.tanh %812 : vector<8x64xf32>
    %815 = arith.mulf %813, %814 : vector<8x64xf32>
    %816 = vector.extract_strided_slice %815 {offsets = [0, 0], sizes = [8, 32], strides = [1, 1]} : vector<8x64xf32> to vector<8x32xf32>
    %817 = arith.index_cast %c0_i32_276 : i32 to index
    %c0_281 = arith.constant 0 : index
    %c0_282 = arith.constant 0 : index
    %818 = vector.load %arg13[%817, %c0_281, %c0_282] : memref<8x8x32xf32, #tpu.memory_space<vmem>>, vector<1x8x32xf32>
    %819 = vector.shape_cast %818 : vector<1x8x32xf32> to vector<8x32xf32>
    %820 = vector.shape_cast %816 : vector<8x32xf32> to vector<1x8x32xf32>
    tpu.vector_store %arg13[%817, %c0_281, %c0_282], %820 {strides = array<i32>} : memref<8x8x32xf32, #tpu.memory_space<vmem>>, vector<1x8x32xf32>,
    %821 = vector.extract_strided_slice %815 {offsets = [0, 32], sizes = [8, 32], strides = [1, 1]} : vector<8x64xf32> to vector<8x32xf32>
    %c7_i32_283 = arith.constant 7 : i32
    %822 = arith.subi %c7_i32_283, %c0_i32_276 : i32
    %823 = arith.index_cast %822 : i32 to index
    %c0_284 = arith.constant 0 : index
    %c0_285 = arith.constant 0 : index
    %824 = vector.load %arg14[%823, %c0_284, %c0_285] : memref<8x8x32xf32, #tpu.memory_space<vmem>>, vector<1x8x32xf32>
    %825 = vector.shape_cast %824 : vector<1x8x32xf32> to vector<8x32xf32>
    %826 = vector.shape_cast %821 : vector<8x32xf32> to vector<1x8x32xf32>
    tpu.vector_store %arg14[%823, %c0_284, %c0_285], %826 {strides = array<i32>} : memref<8x8x32xf32, #tpu.memory_space<vmem>>, vector<1x8x32xf32>,
    %c1_i32_286 = arith.constant 1 : i32
    %827 = arith.truncf %815 : vector<8x64xf32> to vector<8x64xbf16>
    %cst_287 = arith.constant dense<0.000000e+00> : vector<8x256xf32>
    %828 = tpu.matmul %827, %792, %cst_287 {dimension_numbers = #tpu.dot_dimension_numbers<[1], [0], [0], [1], [0, 0, 1, 1], [], []>} : vector<8x64xbf16>, vector<64x256xbf16>, vector<8x256xf32> -> vector<8x256xf32>
    %829 = arith.index_cast %c1_i32_286 : i32 to index
    %c0_288 = arith.constant 0 : index
    %c0_289 = arith.constant 0 : index
    %830 = vector.load %arg12[%829, %c0_288, %c0_289] : memref<8x8x256xf32, #tpu.memory_space<vmem>>, vector<1x8x256xf32>
    %831 = vector.shape_cast %830 : vector<1x8x256xf32> to vector<8x256xf32>
    %832 = arith.addf %828, %831 : vector<8x256xf32>
    %833 = vector.extract_strided_slice %832 {offsets = [0, 0], sizes = [8, 192], strides = [1, 1]} : vector<8x256xf32> to vector<8x192xf32>
    %834 = arith.negf %833 : vector<8x192xf32>
    %835 = math.exp %834 : vector<8x192xf32>
    %cst_290 = arith.constant 1.000000e+00 : f32
    %836 = vector.broadcast %cst_290 : f32 to vector<8x192xf32>
    %837 = arith.addf %836, %835 : vector<8x192xf32>
    %838 = arith.divf %836, %837 : vector<8x192xf32>
    %839 = vector.extract_strided_slice %832 {offsets = [0, 192], sizes = [8, 64], strides = [1, 1]} : vector<8x256xf32> to vector<8x64xf32>
    %840 = math.tanh %839 : vector<8x64xf32>
    %841 = vector.extract_strided_slice %838 {offsets = [0, 64], sizes = [8, 64], strides = [1, 1]} : vector<8x192xf32> to vector<8x64xf32>
    %842 = arith.mulf %841, %812 : vector<8x64xf32>
    %843 = vector.extract_strided_slice %838 {offsets = [0, 0], sizes = [8, 64], strides = [1, 1]} : vector<8x192xf32> to vector<8x64xf32>
    %844 = arith.mulf %843, %840 : vector<8x64xf32>
    %845 = arith.addf %842, %844 : vector<8x64xf32>
    %846 = vector.extract_strided_slice %838 {offsets = [0, 128], sizes = [8, 64], strides = [1, 1]} : vector<8x192xf32> to vector<8x64xf32>
    %847 = math.tanh %845 : vector<8x64xf32>
    %848 = arith.mulf %846, %847 : vector<8x64xf32>
    %849 = vector.extract_strided_slice %848 {offsets = [0, 0], sizes = [8, 32], strides = [1, 1]} : vector<8x64xf32> to vector<8x32xf32>
    %850 = arith.index_cast %c1_i32_286 : i32 to index
    %c0_291 = arith.constant 0 : index
    %c0_292 = arith.constant 0 : index
    %851 = vector.load %arg13[%850, %c0_291, %c0_292] : memref<8x8x32xf32, #tpu.memory_space<vmem>>, vector<1x8x32xf32>
    %852 = vector.shape_cast %851 : vector<1x8x32xf32> to vector<8x32xf32>
    %853 = vector.shape_cast %849 : vector<8x32xf32> to vector<1x8x32xf32>
    tpu.vector_store %arg13[%850, %c0_291, %c0_292], %853 {strides = array<i32>} : memref<8x8x32xf32, #tpu.memory_space<vmem>>, vector<1x8x32xf32>,
    %854 = vector.extract_strided_slice %848 {offsets = [0, 32], sizes = [8, 32], strides = [1, 1]} : vector<8x64xf32> to vector<8x32xf32>
    %c7_i32_293 = arith.constant 7 : i32
    %855 = arith.subi %c7_i32_293, %c1_i32_286 : i32
    %856 = arith.index_cast %855 : i32 to index
    %c0_294 = arith.constant 0 : index
    %c0_295 = arith.constant 0 : index
    %857 = vector.load %arg14[%856, %c0_294, %c0_295] : memref<8x8x32xf32, #tpu.memory_space<vmem>>, vector<1x8x32xf32>
    %858 = vector.shape_cast %857 : vector<1x8x32xf32> to vector<8x32xf32>
    %859 = vector.shape_cast %854 : vector<8x32xf32> to vector<1x8x32xf32>
    tpu.vector_store %arg14[%856, %c0_294, %c0_295], %859 {strides = array<i32>} : memref<8x8x32xf32, #tpu.memory_space<vmem>>, vector<1x8x32xf32>,
    %c2_i32_296 = arith.constant 2 : i32
    %860 = arith.truncf %848 : vector<8x64xf32> to vector<8x64xbf16>
    %cst_297 = arith.constant dense<0.000000e+00> : vector<8x256xf32>
    %861 = tpu.matmul %860, %792, %cst_297 {dimension_numbers = #tpu.dot_dimension_numbers<[1], [0], [0], [1], [0, 0, 1, 1], [], []>} : vector<8x64xbf16>, vector<64x256xbf16>, vector<8x256xf32> -> vector<8x256xf32>
    %862 = arith.index_cast %c2_i32_296 : i32 to index
    %c0_298 = arith.constant 0 : index
    %c0_299 = arith.constant 0 : index
    %863 = vector.load %arg12[%862, %c0_298, %c0_299] : memref<8x8x256xf32, #tpu.memory_space<vmem>>, vector<1x8x256xf32>
    %864 = vector.shape_cast %863 : vector<1x8x256xf32> to vector<8x256xf32>
    %865 = arith.addf %861, %864 : vector<8x256xf32>
    %866 = vector.extract_strided_slice %865 {offsets = [0, 0], sizes = [8, 192], strides = [1, 1]} : vector<8x256xf32> to vector<8x192xf32>
    %867 = arith.negf %866 : vector<8x192xf32>
    %868 = math.exp %867 : vector<8x192xf32>
    %cst_300 = arith.constant 1.000000e+00 : f32
    %869 = vector.broadcast %cst_300 : f32 to vector<8x192xf32>
    %870 = arith.addf %869, %868 : vector<8x192xf32>
    %871 = arith.divf %869, %870 : vector<8x192xf32>
    %872 = vector.extract_strided_slice %865 {offsets = [0, 192], sizes = [8, 64], strides = [1, 1]} : vector<8x256xf32> to vector<8x64xf32>
    %873 = math.tanh %872 : vector<8x64xf32>
    %874 = vector.extract_strided_slice %871 {offsets = [0, 64], sizes = [8, 64], strides = [1, 1]} : vector<8x192xf32> to vector<8x64xf32>
    %875 = arith.mulf %874, %845 : vector<8x64xf32>
    %876 = vector.extract_strided_slice %871 {offsets = [0, 0], sizes = [8, 64], strides = [1, 1]} : vector<8x192xf32> to vector<8x64xf32>
    %877 = arith.mulf %876, %873 : vector<8x64xf32>
    %878 = arith.addf %875, %877 : vector<8x64xf32>
    %879 = vector.extract_strided_slice %871 {offsets = [0, 128], sizes = [8, 64], strides = [1, 1]} : vector<8x192xf32> to vector<8x64xf32>
    %880 = math.tanh %878 : vector<8x64xf32>
    %881 = arith.mulf %879, %880 : vector<8x64xf32>
    %882 = vector.extract_strided_slice %881 {offsets = [0, 0], sizes = [8, 32], strides = [1, 1]} : vector<8x64xf32> to vector<8x32xf32>
    %883 = arith.index_cast %c2_i32_296 : i32 to index
    %c0_301 = arith.constant 0 : index
    %c0_302 = arith.constant 0 : index
    %884 = vector.load %arg13[%883, %c0_301, %c0_302] : memref<8x8x32xf32, #tpu.memory_space<vmem>>, vector<1x8x32xf32>
    %885 = vector.shape_cast %884 : vector<1x8x32xf32> to vector<8x32xf32>
    %886 = vector.shape_cast %882 : vector<8x32xf32> to vector<1x8x32xf32>
    tpu.vector_store %arg13[%883, %c0_301, %c0_302], %886 {strides = array<i32>} : memref<8x8x32xf32, #tpu.memory_space<vmem>>, vector<1x8x32xf32>,
    %887 = vector.extract_strided_slice %881 {offsets = [0, 32], sizes = [8, 32], strides = [1, 1]} : vector<8x64xf32> to vector<8x32xf32>
    %c7_i32_303 = arith.constant 7 : i32
    %888 = arith.subi %c7_i32_303, %c2_i32_296 : i32
    %889 = arith.index_cast %888 : i32 to index
    %c0_304 = arith.constant 0 : index
    %c0_305 = arith.constant 0 : index
    %890 = vector.load %arg14[%889, %c0_304, %c0_305] : memref<8x8x32xf32, #tpu.memory_space<vmem>>, vector<1x8x32xf32>
    %891 = vector.shape_cast %890 : vector<1x8x32xf32> to vector<8x32xf32>
    %892 = vector.shape_cast %887 : vector<8x32xf32> to vector<1x8x32xf32>
    tpu.vector_store %arg14[%889, %c0_304, %c0_305], %892 {strides = array<i32>} : memref<8x8x32xf32, #tpu.memory_space<vmem>>, vector<1x8x32xf32>,
    %c3_i32_306 = arith.constant 3 : i32
    %893 = arith.truncf %881 : vector<8x64xf32> to vector<8x64xbf16>
    %cst_307 = arith.constant dense<0.000000e+00> : vector<8x256xf32>
    %894 = tpu.matmul %893, %792, %cst_307 {dimension_numbers = #tpu.dot_dimension_numbers<[1], [0], [0], [1], [0, 0, 1, 1], [], []>} : vector<8x64xbf16>, vector<64x256xbf16>, vector<8x256xf32> -> vector<8x256xf32>
    %895 = arith.index_cast %c3_i32_306 : i32 to index
    %c0_308 = arith.constant 0 : index
    %c0_309 = arith.constant 0 : index
    %896 = vector.load %arg12[%895, %c0_308, %c0_309] : memref<8x8x256xf32, #tpu.memory_space<vmem>>, vector<1x8x256xf32>
    %897 = vector.shape_cast %896 : vector<1x8x256xf32> to vector<8x256xf32>
    %898 = arith.addf %894, %897 : vector<8x256xf32>
    %899 = vector.extract_strided_slice %898 {offsets = [0, 0], sizes = [8, 192], strides = [1, 1]} : vector<8x256xf32> to vector<8x192xf32>
    %900 = arith.negf %899 : vector<8x192xf32>
    %901 = math.exp %900 : vector<8x192xf32>
    %cst_310 = arith.constant 1.000000e+00 : f32
    %902 = vector.broadcast %cst_310 : f32 to vector<8x192xf32>
    %903 = arith.addf %902, %901 : vector<8x192xf32>
    %904 = arith.divf %902, %903 : vector<8x192xf32>
    %905 = vector.extract_strided_slice %898 {offsets = [0, 192], sizes = [8, 64], strides = [1, 1]} : vector<8x256xf32> to vector<8x64xf32>
    %906 = math.tanh %905 : vector<8x64xf32>
    %907 = vector.extract_strided_slice %904 {offsets = [0, 64], sizes = [8, 64], strides = [1, 1]} : vector<8x192xf32> to vector<8x64xf32>
    %908 = arith.mulf %907, %878 : vector<8x64xf32>
    %909 = vector.extract_strided_slice %904 {offsets = [0, 0], sizes = [8, 64], strides = [1, 1]} : vector<8x192xf32> to vector<8x64xf32>
    %910 = arith.mulf %909, %906 : vector<8x64xf32>
    %911 = arith.addf %908, %910 : vector<8x64xf32>
    %912 = vector.extract_strided_slice %904 {offsets = [0, 128], sizes = [8, 64], strides = [1, 1]} : vector<8x192xf32> to vector<8x64xf32>
    %913 = math.tanh %911 : vector<8x64xf32>
    %914 = arith.mulf %912, %913 : vector<8x64xf32>
    %915 = vector.extract_strided_slice %914 {offsets = [0, 0], sizes = [8, 32], strides = [1, 1]} : vector<8x64xf32> to vector<8x32xf32>
    %916 = arith.index_cast %c3_i32_306 : i32 to index
    %c0_311 = arith.constant 0 : index
    %c0_312 = arith.constant 0 : index
    %917 = vector.load %arg13[%916, %c0_311, %c0_312] : memref<8x8x32xf32, #tpu.memory_space<vmem>>, vector<1x8x32xf32>
    %918 = vector.shape_cast %917 : vector<1x8x32xf32> to vector<8x32xf32>
    %919 = vector.shape_cast %915 : vector<8x32xf32> to vector<1x8x32xf32>
    tpu.vector_store %arg13[%916, %c0_311, %c0_312], %919 {strides = array<i32>} : memref<8x8x32xf32, #tpu.memory_space<vmem>>, vector<1x8x32xf32>,
    %920 = vector.extract_strided_slice %914 {offsets = [0, 32], sizes = [8, 32], strides = [1, 1]} : vector<8x64xf32> to vector<8x32xf32>
    %c7_i32_313 = arith.constant 7 : i32
    %921 = arith.subi %c7_i32_313, %c3_i32_306 : i32
    %922 = arith.index_cast %921 : i32 to index
    %c0_314 = arith.constant 0 : index
    %c0_315 = arith.constant 0 : index
    %923 = vector.load %arg14[%922, %c0_314, %c0_315] : memref<8x8x32xf32, #tpu.memory_space<vmem>>, vector<1x8x32xf32>
    %924 = vector.shape_cast %923 : vector<1x8x32xf32> to vector<8x32xf32>
    %925 = vector.shape_cast %920 : vector<8x32xf32> to vector<1x8x32xf32>
    tpu.vector_store %arg14[%922, %c0_314, %c0_315], %925 {strides = array<i32>} : memref<8x8x32xf32, #tpu.memory_space<vmem>>, vector<1x8x32xf32>,
    %c4_i32_316 = arith.constant 4 : i32
    %926 = arith.truncf %914 : vector<8x64xf32> to vector<8x64xbf16>
    %cst_317 = arith.constant dense<0.000000e+00> : vector<8x256xf32>
    %927 = tpu.matmul %926, %792, %cst_317 {dimension_numbers = #tpu.dot_dimension_numbers<[1], [0], [0], [1], [0, 0, 1, 1], [], []>} : vector<8x64xbf16>, vector<64x256xbf16>, vector<8x256xf32> -> vector<8x256xf32>
    %928 = arith.index_cast %c4_i32_316 : i32 to index
    %c0_318 = arith.constant 0 : index
    %c0_319 = arith.constant 0 : index
    %929 = vector.load %arg12[%928, %c0_318, %c0_319] : memref<8x8x256xf32, #tpu.memory_space<vmem>>, vector<1x8x256xf32>
    %930 = vector.shape_cast %929 : vector<1x8x256xf32> to vector<8x256xf32>
    %931 = arith.addf %927, %930 : vector<8x256xf32>
    %932 = vector.extract_strided_slice %931 {offsets = [0, 0], sizes = [8, 192], strides = [1, 1]} : vector<8x256xf32> to vector<8x192xf32>
    %933 = arith.negf %932 : vector<8x192xf32>
    %934 = math.exp %933 : vector<8x192xf32>
    %cst_320 = arith.constant 1.000000e+00 : f32
    %935 = vector.broadcast %cst_320 : f32 to vector<8x192xf32>
    %936 = arith.addf %935, %934 : vector<8x192xf32>
    %937 = arith.divf %935, %936 : vector<8x192xf32>
    %938 = vector.extract_strided_slice %931 {offsets = [0, 192], sizes = [8, 64], strides = [1, 1]} : vector<8x256xf32> to vector<8x64xf32>
    %939 = math.tanh %938 : vector<8x64xf32>
    %940 = vector.extract_strided_slice %937 {offsets = [0, 64], sizes = [8, 64], strides = [1, 1]} : vector<8x192xf32> to vector<8x64xf32>
    %941 = arith.mulf %940, %911 : vector<8x64xf32>
    %942 = vector.extract_strided_slice %937 {offsets = [0, 0], sizes = [8, 64], strides = [1, 1]} : vector<8x192xf32> to vector<8x64xf32>
    %943 = arith.mulf %942, %939 : vector<8x64xf32>
    %944 = arith.addf %941, %943 : vector<8x64xf32>
    %945 = vector.extract_strided_slice %937 {offsets = [0, 128], sizes = [8, 64], strides = [1, 1]} : vector<8x192xf32> to vector<8x64xf32>
    %946 = math.tanh %944 : vector<8x64xf32>
    %947 = arith.mulf %945, %946 : vector<8x64xf32>
    %948 = vector.extract_strided_slice %947 {offsets = [0, 0], sizes = [8, 32], strides = [1, 1]} : vector<8x64xf32> to vector<8x32xf32>
    %949 = arith.index_cast %c4_i32_316 : i32 to index
    %c0_321 = arith.constant 0 : index
    %c0_322 = arith.constant 0 : index
    %950 = vector.load %arg13[%949, %c0_321, %c0_322] : memref<8x8x32xf32, #tpu.memory_space<vmem>>, vector<1x8x32xf32>
    %951 = vector.shape_cast %950 : vector<1x8x32xf32> to vector<8x32xf32>
    %952 = vector.shape_cast %948 : vector<8x32xf32> to vector<1x8x32xf32>
    tpu.vector_store %arg13[%949, %c0_321, %c0_322], %952 {strides = array<i32>} : memref<8x8x32xf32, #tpu.memory_space<vmem>>, vector<1x8x32xf32>,
    %953 = vector.extract_strided_slice %947 {offsets = [0, 32], sizes = [8, 32], strides = [1, 1]} : vector<8x64xf32> to vector<8x32xf32>
    %c7_i32_323 = arith.constant 7 : i32
    %954 = arith.subi %c7_i32_323, %c4_i32_316 : i32
    %955 = arith.index_cast %954 : i32 to index
    %c0_324 = arith.constant 0 : index
    %c0_325 = arith.constant 0 : index
    %956 = vector.load %arg14[%955, %c0_324, %c0_325] : memref<8x8x32xf32, #tpu.memory_space<vmem>>, vector<1x8x32xf32>
    %957 = vector.shape_cast %956 : vector<1x8x32xf32> to vector<8x32xf32>
    %958 = vector.shape_cast %953 : vector<8x32xf32> to vector<1x8x32xf32>
    tpu.vector_store %arg14[%955, %c0_324, %c0_325], %958 {strides = array<i32>} : memref<8x8x32xf32, #tpu.memory_space<vmem>>, vector<1x8x32xf32>,
    %c5_i32_326 = arith.constant 5 : i32
    %959 = arith.truncf %947 : vector<8x64xf32> to vector<8x64xbf16>
    %cst_327 = arith.constant dense<0.000000e+00> : vector<8x256xf32>
    %960 = tpu.matmul %959, %792, %cst_327 {dimension_numbers = #tpu.dot_dimension_numbers<[1], [0], [0], [1], [0, 0, 1, 1], [], []>} : vector<8x64xbf16>, vector<64x256xbf16>, vector<8x256xf32> -> vector<8x256xf32>
    %961 = arith.index_cast %c5_i32_326 : i32 to index
    %c0_328 = arith.constant 0 : index
    %c0_329 = arith.constant 0 : index
    %962 = vector.load %arg12[%961, %c0_328, %c0_329] : memref<8x8x256xf32, #tpu.memory_space<vmem>>, vector<1x8x256xf32>
    %963 = vector.shape_cast %962 : vector<1x8x256xf32> to vector<8x256xf32>
    %964 = arith.addf %960, %963 : vector<8x256xf32>
    %965 = vector.extract_strided_slice %964 {offsets = [0, 0], sizes = [8, 192], strides = [1, 1]} : vector<8x256xf32> to vector<8x192xf32>
    %966 = arith.negf %965 : vector<8x192xf32>
    %967 = math.exp %966 : vector<8x192xf32>
    %cst_330 = arith.constant 1.000000e+00 : f32
    %968 = vector.broadcast %cst_330 : f32 to vector<8x192xf32>
    %969 = arith.addf %968, %967 : vector<8x192xf32>
    %970 = arith.divf %968, %969 : vector<8x192xf32>
    %971 = vector.extract_strided_slice %964 {offsets = [0, 192], sizes = [8, 64], strides = [1, 1]} : vector<8x256xf32> to vector<8x64xf32>
    %972 = math.tanh %971 : vector<8x64xf32>
    %973 = vector.extract_strided_slice %970 {offsets = [0, 64], sizes = [8, 64], strides = [1, 1]} : vector<8x192xf32> to vector<8x64xf32>
    %974 = arith.mulf %973, %944 : vector<8x64xf32>
    %975 = vector.extract_strided_slice %970 {offsets = [0, 0], sizes = [8, 64], strides = [1, 1]} : vector<8x192xf32> to vector<8x64xf32>
    %976 = arith.mulf %975, %972 : vector<8x64xf32>
    %977 = arith.addf %974, %976 : vector<8x64xf32>
    %978 = vector.extract_strided_slice %970 {offsets = [0, 128], sizes = [8, 64], strides = [1, 1]} : vector<8x192xf32> to vector<8x64xf32>
    %979 = math.tanh %977 : vector<8x64xf32>
    %980 = arith.mulf %978, %979 : vector<8x64xf32>
    %981 = vector.extract_strided_slice %980 {offsets = [0, 0], sizes = [8, 32], strides = [1, 1]} : vector<8x64xf32> to vector<8x32xf32>
    %982 = arith.index_cast %c5_i32_326 : i32 to index
    %c0_331 = arith.constant 0 : index
    %c0_332 = arith.constant 0 : index
    %983 = vector.load %arg13[%982, %c0_331, %c0_332] : memref<8x8x32xf32, #tpu.memory_space<vmem>>, vector<1x8x32xf32>
    %984 = vector.shape_cast %983 : vector<1x8x32xf32> to vector<8x32xf32>
    %985 = vector.shape_cast %981 : vector<8x32xf32> to vector<1x8x32xf32>
    tpu.vector_store %arg13[%982, %c0_331, %c0_332], %985 {strides = array<i32>} : memref<8x8x32xf32, #tpu.memory_space<vmem>>, vector<1x8x32xf32>,
    %986 = vector.extract_strided_slice %980 {offsets = [0, 32], sizes = [8, 32], strides = [1, 1]} : vector<8x64xf32> to vector<8x32xf32>
    %c7_i32_333 = arith.constant 7 : i32
    %987 = arith.subi %c7_i32_333, %c5_i32_326 : i32
    %988 = arith.index_cast %987 : i32 to index
    %c0_334 = arith.constant 0 : index
    %c0_335 = arith.constant 0 : index
    %989 = vector.load %arg14[%988, %c0_334, %c0_335] : memref<8x8x32xf32, #tpu.memory_space<vmem>>, vector<1x8x32xf32>
    %990 = vector.shape_cast %989 : vector<1x8x32xf32> to vector<8x32xf32>
    %991 = vector.shape_cast %986 : vector<8x32xf32> to vector<1x8x32xf32>
    tpu.vector_store %arg14[%988, %c0_334, %c0_335], %991 {strides = array<i32>} : memref<8x8x32xf32, #tpu.memory_space<vmem>>, vector<1x8x32xf32>,
    %c6_i32_336 = arith.constant 6 : i32
    %992 = arith.truncf %980 : vector<8x64xf32> to vector<8x64xbf16>
    %cst_337 = arith.constant dense<0.000000e+00> : vector<8x256xf32>
    %993 = tpu.matmul %992, %792, %cst_337 {dimension_numbers = #tpu.dot_dimension_numbers<[1], [0], [0], [1], [0, 0, 1, 1], [], []>} : vector<8x64xbf16>, vector<64x256xbf16>, vector<8x256xf32> -> vector<8x256xf32>
    %994 = arith.index_cast %c6_i32_336 : i32 to index
    %c0_338 = arith.constant 0 : index
    %c0_339 = arith.constant 0 : index
    %995 = vector.load %arg12[%994, %c0_338, %c0_339] : memref<8x8x256xf32, #tpu.memory_space<vmem>>, vector<1x8x256xf32>
    %996 = vector.shape_cast %995 : vector<1x8x256xf32> to vector<8x256xf32>
    %997 = arith.addf %993, %996 : vector<8x256xf32>
    %998 = vector.extract_strided_slice %997 {offsets = [0, 0], sizes = [8, 192], strides = [1, 1]} : vector<8x256xf32> to vector<8x192xf32>
    %999 = arith.negf %998 : vector<8x192xf32>
    %1000 = math.exp %999 : vector<8x192xf32>
    %cst_340 = arith.constant 1.000000e+00 : f32
    %1001 = vector.broadcast %cst_340 : f32 to vector<8x192xf32>
    %1002 = arith.addf %1001, %1000 : vector<8x192xf32>
    %1003 = arith.divf %1001, %1002 : vector<8x192xf32>
    %1004 = vector.extract_strided_slice %997 {offsets = [0, 192], sizes = [8, 64], strides = [1, 1]} : vector<8x256xf32> to vector<8x64xf32>
    %1005 = math.tanh %1004 : vector<8x64xf32>
    %1006 = vector.extract_strided_slice %1003 {offsets = [0, 64], sizes = [8, 64], strides = [1, 1]} : vector<8x192xf32> to vector<8x64xf32>
    %1007 = arith.mulf %1006, %977 : vector<8x64xf32>
    %1008 = vector.extract_strided_slice %1003 {offsets = [0, 0], sizes = [8, 64], strides = [1, 1]} : vector<8x192xf32> to vector<8x64xf32>
    %1009 = arith.mulf %1008, %1005 : vector<8x64xf32>
    %1010 = arith.addf %1007, %1009 : vector<8x64xf32>
    %1011 = vector.extract_strided_slice %1003 {offsets = [0, 128], sizes = [8, 64], strides = [1, 1]} : vector<8x192xf32> to vector<8x64xf32>
    %1012 = math.tanh %1010 : vector<8x64xf32>
    %1013 = arith.mulf %1011, %1012 : vector<8x64xf32>
    %1014 = vector.extract_strided_slice %1013 {offsets = [0, 0], sizes = [8, 32], strides = [1, 1]} : vector<8x64xf32> to vector<8x32xf32>
    %1015 = arith.index_cast %c6_i32_336 : i32 to index
    %c0_341 = arith.constant 0 : index
    %c0_342 = arith.constant 0 : index
    %1016 = vector.load %arg13[%1015, %c0_341, %c0_342] : memref<8x8x32xf32, #tpu.memory_space<vmem>>, vector<1x8x32xf32>
    %1017 = vector.shape_cast %1016 : vector<1x8x32xf32> to vector<8x32xf32>
    %1018 = vector.shape_cast %1014 : vector<8x32xf32> to vector<1x8x32xf32>
    tpu.vector_store %arg13[%1015, %c0_341, %c0_342], %1018 {strides = array<i32>} : memref<8x8x32xf32, #tpu.memory_space<vmem>>, vector<1x8x32xf32>,
    %1019 = vector.extract_strided_slice %1013 {offsets = [0, 32], sizes = [8, 32], strides = [1, 1]} : vector<8x64xf32> to vector<8x32xf32>
    %c7_i32_343 = arith.constant 7 : i32
    %1020 = arith.subi %c7_i32_343, %c6_i32_336 : i32
    %1021 = arith.index_cast %1020 : i32 to index
    %c0_344 = arith.constant 0 : index
    %c0_345 = arith.constant 0 : index
    %1022 = vector.load %arg14[%1021, %c0_344, %c0_345] : memref<8x8x32xf32, #tpu.memory_space<vmem>>, vector<1x8x32xf32>
    %1023 = vector.shape_cast %1022 : vector<1x8x32xf32> to vector<8x32xf32>
    %1024 = vector.shape_cast %1019 : vector<8x32xf32> to vector<1x8x32xf32>
    tpu.vector_store %arg14[%1021, %c0_344, %c0_345], %1024 {strides = array<i32>} : memref<8x8x32xf32, #tpu.memory_space<vmem>>, vector<1x8x32xf32>,
    %c7_i32_346 = arith.constant 7 : i32
    %1025 = arith.truncf %1013 : vector<8x64xf32> to vector<8x64xbf16>
    %cst_347 = arith.constant dense<0.000000e+00> : vector<8x256xf32>
    %1026 = tpu.matmul %1025, %792, %cst_347 {dimension_numbers = #tpu.dot_dimension_numbers<[1], [0], [0], [1], [0, 0, 1, 1], [], []>} : vector<8x64xbf16>, vector<64x256xbf16>, vector<8x256xf32> -> vector<8x256xf32>
    %1027 = arith.index_cast %c7_i32_346 : i32 to index
    %c0_348 = arith.constant 0 : index
    %c0_349 = arith.constant 0 : index
    %1028 = vector.load %arg12[%1027, %c0_348, %c0_349] : memref<8x8x256xf32, #tpu.memory_space<vmem>>, vector<1x8x256xf32>
    %1029 = vector.shape_cast %1028 : vector<1x8x256xf32> to vector<8x256xf32>
    %1030 = arith.addf %1026, %1029 : vector<8x256xf32>
    %1031 = vector.extract_strided_slice %1030 {offsets = [0, 0], sizes = [8, 192], strides = [1, 1]} : vector<8x256xf32> to vector<8x192xf32>
    %1032 = arith.negf %1031 : vector<8x192xf32>
    %1033 = math.exp %1032 : vector<8x192xf32>
    %cst_350 = arith.constant 1.000000e+00 : f32
    %1034 = vector.broadcast %cst_350 : f32 to vector<8x192xf32>
    %1035 = arith.addf %1034, %1033 : vector<8x192xf32>
    %1036 = arith.divf %1034, %1035 : vector<8x192xf32>
    %1037 = vector.extract_strided_slice %1030 {offsets = [0, 192], sizes = [8, 64], strides = [1, 1]} : vector<8x256xf32> to vector<8x64xf32>
    %1038 = math.tanh %1037 : vector<8x64xf32>
    %1039 = vector.extract_strided_slice %1036 {offsets = [0, 64], sizes = [8, 64], strides = [1, 1]} : vector<8x192xf32> to vector<8x64xf32>
    %1040 = arith.mulf %1039, %1010 : vector<8x64xf32>
    %1041 = vector.extract_strided_slice %1036 {offsets = [0, 0], sizes = [8, 64], strides = [1, 1]} : vector<8x192xf32> to vector<8x64xf32>
    %1042 = arith.mulf %1041, %1038 : vector<8x64xf32>
    %1043 = arith.addf %1040, %1042 : vector<8x64xf32>
    %1044 = vector.extract_strided_slice %1036 {offsets = [0, 128], sizes = [8, 64], strides = [1, 1]} : vector<8x192xf32> to vector<8x64xf32>
    %1045 = math.tanh %1043 : vector<8x64xf32>
    %1046 = arith.mulf %1044, %1045 : vector<8x64xf32>
    %1047 = vector.extract_strided_slice %1046 {offsets = [0, 0], sizes = [8, 32], strides = [1, 1]} : vector<8x64xf32> to vector<8x32xf32>
    %1048 = arith.index_cast %c7_i32_346 : i32 to index
    %c0_351 = arith.constant 0 : index
    %c0_352 = arith.constant 0 : index
    %1049 = vector.load %arg13[%1048, %c0_351, %c0_352] : memref<8x8x32xf32, #tpu.memory_space<vmem>>, vector<1x8x32xf32>
    %1050 = vector.shape_cast %1049 : vector<1x8x32xf32> to vector<8x32xf32>
    %1051 = vector.shape_cast %1047 : vector<8x32xf32> to vector<1x8x32xf32>
    tpu.vector_store %arg13[%1048, %c0_351, %c0_352], %1051 {strides = array<i32>} : memref<8x8x32xf32, #tpu.memory_space<vmem>>, vector<1x8x32xf32>,
    %1052 = vector.extract_strided_slice %1046 {offsets = [0, 32], sizes = [8, 32], strides = [1, 1]} : vector<8x64xf32> to vector<8x32xf32>
    %c7_i32_353 = arith.constant 7 : i32
    %1053 = arith.subi %c7_i32_353, %c7_i32_346 : i32
    %1054 = arith.index_cast %1053 : i32 to index
    %c0_354 = arith.constant 0 : index
    %c0_355 = arith.constant 0 : index
    %1055 = vector.load %arg14[%1054, %c0_354, %c0_355] : memref<8x8x32xf32, #tpu.memory_space<vmem>>, vector<1x8x32xf32>
    %1056 = vector.shape_cast %1055 : vector<1x8x32xf32> to vector<8x32xf32>
    %1057 = vector.shape_cast %1052 : vector<8x32xf32> to vector<1x8x32xf32>
    tpu.vector_store %arg14[%1054, %c0_354, %c0_355], %1057 {strides = array<i32>} : memref<8x8x32xf32, #tpu.memory_space<vmem>>, vector<1x8x32xf32>,
    %c8_i32_356 = arith.constant 8 : i32
    %c0_357 = arith.constant 0 : index
    %c0_358 = arith.constant 0 : index
    %c0_359 = arith.constant 0 : index
    %1058 = vector.load %arg13[%c0_357, %c0_358, %c0_359] : memref<8x8x32xf32, #tpu.memory_space<vmem>>, vector<8x8x32xf32>
    %1059 = vector.shape_cast %1058 : vector<8x8x32xf32> to vector<64x32xf32>
    %1060 = arith.truncf %1059 : vector<64x32xf32> to vector<64x32xbf16>
    %c0_360 = arith.constant 0 : index
    %c0_361 = arith.constant 0 : index
    %c0_362 = arith.constant 0 : index
    %1061 = vector.load %arg14[%c0_360, %c0_361, %c0_362] : memref<8x8x32xf32, #tpu.memory_space<vmem>>, vector<8x8x32xf32>
    %1062 = vector.shape_cast %1061 : vector<8x8x32xf32> to vector<64x32xf32>
    %1063 = arith.truncf %1062 : vector<64x32xf32> to vector<64x32xbf16>
    %c2_363 = arith.constant 2 : index
    %c0_364 = arith.constant 0 : index
    %c0_365 = arith.constant 0 : index
    %1064 = vector.load %arg3[%c2_363, %c0_364, %c0_365] : memref<3x32x256xbf16, #tpu.memory_space<vmem>>, vector<1x32x256xbf16>
    %1065 = vector.shape_cast %1064 : vector<1x32x256xbf16> to vector<32x256xbf16>
    %cst_366 = arith.constant dense<0.000000e+00> : vector<64x256xf32>
    %1066 = tpu.matmul %1060, %1065, %cst_366 {dimension_numbers = #tpu.dot_dimension_numbers<[1], [0], [0], [1], [0, 0, 1, 1], [], []>} : vector<64x32xbf16>, vector<32x256xbf16>, vector<64x256xf32> -> vector<64x256xf32>
    %c2_367 = arith.constant 2 : index
    %c0_368 = arith.constant 0 : index
    %c0_369 = arith.constant 0 : index
    %1067 = vector.load %arg4[%c2_367, %c0_368, %c0_369] : memref<3x32x256xbf16, #tpu.memory_space<vmem>>, vector<1x32x256xbf16>
    %1068 = vector.shape_cast %1067 : vector<1x32x256xbf16> to vector<32x256xbf16>
    %cst_370 = arith.constant dense<0.000000e+00> : vector<64x256xf32>
    %1069 = tpu.matmul %1063, %1068, %cst_370 {dimension_numbers = #tpu.dot_dimension_numbers<[1], [0], [0], [1], [0, 0, 1, 1], [], []>} : vector<64x32xbf16>, vector<32x256xbf16>, vector<64x256xf32> -> vector<64x256xf32>
    %1070 = arith.addf %1066, %1069 : vector<64x256xf32>
    %c3_371 = arith.constant 3 : index
    %c0_372 = arith.constant 0 : index
    %c0_373 = arith.constant 0 : index
    %1071 = vector.load %arg6[%c3_371, %c0_372, %c0_373] : memref<4x1x256xf32, #tpu.memory_space<vmem>>, vector<1x1x256xf32>
    %1072 = vector.shape_cast %1071 : vector<1x1x256xf32> to vector<1x256xf32>
    %1073 = vector.broadcast %1072 : vector<1x256xf32> to vector<64x256xf32>
    %1074 = arith.addf %1070, %1073 : vector<64x256xf32>
    %1075 = vector.shape_cast %1074 : vector<64x256xf32> to vector<8x8x256xf32>
    %1076 = vector.extract_strided_slice %1075 {offsets = [0, 0, 0], sizes = [1, 8, 256], strides = [1, 1, 1]} : vector<8x8x256xf32> to vector<1x8x256xf32>
    %1077 = vector.shape_cast %1076 : vector<1x8x256xf32> to vector<8x256xf32>
    %1078 = vector.extract_strided_slice %1075 {offsets = [7, 0, 0], sizes = [1, 8, 256], strides = [1, 1, 1]} : vector<8x8x256xf32> to vector<1x8x256xf32>
    %1079 = vector.shape_cast %1078 : vector<1x8x256xf32> to vector<8x256xf32>
    %1080 = arith.select %18, %1077, %1079 : vector<8x256xi1>, vector<8x256xf32>
    %c0_374 = arith.constant 0 : index
    %c0_375 = arith.constant 0 : index
    %c0_376 = arith.constant 0 : index
    %1081 = vector.load %arg12[%c0_374, %c0_375, %c0_376] : memref<8x8x256xf32, #tpu.memory_space<vmem>>, vector<1x8x256xf32>
    %1082 = vector.shape_cast %1081 : vector<1x8x256xf32> to vector<8x256xf32>
    %1083 = vector.shape_cast %1080 : vector<8x256xf32> to vector<1x8x256xf32>
    tpu.vector_store %arg12[%c0_374, %c0_375, %c0_376], %1083 {strides = array<i32>} : memref<8x8x256xf32, #tpu.memory_space<vmem>>, vector<1x8x256xf32>,
    %1084 = vector.extract_strided_slice %1075 {offsets = [1, 0, 0], sizes = [1, 8, 256], strides = [1, 1, 1]} : vector<8x8x256xf32> to vector<1x8x256xf32>
    %1085 = vector.shape_cast %1084 : vector<1x8x256xf32> to vector<8x256xf32>
    %1086 = vector.extract_strided_slice %1075 {offsets = [6, 0, 0], sizes = [1, 8, 256], strides = [1, 1, 1]} : vector<8x8x256xf32> to vector<1x8x256xf32>
    %1087 = vector.shape_cast %1086 : vector<1x8x256xf32> to vector<8x256xf32>
    %1088 = arith.select %18, %1085, %1087 : vector<8x256xi1>, vector<8x256xf32>
    %c1_377 = arith.constant 1 : index
    %c0_378 = arith.constant 0 : index
    %c0_379 = arith.constant 0 : index
    %1089 = vector.load %arg12[%c1_377, %c0_378, %c0_379] : memref<8x8x256xf32, #tpu.memory_space<vmem>>, vector<1x8x256xf32>
    %1090 = vector.shape_cast %1089 : vector<1x8x256xf32> to vector<8x256xf32>
    %1091 = vector.shape_cast %1088 : vector<8x256xf32> to vector<1x8x256xf32>
    tpu.vector_store %arg12[%c1_377, %c0_378, %c0_379], %1091 {strides = array<i32>} : memref<8x8x256xf32, #tpu.memory_space<vmem>>, vector<1x8x256xf32>,
    %1092 = vector.extract_strided_slice %1075 {offsets = [2, 0, 0], sizes = [1, 8, 256], strides = [1, 1, 1]} : vector<8x8x256xf32> to vector<1x8x256xf32>
    %1093 = vector.shape_cast %1092 : vector<1x8x256xf32> to vector<8x256xf32>
    %1094 = vector.extract_strided_slice %1075 {offsets = [5, 0, 0], sizes = [1, 8, 256], strides = [1, 1, 1]} : vector<8x8x256xf32> to vector<1x8x256xf32>
    %1095 = vector.shape_cast %1094 : vector<1x8x256xf32> to vector<8x256xf32>
    %1096 = arith.select %18, %1093, %1095 : vector<8x256xi1>, vector<8x256xf32>
    %c2_380 = arith.constant 2 : index
    %c0_381 = arith.constant 0 : index
    %c0_382 = arith.constant 0 : index
    %1097 = vector.load %arg12[%c2_380, %c0_381, %c0_382] : memref<8x8x256xf32, #tpu.memory_space<vmem>>, vector<1x8x256xf32>
    %1098 = vector.shape_cast %1097 : vector<1x8x256xf32> to vector<8x256xf32>
    %1099 = vector.shape_cast %1096 : vector<8x256xf32> to vector<1x8x256xf32>
    tpu.vector_store %arg12[%c2_380, %c0_381, %c0_382], %1099 {strides = array<i32>} : memref<8x8x256xf32, #tpu.memory_space<vmem>>, vector<1x8x256xf32>,
    %1100 = vector.extract_strided_slice %1075 {offsets = [3, 0, 0], sizes = [1, 8, 256], strides = [1, 1, 1]} : vector<8x8x256xf32> to vector<1x8x256xf32>
    %1101 = vector.shape_cast %1100 : vector<1x8x256xf32> to vector<8x256xf32>
    %1102 = vector.extract_strided_slice %1075 {offsets = [4, 0, 0], sizes = [1, 8, 256], strides = [1, 1, 1]} : vector<8x8x256xf32> to vector<1x8x256xf32>
    %1103 = vector.shape_cast %1102 : vector<1x8x256xf32> to vector<8x256xf32>
    %1104 = arith.select %18, %1101, %1103 : vector<8x256xi1>, vector<8x256xf32>
    %c3_383 = arith.constant 3 : index
    %c0_384 = arith.constant 0 : index
    %c0_385 = arith.constant 0 : index
    %1105 = vector.load %arg12[%c3_383, %c0_384, %c0_385] : memref<8x8x256xf32, #tpu.memory_space<vmem>>, vector<1x8x256xf32>
    %1106 = vector.shape_cast %1105 : vector<1x8x256xf32> to vector<8x256xf32>
    %1107 = vector.shape_cast %1104 : vector<8x256xf32> to vector<1x8x256xf32>
    tpu.vector_store %arg12[%c3_383, %c0_384, %c0_385], %1107 {strides = array<i32>} : memref<8x8x256xf32, #tpu.memory_space<vmem>>, vector<1x8x256xf32>,
    %1108 = vector.extract_strided_slice %1075 {offsets = [4, 0, 0], sizes = [1, 8, 256], strides = [1, 1, 1]} : vector<8x8x256xf32> to vector<1x8x256xf32>
    %1109 = vector.shape_cast %1108 : vector<1x8x256xf32> to vector<8x256xf32>
    %1110 = vector.extract_strided_slice %1075 {offsets = [3, 0, 0], sizes = [1, 8, 256], strides = [1, 1, 1]} : vector<8x8x256xf32> to vector<1x8x256xf32>
    %1111 = vector.shape_cast %1110 : vector<1x8x256xf32> to vector<8x256xf32>
    %1112 = arith.select %18, %1109, %1111 : vector<8x256xi1>, vector<8x256xf32>
    %c4_386 = arith.constant 4 : index
    %c0_387 = arith.constant 0 : index
    %c0_388 = arith.constant 0 : index
    %1113 = vector.load %arg12[%c4_386, %c0_387, %c0_388] : memref<8x8x256xf32, #tpu.memory_space<vmem>>, vector<1x8x256xf32>
    %1114 = vector.shape_cast %1113 : vector<1x8x256xf32> to vector<8x256xf32>
    %1115 = vector.shape_cast %1112 : vector<8x256xf32> to vector<1x8x256xf32>
    tpu.vector_store %arg12[%c4_386, %c0_387, %c0_388], %1115 {strides = array<i32>} : memref<8x8x256xf32, #tpu.memory_space<vmem>>, vector<1x8x256xf32>,
    %1116 = vector.extract_strided_slice %1075 {offsets = [5, 0, 0], sizes = [1, 8, 256], strides = [1, 1, 1]} : vector<8x8x256xf32> to vector<1x8x256xf32>
    %1117 = vector.shape_cast %1116 : vector<1x8x256xf32> to vector<8x256xf32>
    %1118 = vector.extract_strided_slice %1075 {offsets = [2, 0, 0], sizes = [1, 8, 256], strides = [1, 1, 1]} : vector<8x8x256xf32> to vector<1x8x256xf32>
    %1119 = vector.shape_cast %1118 : vector<1x8x256xf32> to vector<8x256xf32>
    %1120 = arith.select %18, %1117, %1119 : vector<8x256xi1>, vector<8x256xf32>
    %c5_389 = arith.constant 5 : index
    %c0_390 = arith.constant 0 : index
    %c0_391 = arith.constant 0 : index
    %1121 = vector.load %arg12[%c5_389, %c0_390, %c0_391] : memref<8x8x256xf32, #tpu.memory_space<vmem>>, vector<1x8x256xf32>
    %1122 = vector.shape_cast %1121 : vector<1x8x256xf32> to vector<8x256xf32>
    %1123 = vector.shape_cast %1120 : vector<8x256xf32> to vector<1x8x256xf32>
    tpu.vector_store %arg12[%c5_389, %c0_390, %c0_391], %1123 {strides = array<i32>} : memref<8x8x256xf32, #tpu.memory_space<vmem>>, vector<1x8x256xf32>,
    %1124 = vector.extract_strided_slice %1075 {offsets = [6, 0, 0], sizes = [1, 8, 256], strides = [1, 1, 1]} : vector<8x8x256xf32> to vector<1x8x256xf32>
    %1125 = vector.shape_cast %1124 : vector<1x8x256xf32> to vector<8x256xf32>
    %1126 = vector.extract_strided_slice %1075 {offsets = [1, 0, 0], sizes = [1, 8, 256], strides = [1, 1, 1]} : vector<8x8x256xf32> to vector<1x8x256xf32>
    %1127 = vector.shape_cast %1126 : vector<1x8x256xf32> to vector<8x256xf32>
    %1128 = arith.select %18, %1125, %1127 : vector<8x256xi1>, vector<8x256xf32>
    %c6_392 = arith.constant 6 : index
    %c0_393 = arith.constant 0 : index
    %c0_394 = arith.constant 0 : index
    %1129 = vector.load %arg12[%c6_392, %c0_393, %c0_394] : memref<8x8x256xf32, #tpu.memory_space<vmem>>, vector<1x8x256xf32>
    %1130 = vector.shape_cast %1129 : vector<1x8x256xf32> to vector<8x256xf32>
    %1131 = vector.shape_cast %1128 : vector<8x256xf32> to vector<1x8x256xf32>
    tpu.vector_store %arg12[%c6_392, %c0_393, %c0_394], %1131 {strides = array<i32>} : memref<8x8x256xf32, #tpu.memory_space<vmem>>, vector<1x8x256xf32>,
    %1132 = vector.extract_strided_slice %1075 {offsets = [7, 0, 0], sizes = [1, 8, 256], strides = [1, 1, 1]} : vector<8x8x256xf32> to vector<1x8x256xf32>
    %1133 = vector.shape_cast %1132 : vector<1x8x256xf32> to vector<8x256xf32>
    %1134 = vector.extract_strided_slice %1075 {offsets = [0, 0, 0], sizes = [1, 8, 256], strides = [1, 1, 1]} : vector<8x8x256xf32> to vector<1x8x256xf32>
    %1135 = vector.shape_cast %1134 : vector<1x8x256xf32> to vector<8x256xf32>
    %1136 = arith.select %18, %1133, %1135 : vector<8x256xi1>, vector<8x256xf32>
    %c7_395 = arith.constant 7 : index
    %c0_396 = arith.constant 0 : index
    %c0_397 = arith.constant 0 : index
    %1137 = vector.load %arg12[%c7_395, %c0_396, %c0_397] : memref<8x8x256xf32, #tpu.memory_space<vmem>>, vector<1x8x256xf32>
    %1138 = vector.shape_cast %1137 : vector<1x8x256xf32> to vector<8x256xf32>
    %1139 = vector.shape_cast %1136 : vector<8x256xf32> to vector<1x8x256xf32>
    tpu.vector_store %arg12[%c7_395, %c0_396, %c0_397], %1139 {strides = array<i32>} : memref<8x8x256xf32, #tpu.memory_space<vmem>>, vector<1x8x256xf32>,
    %c3_398 = arith.constant 3 : index
    %c0_399 = arith.constant 0 : index
    %c0_400 = arith.constant 0 : index
    %1140 = vector.load %arg5[%c3_398, %c0_399, %c0_400] : memref<4x64x256xbf16, #tpu.memory_space<vmem>>, vector<1x64x256xbf16>
    %1141 = vector.shape_cast %1140 : vector<1x64x256xbf16> to vector<64x256xbf16>
    %cst_401 = arith.constant 0.000000e+00 : f32
    %1142 = vector.broadcast %cst_401 : f32 to vector<8x64xf32>
    %c0_i32_402 = arith.constant 0 : i32
    %1143 = arith.truncf %1142 : vector<8x64xf32> to vector<8x64xbf16>
    %cst_403 = arith.constant dense<0.000000e+00> : vector<8x256xf32>
    %1144 = tpu.matmul %1143, %1141, %cst_403 {dimension_numbers = #tpu.dot_dimension_numbers<[1], [0], [0], [1], [0, 0, 1, 1], [], []>} : vector<8x64xbf16>, vector<64x256xbf16>, vector<8x256xf32> -> vector<8x256xf32>
    %1145 = arith.index_cast %c0_i32_402 : i32 to index
    %c0_404 = arith.constant 0 : index
    %c0_405 = arith.constant 0 : index
    %1146 = vector.load %arg12[%1145, %c0_404, %c0_405] : memref<8x8x256xf32, #tpu.memory_space<vmem>>, vector<1x8x256xf32>
    %1147 = vector.shape_cast %1146 : vector<1x8x256xf32> to vector<8x256xf32>
    %1148 = arith.addf %1144, %1147 : vector<8x256xf32>
    %1149 = vector.extract_strided_slice %1148 {offsets = [0, 0], sizes = [8, 192], strides = [1, 1]} : vector<8x256xf32> to vector<8x192xf32>
    %1150 = arith.negf %1149 : vector<8x192xf32>
    %1151 = math.exp %1150 : vector<8x192xf32>
    %cst_406 = arith.constant 1.000000e+00 : f32
    %1152 = vector.broadcast %cst_406 : f32 to vector<8x192xf32>
    %1153 = arith.addf %1152, %1151 : vector<8x192xf32>
    %1154 = arith.divf %1152, %1153 : vector<8x192xf32>
    %1155 = vector.extract_strided_slice %1148 {offsets = [0, 192], sizes = [8, 64], strides = [1, 1]} : vector<8x256xf32> to vector<8x64xf32>
    %1156 = math.tanh %1155 : vector<8x64xf32>
    %1157 = vector.extract_strided_slice %1154 {offsets = [0, 64], sizes = [8, 64], strides = [1, 1]} : vector<8x192xf32> to vector<8x64xf32>
    %1158 = arith.mulf %1157, %1142 : vector<8x64xf32>
    %1159 = vector.extract_strided_slice %1154 {offsets = [0, 0], sizes = [8, 64], strides = [1, 1]} : vector<8x192xf32> to vector<8x64xf32>
    %1160 = arith.mulf %1159, %1156 : vector<8x64xf32>
    %1161 = arith.addf %1158, %1160 : vector<8x64xf32>
    %1162 = vector.extract_strided_slice %1154 {offsets = [0, 128], sizes = [8, 64], strides = [1, 1]} : vector<8x192xf32> to vector<8x64xf32>
    %1163 = math.tanh %1161 : vector<8x64xf32>
    %1164 = arith.mulf %1162, %1163 : vector<8x64xf32>
    %1165 = vector.extract_strided_slice %1164 {offsets = [0, 0], sizes = [8, 32], strides = [1, 1]} : vector<8x64xf32> to vector<8x32xf32>
    %1166 = arith.index_cast %c0_i32_402 : i32 to index
    %c0_407 = arith.constant 0 : index
    %c0_408 = arith.constant 0 : index
    %1167 = vector.load %arg13[%1166, %c0_407, %c0_408] : memref<8x8x32xf32, #tpu.memory_space<vmem>>, vector<1x8x32xf32>
    %1168 = vector.shape_cast %1167 : vector<1x8x32xf32> to vector<8x32xf32>
    %1169 = vector.shape_cast %1165 : vector<8x32xf32> to vector<1x8x32xf32>
    tpu.vector_store %arg13[%1166, %c0_407, %c0_408], %1169 {strides = array<i32>} : memref<8x8x32xf32, #tpu.memory_space<vmem>>, vector<1x8x32xf32>,
    %1170 = vector.extract_strided_slice %1164 {offsets = [0, 32], sizes = [8, 32], strides = [1, 1]} : vector<8x64xf32> to vector<8x32xf32>
    %c7_i32_409 = arith.constant 7 : i32
    %1171 = arith.subi %c7_i32_409, %c0_i32_402 : i32
    %1172 = arith.index_cast %1171 : i32 to index
    %c0_410 = arith.constant 0 : index
    %c0_411 = arith.constant 0 : index
    %1173 = vector.load %arg14[%1172, %c0_410, %c0_411] : memref<8x8x32xf32, #tpu.memory_space<vmem>>, vector<1x8x32xf32>
    %1174 = vector.shape_cast %1173 : vector<1x8x32xf32> to vector<8x32xf32>
    %1175 = vector.shape_cast %1170 : vector<8x32xf32> to vector<1x8x32xf32>
    tpu.vector_store %arg14[%1172, %c0_410, %c0_411], %1175 {strides = array<i32>} : memref<8x8x32xf32, #tpu.memory_space<vmem>>, vector<1x8x32xf32>,
    %c1_i32_412 = arith.constant 1 : i32
    %1176 = arith.truncf %1164 : vector<8x64xf32> to vector<8x64xbf16>
    %cst_413 = arith.constant dense<0.000000e+00> : vector<8x256xf32>
    %1177 = tpu.matmul %1176, %1141, %cst_413 {dimension_numbers = #tpu.dot_dimension_numbers<[1], [0], [0], [1], [0, 0, 1, 1], [], []>} : vector<8x64xbf16>, vector<64x256xbf16>, vector<8x256xf32> -> vector<8x256xf32>
    %1178 = arith.index_cast %c1_i32_412 : i32 to index
    %c0_414 = arith.constant 0 : index
    %c0_415 = arith.constant 0 : index
    %1179 = vector.load %arg12[%1178, %c0_414, %c0_415] : memref<8x8x256xf32, #tpu.memory_space<vmem>>, vector<1x8x256xf32>
    %1180 = vector.shape_cast %1179 : vector<1x8x256xf32> to vector<8x256xf32>
    %1181 = arith.addf %1177, %1180 : vector<8x256xf32>
    %1182 = vector.extract_strided_slice %1181 {offsets = [0, 0], sizes = [8, 192], strides = [1, 1]} : vector<8x256xf32> to vector<8x192xf32>
    %1183 = arith.negf %1182 : vector<8x192xf32>
    %1184 = math.exp %1183 : vector<8x192xf32>
    %cst_416 = arith.constant 1.000000e+00 : f32
    %1185 = vector.broadcast %cst_416 : f32 to vector<8x192xf32>
    %1186 = arith.addf %1185, %1184 : vector<8x192xf32>
    %1187 = arith.divf %1185, %1186 : vector<8x192xf32>
    %1188 = vector.extract_strided_slice %1181 {offsets = [0, 192], sizes = [8, 64], strides = [1, 1]} : vector<8x256xf32> to vector<8x64xf32>
    %1189 = math.tanh %1188 : vector<8x64xf32>
    %1190 = vector.extract_strided_slice %1187 {offsets = [0, 64], sizes = [8, 64], strides = [1, 1]} : vector<8x192xf32> to vector<8x64xf32>
    %1191 = arith.mulf %1190, %1161 : vector<8x64xf32>
    %1192 = vector.extract_strided_slice %1187 {offsets = [0, 0], sizes = [8, 64], strides = [1, 1]} : vector<8x192xf32> to vector<8x64xf32>
    %1193 = arith.mulf %1192, %1189 : vector<8x64xf32>
    %1194 = arith.addf %1191, %1193 : vector<8x64xf32>
    %1195 = vector.extract_strided_slice %1187 {offsets = [0, 128], sizes = [8, 64], strides = [1, 1]} : vector<8x192xf32> to vector<8x64xf32>
    %1196 = math.tanh %1194 : vector<8x64xf32>
    %1197 = arith.mulf %1195, %1196 : vector<8x64xf32>
    %1198 = vector.extract_strided_slice %1197 {offsets = [0, 0], sizes = [8, 32], strides = [1, 1]} : vector<8x64xf32> to vector<8x32xf32>
    %1199 = arith.index_cast %c1_i32_412 : i32 to index
    %c0_417 = arith.constant 0 : index
    %c0_418 = arith.constant 0 : index
    %1200 = vector.load %arg13[%1199, %c0_417, %c0_418] : memref<8x8x32xf32, #tpu.memory_space<vmem>>, vector<1x8x32xf32>
    %1201 = vector.shape_cast %1200 : vector<1x8x32xf32> to vector<8x32xf32>
    %1202 = vector.shape_cast %1198 : vector<8x32xf32> to vector<1x8x32xf32>
    tpu.vector_store %arg13[%1199, %c0_417, %c0_418], %1202 {strides = array<i32>} : memref<8x8x32xf32, #tpu.memory_space<vmem>>, vector<1x8x32xf32>,
    %1203 = vector.extract_strided_slice %1197 {offsets = [0, 32], sizes = [8, 32], strides = [1, 1]} : vector<8x64xf32> to vector<8x32xf32>
    %c7_i32_419 = arith.constant 7 : i32
    %1204 = arith.subi %c7_i32_419, %c1_i32_412 : i32
    %1205 = arith.index_cast %1204 : i32 to index
    %c0_420 = arith.constant 0 : index
    %c0_421 = arith.constant 0 : index
    %1206 = vector.load %arg14[%1205, %c0_420, %c0_421] : memref<8x8x32xf32, #tpu.memory_space<vmem>>, vector<1x8x32xf32>
    %1207 = vector.shape_cast %1206 : vector<1x8x32xf32> to vector<8x32xf32>
    %1208 = vector.shape_cast %1203 : vector<8x32xf32> to vector<1x8x32xf32>
    tpu.vector_store %arg14[%1205, %c0_420, %c0_421], %1208 {strides = array<i32>} : memref<8x8x32xf32, #tpu.memory_space<vmem>>, vector<1x8x32xf32>,
    %c2_i32_422 = arith.constant 2 : i32
    %1209 = arith.truncf %1197 : vector<8x64xf32> to vector<8x64xbf16>
    %cst_423 = arith.constant dense<0.000000e+00> : vector<8x256xf32>
    %1210 = tpu.matmul %1209, %1141, %cst_423 {dimension_numbers = #tpu.dot_dimension_numbers<[1], [0], [0], [1], [0, 0, 1, 1], [], []>} : vector<8x64xbf16>, vector<64x256xbf16>, vector<8x256xf32> -> vector<8x256xf32>
    %1211 = arith.index_cast %c2_i32_422 : i32 to index
    %c0_424 = arith.constant 0 : index
    %c0_425 = arith.constant 0 : index
    %1212 = vector.load %arg12[%1211, %c0_424, %c0_425] : memref<8x8x256xf32, #tpu.memory_space<vmem>>, vector<1x8x256xf32>
    %1213 = vector.shape_cast %1212 : vector<1x8x256xf32> to vector<8x256xf32>
    %1214 = arith.addf %1210, %1213 : vector<8x256xf32>
    %1215 = vector.extract_strided_slice %1214 {offsets = [0, 0], sizes = [8, 192], strides = [1, 1]} : vector<8x256xf32> to vector<8x192xf32>
    %1216 = arith.negf %1215 : vector<8x192xf32>
    %1217 = math.exp %1216 : vector<8x192xf32>
    %cst_426 = arith.constant 1.000000e+00 : f32
    %1218 = vector.broadcast %cst_426 : f32 to vector<8x192xf32>
    %1219 = arith.addf %1218, %1217 : vector<8x192xf32>
    %1220 = arith.divf %1218, %1219 : vector<8x192xf32>
    %1221 = vector.extract_strided_slice %1214 {offsets = [0, 192], sizes = [8, 64], strides = [1, 1]} : vector<8x256xf32> to vector<8x64xf32>
    %1222 = math.tanh %1221 : vector<8x64xf32>
    %1223 = vector.extract_strided_slice %1220 {offsets = [0, 64], sizes = [8, 64], strides = [1, 1]} : vector<8x192xf32> to vector<8x64xf32>
    %1224 = arith.mulf %1223, %1194 : vector<8x64xf32>
    %1225 = vector.extract_strided_slice %1220 {offsets = [0, 0], sizes = [8, 64], strides = [1, 1]} : vector<8x192xf32> to vector<8x64xf32>
    %1226 = arith.mulf %1225, %1222 : vector<8x64xf32>
    %1227 = arith.addf %1224, %1226 : vector<8x64xf32>
    %1228 = vector.extract_strided_slice %1220 {offsets = [0, 128], sizes = [8, 64], strides = [1, 1]} : vector<8x192xf32> to vector<8x64xf32>
    %1229 = math.tanh %1227 : vector<8x64xf32>
    %1230 = arith.mulf %1228, %1229 : vector<8x64xf32>
    %1231 = vector.extract_strided_slice %1230 {offsets = [0, 0], sizes = [8, 32], strides = [1, 1]} : vector<8x64xf32> to vector<8x32xf32>
    %1232 = arith.index_cast %c2_i32_422 : i32 to index
    %c0_427 = arith.constant 0 : index
    %c0_428 = arith.constant 0 : index
    %1233 = vector.load %arg13[%1232, %c0_427, %c0_428] : memref<8x8x32xf32, #tpu.memory_space<vmem>>, vector<1x8x32xf32>
    %1234 = vector.shape_cast %1233 : vector<1x8x32xf32> to vector<8x32xf32>
    %1235 = vector.shape_cast %1231 : vector<8x32xf32> to vector<1x8x32xf32>
    tpu.vector_store %arg13[%1232, %c0_427, %c0_428], %1235 {strides = array<i32>} : memref<8x8x32xf32, #tpu.memory_space<vmem>>, vector<1x8x32xf32>,
    %1236 = vector.extract_strided_slice %1230 {offsets = [0, 32], sizes = [8, 32], strides = [1, 1]} : vector<8x64xf32> to vector<8x32xf32>
    %c7_i32_429 = arith.constant 7 : i32
    %1237 = arith.subi %c7_i32_429, %c2_i32_422 : i32
    %1238 = arith.index_cast %1237 : i32 to index
    %c0_430 = arith.constant 0 : index
    %c0_431 = arith.constant 0 : index
    %1239 = vector.load %arg14[%1238, %c0_430, %c0_431] : memref<8x8x32xf32, #tpu.memory_space<vmem>>, vector<1x8x32xf32>
    %1240 = vector.shape_cast %1239 : vector<1x8x32xf32> to vector<8x32xf32>
    %1241 = vector.shape_cast %1236 : vector<8x32xf32> to vector<1x8x32xf32>
    tpu.vector_store %arg14[%1238, %c0_430, %c0_431], %1241 {strides = array<i32>} : memref<8x8x32xf32, #tpu.memory_space<vmem>>, vector<1x8x32xf32>,
    %c3_i32_432 = arith.constant 3 : i32
    %1242 = arith.truncf %1230 : vector<8x64xf32> to vector<8x64xbf16>
    %cst_433 = arith.constant dense<0.000000e+00> : vector<8x256xf32>
    %1243 = tpu.matmul %1242, %1141, %cst_433 {dimension_numbers = #tpu.dot_dimension_numbers<[1], [0], [0], [1], [0, 0, 1, 1], [], []>} : vector<8x64xbf16>, vector<64x256xbf16>, vector<8x256xf32> -> vector<8x256xf32>
    %1244 = arith.index_cast %c3_i32_432 : i32 to index
    %c0_434 = arith.constant 0 : index
    %c0_435 = arith.constant 0 : index
    %1245 = vector.load %arg12[%1244, %c0_434, %c0_435] : memref<8x8x256xf32, #tpu.memory_space<vmem>>, vector<1x8x256xf32>
    %1246 = vector.shape_cast %1245 : vector<1x8x256xf32> to vector<8x256xf32>
    %1247 = arith.addf %1243, %1246 : vector<8x256xf32>
    %1248 = vector.extract_strided_slice %1247 {offsets = [0, 0], sizes = [8, 192], strides = [1, 1]} : vector<8x256xf32> to vector<8x192xf32>
    %1249 = arith.negf %1248 : vector<8x192xf32>
    %1250 = math.exp %1249 : vector<8x192xf32>
    %cst_436 = arith.constant 1.000000e+00 : f32
    %1251 = vector.broadcast %cst_436 : f32 to vector<8x192xf32>
    %1252 = arith.addf %1251, %1250 : vector<8x192xf32>
    %1253 = arith.divf %1251, %1252 : vector<8x192xf32>
    %1254 = vector.extract_strided_slice %1247 {offsets = [0, 192], sizes = [8, 64], strides = [1, 1]} : vector<8x256xf32> to vector<8x64xf32>
    %1255 = math.tanh %1254 : vector<8x64xf32>
    %1256 = vector.extract_strided_slice %1253 {offsets = [0, 64], sizes = [8, 64], strides = [1, 1]} : vector<8x192xf32> to vector<8x64xf32>
    %1257 = arith.mulf %1256, %1227 : vector<8x64xf32>
    %1258 = vector.extract_strided_slice %1253 {offsets = [0, 0], sizes = [8, 64], strides = [1, 1]} : vector<8x192xf32> to vector<8x64xf32>
    %1259 = arith.mulf %1258, %1255 : vector<8x64xf32>
    %1260 = arith.addf %1257, %1259 : vector<8x64xf32>
    %1261 = vector.extract_strided_slice %1253 {offsets = [0, 128], sizes = [8, 64], strides = [1, 1]} : vector<8x192xf32> to vector<8x64xf32>
    %1262 = math.tanh %1260 : vector<8x64xf32>
    %1263 = arith.mulf %1261, %1262 : vector<8x64xf32>
    %1264 = vector.extract_strided_slice %1263 {offsets = [0, 0], sizes = [8, 32], strides = [1, 1]} : vector<8x64xf32> to vector<8x32xf32>
    %1265 = arith.index_cast %c3_i32_432 : i32 to index
    %c0_437 = arith.constant 0 : index
    %c0_438 = arith.constant 0 : index
    %1266 = vector.load %arg13[%1265, %c0_437, %c0_438] : memref<8x8x32xf32, #tpu.memory_space<vmem>>, vector<1x8x32xf32>
    %1267 = vector.shape_cast %1266 : vector<1x8x32xf32> to vector<8x32xf32>
    %1268 = vector.shape_cast %1264 : vector<8x32xf32> to vector<1x8x32xf32>
    tpu.vector_store %arg13[%1265, %c0_437, %c0_438], %1268 {strides = array<i32>} : memref<8x8x32xf32, #tpu.memory_space<vmem>>, vector<1x8x32xf32>,
    %1269 = vector.extract_strided_slice %1263 {offsets = [0, 32], sizes = [8, 32], strides = [1, 1]} : vector<8x64xf32> to vector<8x32xf32>
    %c7_i32_439 = arith.constant 7 : i32
    %1270 = arith.subi %c7_i32_439, %c3_i32_432 : i32
    %1271 = arith.index_cast %1270 : i32 to index
    %c0_440 = arith.constant 0 : index
    %c0_441 = arith.constant 0 : index
    %1272 = vector.load %arg14[%1271, %c0_440, %c0_441] : memref<8x8x32xf32, #tpu.memory_space<vmem>>, vector<1x8x32xf32>
    %1273 = vector.shape_cast %1272 : vector<1x8x32xf32> to vector<8x32xf32>
    %1274 = vector.shape_cast %1269 : vector<8x32xf32> to vector<1x8x32xf32>
    tpu.vector_store %arg14[%1271, %c0_440, %c0_441], %1274 {strides = array<i32>} : memref<8x8x32xf32, #tpu.memory_space<vmem>>, vector<1x8x32xf32>,
    %c4_i32_442 = arith.constant 4 : i32
    %1275 = arith.truncf %1263 : vector<8x64xf32> to vector<8x64xbf16>
    %cst_443 = arith.constant dense<0.000000e+00> : vector<8x256xf32>
    %1276 = tpu.matmul %1275, %1141, %cst_443 {dimension_numbers = #tpu.dot_dimension_numbers<[1], [0], [0], [1], [0, 0, 1, 1], [], []>} : vector<8x64xbf16>, vector<64x256xbf16>, vector<8x256xf32> -> vector<8x256xf32>
    %1277 = arith.index_cast %c4_i32_442 : i32 to index
    %c0_444 = arith.constant 0 : index
    %c0_445 = arith.constant 0 : index
    %1278 = vector.load %arg12[%1277, %c0_444, %c0_445] : memref<8x8x256xf32, #tpu.memory_space<vmem>>, vector<1x8x256xf32>
    %1279 = vector.shape_cast %1278 : vector<1x8x256xf32> to vector<8x256xf32>
    %1280 = arith.addf %1276, %1279 : vector<8x256xf32>
    %1281 = vector.extract_strided_slice %1280 {offsets = [0, 0], sizes = [8, 192], strides = [1, 1]} : vector<8x256xf32> to vector<8x192xf32>
    %1282 = arith.negf %1281 : vector<8x192xf32>
    %1283 = math.exp %1282 : vector<8x192xf32>
    %cst_446 = arith.constant 1.000000e+00 : f32
    %1284 = vector.broadcast %cst_446 : f32 to vector<8x192xf32>
    %1285 = arith.addf %1284, %1283 : vector<8x192xf32>
    %1286 = arith.divf %1284, %1285 : vector<8x192xf32>
    %1287 = vector.extract_strided_slice %1280 {offsets = [0, 192], sizes = [8, 64], strides = [1, 1]} : vector<8x256xf32> to vector<8x64xf32>
    %1288 = math.tanh %1287 : vector<8x64xf32>
    %1289 = vector.extract_strided_slice %1286 {offsets = [0, 64], sizes = [8, 64], strides = [1, 1]} : vector<8x192xf32> to vector<8x64xf32>
    %1290 = arith.mulf %1289, %1260 : vector<8x64xf32>
    %1291 = vector.extract_strided_slice %1286 {offsets = [0, 0], sizes = [8, 64], strides = [1, 1]} : vector<8x192xf32> to vector<8x64xf32>
    %1292 = arith.mulf %1291, %1288 : vector<8x64xf32>
    %1293 = arith.addf %1290, %1292 : vector<8x64xf32>
    %1294 = vector.extract_strided_slice %1286 {offsets = [0, 128], sizes = [8, 64], strides = [1, 1]} : vector<8x192xf32> to vector<8x64xf32>
    %1295 = math.tanh %1293 : vector<8x64xf32>
    %1296 = arith.mulf %1294, %1295 : vector<8x64xf32>
    %1297 = vector.extract_strided_slice %1296 {offsets = [0, 0], sizes = [8, 32], strides = [1, 1]} : vector<8x64xf32> to vector<8x32xf32>
    %1298 = arith.index_cast %c4_i32_442 : i32 to index
    %c0_447 = arith.constant 0 : index
    %c0_448 = arith.constant 0 : index
    %1299 = vector.load %arg13[%1298, %c0_447, %c0_448] : memref<8x8x32xf32, #tpu.memory_space<vmem>>, vector<1x8x32xf32>
    %1300 = vector.shape_cast %1299 : vector<1x8x32xf32> to vector<8x32xf32>
    %1301 = vector.shape_cast %1297 : vector<8x32xf32> to vector<1x8x32xf32>
    tpu.vector_store %arg13[%1298, %c0_447, %c0_448], %1301 {strides = array<i32>} : memref<8x8x32xf32, #tpu.memory_space<vmem>>, vector<1x8x32xf32>,
    %1302 = vector.extract_strided_slice %1296 {offsets = [0, 32], sizes = [8, 32], strides = [1, 1]} : vector<8x64xf32> to vector<8x32xf32>
    %c7_i32_449 = arith.constant 7 : i32
    %1303 = arith.subi %c7_i32_449, %c4_i32_442 : i32
    %1304 = arith.index_cast %1303 : i32 to index
    %c0_450 = arith.constant 0 : index
    %c0_451 = arith.constant 0 : index
    %1305 = vector.load %arg14[%1304, %c0_450, %c0_451] : memref<8x8x32xf32, #tpu.memory_space<vmem>>, vector<1x8x32xf32>
    %1306 = vector.shape_cast %1305 : vector<1x8x32xf32> to vector<8x32xf32>
    %1307 = vector.shape_cast %1302 : vector<8x32xf32> to vector<1x8x32xf32>
    tpu.vector_store %arg14[%1304, %c0_450, %c0_451], %1307 {strides = array<i32>} : memref<8x8x32xf32, #tpu.memory_space<vmem>>, vector<1x8x32xf32>,
    %c5_i32_452 = arith.constant 5 : i32
    %1308 = arith.truncf %1296 : vector<8x64xf32> to vector<8x64xbf16>
    %cst_453 = arith.constant dense<0.000000e+00> : vector<8x256xf32>
    %1309 = tpu.matmul %1308, %1141, %cst_453 {dimension_numbers = #tpu.dot_dimension_numbers<[1], [0], [0], [1], [0, 0, 1, 1], [], []>} : vector<8x64xbf16>, vector<64x256xbf16>, vector<8x256xf32> -> vector<8x256xf32>
    %1310 = arith.index_cast %c5_i32_452 : i32 to index
    %c0_454 = arith.constant 0 : index
    %c0_455 = arith.constant 0 : index
    %1311 = vector.load %arg12[%1310, %c0_454, %c0_455] : memref<8x8x256xf32, #tpu.memory_space<vmem>>, vector<1x8x256xf32>
    %1312 = vector.shape_cast %1311 : vector<1x8x256xf32> to vector<8x256xf32>
    %1313 = arith.addf %1309, %1312 : vector<8x256xf32>
    %1314 = vector.extract_strided_slice %1313 {offsets = [0, 0], sizes = [8, 192], strides = [1, 1]} : vector<8x256xf32> to vector<8x192xf32>
    %1315 = arith.negf %1314 : vector<8x192xf32>
    %1316 = math.exp %1315 : vector<8x192xf32>
    %cst_456 = arith.constant 1.000000e+00 : f32
    %1317 = vector.broadcast %cst_456 : f32 to vector<8x192xf32>
    %1318 = arith.addf %1317, %1316 : vector<8x192xf32>
    %1319 = arith.divf %1317, %1318 : vector<8x192xf32>
    %1320 = vector.extract_strided_slice %1313 {offsets = [0, 192], sizes = [8, 64], strides = [1, 1]} : vector<8x256xf32> to vector<8x64xf32>
    %1321 = math.tanh %1320 : vector<8x64xf32>
    %1322 = vector.extract_strided_slice %1319 {offsets = [0, 64], sizes = [8, 64], strides = [1, 1]} : vector<8x192xf32> to vector<8x64xf32>
    %1323 = arith.mulf %1322, %1293 : vector<8x64xf32>
    %1324 = vector.extract_strided_slice %1319 {offsets = [0, 0], sizes = [8, 64], strides = [1, 1]} : vector<8x192xf32> to vector<8x64xf32>
    %1325 = arith.mulf %1324, %1321 : vector<8x64xf32>
    %1326 = arith.addf %1323, %1325 : vector<8x64xf32>
    %1327 = vector.extract_strided_slice %1319 {offsets = [0, 128], sizes = [8, 64], strides = [1, 1]} : vector<8x192xf32> to vector<8x64xf32>
    %1328 = math.tanh %1326 : vector<8x64xf32>
    %1329 = arith.mulf %1327, %1328 : vector<8x64xf32>
    %1330 = vector.extract_strided_slice %1329 {offsets = [0, 0], sizes = [8, 32], strides = [1, 1]} : vector<8x64xf32> to vector<8x32xf32>
    %1331 = arith.index_cast %c5_i32_452 : i32 to index
    %c0_457 = arith.constant 0 : index
    %c0_458 = arith.constant 0 : index
    %1332 = vector.load %arg13[%1331, %c0_457, %c0_458] : memref<8x8x32xf32, #tpu.memory_space<vmem>>, vector<1x8x32xf32>
    %1333 = vector.shape_cast %1332 : vector<1x8x32xf32> to vector<8x32xf32>
    %1334 = vector.shape_cast %1330 : vector<8x32xf32> to vector<1x8x32xf32>
    tpu.vector_store %arg13[%1331, %c0_457, %c0_458], %1334 {strides = array<i32>} : memref<8x8x32xf32, #tpu.memory_space<vmem>>, vector<1x8x32xf32>,
    %1335 = vector.extract_strided_slice %1329 {offsets = [0, 32], sizes = [8, 32], strides = [1, 1]} : vector<8x64xf32> to vector<8x32xf32>
    %c7_i32_459 = arith.constant 7 : i32
    %1336 = arith.subi %c7_i32_459, %c5_i32_452 : i32
    %1337 = arith.index_cast %1336 : i32 to index
    %c0_460 = arith.constant 0 : index
    %c0_461 = arith.constant 0 : index
    %1338 = vector.load %arg14[%1337, %c0_460, %c0_461] : memref<8x8x32xf32, #tpu.memory_space<vmem>>, vector<1x8x32xf32>
    %1339 = vector.shape_cast %1338 : vector<1x8x32xf32> to vector<8x32xf32>
    %1340 = vector.shape_cast %1335 : vector<8x32xf32> to vector<1x8x32xf32>
    tpu.vector_store %arg14[%1337, %c0_460, %c0_461], %1340 {strides = array<i32>} : memref<8x8x32xf32, #tpu.memory_space<vmem>>, vector<1x8x32xf32>,
    %c6_i32_462 = arith.constant 6 : i32
    %1341 = arith.truncf %1329 : vector<8x64xf32> to vector<8x64xbf16>
    %cst_463 = arith.constant dense<0.000000e+00> : vector<8x256xf32>
    %1342 = tpu.matmul %1341, %1141, %cst_463 {dimension_numbers = #tpu.dot_dimension_numbers<[1], [0], [0], [1], [0, 0, 1, 1], [], []>} : vector<8x64xbf16>, vector<64x256xbf16>, vector<8x256xf32> -> vector<8x256xf32>
    %1343 = arith.index_cast %c6_i32_462 : i32 to index
    %c0_464 = arith.constant 0 : index
    %c0_465 = arith.constant 0 : index
    %1344 = vector.load %arg12[%1343, %c0_464, %c0_465] : memref<8x8x256xf32, #tpu.memory_space<vmem>>, vector<1x8x256xf32>
    %1345 = vector.shape_cast %1344 : vector<1x8x256xf32> to vector<8x256xf32>
    %1346 = arith.addf %1342, %1345 : vector<8x256xf32>
    %1347 = vector.extract_strided_slice %1346 {offsets = [0, 0], sizes = [8, 192], strides = [1, 1]} : vector<8x256xf32> to vector<8x192xf32>
    %1348 = arith.negf %1347 : vector<8x192xf32>
    %1349 = math.exp %1348 : vector<8x192xf32>
    %cst_466 = arith.constant 1.000000e+00 : f32
    %1350 = vector.broadcast %cst_466 : f32 to vector<8x192xf32>
    %1351 = arith.addf %1350, %1349 : vector<8x192xf32>
    %1352 = arith.divf %1350, %1351 : vector<8x192xf32>
    %1353 = vector.extract_strided_slice %1346 {offsets = [0, 192], sizes = [8, 64], strides = [1, 1]} : vector<8x256xf32> to vector<8x64xf32>
    %1354 = math.tanh %1353 : vector<8x64xf32>
    %1355 = vector.extract_strided_slice %1352 {offsets = [0, 64], sizes = [8, 64], strides = [1, 1]} : vector<8x192xf32> to vector<8x64xf32>
    %1356 = arith.mulf %1355, %1326 : vector<8x64xf32>
    %1357 = vector.extract_strided_slice %1352 {offsets = [0, 0], sizes = [8, 64], strides = [1, 1]} : vector<8x192xf32> to vector<8x64xf32>
    %1358 = arith.mulf %1357, %1354 : vector<8x64xf32>
    %1359 = arith.addf %1356, %1358 : vector<8x64xf32>
    %1360 = vector.extract_strided_slice %1352 {offsets = [0, 128], sizes = [8, 64], strides = [1, 1]} : vector<8x192xf32> to vector<8x64xf32>
    %1361 = math.tanh %1359 : vector<8x64xf32>
    %1362 = arith.mulf %1360, %1361 : vector<8x64xf32>
    %1363 = vector.extract_strided_slice %1362 {offsets = [0, 0], sizes = [8, 32], strides = [1, 1]} : vector<8x64xf32> to vector<8x32xf32>
    %1364 = arith.index_cast %c6_i32_462 : i32 to index
    %c0_467 = arith.constant 0 : index
    %c0_468 = arith.constant 0 : index
    %1365 = vector.load %arg13[%1364, %c0_467, %c0_468] : memref<8x8x32xf32, #tpu.memory_space<vmem>>, vector<1x8x32xf32>
    %1366 = vector.shape_cast %1365 : vector<1x8x32xf32> to vector<8x32xf32>
    %1367 = vector.shape_cast %1363 : vector<8x32xf32> to vector<1x8x32xf32>
    tpu.vector_store %arg13[%1364, %c0_467, %c0_468], %1367 {strides = array<i32>} : memref<8x8x32xf32, #tpu.memory_space<vmem>>, vector<1x8x32xf32>,
    %1368 = vector.extract_strided_slice %1362 {offsets = [0, 32], sizes = [8, 32], strides = [1, 1]} : vector<8x64xf32> to vector<8x32xf32>
    %c7_i32_469 = arith.constant 7 : i32
    %1369 = arith.subi %c7_i32_469, %c6_i32_462 : i32
    %1370 = arith.index_cast %1369 : i32 to index
    %c0_470 = arith.constant 0 : index
    %c0_471 = arith.constant 0 : index
    %1371 = vector.load %arg14[%1370, %c0_470, %c0_471] : memref<8x8x32xf32, #tpu.memory_space<vmem>>, vector<1x8x32xf32>
    %1372 = vector.shape_cast %1371 : vector<1x8x32xf32> to vector<8x32xf32>
    %1373 = vector.shape_cast %1368 : vector<8x32xf32> to vector<1x8x32xf32>
    tpu.vector_store %arg14[%1370, %c0_470, %c0_471], %1373 {strides = array<i32>} : memref<8x8x32xf32, #tpu.memory_space<vmem>>, vector<1x8x32xf32>,
    %c7_i32_472 = arith.constant 7 : i32
    %1374 = arith.truncf %1362 : vector<8x64xf32> to vector<8x64xbf16>
    %cst_473 = arith.constant dense<0.000000e+00> : vector<8x256xf32>
    %1375 = tpu.matmul %1374, %1141, %cst_473 {dimension_numbers = #tpu.dot_dimension_numbers<[1], [0], [0], [1], [0, 0, 1, 1], [], []>} : vector<8x64xbf16>, vector<64x256xbf16>, vector<8x256xf32> -> vector<8x256xf32>
    %1376 = arith.index_cast %c7_i32_472 : i32 to index
    %c0_474 = arith.constant 0 : index
    %c0_475 = arith.constant 0 : index
    %1377 = vector.load %arg12[%1376, %c0_474, %c0_475] : memref<8x8x256xf32, #tpu.memory_space<vmem>>, vector<1x8x256xf32>
    %1378 = vector.shape_cast %1377 : vector<1x8x256xf32> to vector<8x256xf32>
    %1379 = arith.addf %1375, %1378 : vector<8x256xf32>
    %1380 = vector.extract_strided_slice %1379 {offsets = [0, 0], sizes = [8, 192], strides = [1, 1]} : vector<8x256xf32> to vector<8x192xf32>
    %1381 = arith.negf %1380 : vector<8x192xf32>
    %1382 = math.exp %1381 : vector<8x192xf32>
    %cst_476 = arith.constant 1.000000e+00 : f32
    %1383 = vector.broadcast %cst_476 : f32 to vector<8x192xf32>
    %1384 = arith.addf %1383, %1382 : vector<8x192xf32>
    %1385 = arith.divf %1383, %1384 : vector<8x192xf32>
    %1386 = vector.extract_strided_slice %1379 {offsets = [0, 192], sizes = [8, 64], strides = [1, 1]} : vector<8x256xf32> to vector<8x64xf32>
    %1387 = math.tanh %1386 : vector<8x64xf32>
    %1388 = vector.extract_strided_slice %1385 {offsets = [0, 64], sizes = [8, 64], strides = [1, 1]} : vector<8x192xf32> to vector<8x64xf32>
    %1389 = arith.mulf %1388, %1359 : vector<8x64xf32>
    %1390 = vector.extract_strided_slice %1385 {offsets = [0, 0], sizes = [8, 64], strides = [1, 1]} : vector<8x192xf32> to vector<8x64xf32>
    %1391 = arith.mulf %1390, %1387 : vector<8x64xf32>
    %1392 = arith.addf %1389, %1391 : vector<8x64xf32>
    %1393 = vector.extract_strided_slice %1385 {offsets = [0, 128], sizes = [8, 64], strides = [1, 1]} : vector<8x192xf32> to vector<8x64xf32>
    %1394 = math.tanh %1392 : vector<8x64xf32>
    %1395 = arith.mulf %1393, %1394 : vector<8x64xf32>
    %1396 = vector.extract_strided_slice %1395 {offsets = [0, 0], sizes = [8, 32], strides = [1, 1]} : vector<8x64xf32> to vector<8x32xf32>
    %1397 = arith.index_cast %c7_i32_472 : i32 to index
    %c0_477 = arith.constant 0 : index
    %c0_478 = arith.constant 0 : index
    %1398 = vector.load %arg13[%1397, %c0_477, %c0_478] : memref<8x8x32xf32, #tpu.memory_space<vmem>>, vector<1x8x32xf32>
    %1399 = vector.shape_cast %1398 : vector<1x8x32xf32> to vector<8x32xf32>
    %1400 = vector.shape_cast %1396 : vector<8x32xf32> to vector<1x8x32xf32>
    tpu.vector_store %arg13[%1397, %c0_477, %c0_478], %1400 {strides = array<i32>} : memref<8x8x32xf32, #tpu.memory_space<vmem>>, vector<1x8x32xf32>,
    %1401 = vector.extract_strided_slice %1395 {offsets = [0, 32], sizes = [8, 32], strides = [1, 1]} : vector<8x64xf32> to vector<8x32xf32>
    %c7_i32_479 = arith.constant 7 : i32
    %1402 = arith.subi %c7_i32_479, %c7_i32_472 : i32
    %1403 = arith.index_cast %1402 : i32 to index
    %c0_480 = arith.constant 0 : index
    %c0_481 = arith.constant 0 : index
    %1404 = vector.load %arg14[%1403, %c0_480, %c0_481] : memref<8x8x32xf32, #tpu.memory_space<vmem>>, vector<1x8x32xf32>
    %1405 = vector.shape_cast %1404 : vector<1x8x32xf32> to vector<8x32xf32>
    %1406 = vector.shape_cast %1401 : vector<8x32xf32> to vector<1x8x32xf32>
    tpu.vector_store %arg14[%1403, %c0_480, %c0_481], %1406 {strides = array<i32>} : memref<8x8x32xf32, #tpu.memory_space<vmem>>, vector<1x8x32xf32>,
    %c8_i32_482 = arith.constant 8 : i32
    %c7_483 = arith.constant 7 : index
    %c0_484 = arith.constant 0 : index
    %c0_485 = arith.constant 0 : index
    %1407 = vector.load %arg13[%c7_483, %c0_484, %c0_485] : memref<8x8x32xf32, #tpu.memory_space<vmem>>, vector<1x8x32xf32>
    %1408 = vector.shape_cast %1407 : vector<1x8x32xf32> to vector<8x32xf32>
    %c7_486 = arith.constant 7 : index
    %c0_487 = arith.constant 0 : index
    %c0_488 = arith.constant 0 : index
    %1409 = vector.load %arg14[%c7_486, %c0_487, %c0_488] : memref<8x8x32xf32, #tpu.memory_space<vmem>>, vector<1x8x32xf32>
    %1410 = vector.shape_cast %1409 : vector<1x8x32xf32> to vector<8x32xf32>
    %1411 = tpu.concatenate %1408, %1410 in 1 : vector<8x32xf32>, vector<8x32xf32> -> vector<8x64xf32>
    %cst_489 = arith.constant 0.000000e+00 : f32
    %1412 = vector.broadcast %cst_489 : f32 to vector<8x64xf32>
    %1413 = arith.maximumf %1411, %1412 : vector<8x64xf32>
    %c0_490 = arith.constant 0 : index
    %c0_491 = arith.constant 0 : index
    %1414 = vector.load %arg7[%c0_490, %c0_491] : memref<1x64xf32, #tpu.memory_space<vmem>>, vector<1x64xf32>
    %1415 = vector.broadcast %1414 : vector<1x64xf32> to vector<8x64xf32>
    %1416 = arith.mulf %1413, %1415 : vector<8x64xf32>
    %c0_492 = arith.constant 0 : index
    %c0_493 = arith.constant 0 : index
    %1417 = vector.load %arg8[%c0_492, %c0_493] : memref<1x64xf32, #tpu.memory_space<vmem>>, vector<1x64xf32>
    %1418 = vector.broadcast %1417 : vector<1x64xf32> to vector<8x64xf32>
    %1419 = arith.addf %1416, %1418 : vector<8x64xf32>
    %1420 = arith.truncf %1419 : vector<8x64xf32> to vector<8x64xbf16>
    %c0_494 = arith.constant 0 : index
    %c0_495 = arith.constant 0 : index
    %1421 = vector.load %arg9[%c0_494, %c0_495] : memref<64x10xbf16, #tpu.memory_space<vmem>>, vector<64x10xbf16>
    %cst_496 = arith.constant dense<0.000000e+00> : vector<8x10xf32>
    %1422 = tpu.matmul %1420, %1421, %cst_496 {dimension_numbers = #tpu.dot_dimension_numbers<[1], [0], [0], [1], [0, 0, 1, 1], [], []>} : vector<8x64xbf16>, vector<64x10xbf16>, vector<8x10xf32> -> vector<8x10xf32>
    %c0_497 = arith.constant 0 : index
    %c0_498 = arith.constant 0 : index
    %1423 = vector.load %arg10[%c0_497, %c0_498] : memref<1x10xf32, #tpu.memory_space<vmem>>, vector<1x10xf32>
    %1424 = vector.broadcast %1423 : vector<1x10xf32> to vector<8x10xf32>
    %1425 = arith.addf %1422, %1424 : vector<8x10xf32>
    %cst_499 = arith.constant dense<0xFF800000> : vector<8xf32>
    %1426 = vector.multi_reduction <maximumf>, %1425, %cst_499 [1] : vector<8x10xf32> to vector<8xf32>
    %1427 = vector.shape_cast %1426 : vector<8xf32> to vector<8x1xf32>
    %1428 = vector.broadcast %1427 : vector<8x1xf32> to vector<8x10xf32>
    %1429 = arith.subf %1425, %1428 : vector<8x10xf32>
    %1430 = math.exp %1429 : vector<8x10xf32>
    %cst_500 = arith.constant dense<0.000000e+00> : vector<8xf32>
    %1431 = vector.multi_reduction <add>, %1430, %cst_500 [1] : vector<8x10xf32> to vector<8xf32>
    %1432 = vector.shape_cast %1431 : vector<8xf32> to vector<8x1xf32>
    %1433 = vector.broadcast %1432 : vector<8x1xf32> to vector<8x10xf32>
    %1434 = arith.divf %1430, %1433 : vector<8x10xf32>
    %c0_501 = arith.constant 0 : index
    %c0_502 = arith.constant 0 : index
    %1435 = vector.load %arg11[%c0_501, %c0_502] : memref<8x10xf32, #tpu.memory_space<vmem>>, vector<8x10xf32>
    tpu.vector_store %arg11[%c0_501, %c0_502], %1434 {strides = array<i32>} : memref<8x10xf32, #tpu.memory_space<vmem>>, vector<8x10xf32>,
    return
  }
  func.func @transform_0(%arg0: i32) -> (i32, i32, i32) {
    %c0_i32 = arith.constant 0 : i32
    %c0_i32_0 = arith.constant 0 : i32
    %c0_i32_1 = arith.constant 0 : i32
    return %c0_i32, %arg0, %c0_i32_0 : i32, i32, i32
  }
  func.func @transform_1(%arg0: i32) -> (i32, i32) {
    %c0_i32 = arith.constant 0 : i32
    %c0_i32_0 = arith.constant 0 : i32
    %c0_i32_1 = arith.constant 0 : i32
    return %c0_i32, %c0_i32_0 : i32, i32
  }
  func.func @transform_2(%arg0: i32) -> (i32, i32, i32) {
    %c0_i32 = arith.constant 0 : i32
    %c0_i32_0 = arith.constant 0 : i32
    %c0_i32_1 = arith.constant 0 : i32
    %c0_i32_2 = arith.constant 0 : i32
    return %c0_i32, %c0_i32_0, %c0_i32_1 : i32, i32, i32
  }
  func.func @transform_3(%arg0: i32) -> (i32, i32, i32) {
    %c0_i32 = arith.constant 0 : i32
    %c0_i32_0 = arith.constant 0 : i32
    %c0_i32_1 = arith.constant 0 : i32
    %c0_i32_2 = arith.constant 0 : i32
    return %c0_i32, %c0_i32_0, %c0_i32_1 : i32, i32, i32
  }
  func.func @transform_4(%arg0: i32) -> (i32, i32, i32) {
    %c0_i32 = arith.constant 0 : i32
    %c0_i32_0 = arith.constant 0 : i32
    %c0_i32_1 = arith.constant 0 : i32
    %c0_i32_2 = arith.constant 0 : i32
    return %c0_i32, %c0_i32_0, %c0_i32_1 : i32, i32, i32
  }
  func.func @transform_5(%arg0: i32) -> (i32, i32, i32) {
    %c0_i32 = arith.constant 0 : i32
    %c0_i32_0 = arith.constant 0 : i32
    %c0_i32_1 = arith.constant 0 : i32
    %c0_i32_2 = arith.constant 0 : i32
    return %c0_i32, %c0_i32_0, %c0_i32_1 : i32, i32, i32
  }
  func.func @transform_6(%arg0: i32) -> (i32, i32) {
    %c0_i32 = arith.constant 0 : i32
    %c0_i32_0 = arith.constant 0 : i32
    %c0_i32_1 = arith.constant 0 : i32
    return %c0_i32, %c0_i32_0 : i32, i32
  }
  func.func @transform_7(%arg0: i32) -> (i32, i32) {
    %c0_i32 = arith.constant 0 : i32
    %c0_i32_0 = arith.constant 0 : i32
    %c0_i32_1 = arith.constant 0 : i32
    return %c0_i32, %c0_i32_0 : i32, i32
  }
  func.func @transform_8(%arg0: i32) -> (i32, i32) {
    %c0_i32 = arith.constant 0 : i32
    %c0_i32_0 = arith.constant 0 : i32
    %c0_i32_1 = arith.constant 0 : i32
    return %c0_i32, %c0_i32_0 : i32, i32
  }
  func.func @transform_9(%arg0: i32) -> (i32, i32) {
    %c0_i32 = arith.constant 0 : i32
    %c0_i32_0 = arith.constant 0 : i32
    %c0_i32_1 = arith.constant 0 : i32
    return %c0_i32, %c0_i32_0 : i32, i32
  }
  func.func @transform_10(%arg0: i32) -> (i32, i32) {
    %c0_i32 = arith.constant 0 : i32
    %c0_i32_0 = arith.constant 0 : i32
    return %arg0, %c0_i32 : i32, i32
  }
}

</mosaic_0001>

<llo_original>
// kernel: sequence_classifier_forward.1
$region0: #{sequence_classifier_forward.1}
  #allocation0 [shape = 'u32[]', space=smem, size = 0x4, offset = 0x4, fixed_abs, tag = 'smem constant byte address 0x4 - core index']
  #allocation1 [shape = 'u32[72,128]{1,0:T(1,128)}', space=vmem, size = 0x9000, scoped, tag = 'internal scratch']
  #allocation2 [shape = 'f32[8,8,256]{2,1,0:T(8,128)}', space=vmem, size = 0x10000, scoped, tag = 'scratch operand']
  #allocation3 [shape = 'f32[8,8,32]{2,1,0:T(8,128)}', space=vmem, size = 0x8000, scoped, tag = 'scratch operand']
  #allocation4 [shape = 'f32[8,8,32]{2,1,0:T(8,128)}', space=vmem, size = 0x8000, scoped, tag = 'scratch operand']
  %s0 = inlined_call_operand.vmem [shape: f32[8,8,16], index: 0, kind: input, shape index: {}]
  %s1 = inlined_call_operand.vmem [shape: bf16[16,256], index: 1, kind: input, shape index: {}]
  %s2 = inlined_call_operand.vmem [shape: bf16[3,32,256], index: 2, kind: input, shape index: {}]
  %s3 = inlined_call_operand.hbm [shape: bf16[3,32,256], index: 3, kind: input, shape index: {}]
  %s4 = inlined_call_operand.hbm [shape: bf16[4,64,256], index: 4, kind: input, shape index: {}]
  %s5 = inlined_call_operand.vmem [shape: f32[4,1,256], index: 5, kind: input, shape index: {}]
  %s6 = inlined_call_operand.vmem [shape: f32[1,64], index: 6, kind: input, shape index: {}]
  %s7 = inlined_call_operand.vmem [shape: f32[1,64], index: 7, kind: input, shape index: {}]
  %s8 = inlined_call_operand.vmem [shape: bf16[64,10], index: 8, kind: input, shape index: {}]
  %s9 = inlined_call_operand.vmem [shape: f32[1,10], index: 9, kind: input, shape index: {}]
  %s10 = inlined_call_operand.hbm [shape: f32[8,10], index: 10, kind: output, shape index: {}]
  %s11 = sld [smem:[#allocation0]]
  $region58: #{sequence_classifier_forward.1} parent=0
    _
  %s13 = ssub.s32 1, %s11
  %s14 = scalar_select 0, %s13, %s11
  $region1: #{sequence_classifier_forward.1} parent=0
    #allocation5 [shape = 'u8[49152]{0}', space=vmem, size = 0xc000, scoped, tag = 'input window, operand 3, single buffered']
    #allocation6 [shape = 's32[1]{0}', space=sflag, size = 0x4, scoped, tag = 'scoped memory for sequence_classifier_forward.1']
    #allocation7 [shape = 's32[1]{0}', space=sflag, size = 0x4, scoped, tag = 'scoped memory for sequence_classifier_forward.1']
    #allocation8 [shape = 'u8[131072]{0}', space=vmem, size = 0x20000, scoped, tag = 'input window, operand 4, single buffered']
    #allocation9 [shape = 's32[1]{0}', space=sflag, size = 0x4, scoped, tag = 'scoped memory for sequence_classifier_forward.1']
    #allocation10 [shape = 'u8[4096]{0}', space=vmem, size = 0x1000, scoped, tag = 'output window, operand 0, single buffered']
    %15 = vsyncpa [#allocation6], 0
    %16 = vsyncpa [#allocation9], 0
    %17 = vsyncpa [#allocation7], 0
    // Predicated region
    $region2: #{sequence_classifier_forward.1} parent=1 // pred_check
      _
    $region3: #{sequence_classifier_forward.1} parent=1 // pred_check_branch
      %19 = sbr.rel (0) target = $region5
    $region4: #{sequence_classifier_forward.1} parent=1 // pred_region
      _
    $region5: #{sequence_classifier_forward.1} parent=1 // pred_fallthru
      _
    // Predicated region
    $region6: #{sequence_classifier_forward.1} parent=1 // pred_check
      _
    $region7: #{sequence_classifier_forward.1} parent=1 // pred_check_branch
      %21 = sbr.rel (0) target = $region9
    $region8: #{sequence_classifier_forward.1} parent=1 // pred_region
      _
    $region9: #{sequence_classifier_forward.1} parent=1 // pred_fallthru
      _
    // Predicated region
    $region10: #{sequence_classifier_forward.1} parent=1 // pred_check
      _
    $region11: #{sequence_classifier_forward.1} parent=1 // pred_check_branch
      %23 = sbr.rel (0) target = $region13
    $region12: #{sequence_classifier_forward.1} parent=1 // pred_region
      _
    $region13: #{sequence_classifier_forward.1} parent=1 // pred_fallthru
      _
    // Predicated region
    $region14: #{sequence_classifier_forward.1} parent=1 // pred_check
      _
    $region15: #{sequence_classifier_forward.1} parent=1 // pred_check_branch
      %25 = sbr.rel (0) target = $region17
    $region16: #{sequence_classifier_forward.1} parent=1 // pred_region
      %27 = vsyncadd [#allocation6], 0
      %s28 = sshll.u32 %s3, 4
      %s29 = int_to_ptr.hbm [resolvable:$true] %s28
      %s30 = sshll.u32 [#allocation5], 4
      %s31 = int_to_ptr.vmem [resolvable:$true] %s30
      %36 = dma.hbm_to_vmem [thread:$0]  %s29, 1536, %s31, [#allocation6], 128, 128, 8
    $region17: #{sequence_classifier_forward.1} parent=1 // pred_fallthru
      _
    // Predicated region
    $region18: #{sequence_classifier_forward.1} parent=1 // pred_check
      _
    $region19: #{sequence_classifier_forward.1} parent=1 // pred_check_branch
      %38 = sbr.rel (0) target = $region21
    $region20: #{sequence_classifier_forward.1} parent=1 // pred_region
      %40 = vsyncadd [#allocation9], 0
      %s41 = sshll.u32 %s4, 4
      %s42 = int_to_ptr.hbm [resolvable:$true] %s41
      %s43 = sshll.u32 [#allocation8], 4
      %s44 = int_to_ptr.vmem [resolvable:$true] %s43
      %49 = dma.hbm_to_vmem [thread:$0]  %s42, 4096, %s44, [#allocation9], 128, 128, 8
    $region21: #{sequence_classifier_forward.1} parent=1 // pred_fallthru
      _
    // Predicated region
    $region22: #{sequence_classifier_forward.1} parent=1 // pred_check
      _
    $region23: #{sequence_classifier_forward.1} parent=1 // pred_check_branch
      %51 = sbr.rel (0) target = $region25
    $region24: #{sequence_classifier_forward.1} parent=1 // pred_region
      _
    $region25: #{sequence_classifier_forward.1} parent=1 // pred_fallthru
      _
    // Predicated region
    $region26: #{sequence_classifier_forward.1} parent=1 // pred_check
      _
    $region27: #{sequence_classifier_forward.1} parent=1 // pred_check_branch
      %53 = sbr.rel (0) target = $region29
    $region28: #{sequence_classifier_forward.1} parent=1 // pred_region
      _
    $region29: #{sequence_classifier_forward.1} parent=1 // pred_fallthru
      _
    // Predicated region
    $region30: #{sequence_classifier_forward.1} parent=1 // pred_check
      _
    $region31: #{sequence_classifier_forward.1} parent=1 // pred_check_branch
      %55 = sbr.rel (0) target = $region33
    $region32: #{sequence_classifier_forward.1} parent=1 // pred_region
      _
    $region33: #{sequence_classifier_forward.1} parent=1 // pred_fallthru
      _
    // Predicated region
    $region34: #{sequence_classifier_forward.1} parent=1 // pred_check
      _
    $region35: #{sequence_classifier_forward.1} parent=1 // pred_check_branch
      %57 = sbr.rel (0) target = $region37
    $region36: #{sequence_classifier_forward.1} parent=1 // pred_region
      _
    $region37: #{sequence_classifier_forward.1} parent=1 // pred_fallthru
      _
    // Predicated region
    $region38: #{sequence_classifier_forward.1} parent=1 // pred_check
      _
    $region39: #{sequence_classifier_forward.1} parent=1 // pred_check_branch
      %59 = sbr.rel (0) target = $region41
    $region40: #{sequence_classifier_forward.1} parent=1 // pred_region
      _
    $region41: #{sequence_classifier_forward.1} parent=1 // pred_fallthru
      _
    // Predicated region
    $region42: #{sequence_classifier_forward.1} parent=1 // pred_check
      _
    $region43: #{sequence_classifier_forward.1} parent=1 // pred_check_branch
      %61 = sbr.rel (0) target = $region45
    $region44: #{sequence_classifier_forward.1} parent=1 // pred_region
      %63 = dma.done [#allocation6], 1536
    $region45: #{sequence_classifier_forward.1} parent=1 // pred_fallthru
      _
    // Predicated region
    $region46: #{sequence_classifier_forward.1} parent=1 // pred_check
      _
    $region47: #{sequence_classifier_forward.1} parent=1 // pred_check_branch
      %65 = sbr.rel (0) target = $region49
    $region48: #{sequence_classifier_forward.1} parent=1 // pred_region
      %67 = dma.done [#allocation9], 4096
    $region49: #{sequence_classifier_forward.1} parent=1 // pred_fallthru
      _
    %v69 = vlaneseq
    %v70 = vand.u32 %v69, 127
    %v71 = vadd.s32 %v70, 128
    %vm72 = vcmp.lt.s32.totalorder %v70, 0
    %v73 = vsub.s32 0, %v70
    %v74 = vsel %vm72, %v73, %v70
    %v75 = vshrl.u32 %v74, 6
    %v76 = vand.u32 %v74, 63
    %v77 = vsub.s32 0, %v76
    %v78 = vsel %vm72, %v77, %v76
    %vm79 = vcmp.lt.s32.totalorder %v71, 0
    %v80 = vsub.s32 0, %v71
    %v81 = vsel %vm79, %v80, %v71
    %v82 = vshrl.u32 %v81, 6
    %v83 = vand.u32 %v81, 63
    %v84 = vsub.s32 0, %v83
    %v85 = vsel %vm79, %v84, %v83
    %vm86 = vcmp.ne.s32.totalorder %v78, 0
    %vm87 = vcmp.ne.s32.totalorder %v85, 0
    %vm88 = vcmp.lt.s32.totalorder %v78, 0
    %vm89 = vcmp.lt.s32.totalorder %v85, 0
    %vm90 = vmand %vm88, %vm86
    %vm91 = vmand %vm89, %vm87
    %v92 = vadd.s32 %v78, 64
    %v93 = vadd.s32 %v85, 64
    %v94 = vsel %vm90, %v92, %v78
    %v95 = vsel %vm91, %v93, %v85
    %vm96 = vcmp.lt.s32.totalorder %v94, 32
    %vm97 = vcmp.lt.s32.totalorder %v95, 32
    %v98 = vld [vmem:[%s0] sm:$0xff]
    %v99 = vld [vmem:[%s0 + $0x8] sm:$0xff]
    %v100 = vld [vmem:[%s0 + $0x10] sm:$0xff]
    %v101 = vld [vmem:[%s0 + $0x18] sm:$0xff]
    %v102 = vld [vmem:[%s0 + $0x20] sm:$0xff]
    %v103 = vld [vmem:[%s0 + $0x28] sm:$0xff]
    %v104 = vld [vmem:[%s0 + $0x30] sm:$0xff]
    %v105 = vld [vmem:[%s0 + $0x38] sm:$0xff]
    %v106 = vpack.c.bf16 %v99, %v98
    %v107 = vpack.c.bf16 %v101, %v100
    %v108 = vpack.c.bf16 %v103, %v102
    %v109 = vpack.c.bf16 %v105, %v104
    %v110 = vld [vmem:[%s1] sm:$0xff]
    %v111 = vld [vmem:[%s1 + $0x8] sm:$0xff]
    %v112 = vld [vmem:[%s5] sm:$0x3]
    %v114 = vperm.slane %v112, 0
    %v115 = vperm.slane %v112, 1
    %v120 = vunpack.c.l.b16 %v110
    %v121 = vunpack.c.h.b16 %v110
    %v122 = vunpack.c.l.b16 %v111
    %v123 = vunpack.c.h.b16 %v111
    %v124 = vpack.c.b16 %v122, %v120
    %v125 = vpack.c.b16 %v123, %v121
    %vm128 = vcmask 130048
    %v130 = vsel %vm128, %v106, 0
    %v133 = vsel %vm128, %v107, 0
    %v136 = vsel %vm128, %v108, 0
    %v139 = vsel %vm128, %v109, 0
    %141 = vmatpush.bf16.msra.mxu0 0
    %142 = vmatpush.bf16.msra.mxu0 0
    %143 = vmatpush.bf16.msra.mxu0 0
    %144 = vmatpush.bf16.msra.mxu0 0
    %145 = vmatpush.bf16.msra.mxu0 0
    %146 = vmatpush.bf16.msra.mxu0 0
    %147 = vmatpush.bf16.msra.mxu0 0
    %148 = vmatpush.bf16.msra.mxu0 %v124
    %149 = vmatmul.bf16.gmra.mxu0 %v130
    %v150 = vpop.f32.mrf.mxu0
    %v151 = vadd.f32 %v114, %v150
    %v152 = vpop.f32.mrf.mxu0
    %v153 = vadd.f32 %v114, %v152
    %154 = vmatmul.bf16.gmra.mxu0 %v133
    %v155 = vpop.f32.mrf.mxu0
    %v156 = vadd.f32 %v114, %v155
    %v157 = vpop.f32.mrf.mxu0
    %v158 = vadd.f32 %v114, %v157
    %159 = vmatmul.bf16.gmra.mxu0 %v136
    %v160 = vpop.f32.mrf.mxu0
    %v161 = vadd.f32 %v114, %v160
    %v162 = vpop.f32.mrf.mxu0
    %v163 = vadd.f32 %v114, %v162
    %164 = vmatmul.bf16.gmra.mxu0 %v139
    %v165 = vpop.f32.mrf.mxu0
    %v166 = vadd.f32 %v114, %v165
    %v167 = vpop.f32.mrf.mxu0
    %v168 = vadd.f32 %v114, %v167
    %169 = vdwg.mxu0
    %170 = vmatpush.bf16.msra.mxu0 0
    %171 = vmatpush.bf16.msra.mxu0 0
    %172 = vmatpush.bf16.msra.mxu0 0
    %173 = vmatpush.bf16.msra.mxu0 0
    %174 = vmatpush.bf16.msra.mxu0 0
    %175 = vmatpush.bf16.msra.mxu0 0
    %176 = vmatpush.bf16.msra.mxu0 0
    %177 = vmatpush.bf16.msra.mxu0 %v125
    %178 = vmatmul.bf16.gmra.mxu0 %v130
    %v179 = vpop.f32.mrf.mxu0
    %v180 = vadd.f32 %v115, %v179
    %v181 = vpop.f32.mrf.mxu0
    %v182 = vadd.f32 %v115, %v181
    %183 = vmatmul.bf16.gmra.mxu0 %v133
    %v184 = vpop.f32.mrf.mxu0
    %v185 = vadd.f32 %v115, %v184
    %v186 = vpop.f32.mrf.mxu0
    %v187 = vadd.f32 %v115, %v186
    %188 = vmatmul.bf16.gmra.mxu0 %v136
    %v189 = vpop.f32.mrf.mxu0
    %v190 = vadd.f32 %v115, %v189
    %v191 = vpop.f32.mrf.mxu0
    %v192 = vadd.f32 %v115, %v191
    %193 = vmatmul.bf16.gmra.mxu0 %v139
    %v194 = vpop.f32.mrf.mxu0
    %v195 = vadd.f32 %v115, %v194
    %v196 = vpop.f32.mrf.mxu0
    %v197 = vadd.f32 %v115, %v196
    %198 = vdwg.mxu0
    %v199 = vsel %vm96, %v151, %v168
    %v200 = vsel %vm97, %v180, %v197
    %201 = vst [vmem:[#allocation2] sm:$0xff] %v199
    %202 = vst [vmem:[#allocation2 + $0x8] sm:$0xff] %v200
    %v203 = vsel %vm96, %v153, %v166
    %v204 = vsel %vm97, %v182, %v195
    %s205 = scalar_lea.vmem [#allocation2], 16
    %206 = vst [vmem:[%s205] sm:$0xff] %v203
    %207 = vst [vmem:[%s205 + $0x8] sm:$0xff] %v204
    %v208 = vsel %vm96, %v156, %v163
    %v209 = vsel %vm97, %v185, %v192
    %s210 = scalar_lea.vmem [#allocation2], 32
    %211 = vst [vmem:[%s210] sm:$0xff] %v208
    %212 = vst [vmem:[%s210 + $0x8] sm:$0xff] %v209
    %v213 = vsel %vm96, %v158, %v161
    %v214 = vsel %vm97, %v187, %v190
    %s215 = scalar_lea.vmem [#allocation2], 48
    %216 = vst [vmem:[%s215] sm:$0xff] %v213
    %217 = vst [vmem:[%s215 + $0x8] sm:$0xff] %v214
    %v218 = vsel %vm96, %v161, %v158
    %v219 = vsel %vm97, %v190, %v187
    %s220 = scalar_lea.vmem [#allocation2], 64
    %221 = vst [vmem:[%s220] sm:$0xff] %v218
    %222 = vst [vmem:[%s220 + $0x8] sm:$0xff] %v219
    %v223 = vsel %vm96, %v163, %v156
    %v224 = vsel %vm97, %v192, %v185
    %s225 = scalar_lea.vmem [#allocation2], 80
    %226 = vst [vmem:[%s225] sm:$0xff] %v223
    %227 = vst [vmem:[%s225 + $0x8] sm:$0xff] %v224
    %v228 = vsel %vm96, %v166, %v153
    %v229 = vsel %vm97, %v195, %v182
    %s230 = scalar_lea.vmem [#allocation2], 96
    %231 = vst [vmem:[%s230] sm:$0xff] %v228
    %232 = vst [vmem:[%s230 + $0x8] sm:$0xff] %v229
    %v233 = vsel %vm96, %v168, %v151
    %v234 = vsel %vm97, %v197, %v180
    %s235 = scalar_lea.vmem [#allocation2], 112
    %236 = vst [vmem:[%s235] sm:$0xff] %v233
    %237 = vst [vmem:[%s235 + $0x8] sm:$0xff] %v234
    %v238 = vld [vmem:[#allocation8] sm:$0xff]
    %v239 = vld [vmem:[#allocation8 + $0x8] sm:$0xff]
    %v240 = vld [vmem:[#allocation8 + $0x10] sm:$0xff]
    %v241 = vld [vmem:[#allocation8 + $0x18] sm:$0xff]
    %v242 = vld [vmem:[#allocation8 + $0x20] sm:$0xff]
    %v243 = vld [vmem:[#allocation8 + $0x28] sm:$0xff]
    %v244 = vld [vmem:[#allocation8 + $0x30] sm:$0xff]
    %v245 = vld [vmem:[#allocation8 + $0x38] sm:$0xff]
    %v246 = vld [vmem:[#allocation2] sm:$0xff]
    %v247 = vld [vmem:[#allocation2 + $0x8] sm:$0xff]
    %v256 = vunpack.c.l.b16 %v238
    %v257 = vunpack.c.h.b16 %v238
    %v258 = vunpack.c.l.b16 %v239
    %v259 = vunpack.c.h.b16 %v239
    %v260 = vunpack.c.l.b16 %v240
    %v261 = vunpack.c.h.b16 %v240
    %v262 = vunpack.c.l.b16 %v241
    %v263 = vunpack.c.h.b16 %v241
    %v264 = vunpack.c.l.b16 %v242
    %v265 = vunpack.c.h.b16 %v242
    %v266 = vunpack.c.l.b16 %v243
    %v267 = vunpack.c.h.b16 %v243
    %v268 = vunpack.c.l.b16 %v244
    %v269 = vunpack.c.h.b16 %v244
    %v270 = vunpack.c.l.b16 %v245
    %v271 = vunpack.c.h.b16 %v245
    %v272 = vpack.c.b16 %v258, %v256
    %v273 = vpack.c.b16 %v259, %v257
    %v274 = vpack.c.b16 %v262, %v260
    %v275 = vpack.c.b16 %v263, %v261
    %v276 = vpack.c.b16 %v266, %v264
    %v277 = vpack.c.b16 %v267, %v265
    %v278 = vpack.c.b16 %v270, %v268
    %v279 = vpack.c.b16 %v271, %v269
    %vm288 = vcmask 523264
    %v290 = vsel %vm288, 0, 0
    %292 = vmatpush.bf16.msra.mxu0 0
    %293 = vmatpush.bf16.msra.mxu0 0
    %294 = vmatpush.bf16.msra.mxu0 0
    %295 = vmatpush.bf16.msra.mxu0 0
    %296 = vmatpush.bf16.msra.mxu0 %v278
    %297 = vmatpush.bf16.msra.mxu0 %v276
    %298 = vmatpush.bf16.msra.mxu0 %v274
    %299 = vmatpush.bf16.msra.mxu0 %v272
    %300 = vmatmul.bf16.gmra.mxu0 %v290
    %v301 = vpop.f32.mrf.mxu0
    %v302 = vadd.f32 %v246, %v301
    %v303 = vpop.f32.mrf.mxu0
    %304 = vdwg.mxu0
    %305 = vmatpush.bf16.msra.mxu0 0
    %306 = vmatpush.bf16.msra.mxu0 0
    %307 = vmatpush.bf16.msra.mxu0 0
    %308 = vmatpush.bf16.msra.mxu0 0
    %309 = vmatpush.bf16.msra.mxu0 %v279
    %310 = vmatpush.bf16.msra.mxu0 %v277
    %311 = vmatpush.bf16.msra.mxu0 %v275
    %312 = vmatpush.bf16.msra.mxu0 %v273
    %313 = vmatmul.bf16.gmra.mxu0 %v290
    %v314 = vpop.f32.mrf.mxu0
    %v315 = vadd.f32 %v247, %v314
    %v316 = vpop.f32.mrf.mxu0
    %317 = vdwg.mxu0
    %v318 = vxor.u32 %v302, 2147483648
    %v319 = vxor.u32 %v315, 2147483648
    %v320 = vmul.f32 %v318, 1.442695
    %v321 = vpow.pop %v320
    %v322 = vmul.f32 %v319, 1.442695
    %v323 = vpow.pop %v322
    %v324 = vadd.f32 %v321, 1.0
    %v325 = vadd.f32 %v323, 1.0
    %v326 = vrcp.pop %v324
    %v327 = vmul.f32 %v324, %v326
    %v328 = vsub.f32 1.0, %v327
    %v329 = vmul.f32 %v326, %v328
    %v330 = vadd.f32 %v326, %v329
    %vm331 = vweird.f32 %v324
    %vm332 = vweird.f32 %v326
    %vm333 = vmor %vm331, %vm332
    %v334 = vsel %vm333, %v326, %v330
    %v335 = vand.u32 2147483647, %v324
    %vm336 = vcmp.eq.f32.partialorder %v335, 8.507059e+37
    %v337 = vand.u32 %v324, 2147483648
    %v338 = vor.u32 1.1754944e-38, %v337
    %v339 = vsel %vm336, %v338, %v334
    %v340 = vmul.f32 1.0, %v339
    %v341 = vrcp.pop %v325
    %v342 = vmul.f32 %v325, %v341
    %v343 = vsub.f32 1.0, %v342
    %v344 = vmul.f32 %v341, %v343
    %v345 = vadd.f32 %v341, %v344
    %vm346 = vweird.f32 %v325
    %vm347 = vweird.f32 %v341
    %vm348 = vmor %vm346, %vm347
    %v349 = vsel %vm348, %v341, %v345
    %v350 = vand.u32 2147483647, %v325
    %vm351 = vcmp.eq.f32.partialorder %v350, 8.507059e+37
    %v352 = vand.u32 %v325, 2147483648
    %v353 = vor.u32 1.1754944e-38, %v352
    %v354 = vsel %vm351, %v353, %v349
    %v355 = vmul.f32 1.0, %v354
    %v356 = vtanh.pop %v315
    %v357 = vmul.f32 %v340, 0.0
    %359 = vrot.lane.b32.xlu0 %v356, 64
    %v360 = vpop.permute.xlu0 %359
    %v362 = vmul.f32 %v340, %v360
    %364 = vrot.lane.b32.xlu0 %v362, 64
    %v365 = vpop.permute.xlu0 %364
    %v367 = vadd.f32 %v357, %v365
    %v368 = vtanh.pop %v367
    %370 = vrot.lane.b32.xlu0 %v368, 64
    %v371 = vpop.permute.xlu0 %370
    %v373 = vmul.f32 %v355, %v371
    %vm374 = vcmask 261120
    %375 = vst.msk [vmem:[#allocation3] sm:$0xff] %vm374, %v373
    %377 = vrot.lane.b32.xlu0 %v373, 96
    %v378 = vpop.permute.xlu0 %377
    %s380 = scalar_lea.vmem [#allocation4], 56
    %381 = vst.msk [vmem:[%s380] sm:$0xff] %vm374, %v378
    %v382 = vpack.c.bf16 %v373, %v373
    %v383 = vld [vmem:[%s205] sm:$0xff]
    %v384 = vld [vmem:[%s205 + $0x8] sm:$0xff]
    %v386 = vsel %vm288, %v382, 0
    %388 = vmatpush.bf16.msra.mxu0 0
    %389 = vmatpush.bf16.msra.mxu0 0
    %390 = vmatpush.bf16.msra.mxu0 0
    %391 = vmatpush.bf16.msra.mxu0 0
    %392 = vmatpush.bf16.msra.mxu0 %v278
    %393 = vmatpush.bf16.msra.mxu0 %v276
    %394 = vmatpush.bf16.msra.mxu0 %v274
    %395 = vmatpush.bf16.msra.mxu0 %v272
    %396 = vmatmul.bf16.gmra.mxu0 %v386
    %v397 = vpop.f32.mrf.mxu0
    %v398 = vadd.f32 %v383, %v397
    %v399 = vpop.f32.mrf.mxu0
    %400 = vdwg.mxu0
    %401 = vmatpush.bf16.msra.mxu0 0
    %402 = vmatpush.bf16.msra.mxu0 0
    %403 = vmatpush.bf16.msra.mxu0 0
    %404 = vmatpush.bf16.msra.mxu0 0
    %405 = vmatpush.bf16.msra.mxu0 %v279
    %406 = vmatpush.bf16.msra.mxu0 %v277
    %407 = vmatpush.bf16.msra.mxu0 %v275
    %408 = vmatpush.bf16.msra.mxu0 %v273
    %409 = vmatmul.bf16.gmra.mxu0 %v386
    %v410 = vpop.f32.mrf.mxu0
    %v411 = vadd.f32 %v384, %v410
    %v412 = vpop.f32.mrf.mxu0
    %413 = vdwg.mxu0
    %v414 = vxor.u32 %v398, 2147483648
    %v415 = vxor.u32 %v411, 2147483648
    %v416 = vmul.f32 %v414, 1.442695
    %v417 = vpow.pop %v416
    %v418 = vmul.f32 %v415, 1.442695
    %v419 = vpow.pop %v418
    %v420 = vadd.f32 %v417, 1.0
    %v421 = vadd.f32 %v419, 1.0
    %v422 = vrcp.pop %v420
    %v423 = vmul.f32 %v420, %v422
    %v424 = vsub.f32 1.0, %v423
    %v425 = vmul.f32 %v422, %v424
    %v426 = vadd.f32 %v422, %v425
    %vm427 = vweird.f32 %v420
    %vm428 = vweird.f32 %v422
    %vm429 = vmor %vm427, %vm428
    %v430 = vsel %vm429, %v422, %v426
    %v431 = vand.u32 2147483647, %v420
    %vm432 = vcmp.eq.f32.partialorder %v431, 8.507059e+37
    %v433 = vand.u32 %v420, 2147483648
    %v434 = vor.u32 1.1754944e-38, %v433
    %v435 = vsel %vm432, %v434, %v430
    %v436 = vmul.f32 1.0, %v435
    %v437 = vrcp.pop %v421
    %v438 = vmul.f32 %v421, %v437
    %v439 = vsub.f32 1.0, %v438
    %v440 = vmul.f32 %v437, %v439
    %v441 = vadd.f32 %v437, %v440
    %vm442 = vweird.f32 %v421
    %vm443 = vweird.f32 %v437
    %vm444 = vmor %vm442, %vm443
    %v445 = vsel %vm444, %v437, %v441
    %v446 = vand.u32 2147483647, %v421
    %vm447 = vcmp.eq.f32.partialorder %v446, 8.507059e+37
    %v448 = vand.u32 %v421, 2147483648
    %v449 = vor.u32 1.1754944e-38, %v448
    %v450 = vsel %vm447, %v449, %v445
    %v451 = vmul.f32 1.0, %v450
    %v452 = vtanh.pop %v411
    %v453 = vmul.f32 %v436, %v367
    %455 = vrot.lane.b32.xlu0 %v452, 64
    %v456 = vpop.permute.xlu0 %455
    %v458 = vmul.f32 %v436, %v456
    %460 = vrot.lane.b32.xlu0 %v458, 64
    %v461 = vpop.permute.xlu0 %460
    %v463 = vadd.f32 %v453, %v461
    %v464 = vtanh.pop %v463
    %466 = vrot.lane.b32.xlu0 %v464, 64
    %v467 = vpop.permute.xlu0 %466
    %v469 = vmul.f32 %v451, %v467
    %s470 = scalar_lea.vmem [#allocation3], 8
    %471 = vst.msk [vmem:[%s470] sm:$0xff] %vm374, %v469
    %473 = vrot.lane.b32.xlu0 %v469, 96
    %v474 = vpop.permute.xlu0 %473
    %s476 = scalar_lea.vmem [#allocation4], 48
    %477 = vst.msk [vmem:[%s476] sm:$0xff] %vm374, %v474
    %v478 = vpack.c.bf16 %v469, %v469
    %v479 = vld [vmem:[%s210] sm:$0xff]
    %v480 = vld [vmem:[%s210 + $0x8] sm:$0xff]
    %v482 = vsel %vm288, %v478, 0
    %484 = vmatpush.bf16.msra.mxu0 0
    %485 = vmatpush.bf16.msra.mxu0 0
    %486 = vmatpush.bf16.msra.mxu0 0
    %487 = vmatpush.bf16.msra.mxu0 0
    %488 = vmatpush.bf16.msra.mxu0 %v278
    %489 = vmatpush.bf16.msra.mxu0 %v276
    %490 = vmatpush.bf16.msra.mxu0 %v274
    %491 = vmatpush.bf16.msra.mxu0 %v272
    %492 = vmatmul.bf16.gmra.mxu0 %v482
    %v493 = vpop.f32.mrf.mxu0
    %v494 = vadd.f32 %v479, %v493
    %v495 = vpop.f32.mrf.mxu0
    %496 = vdwg.mxu0
    %497 = vmatpush.bf16.msra.mxu0 0
    %498 = vmatpush.bf16.msra.mxu0 0
    %499 = vmatpush.bf16.msra.mxu0 0
    %500 = vmatpush.bf16.msra.mxu0 0
    %501 = vmatpush.bf16.msra.mxu0 %v279
    %502 = vmatpush.bf16.msra.mxu0 %v277
    %503 = vmatpush.bf16.msra.mxu0 %v275
    %504 = vmatpush.bf16.msra.mxu0 %v273
    %505 = vmatmul.bf16.gmra.mxu0 %v482
    %v506 = vpop.f32.mrf.mxu0
    %v507 = vadd.f32 %v480, %v506
    %v508 = vpop.f32.mrf.mxu0
    %509 = vdwg.mxu0
    %v510 = vxor.u32 %v494, 2147483648
    %v511 = vxor.u32 %v507, 2147483648
    %v512 = vmul.f32 %v510, 1.442695
    %v513 = vpow.pop %v512
    %v514 = vmul.f32 %v511, 1.442695
    %v515 = vpow.pop %v514
    %v516 = vadd.f32 %v513, 1.0
    %v517 = vadd.f32 %v515, 1.0
    %v518 = vrcp.pop %v516
    %v519 = vmul.f32 %v516, %v518
    %v520 = vsub.f32 1.0, %v519
    %v521 = vmul.f32 %v518, %v520
    %v522 = vadd.f32 %v518, %v521
    %vm523 = vweird.f32 %v516
    %vm524 = vweird.f32 %v518
    %vm525 = vmor %vm523, %vm524
    %v526 = vsel %vm525, %v518, %v522
    %v527 = vand.u32 2147483647, %v516
    %vm528 = vcmp.eq.f32.partialorder %v527, 8.507059e+37
    %v529 = vand.u32 %v516, 2147483648
    %v530 = vor.u32 1.1754944e-38, %v529
    %v531 = vsel %vm528, %v530, %v526
    %v532 = vmul.f32 1.0, %v531
    %v533 = vrcp.pop %v517
    %v534 = vmul.f32 %v517, %v533
    %v535 = vsub.f32 1.0, %v534
    %v536 = vmul.f32 %v533, %v535
    %v537 = vadd.f32 %v533, %v536
    %vm538 = vweird.f32 %v517
    %vm539 = vweird.f32 %v533
    %vm540 = vmor %vm538, %vm539
    %v541 = vsel %vm540, %v533, %v537
    %v542 = vand.u32 2147483647, %v517
    %vm543 = vcmp.eq.f32.partialorder %v542, 8.507059e+37
    %v544 = vand.u32 %v517, 2147483648
    %v545 = vor.u32 1.1754944e-38, %v544
    %v546 = vsel %vm543, %v545, %v541
    %v547 = vmul.f32 1.0, %v546
    %v548 = vtanh.pop %v507
    %v549 = vmul.f32 %v532, %v463
    %551 = vrot.lane.b32.xlu0 %v548, 64
    %v552 = vpop.permute.xlu0 %551
    %v554 = vmul.f32 %v532, %v552
    %556 = vrot.lane.b32.xlu0 %v554, 64
    %v557 = vpop.permute.xlu0 %556
    %v559 = vadd.f32 %v549, %v557
    %v560 = vtanh.pop %v559
    %562 = vrot.lane.b32.xlu0 %v560, 64
    %v563 = vpop.permute.xlu0 %562
    %v565 = vmul.f32 %v547, %v563
    %s566 = scalar_lea.vmem [#allocation3], 16
    %567 = vst.msk [vmem:[%s566] sm:$0xff] %vm374, %v565
    %569 = vrot.lane.b32.xlu0 %v565, 96
    %v570 = vpop.permute.xlu0 %569
    %s572 = scalar_lea.vmem [#allocation4], 40
    %573 = vst.msk [vmem:[%s572] sm:$0xff] %vm374, %v570
    %v574 = vpack.c.bf16 %v565, %v565
    %v575 = vld [vmem:[%s215] sm:$0xff]
    %v576 = vld [vmem:[%s215 + $0x8] sm:$0xff]
    %v578 = vsel %vm288, %v574, 0
    %580 = vmatpush.bf16.msra.mxu0 0
    %581 = vmatpush.bf16.msra.mxu0 0
    %582 = vmatpush.bf16.msra.mxu0 0
    %583 = vmatpush.bf16.msra.mxu0 0
    %584 = vmatpush.bf16.msra.mxu0 %v278
    %585 = vmatpush.bf16.msra.mxu0 %v276
    %586 = vmatpush.bf16.msra.mxu0 %v274
    %587 = vmatpush.bf16.msra.mxu0 %v272
    %588 = vmatmul.bf16.gmra.mxu0 %v578
    %v589 = vpop.f32.mrf.mxu0
    %v590 = vadd.f32 %v575, %v589
    %v591 = vpop.f32.mrf.mxu0
    %592 = vdwg.mxu0
    %593 = vmatpush.bf16.msra.mxu0 0
    %594 = vmatpush.bf16.msra.mxu0 0
    %595 = vmatpush.bf16.msra.mxu0 0
    %596 = vmatpush.bf16.msra.mxu0 0
    %597 = vmatpush.bf16.msra.mxu0 %v279
    %598 = vmatpush.bf16.msra.mxu0 %v277
    %599 = vmatpush.bf16.msra.mxu0 %v275
    %600 = vmatpush.bf16.msra.mxu0 %v273
    %601 = vmatmul.bf16.gmra.mxu0 %v578
    %v602 = vpop.f32.mrf.mxu0
    %v603 = vadd.f32 %v576, %v602
    %v604 = vpop.f32.mrf.mxu0
    %605 = vdwg.mxu0
    %v606 = vxor.u32 %v590, 2147483648
    %v607 = vxor.u32 %v603, 2147483648
    %v608 = vmul.f32 %v606, 1.442695
    %v609 = vpow.pop %v608
    %v610 = vmul.f32 %v607, 1.442695
    %v611 = vpow.pop %v610
    %v612 = vadd.f32 %v609, 1.0
    %v613 = vadd.f32 %v611, 1.0
    %v614 = vrcp.pop %v612
    %v615 = vmul.f32 %v612, %v614
    %v616 = vsub.f32 1.0, %v615
    %v617 = vmul.f32 %v614, %v616
    %v618 = vadd.f32 %v614, %v617
    %vm619 = vweird.f32 %v612
    %vm620 = vweird.f32 %v614
    %vm621 = vmor %vm619, %vm620
    %v622 = vsel %vm621, %v614, %v618
    %v623 = vand.u32 2147483647, %v612
    %vm624 = vcmp.eq.f32.partialorder %v623, 8.507059e+37
    %v625 = vand.u32 %v612, 2147483648
    %v626 = vor.u32 1.1754944e-38, %v625
    %v627 = vsel %vm624, %v626, %v622
    %v628 = vmul.f32 1.0, %v627
    %v629 = vrcp.pop %v613
    %v630 = vmul.f32 %v613, %v629
    %v631 = vsub.f32 1.0, %v630
    %v632 = vmul.f32 %v629, %v631
    %v633 = vadd.f32 %v629, %v632
    %vm634 = vweird.f32 %v613
    %vm635 = vweird.f32 %v629
    %vm636 = vmor %vm634, %vm635
    %v637 = vsel %vm636, %v629, %v633
    %v638 = vand.u32 2147483647, %v613
    %vm639 = vcmp.eq.f32.partialorder %v638, 8.507059e+37
    %v640 = vand.u32 %v613, 2147483648
    %v641 = vor.u32 1.1754944e-38, %v640
    %v642 = vsel %vm639, %v641, %v637
    %v643 = vmul.f32 1.0, %v642
    %v644 = vtanh.pop %v603
    %v645 = vmul.f32 %v628, %v559
    %647 = vrot.lane.b32.xlu0 %v644, 64
    %v648 = vpop.permute.xlu0 %647
    %v650 = vmul.f32 %v628, %v648
    %652 = vrot.lane.b32.xlu0 %v650, 64
    %v653 = vpop.permute.xlu0 %652
    %v655 = vadd.f32 %v645, %v653
    %v656 = vtanh.pop %v655
    %658 = vrot.lane.b32.xlu0 %v656, 64
    %v659 = vpop.permute.xlu0 %658
    %v661 = vmul.f32 %v643, %v659
    %s662 = scalar_lea.vmem [#allocation3], 24
    %663 = vst.msk [vmem:[%s662] sm:$0xff] %vm374, %v661
    %665 = vrot.lane.b32.xlu0 %v661, 96
    %v666 = vpop.permute.xlu0 %665
    %s668 = scalar_lea.vmem [#allocation4], 32
    %669 = vst.msk [vmem:[%s668] sm:$0xff] %vm374, %v666
    %v670 = vpack.c.bf16 %v661, %v661
    %v671 = vld [vmem:[%s220] sm:$0xff]
    %v672 = vld [vmem:[%s220 + $0x8] sm:$0xff]
    %v674 = vsel %vm288, %v670, 0
    %676 = vmatpush.bf16.msra.mxu0 0
    %677 = vmatpush.bf16.msra.mxu0 0
    %678 = vmatpush.bf16.msra.mxu0 0
    %679 = vmatpush.bf16.msra.mxu0 0
    %680 = vmatpush.bf16.msra.mxu0 %v278
    %681 = vmatpush.bf16.msra.mxu0 %v276
    %682 = vmatpush.bf16.msra.mxu0 %v274
    %683 = vmatpush.bf16.msra.mxu0 %v272
    %684 = vmatmul.bf16.gmra.mxu0 %v674
    %v685 = vpop.f32.mrf.mxu0
    %v686 = vadd.f32 %v671, %v685
    %v687 = vpop.f32.mrf.mxu0
    %688 = vdwg.mxu0
    %689 = vmatpush.bf16.msra.mxu0 0
    %690 = vmatpush.bf16.msra.mxu0 0
    %691 = vmatpush.bf16.msra.mxu0 0
    %692 = vmatpush.bf16.msra.mxu0 0
    %693 = vmatpush.bf16.msra.mxu0 %v279
    %694 = vmatpush.bf16.msra.mxu0 %v277
    %695 = vmatpush.bf16.msra.mxu0 %v275
    %696 = vmatpush.bf16.msra.mxu0 %v273
    %697 = vmatmul.bf16.gmra.mxu0 %v674
    %v698 = vpop.f32.mrf.mxu0
    %v699 = vadd.f32 %v672, %v698
    %v700 = vpop.f32.mrf.mxu0
    %701 = vdwg.mxu0
    %v702 = vxor.u32 %v686, 2147483648
    %v703 = vxor.u32 %v699, 2147483648
    %v704 = vmul.f32 %v702, 1.442695
    %v705 = vpow.pop %v704
    %v706 = vmul.f32 %v703, 1.442695
    %v707 = vpow.pop %v706
    %v708 = vadd.f32 %v705, 1.0
    %v709 = vadd.f32 %v707, 1.0
    %v710 = vrcp.pop %v708
    %v711 = vmul.f32 %v708, %v710
    %v712 = vsub.f32 1.0, %v711
    %v713 = vmul.f32 %v710, %v712
    %v714 = vadd.f32 %v710, %v713
    %vm715 = vweird.f32 %v708
    %vm716 = vweird.f32 %v710
    %vm717 = vmor %vm715, %vm716
    %v718 = vsel %vm717, %v710, %v714
    %v719 = vand.u32 2147483647, %v708
    %vm720 = vcmp.eq.f32.partialorder %v719, 8.507059e+37
    %v721 = vand.u32 %v708, 2147483648
    %v722 = vor.u32 1.1754944e-38, %v721
    %v723 = vsel %vm720, %v722, %v718
    %v724 = vmul.f32 1.0, %v723
    %v725 = vrcp.pop %v709
    %v726 = vmul.f32 %v709, %v725
    %v727 = vsub.f32 1.0, %v726
    %v728 = vmul.f32 %v725, %v727
    %v729 = vadd.f32 %v725, %v728
    %vm730 = vweird.f32 %v709
    %vm731 = vweird.f32 %v725
    %vm732 = vmor %vm730, %vm731
    %v733 = vsel %vm732, %v725, %v729
    %v734 = vand.u32 2147483647, %v709
    %vm735 = vcmp.eq.f32.partialorder %v734, 8.507059e+37
    %v736 = vand.u32 %v709, 2147483648
    %v737 = vor.u32 1.1754944e-38, %v736
    %v738 = vsel %vm735, %v737, %v733
    %v739 = vmul.f32 1.0, %v738
    %v740 = vtanh.pop %v699
    %v741 = vmul.f32 %v724, %v655
    %743 = vrot.lane.b32.xlu0 %v740, 64
    %v744 = vpop.permute.xlu0 %743
    %v746 = vmul.f32 %v724, %v744
    %748 = vrot.lane.b32.xlu0 %v746, 64
    %v749 = vpop.permute.xlu0 %748
    %v751 = vadd.f32 %v741, %v749
    %v752 = vtanh.pop %v751
    %754 = vrot.lane.b32.xlu0 %v752, 64
    %v755 = vpop.permute.xlu0 %754
    %v757 = vmul.f32 %v739, %v755
    %s758 = scalar_lea.vmem [#allocation3], 32
    %759 = vst.msk [vmem:[%s758] sm:$0xff] %vm374, %v757
    %761 = vrot.lane.b32.xlu0 %v757, 96
    %v762 = vpop.permute.xlu0 %761
    %s764 = scalar_lea.vmem [#allocation4], 24
    %765 = vst.msk [vmem:[%s764] sm:$0xff] %vm374, %v762
    %v766 = vpack.c.bf16 %v757, %v757
    %v767 = vld [vmem:[%s225] sm:$0xff]
    %v768 = vld [vmem:[%s225 + $0x8] sm:$0xff]
    %v770 = vsel %vm288, %v766, 0
    %772 = vmatpush.bf16.msra.mxu0 0
    %773 = vmatpush.bf16.msra.mxu0 0
    %774 = vmatpush.bf16.msra.mxu0 0
    %775 = vmatpush.bf16.msra.mxu0 0
    %776 = vmatpush.bf16.msra.mxu0 %v278
    %777 = vmatpush.bf16.msra.mxu0 %v276
    %778 = vmatpush.bf16.msra.mxu0 %v274
    %779 = vmatpush.bf16.msra.mxu0 %v272
    %780 = vmatmul.bf16.gmra.mxu0 %v770
    %v781 = vpop.f32.mrf.mxu0
    %v782 = vadd.f32 %v767, %v781
    %v783 = vpop.f32.mrf.mxu0
    %784 = vdwg.mxu0
    %785 = vmatpush.bf16.msra.mxu0 0
    %786 = vmatpush.bf16.msra.mxu0 0
    %787 = vmatpush.bf16.msra.mxu0 0
    %788 = vmatpush.bf16.msra.mxu0 0
    %789 = vmatpush.bf16.msra.mxu0 %v279
    %790 = vmatpush.bf16.msra.mxu0 %v277
    %791 = vmatpush.bf16.msra.mxu0 %v275
    %792 = vmatpush.bf16.msra.mxu0 %v273
    %793 = vmatmul.bf16.gmra.mxu0 %v770
    %v794 = vpop.f32.mrf.mxu0
    %v795 = vadd.f32 %v768, %v794
    %v796 = vpop.f32.mrf.mxu0
    %797 = vdwg.mxu0
    %v798 = vxor.u32 %v782, 2147483648
    %v799 = vxor.u32 %v795, 2147483648
    %v800 = vmul.f32 %v798, 1.442695
    %v801 = vpow.pop %v800
    %v802 = vmul.f32 %v799, 1.442695
    %v803 = vpow.pop %v802
    %v804 = vadd.f32 %v801, 1.0
    %v805 = vadd.f32 %v803, 1.0
    %v806 = vrcp.pop %v804
    %v807 = vmul.f32 %v804, %v806
    %v808 = vsub.f32 1.0, %v807
    %v809 = vmul.f32 %v806, %v808
    %v810 = vadd.f32 %v806, %v809
    %vm811 = vweird.f32 %v804
    %vm812 = vweird.f32 %v806
    %vm813 = vmor %vm811, %vm812
    %v814 = vsel %vm813, %v806, %v810
    %v815 = vand.u32 2147483647, %v804
    %vm816 = vcmp.eq.f32.partialorder %v815, 8.507059e+37
    %v817 = vand.u32 %v804, 2147483648
    %v818 = vor.u32 1.1754944e-38, %v817
    %v819 = vsel %vm816, %v818, %v814
    %v820 = vmul.f32 1.0, %v819
    %v821 = vrcp.pop %v805
    %v822 = vmul.f32 %v805, %v821
    %v823 = vsub.f32 1.0, %v822
    %v824 = vmul.f32 %v821, %v823
    %v825 = vadd.f32 %v821, %v824
    %vm826 = vweird.f32 %v805
    %vm827 = vweird.f32 %v821
    %vm828 = vmor %vm826, %vm827
    %v829 = vsel %vm828, %v821, %v825
    %v830 = vand.u32 2147483647, %v805
    %vm831 = vcmp.eq.f32.partialorder %v830, 8.507059e+37
    %v832 = vand.u32 %v805, 2147483648
    %v833 = vor.u32 1.1754944e-38, %v832
    %v834 = vsel %vm831, %v833, %v829
    %v835 = vmul.f32 1.0, %v834
    %v836 = vtanh.pop %v795
    %v837 = vmul.f32 %v820, %v751
    %839 = vrot.lane.b32.xlu0 %v836, 64
    %v840 = vpop.permute.xlu0 %839
    %v842 = vmul.f32 %v820, %v840
    %844 = vrot.lane.b32.xlu0 %v842, 64
    %v845 = vpop.permute.xlu0 %844
    %v847 = vadd.f32 %v837, %v845
    %v848 = vtanh.pop %v847
    %850 = vrot.lane.b32.xlu0 %v848, 64
    %v851 = vpop.permute.xlu0 %850
    %v853 = vmul.f32 %v835, %v851
    %s854 = scalar_lea.vmem [#allocation3], 40
    %855 = vst.msk [vmem:[%s854] sm:$0xff] %vm374, %v853
    %857 = vrot.lane.b32.xlu0 %v853, 96
    %v858 = vpop.permute.xlu0 %857
    %s860 = scalar_lea.vmem [#allocation4], 16
    %861 = vst.msk [vmem:[%s860] sm:$0xff] %vm374, %v858
    %v862 = vpack.c.bf16 %v853, %v853
    %v863 = vld [vmem:[%s230] sm:$0xff]
    %v864 = vld [vmem:[%s230 + $0x8] sm:$0xff]
    %v866 = vsel %vm288, %v862, 0
    %868 = vmatpush.bf16.msra.mxu0 0
    %869 = vmatpush.bf16.msra.mxu0 0
    %870 = vmatpush.bf16.msra.mxu0 0
    %871 = vmatpush.bf16.msra.mxu0 0
    %872 = vmatpush.bf16.msra.mxu0 %v278
    %873 = vmatpush.bf16.msra.mxu0 %v276
    %874 = vmatpush.bf16.msra.mxu0 %v274
    %875 = vmatpush.bf16.msra.mxu0 %v272
    %876 = vmatmul.bf16.gmra.mxu0 %v866
    %v877 = vpop.f32.mrf.mxu0
    %v878 = vadd.f32 %v863, %v877
    %v879 = vpop.f32.mrf.mxu0
    %880 = vdwg.mxu0
    %881 = vmatpush.bf16.msra.mxu0 0
    %882 = vmatpush.bf16.msra.mxu0 0
    %883 = vmatpush.bf16.msra.mxu0 0
    %884 = vmatpush.bf16.msra.mxu0 0
    %885 = vmatpush.bf16.msra.mxu0 %v279
    %886 = vmatpush.bf16.msra.mxu0 %v277
    %887 = vmatpush.bf16.msra.mxu0 %v275
    %888 = vmatpush.bf16.msra.mxu0 %v273
    %889 = vmatmul.bf16.gmra.mxu0 %v866
    %v890 = vpop.f32.mrf.mxu0
    %v891 = vadd.f32 %v864, %v890
    %v892 = vpop.f32.mrf.mxu0
    %893 = vdwg.mxu0
    %v894 = vxor.u32 %v878, 2147483648
    %v895 = vxor.u32 %v891, 2147483648
    %v896 = vmul.f32 %v894, 1.442695
    %v897 = vpow.pop %v896
    %v898 = vmul.f32 %v895, 1.442695
    %v899 = vpow.pop %v898
    %v900 = vadd.f32 %v897, 1.0
    %v901 = vadd.f32 %v899, 1.0
    %v902 = vrcp.pop %v900
    %v903 = vmul.f32 %v900, %v902
    %v904 = vsub.f32 1.0, %v903
    %v905 = vmul.f32 %v902, %v904
    %v906 = vadd.f32 %v902, %v905
    %vm907 = vweird.f32 %v900
    %vm908 = vweird.f32 %v902
    %vm909 = vmor %vm907, %vm908
    %v910 = vsel %vm909, %v902, %v906
    %v911 = vand.u32 2147483647, %v900
    %vm912 = vcmp.eq.f32.partialorder %v911, 8.507059e+37
    %v913 = vand.u32 %v900, 2147483648
    %v914 = vor.u32 1.1754944e-38, %v913
    %v915 = vsel %vm912, %v914, %v910
    %v916 = vmul.f32 1.0, %v915
    %v917 = vrcp.pop %v901
    %v918 = vmul.f32 %v901, %v917
    %v919 = vsub.f32 1.0, %v918
    %v920 = vmul.f32 %v917, %v919
    %v921 = vadd.f32 %v917, %v920
    %vm922 = vweird.f32 %v901
    %vm923 = vweird.f32 %v917
    %vm924 = vmor %vm922, %vm923
    %v925 = vsel %vm924, %v917, %v921
    %v926 = vand.u32 2147483647, %v901
    %vm927 = vcmp.eq.f32.partialorder %v926, 8.507059e+37
    %v928 = vand.u32 %v901, 2147483648
    %v929 = vor.u32 1.1754944e-38, %v928
    %v930 = vsel %vm927, %v929, %v925
    %v931 = vmul.f32 1.0, %v930
    %v932 = vtanh.pop %v891
    %v933 = vmul.f32 %v916, %v847
    %935 = vrot.lane.b32.xlu0 %v932, 64
    %v936 = vpop.permute.xlu0 %935
    %v938 = vmul.f32 %v916, %v936
    %940 = vrot.lane.b32.xlu0 %v938, 64
    %v941 = vpop.permute.xlu0 %940
    %v943 = vadd.f32 %v933, %v941
    %v944 = vtanh.pop %v943
    %946 = vrot.lane.b32.xlu0 %v944, 64
    %v947 = vpop.permute.xlu0 %946
    %v949 = vmul.f32 %v931, %v947
    %s950 = scalar_lea.vmem [#allocation3], 48
    %951 = vst.msk [vmem:[%s950] sm:$0xff] %vm374, %v949
    %953 = vrot.lane.b32.xlu0 %v949, 96
    %v954 = vpop.permute.xlu0 %953
    %s956 = scalar_lea.vmem [#allocation4], 8
    %957 = vst.msk [vmem:[%s956] sm:$0xff] %vm374, %v954
    %v958 = vpack.c.bf16 %v949, %v949
    %v959 = vld [vmem:[%s235] sm:$0xff]
    %v960 = vld [vmem:[%s235 + $0x8] sm:$0xff]
    %v962 = vsel %vm288, %v958, 0
    %964 = vmatpush.bf16.msra.mxu0 0
    %965 = vmatpush.bf16.msra.mxu0 0
    %966 = vmatpush.bf16.msra.mxu0 0
    %967 = vmatpush.bf16.msra.mxu0 0
    %968 = vmatpush.bf16.msra.mxu0 %v278
    %969 = vmatpush.bf16.msra.mxu0 %v276
    %970 = vmatpush.bf16.msra.mxu0 %v274
    %971 = vmatpush.bf16.msra.mxu0 %v272
    %972 = vmatmul.bf16.gmra.mxu0 %v962
    %v973 = vpop.f32.mrf.mxu0
    %v974 = vadd.f32 %v959, %v973
    %v975 = vpop.f32.mrf.mxu0
    %976 = vdwg.mxu0
    %977 = vmatpush.bf16.msra.mxu0 0
    %978 = vmatpush.bf16.msra.mxu0 0
    %979 = vmatpush.bf16.msra.mxu0 0
    %980 = vmatpush.bf16.msra.mxu0 0
    %981 = vmatpush.bf16.msra.mxu0 %v279
    %982 = vmatpush.bf16.msra.mxu0 %v277
    %983 = vmatpush.bf16.msra.mxu0 %v275
    %984 = vmatpush.bf16.msra.mxu0 %v273
    %985 = vmatmul.bf16.gmra.mxu0 %v962
    %v986 = vpop.f32.mrf.mxu0
    %v987 = vadd.f32 %v960, %v986
    %v988 = vpop.f32.mrf.mxu0
    %989 = vdwg.mxu0
    %v990 = vxor.u32 %v974, 2147483648
    %v991 = vxor.u32 %v987, 2147483648
    %v992 = vmul.f32 %v990, 1.442695
    %v993 = vpow.pop %v992
    %v994 = vmul.f32 %v991, 1.442695
    %v995 = vpow.pop %v994
    %v996 = vadd.f32 %v993, 1.0
    %v997 = vadd.f32 %v995, 1.0
    %v998 = vrcp.pop %v996
    %v999 = vmul.f32 %v996, %v998
    %v1000 = vsub.f32 1.0, %v999
    %v1001 = vmul.f32 %v998, %v1000
    %v1002 = vadd.f32 %v998, %v1001
    %vm1003 = vweird.f32 %v996
    %vm1004 = vweird.f32 %v998
    %vm1005 = vmor %vm1003, %vm1004
    %v1006 = vsel %vm1005, %v998, %v1002
    %v1007 = vand.u32 2147483647, %v996
    %vm1008 = vcmp.eq.f32.partialorder %v1007, 8.507059e+37
    %v1009 = vand.u32 %v996, 2147483648
    %v1010 = vor.u32 1.1754944e-38, %v1009
    %v1011 = vsel %vm1008, %v1010, %v1006
    %v1012 = vmul.f32 1.0, %v1011
    %v1013 = vrcp.pop %v997
    %v1014 = vmul.f32 %v997, %v1013
    %v1015 = vsub.f32 1.0, %v1014
    %v1016 = vmul.f32 %v1013, %v1015
    %v1017 = vadd.f32 %v1013, %v1016
    %vm1018 = vweird.f32 %v997
    %vm1019 = vweird.f32 %v1013
    %vm1020 = vmor %vm1018, %vm1019
    %v1021 = vsel %vm1020, %v1013, %v1017
    %v1022 = vand.u32 2147483647, %v997
    %vm1023 = vcmp.eq.f32.partialorder %v1022, 8.507059e+37
    %v1024 = vand.u32 %v997, 2147483648
    %v1025 = vor.u32 1.1754944e-38, %v1024
    %v1026 = vsel %vm1023, %v1025, %v1021
    %v1027 = vmul.f32 1.0, %v1026
    %v1028 = vtanh.pop %v987
    %v1029 = vmul.f32 %v1012, %v943
    %1031 = vrot.lane.b32.xlu0 %v1028, 64
    %v1032 = vpop.permute.xlu0 %1031
    %v1034 = vmul.f32 %v1012, %v1032
    %1036 = vrot.lane.b32.xlu0 %v1034, 64
    %v1037 = vpop.permute.xlu0 %1036
    %v1039 = vadd.f32 %v1029, %v1037
    %v1040 = vtanh.pop %v1039
    %1042 = vrot.lane.b32.xlu0 %v1040, 64
    %v1043 = vpop.permute.xlu0 %1042
    %v1045 = vmul.f32 %v1027, %v1043
    %s1046 = scalar_lea.vmem [#allocation3], 56
    %1047 = vst.msk [vmem:[%s1046] sm:$0xff] %vm374, %v1045
    %1049 = vrot.lane.b32.xlu0 %v1045, 96
    %v1050 = vpop.permute.xlu0 %1049
    %1052 = vst.msk [vmem:[#allocation4] sm:$0xff] %vm374, %v1050
    %v1053 = vld [vmem:[#allocation3] sm:$0xff]
    %v1054 = vld [vmem:[#allocation3 + $0x8] sm:$0xff]
    %v1055 = vld [vmem:[#allocation3 + $0x10] sm:$0xff]
    %v1056 = vld [vmem:[#allocation3 + $0x18] sm:$0xff]
    %v1057 = vld [vmem:[#allocation3 + $0x20] sm:$0xff]
    %v1058 = vld [vmem:[#allocation3 + $0x28] sm:$0xff]
    %v1059 = vld [vmem:[#allocation3 + $0x30] sm:$0xff]
    %v1060 = vld [vmem:[#allocation3 + $0x38] sm:$0xff]
    %v1061 = vpack.c.bf16 %v1054, %v1053
    %v1062 = vpack.c.bf16 %v1056, %v1055
    %v1063 = vpack.c.bf16 %v1058, %v1057
    %v1064 = vpack.c.bf16 %v1060, %v1059
    %v1065 = vld [vmem:[#allocation4] sm:$0xff]
    %v1066 = vld [vmem:[#allocation4 + $0x8] sm:$0xff]
    %v1067 = vld [vmem:[#allocation4 + $0x10] sm:$0xff]
    %v1068 = vld [vmem:[#allocation4 + $0x18] sm:$0xff]
    %v1069 = vld [vmem:[#allocation4 + $0x20] sm:$0xff]
    %v1070 = vld [vmem:[#allocation4 + $0x28] sm:$0xff]
    %v1071 = vld [vmem:[#allocation4 + $0x30] sm:$0xff]
    %v1072 = vld [vmem:[#allocation4 + $0x38] sm:$0xff]
    %v1073 = vpack.c.bf16 %v1066, %v1065
    %v1074 = vpack.c.bf16 %v1068, %v1067
    %v1075 = vpack.c.bf16 %v1070, %v1069
    %v1076 = vpack.c.bf16 %v1072, %v1071
    %v1077 = vld [vmem:[%s2] sm:$0xff]
    %v1078 = vld [vmem:[%s2 + $0x8] sm:$0xff]
    %v1079 = vld [vmem:[%s2 + $0x10] sm:$0xff]
    %v1080 = vld [vmem:[%s2 + $0x18] sm:$0xff]
    %v1081 = vld [vmem:[#allocation5] sm:$0xff]
    %v1082 = vld [vmem:[#allocation5 + $0x8] sm:$0xff]
    %v1083 = vld [vmem:[#allocation5 + $0x10] sm:$0xff]
    %v1084 = vld [vmem:[#allocation5 + $0x18] sm:$0xff]
    %v1089 = vunpack.c.l.b16 %v1081
    %v1090 = vunpack.c.h.b16 %v1081
    %v1091 = vunpack.c.l.b16 %v1082
    %v1092 = vunpack.c.h.b16 %v1082
    %v1093 = vunpack.c.l.b16 %v1083
    %v1094 = vunpack.c.h.b16 %v1083
    %v1095 = vunpack.c.l.b16 %v1084
    %v1096 = vunpack.c.h.b16 %v1084
    %v1097 = vpack.c.b16 %v1091, %v1089
    %v1098 = vpack.c.b16 %v1092, %v1090
    %v1099 = vpack.c.b16 %v1095, %v1093
    %v1100 = vpack.c.b16 %v1096, %v1094
    %v1106 = vsel %vm374, %v1073, 0
    %v1109 = vsel %vm374, %v1074, 0
    %v1112 = vsel %vm374, %v1075, 0
    %v1115 = vsel %vm374, %v1076, 0
    %1117 = vmatpush.bf16.msra.mxu0 0
    %1118 = vmatpush.bf16.msra.mxu0 0
    %1119 = vmatpush.bf16.msra.mxu0 0
    %1120 = vmatpush.bf16.msra.mxu0 0
    %1121 = vmatpush.bf16.msra.mxu0 0
    %1122 = vmatpush.bf16.msra.mxu0 0
    %1123 = vmatpush.bf16.msra.mxu0 %v1099
    %1124 = vmatpush.bf16.msra.mxu0 %v1097
    %1125 = vmatmul.bf16.gmra.mxu0 %v1106
    %v1126 = vpop.f32.mrf.mxu0
    %v1127 = vadd.f32 0.0, %v1126
    %v1128 = vpop.f32.mrf.mxu0
    %v1129 = vadd.f32 0.0, %v1128
    %1130 = vmatmul.bf16.gmra.mxu0 %v1109
    %v1131 = vpop.f32.mrf.mxu0
    %v1132 = vadd.f32 0.0, %v1131
    %v1133 = vpop.f32.mrf.mxu0
    %v1134 = vadd.f32 0.0, %v1133
    %1135 = vmatmul.bf16.gmra.mxu0 %v1112
    %v1136 = vpop.f32.mrf.mxu0
    %v1137 = vadd.f32 0.0, %v1136
    %v1138 = vpop.f32.mrf.mxu0
    %v1139 = vadd.f32 0.0, %v1138
    %1140 = vmatmul.bf16.gmra.mxu0 %v1115
    %v1141 = vpop.f32.mrf.mxu0
    %v1142 = vadd.f32 0.0, %v1141
    %v1143 = vpop.f32.mrf.mxu0
    %v1144 = vadd.f32 0.0, %v1143
    %1145 = vdwg.mxu0
    %1146 = vmatpush.bf16.msra.mxu0 0
    %1147 = vmatpush.bf16.msra.mxu0 0
    %1148 = vmatpush.bf16.msra.mxu0 0
    %1149 = vmatpush.bf16.msra.mxu0 0
    %1150 = vmatpush.bf16.msra.mxu0 0
    %1151 = vmatpush.bf16.msra.mxu0 0
    %1152 = vmatpush.bf16.msra.mxu0 %v1100
    %1153 = vmatpush.bf16.msra.mxu0 %v1098
    %1154 = vmatmul.bf16.gmra.mxu0 %v1106
    %v1155 = vpop.f32.mrf.mxu0
    %v1156 = vadd.f32 0.0, %v1155
    %v1157 = vpop.f32.mrf.mxu0
    %v1158 = vadd.f32 0.0, %v1157
    %1159 = vmatmul.bf16.gmra.mxu0 %v1109
    %v1160 = vpop.f32.mrf.mxu0
    %v1161 = vadd.f32 0.0, %v1160
    %v1162 = vpop.f32.mrf.mxu0
    %v1163 = vadd.f32 0.0, %v1162
    %1164 = vmatmul.bf16.gmra.mxu0 %v1112
    %v1165 = vpop.f32.mrf.mxu0
    %v1166 = vadd.f32 0.0, %v1165
    %v1167 = vpop.f32.mrf.mxu0
    %v1168 = vadd.f32 0.0, %v1167
    %1169 = vmatmul.bf16.gmra.mxu0 %v1115
    %v1170 = vpop.f32.mrf.mxu0
    %v1171 = vadd.f32 0.0, %v1170
    %v1172 = vpop.f32.mrf.mxu0
    %v1173 = vadd.f32 0.0, %v1172
    %1174 = vdwg.mxu0
    %v1179 = vunpack.c.l.b16 %v1077
    %v1180 = vunpack.c.h.b16 %v1077
    %v1181 = vunpack.c.l.b16 %v1078
    %v1182 = vunpack.c.h.b16 %v1078
    %v1183 = vunpack.c.l.b16 %v1079
    %v1184 = vunpack.c.h.b16 %v1079
    %v1185 = vunpack.c.l.b16 %v1080
    %v1186 = vunpack.c.h.b16 %v1080
    %v1187 = vpack.c.b16 %v1181, %v1179
    %v1188 = vpack.c.b16 %v1182, %v1180
    %v1189 = vpack.c.b16 %v1185, %v1183
    %v1190 = vpack.c.b16 %v1186, %v1184
    %v1196 = vsel %vm374, %v1061, 0
    %v1199 = vsel %vm374, %v1062, 0
    %v1202 = vsel %vm374, %v1063, 0
    %v1205 = vsel %vm374, %v1064, 0
    %1207 = vmatpush.bf16.msra.mxu0 0
    %1208 = vmatpush.bf16.msra.mxu0 0
    %1209 = vmatpush.bf16.msra.mxu0 0
    %1210 = vmatpush.bf16.msra.mxu0 0
    %1211 = vmatpush.bf16.msra.mxu0 0
    %1212 = vmatpush.bf16.msra.mxu0 0
    %1213 = vmatpush.bf16.msra.mxu0 %v1189
    %1214 = vmatpush.bf16.msra.mxu0 %v1187
    %1215 = vmatmul.bf16.gmra.mxu0 %v1196
    %v1216 = vpop.f32.mrf.mxu0
    %v1217 = vadd.f32 %v1127, %v1216
    %v1218 = vpop.f32.mrf.mxu0
    %v1219 = vadd.f32 %v1129, %v1218
    %1220 = vmatmul.bf16.gmra.mxu0 %v1199
    %v1221 = vpop.f32.mrf.mxu0
    %v1222 = vadd.f32 %v1132, %v1221
    %v1223 = vpop.f32.mrf.mxu0
    %v1224 = vadd.f32 %v1134, %v1223
    %1225 = vmatmul.bf16.gmra.mxu0 %v1202
    %v1226 = vpop.f32.mrf.mxu0
    %v1227 = vadd.f32 %v1137, %v1226
    %v1228 = vpop.f32.mrf.mxu0
    %v1229 = vadd.f32 %v1139, %v1228
    %1230 = vmatmul.bf16.gmra.mxu0 %v1205
    %v1231 = vpop.f32.mrf.mxu0
    %v1232 = vadd.f32 %v1142, %v1231
    %v1233 = vpop.f32.mrf.mxu0
    %v1234 = vadd.f32 %v1144, %v1233
    %1235 = vdwg.mxu0
    %1236 = vmatpush.bf16.msra.mxu0 0
    %1237 = vmatpush.bf16.msra.mxu0 0
    %1238 = vmatpush.bf16.msra.mxu0 0
    %1239 = vmatpush.bf16.msra.mxu0 0
    %1240 = vmatpush.bf16.msra.mxu0 0
    %1241 = vmatpush.bf16.msra.mxu0 0
    %1242 = vmatpush.bf16.msra.mxu0 %v1190
    %1243 = vmatpush.bf16.msra.mxu0 %v1188
    %1244 = vmatmul.bf16.gmra.mxu0 %v1196
    %v1245 = vpop.f32.mrf.mxu0
    %v1246 = vadd.f32 %v1156, %v1245
    %v1247 = vpop.f32.mrf.mxu0
    %v1248 = vadd.f32 %v1158, %v1247
    %1249 = vmatmul.bf16.gmra.mxu0 %v1199
    %v1250 = vpop.f32.mrf.mxu0
    %v1251 = vadd.f32 %v1161, %v1250
    %v1252 = vpop.f32.mrf.mxu0
    %v1253 = vadd.f32 %v1163, %v1252
    %1254 = vmatmul.bf16.gmra.mxu0 %v1202
    %v1255 = vpop.f32.mrf.mxu0
    %v1256 = vadd.f32 %v1166, %v1255
    %v1257 = vpop.f32.mrf.mxu0
    %v1258 = vadd.f32 %v1168, %v1257
    %1259 = vmatmul.bf16.gmra.mxu0 %v1205
    %v1260 = vpop.f32.mrf.mxu0
    %v1261 = vadd.f32 %v1171, %v1260
    %v1262 = vpop.f32.mrf.mxu0
    %v1263 = vadd.f32 %v1173, %v1262
    %1264 = vdwg.mxu0
    %s1265 = scalar_lea.vmem %s5, 2
    %v1266 = vld [vmem:[%s1265] sm:$0x3]
    %v1268 = vperm.slane %v1266, 0
    %v1269 = vperm.slane %v1266, 1
    %v1272 = vadd.f32 %v1217, %v1268
    %v1273 = vadd.f32 %v1246, %v1269
    %v1274 = vadd.f32 %v1219, %v1268
    %v1275 = vadd.f32 %v1248, %v1269
    %v1276 = vadd.f32 %v1222, %v1268
    %v1277 = vadd.f32 %v1251, %v1269
    %v1278 = vadd.f32 %v1224, %v1268
    %v1279 = vadd.f32 %v1253, %v1269
    %v1280 = vadd.f32 %v1227, %v1268
    %v1281 = vadd.f32 %v1256, %v1269
    %v1282 = vadd.f32 %v1229, %v1268
    %v1283 = vadd.f32 %v1258, %v1269
    %v1284 = vadd.f32 %v1232, %v1268
    %v1285 = vadd.f32 %v1261, %v1269
    %v1286 = vadd.f32 %v1234, %v1268
    %v1287 = vadd.f32 %v1263, %v1269
    %v1288 = vsel %vm96, %v1272, %v1286
    %v1289 = vsel %vm97, %v1273, %v1287
    %1290 = vst [vmem:[#allocation2] sm:$0xff] %v1288
    %1291 = vst [vmem:[#allocation2 + $0x8] sm:$0xff] %v1289
    %v1292 = vsel %vm96, %v1274, %v1284
    %v1293 = vsel %vm97, %v1275, %v1285
    %1294 = vst [vmem:[%s205] sm:$0xff] %v1292
    %1295 = vst [vmem:[%s205 + $0x8] sm:$0xff] %v1293
    %v1296 = vsel %vm96, %v1276, %v1282
    %v1297 = vsel %vm97, %v1277, %v1283
    %1298 = vst [vmem:[%s210] sm:$0xff] %v1296
    %1299 = vst [vmem:[%s210 + $0x8] sm:$0xff] %v1297
    %v1300 = vsel %vm96, %v1278, %v1280
    %v1301 = vsel %vm97, %v1279, %v1281
    %1302 = vst [vmem:[%s215] sm:$0xff] %v1300
    %1303 = vst [vmem:[%s215 + $0x8] sm:$0xff] %v1301
    %v1304 = vsel %vm96, %v1280, %v1278
    %v1305 = vsel %vm97, %v1281, %v1279
    %1306 = vst [vmem:[%s220] sm:$0xff] %v1304
    %1307 = vst [vmem:[%s220 + $0x8] sm:$0xff] %v1305
    %v1308 = vsel %vm96, %v1282, %v1276
    %v1309 = vsel %vm97, %v1283, %v1277
    %1310 = vst [vmem:[%s225] sm:$0xff] %v1308
    %1311 = vst [vmem:[%s225 + $0x8] sm:$0xff] %v1309
    %v1312 = vsel %vm96, %v1284, %v1274
    %v1313 = vsel %vm97, %v1285, %v1275
    %1314 = vst [vmem:[%s230] sm:$0xff] %v1312
    %1315 = vst [vmem:[%s230 + $0x8] sm:$0xff] %v1313
    %v1316 = vsel %vm96, %v1286, %v1272
    %v1317 = vsel %vm97, %v1287, %v1273
    %1318 = vst [vmem:[%s235] sm:$0xff] %v1316
    %1319 = vst [vmem:[%s235 + $0x8] sm:$0xff] %v1317
    %s1320 = scalar_lea.vmem [#allocation8], 64
    %v1321 = vld [vmem:[%s1320] sm:$0xff]
    %v1322 = vld [vmem:[%s1320 + $0x8] sm:$0xff]
    %v1323 = vld [vmem:[%s1320 + $0x10] sm:$0xff]
    %v1324 = vld [vmem:[%s1320 + $0x18] sm:$0xff]
    %v1325 = vld [vmem:[%s1320 + $0x20] sm:$0xff]
    %v1326 = vld [vmem:[%s1320 + $0x28] sm:$0xff]
    %v1327 = vld [vmem:[%s1320 + $0x30] sm:$0xff]
    %v1328 = vld [vmem:[%s1320 + $0x38] sm:$0xff]
    %v1329 = vld [vmem:[#allocation2] sm:$0xff]
    %v1330 = vld [vmem:[#allocation2 + $0x8] sm:$0xff]
    %v1339 = vunpack.c.l.b16 %v1321
    %v1340 = vunpack.c.h.b16 %v1321
    %v1341 = vunpack.c.l.b16 %v1322
    %v1342 = vunpack.c.h.b16 %v1322
    %v1343 = vunpack.c.l.b16 %v1323
    %v1344 = vunpack.c.h.b16 %v1323
    %v1345 = vunpack.c.l.b16 %v1324
    %v1346 = vunpack.c.h.b16 %v1324
    %v1347 = vunpack.c.l.b16 %v1325
    %v1348 = vunpack.c.h.b16 %v1325
    %v1349 = vunpack.c.l.b16 %v1326
    %v1350 = vunpack.c.h.b16 %v1326
    %v1351 = vunpack.c.l.b16 %v1327
    %v1352 = vunpack.c.h.b16 %v1327
    %v1353 = vunpack.c.l.b16 %v1328
    %v1354 = vunpack.c.h.b16 %v1328
    %v1355 = vpack.c.b16 %v1341, %v1339
    %v1356 = vpack.c.b16 %v1342, %v1340
    %v1357 = vpack.c.b16 %v1345, %v1343
    %v1358 = vpack.c.b16 %v1346, %v1344
    %v1359 = vpack.c.b16 %v1349, %v1347
    %v1360 = vpack.c.b16 %v1350, %v1348
    %v1361 = vpack.c.b16 %v1353, %v1351
    %v1362 = vpack.c.b16 %v1354, %v1352
    %1371 = vmatpush.bf16.msra.mxu0 0
    %1372 = vmatpush.bf16.msra.mxu0 0
    %1373 = vmatpush.bf16.msra.mxu0 0
    %1374 = vmatpush.bf16.msra.mxu0 0
    %1375 = vmatpush.bf16.msra.mxu0 %v1361
    %1376 = vmatpush.bf16.msra.mxu0 %v1359
    %1377 = vmatpush.bf16.msra.mxu0 %v1357
    %1378 = vmatpush.bf16.msra.mxu0 %v1355
    %1379 = vmatmul.bf16.gmra.mxu0 %v290
    %v1380 = vpop.f32.mrf.mxu0
    %v1381 = vadd.f32 %v1329, %v1380
    %v1382 = vpop.f32.mrf.mxu0
    %1383 = vdwg.mxu0
    %1384 = vmatpush.bf16.msra.mxu0 0
    %1385 = vmatpush.bf16.msra.mxu0 0
    %1386 = vmatpush.bf16.msra.mxu0 0
    %1387 = vmatpush.bf16.msra.mxu0 0
    %1388 = vmatpush.bf16.msra.mxu0 %v1362
    %1389 = vmatpush.bf16.msra.mxu0 %v1360
    %1390 = vmatpush.bf16.msra.mxu0 %v1358
    %1391 = vmatpush.bf16.msra.mxu0 %v1356
    %1392 = vmatmul.bf16.gmra.mxu0 %v290
    %v1393 = vpop.f32.mrf.mxu0
    %v1394 = vadd.f32 %v1330, %v1393
    %v1395 = vpop.f32.mrf.mxu0
    %1396 = vdwg.mxu0
    %v1397 = vxor.u32 %v1381, 2147483648
    %v1398 = vxor.u32 %v1394, 2147483648
    %v1399 = vmul.f32 %v1397, 1.442695
    %v1400 = vpow.pop %v1399
    %v1401 = vmul.f32 %v1398, 1.442695
    %v1402 = vpow.pop %v1401
    %v1403 = vadd.f32 %v1400, 1.0
    %v1404 = vadd.f32 %v1402, 1.0
    %v1405 = vrcp.pop %v1403
    %v1406 = vmul.f32 %v1403, %v1405
    %v1407 = vsub.f32 1.0, %v1406
    %v1408 = vmul.f32 %v1405, %v1407
    %v1409 = vadd.f32 %v1405, %v1408
    %vm1410 = vweird.f32 %v1403
    %vm1411 = vweird.f32 %v1405
    %vm1412 = vmor %vm1410, %vm1411
    %v1413 = vsel %vm1412, %v1405, %v1409
    %v1414 = vand.u32 2147483647, %v1403
    %vm1415 = vcmp.eq.f32.partialorder %v1414, 8.507059e+37
    %v1416 = vand.u32 %v1403, 2147483648
    %v1417 = vor.u32 1.1754944e-38, %v1416
    %v1418 = vsel %vm1415, %v1417, %v1413
    %v1419 = vmul.f32 1.0, %v1418
    %v1420 = vrcp.pop %v1404
    %v1421 = vmul.f32 %v1404, %v1420
    %v1422 = vsub.f32 1.0, %v1421
    %v1423 = vmul.f32 %v1420, %v1422
    %v1424 = vadd.f32 %v1420, %v1423
    %vm1425 = vweird.f32 %v1404
    %vm1426 = vweird.f32 %v1420
    %vm1427 = vmor %vm1425, %vm1426
    %v1428 = vsel %vm1427, %v1420, %v1424
    %v1429 = vand.u32 2147483647, %v1404
    %vm1430 = vcmp.eq.f32.partialorder %v1429, 8.507059e+37
    %v1431 = vand.u32 %v1404, 2147483648
    %v1432 = vor.u32 1.1754944e-38, %v1431
    %v1433 = vsel %vm1430, %v1432, %v1428
    %v1434 = vmul.f32 1.0, %v1433
    %v1435 = vtanh.pop %v1394
    %v1436 = vmul.f32 %v1419, 0.0
    %1438 = vrot.lane.b32.xlu0 %v1435, 64
    %v1439 = vpop.permute.xlu0 %1438
    %v1441 = vmul.f32 %v1419, %v1439
    %1443 = vrot.lane.b32.xlu0 %v1441, 64
    %v1444 = vpop.permute.xlu0 %1443
    %v1446 = vadd.f32 %v1436, %v1444
    %v1447 = vtanh.pop %v1446
    %1449 = vrot.lane.b32.xlu0 %v1447, 64
    %v1450 = vpop.permute.xlu0 %1449
    %v1452 = vmul.f32 %v1434, %v1450
    %1453 = vst.msk [vmem:[#allocation3] sm:$0xff] %vm374, %v1452
    %1455 = vrot.lane.b32.xlu0 %v1452, 96
    %v1456 = vpop.permute.xlu0 %1455
    %1458 = vst.msk [vmem:[%s380] sm:$0xff] %vm374, %v1456
    %v1459 = vpack.c.bf16 %v1452, %v1452
    %v1460 = vld [vmem:[%s205] sm:$0xff]
    %v1461 = vld [vmem:[%s205 + $0x8] sm:$0xff]
    %v1463 = vsel %vm288, %v1459, 0
    %1465 = vmatpush.bf16.msra.mxu0 0
    %1466 = vmatpush.bf16.msra.mxu0 0
    %1467 = vmatpush.bf16.msra.mxu0 0
    %1468 = vmatpush.bf16.msra.mxu0 0
    %1469 = vmatpush.bf16.msra.mxu0 %v1361
    %1470 = vmatpush.bf16.msra.mxu0 %v1359
    %1471 = vmatpush.bf16.msra.mxu0 %v1357
    %1472 = vmatpush.bf16.msra.mxu0 %v1355
    %1473 = vmatmul.bf16.gmra.mxu0 %v1463
    %v1474 = vpop.f32.mrf.mxu0
    %v1475 = vadd.f32 %v1460, %v1474
    %v1476 = vpop.f32.mrf.mxu0
    %1477 = vdwg.mxu0
    %1478 = vmatpush.bf16.msra.mxu0 0
    %1479 = vmatpush.bf16.msra.mxu0 0
    %1480 = vmatpush.bf16.msra.mxu0 0
    %1481 = vmatpush.bf16.msra.mxu0 0
    %1482 = vmatpush.bf16.msra.mxu0 %v1362
    %1483 = vmatpush.bf16.msra.mxu0 %v1360
    %1484 = vmatpush.bf16.msra.mxu0 %v1358
    %1485 = vmatpush.bf16.msra.mxu0 %v1356
    %1486 = vmatmul.bf16.gmra.mxu0 %v1463
    %v1487 = vpop.f32.mrf.mxu0
    %v1488 = vadd.f32 %v1461, %v1487
    %v1489 = vpop.f32.mrf.mxu0
    %1490 = vdwg.mxu0
    %v1491 = vxor.u32 %v1475, 2147483648
    %v1492 = vxor.u32 %v1488, 2147483648
    %v1493 = vmul.f32 %v1491, 1.442695
    %v1494 = vpow.pop %v1493
    %v1495 = vmul.f32 %v1492, 1.442695
    %v1496 = vpow.pop %v1495
    %v1497 = vadd.f32 %v1494, 1.0
    %v1498 = vadd.f32 %v1496, 1.0
    %v1499 = vrcp.pop %v1497
    %v1500 = vmul.f32 %v1497, %v1499
    %v1501 = vsub.f32 1.0, %v1500
    %v1502 = vmul.f32 %v1499, %v1501
    %v1503 = vadd.f32 %v1499, %v1502
    %vm1504 = vweird.f32 %v1497
    %vm1505 = vweird.f32 %v1499
    %vm1506 = vmor %vm1504, %vm1505
    %v1507 = vsel %vm1506, %v1499, %v1503
    %v1508 = vand.u32 2147483647, %v1497
    %vm1509 = vcmp.eq.f32.partialorder %v1508, 8.507059e+37
    %v1510 = vand.u32 %v1497, 2147483648
    %v1511 = vor.u32 1.1754944e-38, %v1510
    %v1512 = vsel %vm1509, %v1511, %v1507
    %v1513 = vmul.f32 1.0, %v1512
    %v1514 = vrcp.pop %v1498
    %v1515 = vmul.f32 %v1498, %v1514
    %v1516 = vsub.f32 1.0, %v1515
    %v1517 = vmul.f32 %v1514, %v1516
    %v1518 = vadd.f32 %v1514, %v1517
    %vm1519 = vweird.f32 %v1498
    %vm1520 = vweird.f32 %v1514
    %vm1521 = vmor %vm1519, %vm1520
    %v1522 = vsel %vm1521, %v1514, %v1518
    %v1523 = vand.u32 2147483647, %v1498
    %vm1524 = vcmp.eq.f32.partialorder %v1523, 8.507059e+37
    %v1525 = vand.u32 %v1498, 2147483648
    %v1526 = vor.u32 1.1754944e-38, %v1525
    %v1527 = vsel %vm1524, %v1526, %v1522
    %v1528 = vmul.f32 1.0, %v1527
    %v1529 = vtanh.pop %v1488
    %v1530 = vmul.f32 %v1513, %v1446
    %1532 = vrot.lane.b32.xlu0 %v1529, 64
    %v1533 = vpop.permute.xlu0 %1532
    %v1535 = vmul.f32 %v1513, %v1533
    %1537 = vrot.lane.b32.xlu0 %v1535, 64
    %v1538 = vpop.permute.xlu0 %1537
    %v1540 = vadd.f32 %v1530, %v1538
    %v1541 = vtanh.pop %v1540
    %1543 = vrot.lane.b32.xlu0 %v1541, 64
    %v1544 = vpop.permute.xlu0 %1543
    %v1546 = vmul.f32 %v1528, %v1544
    %1547 = vst.msk [vmem:[%s470] sm:$0xff] %vm374, %v1546
    %1549 = vrot.lane.b32.xlu0 %v1546, 96
    %v1550 = vpop.permute.xlu0 %1549
    %1552 = vst.msk [vmem:[%s476] sm:$0xff] %vm374, %v1550
    %v1553 = vpack.c.bf16 %v1546, %v1546
    %v1554 = vld [vmem:[%s210] sm:$0xff]
    %v1555 = vld [vmem:[%s210 + $0x8] sm:$0xff]
    %v1557 = vsel %vm288, %v1553, 0
    %1559 = vmatpush.bf16.msra.mxu0 0
    %1560 = vmatpush.bf16.msra.mxu0 0
    %1561 = vmatpush.bf16.msra.mxu0 0
    %1562 = vmatpush.bf16.msra.mxu0 0
    %1563 = vmatpush.bf16.msra.mxu0 %v1361
    %1564 = vmatpush.bf16.msra.mxu0 %v1359
    %1565 = vmatpush.bf16.msra.mxu0 %v1357
    %1566 = vmatpush.bf16.msra.mxu0 %v1355
    %1567 = vmatmul.bf16.gmra.mxu0 %v1557
    %v1568 = vpop.f32.mrf.mxu0
    %v1569 = vadd.f32 %v1554, %v1568
    %v1570 = vpop.f32.mrf.mxu0
    %1571 = vdwg.mxu0
    %1572 = vmatpush.bf16.msra.mxu0 0
    %1573 = vmatpush.bf16.msra.mxu0 0
    %1574 = vmatpush.bf16.msra.mxu0 0
    %1575 = vmatpush.bf16.msra.mxu0 0
    %1576 = vmatpush.bf16.msra.mxu0 %v1362
    %1577 = vmatpush.bf16.msra.mxu0 %v1360
    %1578 = vmatpush.bf16.msra.mxu0 %v1358
    %1579 = vmatpush.bf16.msra.mxu0 %v1356
    %1580 = vmatmul.bf16.gmra.mxu0 %v1557
    %v1581 = vpop.f32.mrf.mxu0
    %v1582 = vadd.f32 %v1555, %v1581
    %v1583 = vpop.f32.mrf.mxu0
    %1584 = vdwg.mxu0
    %v1585 = vxor.u32 %v1569, 2147483648
    %v1586 = vxor.u32 %v1582, 2147483648
    %v1587 = vmul.f32 %v1585, 1.442695
    %v1588 = vpow.pop %v1587
    %v1589 = vmul.f32 %v1586, 1.442695
    %v1590 = vpow.pop %v1589
    %v1591 = vadd.f32 %v1588, 1.0
    %v1592 = vadd.f32 %v1590, 1.0
    %v1593 = vrcp.pop %v1591
    %v1594 = vmul.f32 %v1591, %v1593
    %v1595 = vsub.f32 1.0, %v1594
    %v1596 = vmul.f32 %v1593, %v1595
    %v1597 = vadd.f32 %v1593, %v1596
    %vm1598 = vweird.f32 %v1591
    %vm1599 = vweird.f32 %v1593
    %vm1600 = vmor %vm1598, %vm1599
    %v1601 = vsel %vm1600, %v1593, %v1597
    %v1602 = vand.u32 2147483647, %v1591
    %vm1603 = vcmp.eq.f32.partialorder %v1602, 8.507059e+37
    %v1604 = vand.u32 %v1591, 2147483648
    %v1605 = vor.u32 1.1754944e-38, %v1604
    %v1606 = vsel %vm1603, %v1605, %v1601
    %v1607 = vmul.f32 1.0, %v1606
    %v1608 = vrcp.pop %v1592
    %v1609 = vmul.f32 %v1592, %v1608
    %v1610 = vsub.f32 1.0, %v1609
    %v1611 = vmul.f32 %v1608, %v1610
    %v1612 = vadd.f32 %v1608, %v1611
    %vm1613 = vweird.f32 %v1592
    %vm1614 = vweird.f32 %v1608
    %vm1615 = vmor %vm1613, %vm1614
    %v1616 = vsel %vm1615, %v1608, %v1612
    %v1617 = vand.u32 2147483647, %v1592
    %vm1618 = vcmp.eq.f32.partialorder %v1617, 8.507059e+37
    %v1619 = vand.u32 %v1592, 2147483648
    %v1620 = vor.u32 1.1754944e-38, %v1619
    %v1621 = vsel %vm1618, %v1620, %v1616
    %v1622 = vmul.f32 1.0, %v1621
    %v1623 = vtanh.pop %v1582
    %v1624 = vmul.f32 %v1607, %v1540
    %1626 = vrot.lane.b32.xlu0 %v1623, 64
    %v1627 = vpop.permute.xlu0 %1626
    %v1629 = vmul.f32 %v1607, %v1627
    %1631 = vrot.lane.b32.xlu0 %v1629, 64
    %v1632 = vpop.permute.xlu0 %1631
    %v1634 = vadd.f32 %v1624, %v1632
    %v1635 = vtanh.pop %v1634
    %1637 = vrot.lane.b32.xlu0 %v1635, 64
    %v1638 = vpop.permute.xlu0 %1637
    %v1640 = vmul.f32 %v1622, %v1638
    %1641 = vst.msk [vmem:[%s566] sm:$0xff] %vm374, %v1640
    %1643 = vrot.lane.b32.xlu0 %v1640, 96
    %v1644 = vpop.permute.xlu0 %1643
    %1646 = vst.msk [vmem:[%s572] sm:$0xff] %vm374, %v1644
    %v1647 = vpack.c.bf16 %v1640, %v1640
    %v1648 = vld [vmem:[%s215] sm:$0xff]
    %v1649 = vld [vmem:[%s215 + $0x8] sm:$0xff]
    %v1651 = vsel %vm288, %v1647, 0
    %1653 = vmatpush.bf16.msra.mxu0 0
    %1654 = vmatpush.bf16.msra.mxu0 0
    %1655 = vmatpush.bf16.msra.mxu0 0
    %1656 = vmatpush.bf16.msra.mxu0 0
    %1657 = vmatpush.bf16.msra.mxu0 %v1361
    %1658 = vmatpush.bf16.msra.mxu0 %v1359
    %1659 = vmatpush.bf16.msra.mxu0 %v1357
    %1660 = vmatpush.bf16.msra.mxu0 %v1355
    %1661 = vmatmul.bf16.gmra.mxu0 %v1651
    %v1662 = vpop.f32.mrf.mxu0
    %v1663 = vadd.f32 %v1648, %v1662
    %v1664 = vpop.f32.mrf.mxu0
    %1665 = vdwg.mxu0
    %1666 = vmatpush.bf16.msra.mxu0 0
    %1667 = vmatpush.bf16.msra.mxu0 0
    %1668 = vmatpush.bf16.msra.mxu0 0
    %1669 = vmatpush.bf16.msra.mxu0 0
    %1670 = vmatpush.bf16.msra.mxu0 %v1362
    %1671 = vmatpush.bf16.msra.mxu0 %v1360
    %1672 = vmatpush.bf16.msra.mxu0 %v1358
    %1673 = vmatpush.bf16.msra.mxu0 %v1356
    %1674 = vmatmul.bf16.gmra.mxu0 %v1651
    %v1675 = vpop.f32.mrf.mxu0
    %v1676 = vadd.f32 %v1649, %v1675
    %v1677 = vpop.f32.mrf.mxu0
    %1678 = vdwg.mxu0
    %v1679 = vxor.u32 %v1663, 2147483648
    %v1680 = vxor.u32 %v1676, 2147483648
    %v1681 = vmul.f32 %v1679, 1.442695
    %v1682 = vpow.pop %v1681
    %v1683 = vmul.f32 %v1680, 1.442695
    %v1684 = vpow.pop %v1683
    %v1685 = vadd.f32 %v1682, 1.0
    %v1686 = vadd.f32 %v1684, 1.0
    %v1687 = vrcp.pop %v1685
    %v1688 = vmul.f32 %v1685, %v1687
    %v1689 = vsub.f32 1.0, %v1688
    %v1690 = vmul.f32 %v1687, %v1689
    %v1691 = vadd.f32 %v1687, %v1690
    %vm1692 = vweird.f32 %v1685
    %vm1693 = vweird.f32 %v1687
    %vm1694 = vmor %vm1692, %vm1693
    %v1695 = vsel %vm1694, %v1687, %v1691
    %v1696 = vand.u32 2147483647, %v1685
    %vm1697 = vcmp.eq.f32.partialorder %v1696, 8.507059e+37
    %v1698 = vand.u32 %v1685, 2147483648
    %v1699 = vor.u32 1.1754944e-38, %v1698
    %v1700 = vsel %vm1697, %v1699, %v1695
    %v1701 = vmul.f32 1.0, %v1700
    %v1702 = vrcp.pop %v1686
    %v1703 = vmul.f32 %v1686, %v1702
    %v1704 = vsub.f32 1.0, %v1703
    %v1705 = vmul.f32 %v1702, %v1704
    %v1706 = vadd.f32 %v1702, %v1705
    %vm1707 = vweird.f32 %v1686
    %vm1708 = vweird.f32 %v1702
    %vm1709 = vmor %vm1707, %vm1708
    %v1710 = vsel %vm1709, %v1702, %v1706
    %v1711 = vand.u32 2147483647, %v1686
    %vm1712 = vcmp.eq.f32.partialorder %v1711, 8.507059e+37
    %v1713 = vand.u32 %v1686, 2147483648
    %v1714 = vor.u32 1.1754944e-38, %v1713
    %v1715 = vsel %vm1712, %v1714, %v1710
    %v1716 = vmul.f32 1.0, %v1715
    %v1717 = vtanh.pop %v1676
    %v1718 = vmul.f32 %v1701, %v1634
    %1720 = vrot.lane.b32.xlu0 %v1717, 64
    %v1721 = vpop.permute.xlu0 %1720
    %v1723 = vmul.f32 %v1701, %v1721
    %1725 = vrot.lane.b32.xlu0 %v1723, 64
    %v1726 = vpop.permute.xlu0 %1725
    %v1728 = vadd.f32 %v1718, %v1726
    %v1729 = vtanh.pop %v1728
    %1731 = vrot.lane.b32.xlu0 %v1729, 64
    %v1732 = vpop.permute.xlu0 %1731
    %v1734 = vmul.f32 %v1716, %v1732
    %1735 = vst.msk [vmem:[%s662] sm:$0xff] %vm374, %v1734
    %1737 = vrot.lane.b32.xlu0 %v1734, 96
    %v1738 = vpop.permute.xlu0 %1737
    %1740 = vst.msk [vmem:[%s668] sm:$0xff] %vm374, %v1738
    %v1741 = vpack.c.bf16 %v1734, %v1734
    %v1742 = vld [vmem:[%s220] sm:$0xff]
    %v1743 = vld [vmem:[%s220 + $0x8] sm:$0xff]
    %v1745 = vsel %vm288, %v1741, 0
    %1747 = vmatpush.bf16.msra.mxu0 0
    %1748 = vmatpush.bf16.msra.mxu0 0
    %1749 = vmatpush.bf16.msra.mxu0 0
    %1750 = vmatpush.bf16.msra.mxu0 0
    %1751 = vmatpush.bf16.msra.mxu0 %v1361
    %1752 = vmatpush.bf16.msra.mxu0 %v1359
    %1753 = vmatpush.bf16.msra.mxu0 %v1357
    %1754 = vmatpush.bf16.msra.mxu0 %v1355
    %1755 = vmatmul.bf16.gmra.mxu0 %v1745
    %v1756 = vpop.f32.mrf.mxu0
    %v1757 = vadd.f32 %v1742, %v1756
    %v1758 = vpop.f32.mrf.mxu0
    %1759 = vdwg.mxu0
    %1760 = vmatpush.bf16.msra.mxu0 0
    %1761 = vmatpush.bf16.msra.mxu0 0
    %1762 = vmatpush.bf16.msra.mxu0 0
    %1763 = vmatpush.bf16.msra.mxu0 0
    %1764 = vmatpush.bf16.msra.mxu0 %v1362
    %1765 = vmatpush.bf16.msra.mxu0 %v1360
    %1766 = vmatpush.bf16.msra.mxu0 %v1358
    %1767 = vmatpush.bf16.msra.mxu0 %v1356
    %1768 = vmatmul.bf16.gmra.mxu0 %v1745
    %v1769 = vpop.f32.mrf.mxu0
    %v1770 = vadd.f32 %v1743, %v1769
    %v1771 = vpop.f32.mrf.mxu0
    %1772 = vdwg.mxu0
    %v1773 = vxor.u32 %v1757, 2147483648
    %v1774 = vxor.u32 %v1770, 2147483648
    %v1775 = vmul.f32 %v1773, 1.442695
    %v1776 = vpow.pop %v1775
    %v1777 = vmul.f32 %v1774, 1.442695
    %v1778 = vpow.pop %v1777
    %v1779 = vadd.f32 %v1776, 1.0
    %v1780 = vadd.f32 %v1778, 1.0
    %v1781 = vrcp.pop %v1779
    %v1782 = vmul.f32 %v1779, %v1781
    %v1783 = vsub.f32 1.0, %v1782
    %v1784 = vmul.f32 %v1781, %v1783
    %v1785 = vadd.f32 %v1781, %v1784
    %vm1786 = vweird.f32 %v1779
    %vm1787 = vweird.f32 %v1781
    %vm1788 = vmor %vm1786, %vm1787
    %v1789 = vsel %vm1788, %v1781, %v1785
    %v1790 = vand.u32 2147483647, %v1779
    %vm1791 = vcmp.eq.f32.partialorder %v1790, 8.507059e+37
    %v1792 = vand.u32 %v1779, 2147483648
    %v1793 = vor.u32 1.1754944e-38, %v1792
    %v1794 = vsel %vm1791, %v1793, %v1789
    %v1795 = vmul.f32 1.0, %v1794
    %v1796 = vrcp.pop %v1780
    %v1797 = vmul.f32 %v1780, %v1796
    %v1798 = vsub.f32 1.0, %v1797
    %v1799 = vmul.f32 %v1796, %v1798
    %v1800 = vadd.f32 %v1796, %v1799
    %vm1801 = vweird.f32 %v1780
    %vm1802 = vweird.f32 %v1796
    %vm1803 = vmor %vm1801, %vm1802
    %v1804 = vsel %vm1803, %v1796, %v1800
    %v1805 = vand.u32 2147483647, %v1780
    %vm1806 = vcmp.eq.f32.partialorder %v1805, 8.507059e+37
    %v1807 = vand.u32 %v1780, 2147483648
    %v1808 = vor.u32 1.1754944e-38, %v1807
    %v1809 = vsel %vm1806, %v1808, %v1804
    %v1810 = vmul.f32 1.0, %v1809
    %v1811 = vtanh.pop %v1770
    %v1812 = vmul.f32 %v1795, %v1728
    %1814 = vrot.lane.b32.xlu0 %v1811, 64
    %v1815 = vpop.permute.xlu0 %1814
    %v1817 = vmul.f32 %v1795, %v1815
    %1819 = vrot.lane.b32.xlu0 %v1817, 64
    %v1820 = vpop.permute.xlu0 %1819
    %v1822 = vadd.f32 %v1812, %v1820
    %v1823 = vtanh.pop %v1822
    %1825 = vrot.lane.b32.xlu0 %v1823, 64
    %v1826 = vpop.permute.xlu0 %1825
    %v1828 = vmul.f32 %v1810, %v1826
    %1829 = vst.msk [vmem:[%s758] sm:$0xff] %vm374, %v1828
    %1831 = vrot.lane.b32.xlu0 %v1828, 96
    %v1832 = vpop.permute.xlu0 %1831
    %1834 = vst.msk [vmem:[%s764] sm:$0xff] %vm374, %v1832
    %v1835 = vpack.c.bf16 %v1828, %v1828
    %v1836 = vld [vmem:[%s225] sm:$0xff]
    %v1837 = vld [vmem:[%s225 + $0x8] sm:$0xff]
    %v1839 = vsel %vm288, %v1835, 0
    %1841 = vmatpush.bf16.msra.mxu0 0
    %1842 = vmatpush.bf16.msra.mxu0 0
    %1843 = vmatpush.bf16.msra.mxu0 0
    %1844 = vmatpush.bf16.msra.mxu0 0
    %1845 = vmatpush.bf16.msra.mxu0 %v1361
    %1846 = vmatpush.bf16.msra.mxu0 %v1359
    %1847 = vmatpush.bf16.msra.mxu0 %v1357
    %1848 = vmatpush.bf16.msra.mxu0 %v1355
    %1849 = vmatmul.bf16.gmra.mxu0 %v1839
    %v1850 = vpop.f32.mrf.mxu0
    %v1851 = vadd.f32 %v1836, %v1850
    %v1852 = vpop.f32.mrf.mxu0
    %1853 = vdwg.mxu0
    %1854 = vmatpush.bf16.msra.mxu0 0
    %1855 = vmatpush.bf16.msra.mxu0 0
    %1856 = vmatpush.bf16.msra.mxu0 0
    %1857 = vmatpush.bf16.msra.mxu0 0
    %1858 = vmatpush.bf16.msra.mxu0 %v1362
    %1859 = vmatpush.bf16.msra.mxu0 %v1360
    %1860 = vmatpush.bf16.msra.mxu0 %v1358
    %1861 = vmatpush.bf16.msra.mxu0 %v1356
    %1862 = vmatmul.bf16.gmra.mxu0 %v1839
    %v1863 = vpop.f32.mrf.mxu0
    %v1864 = vadd.f32 %v1837, %v1863
    %v1865 = vpop.f32.mrf.mxu0
    %1866 = vdwg.mxu0
    %v1867 = vxor.u32 %v1851, 2147483648
    %v1868 = vxor.u32 %v1864, 2147483648
    %v1869 = vmul.f32 %v1867, 1.442695
    %v1870 = vpow.pop %v1869
    %v1871 = vmul.f32 %v1868, 1.442695
    %v1872 = vpow.pop %v1871
    %v1873 = vadd.f32 %v1870, 1.0
    %v1874 = vadd.f32 %v1872, 1.0
    %v1875 = vrcp.pop %v1873
    %v1876 = vmul.f32 %v1873, %v1875
    %v1877 = vsub.f32 1.0, %v1876
    %v1878 = vmul.f32 %v1875, %v1877
    %v1879 = vadd.f32 %v1875, %v1878
    %vm1880 = vweird.f32 %v1873
    %vm1881 = vweird.f32 %v1875
    %vm1882 = vmor %vm1880, %vm1881
    %v1883 = vsel %vm1882, %v1875, %v1879
    %v1884 = vand.u32 2147483647, %v1873
    %vm1885 = vcmp.eq.f32.partialorder %v1884, 8.507059e+37
    %v1886 = vand.u32 %v1873, 2147483648
    %v1887 = vor.u32 1.1754944e-38, %v1886
    %v1888 = vsel %vm1885, %v1887, %v1883
    %v1889 = vmul.f32 1.0, %v1888
    %v1890 = vrcp.pop %v1874
    %v1891 = vmul.f32 %v1874, %v1890
    %v1892 = vsub.f32 1.0, %v1891
    %v1893 = vmul.f32 %v1890, %v1892
    %v1894 = vadd.f32 %v1890, %v1893
    %vm1895 = vweird.f32 %v1874
    %vm1896 = vweird.f32 %v1890
    %vm1897 = vmor %vm1895, %vm1896
    %v1898 = vsel %vm1897, %v1890, %v1894
    %v1899 = vand.u32 2147483647, %v1874
    %vm1900 = vcmp.eq.f32.partialorder %v1899, 8.507059e+37
    %v1901 = vand.u32 %v1874, 2147483648
    %v1902 = vor.u32 1.1754944e-38, %v1901
    %v1903 = vsel %vm1900, %v1902, %v1898
    %v1904 = vmul.f32 1.0, %v1903
    %v1905 = vtanh.pop %v1864
    %v1906 = vmul.f32 %v1889, %v1822
    %1908 = vrot.lane.b32.xlu0 %v1905, 64
    %v1909 = vpop.permute.xlu0 %1908
    %v1911 = vmul.f32 %v1889, %v1909
    %1913 = vrot.lane.b32.xlu0 %v1911, 64
    %v1914 = vpop.permute.xlu0 %1913
    %v1916 = vadd.f32 %v1906, %v1914
    %v1917 = vtanh.pop %v1916
    %1919 = vrot.lane.b32.xlu0 %v1917, 64
    %v1920 = vpop.permute.xlu0 %1919
    %v1922 = vmul.f32 %v1904, %v1920
    %1923 = vst.msk [vmem:[%s854] sm:$0xff] %vm374, %v1922
    %1925 = vrot.lane.b32.xlu0 %v1922, 96
    %v1926 = vpop.permute.xlu0 %1925
    %1928 = vst.msk [vmem:[%s860] sm:$0xff] %vm374, %v1926
    %v1929 = vpack.c.bf16 %v1922, %v1922
    %v1930 = vld [vmem:[%s230] sm:$0xff]
    %v1931 = vld [vmem:[%s230 + $0x8] sm:$0xff]
    %v1933 = vsel %vm288, %v1929, 0
    %1935 = vmatpush.bf16.msra.mxu0 0
    %1936 = vmatpush.bf16.msra.mxu0 0
    %1937 = vmatpush.bf16.msra.mxu0 0
    %1938 = vmatpush.bf16.msra.mxu0 0
    %1939 = vmatpush.bf16.msra.mxu0 %v1361
    %1940 = vmatpush.bf16.msra.mxu0 %v1359
    %1941 = vmatpush.bf16.msra.mxu0 %v1357
    %1942 = vmatpush.bf16.msra.mxu0 %v1355
    %1943 = vmatmul.bf16.gmra.mxu0 %v1933
    %v1944 = vpop.f32.mrf.mxu0
    %v1945 = vadd.f32 %v1930, %v1944
    %v1946 = vpop.f32.mrf.mxu0
    %1947 = vdwg.mxu0
    %1948 = vmatpush.bf16.msra.mxu0 0
    %1949 = vmatpush.bf16.msra.mxu0 0
    %1950 = vmatpush.bf16.msra.mxu0 0
    %1951 = vmatpush.bf16.msra.mxu0 0
    %1952 = vmatpush.bf16.msra.mxu0 %v1362
    %1953 = vmatpush.bf16.msra.mxu0 %v1360
    %1954 = vmatpush.bf16.msra.mxu0 %v1358
    %1955 = vmatpush.bf16.msra.mxu0 %v1356
    %1956 = vmatmul.bf16.gmra.mxu0 %v1933
    %v1957 = vpop.f32.mrf.mxu0
    %v1958 = vadd.f32 %v1931, %v1957
    %v1959 = vpop.f32.mrf.mxu0
    %1960 = vdwg.mxu0
    %v1961 = vxor.u32 %v1945, 2147483648
    %v1962 = vxor.u32 %v1958, 2147483648
    %v1963 = vmul.f32 %v1961, 1.442695
    %v1964 = vpow.pop %v1963
    %v1965 = vmul.f32 %v1962, 1.442695
    %v1966 = vpow.pop %v1965
    %v1967 = vadd.f32 %v1964, 1.0
    %v1968 = vadd.f32 %v1966, 1.0
    %v1969 = vrcp.pop %v1967
    %v1970 = vmul.f32 %v1967, %v1969
    %v1971 = vsub.f32 1.0, %v1970
    %v1972 = vmul.f32 %v1969, %v1971
    %v1973 = vadd.f32 %v1969, %v1972
    %vm1974 = vweird.f32 %v1967
    %vm1975 = vweird.f32 %v1969
    %vm1976 = vmor %vm1974, %vm1975
    %v1977 = vsel %vm1976, %v1969, %v1973
    %v1978 = vand.u32 2147483647, %v1967
    %vm1979 = vcmp.eq.f32.partialorder %v1978, 8.507059e+37
    %v1980 = vand.u32 %v1967, 2147483648
    %v1981 = vor.u32 1.1754944e-38, %v1980
    %v1982 = vsel %vm1979, %v1981, %v1977
    %v1983 = vmul.f32 1.0, %v1982
    %v1984 = vrcp.pop %v1968
    %v1985 = vmul.f32 %v1968, %v1984
    %v1986 = vsub.f32 1.0, %v1985
    %v1987 = vmul.f32 %v1984, %v1986
    %v1988 = vadd.f32 %v1984, %v1987
    %vm1989 = vweird.f32 %v1968
    %vm1990 = vweird.f32 %v1984
    %vm1991 = vmor %vm1989, %vm1990
    %v1992 = vsel %vm1991, %v1984, %v1988
    %v1993 = vand.u32 2147483647, %v1968
    %vm1994 = vcmp.eq.f32.partialorder %v1993, 8.507059e+37
    %v1995 = vand.u32 %v1968, 2147483648
    %v1996 = vor.u32 1.1754944e-38, %v1995
    %v1997 = vsel %vm1994, %v1996, %v1992
    %v1998 = vmul.f32 1.0, %v1997
    %v1999 = vtanh.pop %v1958
    %v2000 = vmul.f32 %v1983, %v1916
    %2002 = vrot.lane.b32.xlu0 %v1999, 64
    %v2003 = vpop.permute.xlu0 %2002
    %v2005 = vmul.f32 %v1983, %v2003
    %2007 = vrot.lane.b32.xlu0 %v2005, 64
    %v2008 = vpop.permute.xlu0 %2007
    %v2010 = vadd.f32 %v2000, %v2008
    %v2011 = vtanh.pop %v2010
    %2013 = vrot.lane.b32.xlu0 %v2011, 64
    %v2014 = vpop.permute.xlu0 %2013
    %v2016 = vmul.f32 %v1998, %v2014
    %2017 = vst.msk [vmem:[%s950] sm:$0xff] %vm374, %v2016
    %2019 = vrot.lane.b32.xlu0 %v2016, 96
    %v2020 = vpop.permute.xlu0 %2019
    %2022 = vst.msk [vmem:[%s956] sm:$0xff] %vm374, %v2020
    %v2023 = vpack.c.bf16 %v2016, %v2016
    %v2024 = vld [vmem:[%s235] sm:$0xff]
    %v2025 = vld [vmem:[%s235 + $0x8] sm:$0xff]
    %v2027 = vsel %vm288, %v2023, 0
    %2029 = vmatpush.bf16.msra.mxu0 0
    %2030 = vmatpush.bf16.msra.mxu0 0
    %2031 = vmatpush.bf16.msra.mxu0 0
    %2032 = vmatpush.bf16.msra.mxu0 0
    %2033 = vmatpush.bf16.msra.mxu0 %v1361
    %2034 = vmatpush.bf16.msra.mxu0 %v1359
    %2035 = vmatpush.bf16.msra.mxu0 %v1357
    %2036 = vmatpush.bf16.msra.mxu0 %v1355
    %2037 = vmatmul.bf16.gmra.mxu0 %v2027
    %v2038 = vpop.f32.mrf.mxu0
    %v2039 = vadd.f32 %v2024, %v2038
    %v2040 = vpop.f32.mrf.mxu0
    %2041 = vdwg.mxu0
    %2042 = vmatpush.bf16.msra.mxu0 0
    %2043 = vmatpush.bf16.msra.mxu0 0
    %2044 = vmatpush.bf16.msra.mxu0 0
    %2045 = vmatpush.bf16.msra.mxu0 0
    %2046 = vmatpush.bf16.msra.mxu0 %v1362
    %2047 = vmatpush.bf16.msra.mxu0 %v1360
    %2048 = vmatpush.bf16.msra.mxu0 %v1358
    %2049 = vmatpush.bf16.msra.mxu0 %v1356
    %2050 = vmatmul.bf16.gmra.mxu0 %v2027
    %v2051 = vpop.f32.mrf.mxu0
    %v2052 = vadd.f32 %v2025, %v2051
    %v2053 = vpop.f32.mrf.mxu0
    %2054 = vdwg.mxu0
    %v2055 = vxor.u32 %v2039, 2147483648
    %v2056 = vxor.u32 %v2052, 2147483648
    %v2057 = vmul.f32 %v2055, 1.442695
    %v2058 = vpow.pop %v2057
    %v2059 = vmul.f32 %v2056, 1.442695
    %v2060 = vpow.pop %v2059
    %v2061 = vadd.f32 %v2058, 1.0
    %v2062 = vadd.f32 %v2060, 1.0
    %v2063 = vrcp.pop %v2061
    %v2064 = vmul.f32 %v2061, %v2063
    %v2065 = vsub.f32 1.0, %v2064
    %v2066 = vmul.f32 %v2063, %v2065
    %v2067 = vadd.f32 %v2063, %v2066
    %vm2068 = vweird.f32 %v2061
    %vm2069 = vweird.f32 %v2063
    %vm2070 = vmor %vm2068, %vm2069
    %v2071 = vsel %vm2070, %v2063, %v2067
    %v2072 = vand.u32 2147483647, %v2061
    %vm2073 = vcmp.eq.f32.partialorder %v2072, 8.507059e+37
    %v2074 = vand.u32 %v2061, 2147483648
    %v2075 = vor.u32 1.1754944e-38, %v2074
    %v2076 = vsel %vm2073, %v2075, %v2071
    %v2077 = vmul.f32 1.0, %v2076
    %v2078 = vrcp.pop %v2062
    %v2079 = vmul.f32 %v2062, %v2078
    %v2080 = vsub.f32 1.0, %v2079
    %v2081 = vmul.f32 %v2078, %v2080
    %v2082 = vadd.f32 %v2078, %v2081
    %vm2083 = vweird.f32 %v2062
    %vm2084 = vweird.f32 %v2078
    %vm2085 = vmor %vm2083, %vm2084
    %v2086 = vsel %vm2085, %v2078, %v2082
    %v2087 = vand.u32 2147483647, %v2062
    %vm2088 = vcmp.eq.f32.partialorder %v2087, 8.507059e+37
    %v2089 = vand.u32 %v2062, 2147483648
    %v2090 = vor.u32 1.1754944e-38, %v2089
    %v2091 = vsel %vm2088, %v2090, %v2086
    %v2092 = vmul.f32 1.0, %v2091
    %v2093 = vtanh.pop %v2052
    %v2094 = vmul.f32 %v2077, %v2010
    %2096 = vrot.lane.b32.xlu0 %v2093, 64
    %v2097 = vpop.permute.xlu0 %2096
    %v2099 = vmul.f32 %v2077, %v2097
    %2101 = vrot.lane.b32.xlu0 %v2099, 64
    %v2102 = vpop.permute.xlu0 %2101
    %v2104 = vadd.f32 %v2094, %v2102
    %v2105 = vtanh.pop %v2104
    %2107 = vrot.lane.b32.xlu0 %v2105, 64
    %v2108 = vpop.permute.xlu0 %2107
    %v2110 = vmul.f32 %v2092, %v2108
    %2111 = vst.msk [vmem:[%s1046] sm:$0xff] %vm374, %v2110
    %2113 = vrot.lane.b32.xlu0 %v2110, 96
    %v2114 = vpop.permute.xlu0 %2113
    %2116 = vst.msk [vmem:[#allocation4] sm:$0xff] %vm374, %v2114
    %v2117 = vld [vmem:[#allocation3] sm:$0xff]
    %v2118 = vld [vmem:[#allocation3 + $0x8] sm:$0xff]
    %v2119 = vld [vmem:[#allocation3 + $0x10] sm:$0xff]
    %v2120 = vld [vmem:[#allocation3 + $0x18] sm:$0xff]
    %v2121 = vld [vmem:[#allocation3 + $0x20] sm:$0xff]
    %v2122 = vld [vmem:[#allocation3 + $0x28] sm:$0xff]
    %v2123 = vld [vmem:[#allocation3 + $0x30] sm:$0xff]
    %v2124 = vld [vmem:[#allocation3 + $0x38] sm:$0xff]
    %v2125 = vpack.c.bf16 %v2118, %v2117
    %v2126 = vpack.c.bf16 %v2120, %v2119
    %v2127 = vpack.c.bf16 %v2122, %v2121
    %v2128 = vpack.c.bf16 %v2124, %v2123
    %v2129 = vld [vmem:[#allocation4] sm:$0xff]
    %v2130 = vld [vmem:[#allocation4 + $0x8] sm:$0xff]
    %v2131 = vld [vmem:[#allocation4 + $0x10] sm:$0xff]
    %v2132 = vld [vmem:[#allocation4 + $0x18] sm:$0xff]
    %v2133 = vld [vmem:[#allocation4 + $0x20] sm:$0xff]
    %v2134 = vld [vmem:[#allocation4 + $0x28] sm:$0xff]
    %v2135 = vld [vmem:[#allocation4 + $0x30] sm:$0xff]
    %v2136 = vld [vmem:[#allocation4 + $0x38] sm:$0xff]
    %v2137 = vpack.c.bf16 %v2130, %v2129
    %v2138 = vpack.c.bf16 %v2132, %v2131
    %v2139 = vpack.c.bf16 %v2134, %v2133
    %v2140 = vpack.c.bf16 %v2136, %v2135
    %s2141 = scalar_lea.vmem %s2, 32
    %v2142 = vld [vmem:[%s2141] sm:$0xff]
    %v2143 = vld [vmem:[%s2141 + $0x8] sm:$0xff]
    %v2144 = vld [vmem:[%s2141 + $0x10] sm:$0xff]
    %v2145 = vld [vmem:[%s2141 + $0x18] sm:$0xff]
    %s2146 = scalar_lea.vmem [#allocation5], 32
    %v2147 = vld [vmem:[%s2146] sm:$0xff]
    %v2148 = vld [vmem:[%s2146 + $0x8] sm:$0xff]
    %v2149 = vld [vmem:[%s2146 + $0x10] sm:$0xff]
    %v2150 = vld [vmem:[%s2146 + $0x18] sm:$0xff]
    %v2155 = vunpack.c.l.b16 %v2147
    %v2156 = vunpack.c.h.b16 %v2147
    %v2157 = vunpack.c.l.b16 %v2148
    %v2158 = vunpack.c.h.b16 %v2148
    %v2159 = vunpack.c.l.b16 %v2149
    %v2160 = vunpack.c.h.b16 %v2149
    %v2161 = vunpack.c.l.b16 %v2150
    %v2162 = vunpack.c.h.b16 %v2150
    %v2163 = vpack.c.b16 %v2157, %v2155
    %v2164 = vpack.c.b16 %v2158, %v2156
    %v2165 = vpack.c.b16 %v2161, %v2159
    %v2166 = vpack.c.b16 %v2162, %v2160
    %v2172 = vsel %vm374, %v2137, 0
    %v2175 = vsel %vm374, %v2138, 0
    %v2178 = vsel %vm374, %v2139, 0
    %v2181 = vsel %vm374, %v2140, 0
    %2183 = vmatpush.bf16.msra.mxu0 0
    %2184 = vmatpush.bf16.msra.mxu0 0
    %2185 = vmatpush.bf16.msra.mxu0 0
    %2186 = vmatpush.bf16.msra.mxu0 0
    %2187 = vmatpush.bf16.msra.mxu0 0
    %2188 = vmatpush.bf16.msra.mxu0 0
    %2189 = vmatpush.bf16.msra.mxu0 %v2165
    %2190 = vmatpush.bf16.msra.mxu0 %v2163
    %2191 = vmatmul.bf16.gmra.mxu0 %v2172
    %v2192 = vpop.f32.mrf.mxu0
    %v2193 = vadd.f32 0.0, %v2192
    %v2194 = vpop.f32.mrf.mxu0
    %v2195 = vadd.f32 0.0, %v2194
    %2196 = vmatmul.bf16.gmra.mxu0 %v2175
    %v2197 = vpop.f32.mrf.mxu0
    %v2198 = vadd.f32 0.0, %v2197
    %v2199 = vpop.f32.mrf.mxu0
    %v2200 = vadd.f32 0.0, %v2199
    %2201 = vmatmul.bf16.gmra.mxu0 %v2178
    %v2202 = vpop.f32.mrf.mxu0
    %v2203 = vadd.f32 0.0, %v2202
    %v2204 = vpop.f32.mrf.mxu0
    %v2205 = vadd.f32 0.0, %v2204
    %2206 = vmatmul.bf16.gmra.mxu0 %v2181
    %v2207 = vpop.f32.mrf.mxu0
    %v2208 = vadd.f32 0.0, %v2207
    %v2209 = vpop.f32.mrf.mxu0
    %v2210 = vadd.f32 0.0, %v2209
    %2211 = vdwg.mxu0
    %2212 = vmatpush.bf16.msra.mxu0 0
    %2213 = vmatpush.bf16.msra.mxu0 0
    %2214 = vmatpush.bf16.msra.mxu0 0
    %2215 = vmatpush.bf16.msra.mxu0 0
    %2216 = vmatpush.bf16.msra.mxu0 0
    %2217 = vmatpush.bf16.msra.mxu0 0
    %2218 = vmatpush.bf16.msra.mxu0 %v2166
    %2219 = vmatpush.bf16.msra.mxu0 %v2164
    %2220 = vmatmul.bf16.gmra.mxu0 %v2172
    %v2221 = vpop.f32.mrf.mxu0
    %v2222 = vadd.f32 0.0, %v2221
    %v2223 = vpop.f32.mrf.mxu0
    %v2224 = vadd.f32 0.0, %v2223
    %2225 = vmatmul.bf16.gmra.mxu0 %v2175
    %v2226 = vpop.f32.mrf.mxu0
    %v2227 = vadd.f32 0.0, %v2226
    %v2228 = vpop.f32.mrf.mxu0
    %v2229 = vadd.f32 0.0, %v2228
    %2230 = vmatmul.bf16.gmra.mxu0 %v2178
    %v2231 = vpop.f32.mrf.mxu0
    %v2232 = vadd.f32 0.0, %v2231
    %v2233 = vpop.f32.mrf.mxu0
    %v2234 = vadd.f32 0.0, %v2233
    %2235 = vmatmul.bf16.gmra.mxu0 %v2181
    %v2236 = vpop.f32.mrf.mxu0
    %v2237 = vadd.f32 0.0, %v2236
    %v2238 = vpop.f32.mrf.mxu0
    %v2239 = vadd.f32 0.0, %v2238
    %2240 = vdwg.mxu0
    %v2245 = vunpack.c.l.b16 %v2142
    %v2246 = vunpack.c.h.b16 %v2142
    %v2247 = vunpack.c.l.b16 %v2143
    %v2248 = vunpack.c.h.b16 %v2143
    %v2249 = vunpack.c.l.b16 %v2144
    %v2250 = vunpack.c.h.b16 %v2144
    %v2251 = vunpack.c.l.b16 %v2145
    %v2252 = vunpack.c.h.b16 %v2145
    %v2253 = vpack.c.b16 %v2247, %v2245
    %v2254 = vpack.c.b16 %v2248, %v2246
    %v2255 = vpack.c.b16 %v2251, %v2249
    %v2256 = vpack.c.b16 %v2252, %v2250
    %v2262 = vsel %vm374, %v2125, 0
    %v2265 = vsel %vm374, %v2126, 0
    %v2268 = vsel %vm374, %v2127, 0
    %v2271 = vsel %vm374, %v2128, 0
    %2273 = vmatpush.bf16.msra.mxu0 0
    %2274 = vmatpush.bf16.msra.mxu0 0
    %2275 = vmatpush.bf16.msra.mxu0 0
    %2276 = vmatpush.bf16.msra.mxu0 0
    %2277 = vmatpush.bf16.msra.mxu0 0
    %2278 = vmatpush.bf16.msra.mxu0 0
    %2279 = vmatpush.bf16.msra.mxu0 %v2255
    %2280 = vmatpush.bf16.msra.mxu0 %v2253
    %2281 = vmatmul.bf16.gmra.mxu0 %v2262
    %v2282 = vpop.f32.mrf.mxu0
    %v2283 = vadd.f32 %v2193, %v2282
    %v2284 = vpop.f32.mrf.mxu0
    %v2285 = vadd.f32 %v2195, %v2284
    %2286 = vmatmul.bf16.gmra.mxu0 %v2265
    %v2287 = vpop.f32.mrf.mxu0
    %v2288 = vadd.f32 %v2198, %v2287
    %v2289 = vpop.f32.mrf.mxu0
    %v2290 = vadd.f32 %v2200, %v2289
    %2291 = vmatmul.bf16.gmra.mxu0 %v2268
    %v2292 = vpop.f32.mrf.mxu0
    %v2293 = vadd.f32 %v2203, %v2292
    %v2294 = vpop.f32.mrf.mxu0
    %v2295 = vadd.f32 %v2205, %v2294
    %2296 = vmatmul.bf16.gmra.mxu0 %v2271
    %v2297 = vpop.f32.mrf.mxu0
    %v2298 = vadd.f32 %v2208, %v2297
    %v2299 = vpop.f32.mrf.mxu0
    %v2300 = vadd.f32 %v2210, %v2299
    %2301 = vdwg.mxu0
    %2302 = vmatpush.bf16.msra.mxu0 0
    %2303 = vmatpush.bf16.msra.mxu0 0
    %2304 = vmatpush.bf16.msra.mxu0 0
    %2305 = vmatpush.bf16.msra.mxu0 0
    %2306 = vmatpush.bf16.msra.mxu0 0
    %2307 = vmatpush.bf16.msra.mxu0 0
    %2308 = vmatpush.bf16.msra.mxu0 %v2256
    %2309 = vmatpush.bf16.msra.mxu0 %v2254
    %2310 = vmatmul.bf16.gmra.mxu0 %v2262
    %v2311 = vpop.f32.mrf.mxu0
    %v2312 = vadd.f32 %v2222, %v2311
    %v2313 = vpop.f32.mrf.mxu0
    %v2314 = vadd.f32 %v2224, %v2313
    %2315 = vmatmul.bf16.gmra.mxu0 %v2265
    %v2316 = vpop.f32.mrf.mxu0
    %v2317 = vadd.f32 %v2227, %v2316
    %v2318 = vpop.f32.mrf.mxu0
    %v2319 = vadd.f32 %v2229, %v2318
    %2320 = vmatmul.bf16.gmra.mxu0 %v2268
    %v2321 = vpop.f32.mrf.mxu0
    %v2322 = vadd.f32 %v2232, %v2321
    %v2323 = vpop.f32.mrf.mxu0
    %v2324 = vadd.f32 %v2234, %v2323
    %2325 = vmatmul.bf16.gmra.mxu0 %v2271
    %v2326 = vpop.f32.mrf.mxu0
    %v2327 = vadd.f32 %v2237, %v2326
    %v2328 = vpop.f32.mrf.mxu0
    %v2329 = vadd.f32 %v2239, %v2328
    %2330 = vdwg.mxu0
    %s2331 = scalar_lea.vmem %s5, 4
    %v2332 = vld [vmem:[%s2331] sm:$0x3]
    %v2334 = vperm.slane %v2332, 0
    %v2335 = vperm.slane %v2332, 1
    %v2338 = vadd.f32 %v2283, %v2334
    %v2339 = vadd.f32 %v2312, %v2335
    %v2340 = vadd.f32 %v2285, %v2334
    %v2341 = vadd.f32 %v2314, %v2335
    %v2342 = vadd.f32 %v2288, %v2334
    %v2343 = vadd.f32 %v2317, %v2335
    %v2344 = vadd.f32 %v2290, %v2334
    %v2345 = vadd.f32 %v2319, %v2335
    %v2346 = vadd.f32 %v2293, %v2334
    %v2347 = vadd.f32 %v2322, %v2335
    %v2348 = vadd.f32 %v2295, %v2334
    %v2349 = vadd.f32 %v2324, %v2335
    %v2350 = vadd.f32 %v2298, %v2334
    %v2351 = vadd.f32 %v2327, %v2335
    %v2352 = vadd.f32 %v2300, %v2334
    %v2353 = vadd.f32 %v2329, %v2335
    %v2354 = vsel %vm96, %v2338, %v2352
    %v2355 = vsel %vm97, %v2339, %v2353
    %2356 = vst [vmem:[#allocation2] sm:$0xff] %v2354
    %2357 = vst [vmem:[#allocation2 + $0x8] sm:$0xff] %v2355
    %v2358 = vsel %vm96, %v2340, %v2350
    %v2359 = vsel %vm97, %v2341, %v2351
    %2360 = vst [vmem:[%s205] sm:$0xff] %v2358
    %2361 = vst [vmem:[%s205 + $0x8] sm:$0xff] %v2359
    %v2362 = vsel %vm96, %v2342, %v2348
    %v2363 = vsel %vm97, %v2343, %v2349
    %2364 = vst [vmem:[%s210] sm:$0xff] %v2362
    %2365 = vst [vmem:[%s210 + $0x8] sm:$0xff] %v2363
    %v2366 = vsel %vm96, %v2344, %v2346
    %v2367 = vsel %vm97, %v2345, %v2347
    %2368 = vst [vmem:[%s215] sm:$0xff] %v2366
    %2369 = vst [vmem:[%s215 + $0x8] sm:$0xff] %v2367
    %v2370 = vsel %vm96, %v2346, %v2344
    %v2371 = vsel %vm97, %v2347, %v2345
    %2372 = vst [vmem:[%s220] sm:$0xff] %v2370
    %2373 = vst [vmem:[%s220 + $0x8] sm:$0xff] %v2371
    %v2374 = vsel %vm96, %v2348, %v2342
    %v2375 = vsel %vm97, %v2349, %v2343
    %2376 = vst [vmem:[%s225] sm:$0xff] %v2374
    %2377 = vst [vmem:[%s225 + $0x8] sm:$0xff] %v2375
    %v2378 = vsel %vm96, %v2350, %v2340
    %v2379 = vsel %vm97, %v2351, %v2341
    %2380 = vst [vmem:[%s230] sm:$0xff] %v2378
    %2381 = vst [vmem:[%s230 + $0x8] sm:$0xff] %v2379
    %v2382 = vsel %vm96, %v2352, %v2338
    %v2383 = vsel %vm97, %v2353, %v2339
    %2384 = vst [vmem:[%s235] sm:$0xff] %v2382
    %2385 = vst [vmem:[%s235 + $0x8] sm:$0xff] %v2383
    %s2386 = scalar_lea.vmem [#allocation8], 128
    %v2387 = vld [vmem:[%s2386] sm:$0xff]
    %v2388 = vld [vmem:[%s2386 + $0x8] sm:$0xff]
    %v2389 = vld [vmem:[%s2386 + $0x10] sm:$0xff]
    %v2390 = vld [vmem:[%s2386 + $0x18] sm:$0xff]
    %v2391 = vld [vmem:[%s2386 + $0x20] sm:$0xff]
    %v2392 = vld [vmem:[%s2386 + $0x28] sm:$0xff]
    %v2393 = vld [vmem:[%s2386 + $0x30] sm:$0xff]
    %v2394 = vld [vmem:[%s2386 + $0x38] sm:$0xff]
    %v2395 = vld [vmem:[#allocation2] sm:$0xff]
    %v2396 = vld [vmem:[#allocation2 + $0x8] sm:$0xff]
    %v2405 = vunpack.c.l.b16 %v2387
    %v2406 = vunpack.c.h.b16 %v2387
    %v2407 = vunpack.c.l.b16 %v2388
    %v2408 = vunpack.c.h.b16 %v2388
    %v2409 = vunpack.c.l.b16 %v2389
    %v2410 = vunpack.c.h.b16 %v2389
    %v2411 = vunpack.c.l.b16 %v2390
    %v2412 = vunpack.c.h.b16 %v2390
    %v2413 = vunpack.c.l.b16 %v2391
    %v2414 = vunpack.c.h.b16 %v2391
    %v2415 = vunpack.c.l.b16 %v2392
    %v2416 = vunpack.c.h.b16 %v2392
    %v2417 = vunpack.c.l.b16 %v2393
    %v2418 = vunpack.c.h.b16 %v2393
    %v2419 = vunpack.c.l.b16 %v2394
    %v2420 = vunpack.c.h.b16 %v2394
    %v2421 = vpack.c.b16 %v2407, %v2405
    %v2422 = vpack.c.b16 %v2408, %v2406
    %v2423 = vpack.c.b16 %v2411, %v2409
    %v2424 = vpack.c.b16 %v2412, %v2410
    %v2425 = vpack.c.b16 %v2415, %v2413
    %v2426 = vpack.c.b16 %v2416, %v2414
    %v2427 = vpack.c.b16 %v2419, %v2417
    %v2428 = vpack.c.b16 %v2420, %v2418
    %2437 = vmatpush.bf16.msra.mxu0 0
    %2438 = vmatpush.bf16.msra.mxu0 0
    %2439 = vmatpush.bf16.msra.mxu0 0
    %2440 = vmatpush.bf16.msra.mxu0 0
    %2441 = vmatpush.bf16.msra.mxu0 %v2427
    %2442 = vmatpush.bf16.msra.mxu0 %v2425
    %2443 = vmatpush.bf16.msra.mxu0 %v2423
    %2444 = vmatpush.bf16.msra.mxu0 %v2421
    %2445 = vmatmul.bf16.gmra.mxu0 %v290
    %v2446 = vpop.f32.mrf.mxu0
    %v2447 = vadd.f32 %v2395, %v2446
    %v2448 = vpop.f32.mrf.mxu0
    %2449 = vdwg.mxu0
    %2450 = vmatpush.bf16.msra.mxu0 0
    %2451 = vmatpush.bf16.msra.mxu0 0
    %2452 = vmatpush.bf16.msra.mxu0 0
    %2453 = vmatpush.bf16.msra.mxu0 0
    %2454 = vmatpush.bf16.msra.mxu0 %v2428
    %2455 = vmatpush.bf16.msra.mxu0 %v2426
    %2456 = vmatpush.bf16.msra.mxu0 %v2424
    %2457 = vmatpush.bf16.msra.mxu0 %v2422
    %2458 = vmatmul.bf16.gmra.mxu0 %v290
    %v2459 = vpop.f32.mrf.mxu0
    %v2460 = vadd.f32 %v2396, %v2459
    %v2461 = vpop.f32.mrf.mxu0
    %2462 = vdwg.mxu0
    %v2463 = vxor.u32 %v2447, 2147483648
    %v2464 = vxor.u32 %v2460, 2147483648
    %v2465 = vmul.f32 %v2463, 1.442695
    %v2466 = vpow.pop %v2465
    %v2467 = vmul.f32 %v2464, 1.442695
    %v2468 = vpow.pop %v2467
    %v2469 = vadd.f32 %v2466, 1.0
    %v2470 = vadd.f32 %v2468, 1.0
    %v2471 = vrcp.pop %v2469
    %v2472 = vmul.f32 %v2469, %v2471
    %v2473 = vsub.f32 1.0, %v2472
    %v2474 = vmul.f32 %v2471, %v2473
    %v2475 = vadd.f32 %v2471, %v2474
    %vm2476 = vweird.f32 %v2469
    %vm2477 = vweird.f32 %v2471
    %vm2478 = vmor %vm2476, %vm2477
    %v2479 = vsel %vm2478, %v2471, %v2475
    %v2480 = vand.u32 2147483647, %v2469
    %vm2481 = vcmp.eq.f32.partialorder %v2480, 8.507059e+37
    %v2482 = vand.u32 %v2469, 2147483648
    %v2483 = vor.u32 1.1754944e-38, %v2482
    %v2484 = vsel %vm2481, %v2483, %v2479
    %v2485 = vmul.f32 1.0, %v2484
    %v2486 = vrcp.pop %v2470
    %v2487 = vmul.f32 %v2470, %v2486
    %v2488 = vsub.f32 1.0, %v2487
    %v2489 = vmul.f32 %v2486, %v2488
    %v2490 = vadd.f32 %v2486, %v2489
    %vm2491 = vweird.f32 %v2470
    %vm2492 = vweird.f32 %v2486
    %vm2493 = vmor %vm2491, %vm2492
    %v2494 = vsel %vm2493, %v2486, %v2490
    %v2495 = vand.u32 2147483647, %v2470
    %vm2496 = vcmp.eq.f32.partialorder %v2495, 8.507059e+37
    %v2497 = vand.u32 %v2470, 2147483648
    %v2498 = vor.u32 1.1754944e-38, %v2497
    %v2499 = vsel %vm2496, %v2498, %v2494
    %v2500 = vmul.f32 1.0, %v2499
    %v2501 = vtanh.pop %v2460
    %v2502 = vmul.f32 %v2485, 0.0
    %2504 = vrot.lane.b32.xlu0 %v2501, 64
    %v2505 = vpop.permute.xlu0 %2504
    %v2507 = vmul.f32 %v2485, %v2505
    %2509 = vrot.lane.b32.xlu0 %v2507, 64
    %v2510 = vpop.permute.xlu0 %2509
    %v2512 = vadd.f32 %v2502, %v2510
    %v2513 = vtanh.pop %v2512
    %2515 = vrot.lane.b32.xlu0 %v2513, 64
    %v2516 = vpop.permute.xlu0 %2515
    %v2518 = vmul.f32 %v2500, %v2516
    %2519 = vst.msk [vmem:[#allocation3] sm:$0xff] %vm374, %v2518
    %2521 = vrot.lane.b32.xlu0 %v2518, 96
    %v2522 = vpop.permute.xlu0 %2521
    %2524 = vst.msk [vmem:[%s380] sm:$0xff] %vm374, %v2522
    %v2525 = vpack.c.bf16 %v2518, %v2518
    %v2526 = vld [vmem:[%s205] sm:$0xff]
    %v2527 = vld [vmem:[%s205 + $0x8] sm:$0xff]
    %v2529 = vsel %vm288, %v2525, 0
    %2531 = vmatpush.bf16.msra.mxu0 0
    %2532 = vmatpush.bf16.msra.mxu0 0
    %2533 = vmatpush.bf16.msra.mxu0 0
    %2534 = vmatpush.bf16.msra.mxu0 0
    %2535 = vmatpush.bf16.msra.mxu0 %v2427
    %2536 = vmatpush.bf16.msra.mxu0 %v2425
    %2537 = vmatpush.bf16.msra.mxu0 %v2423
    %2538 = vmatpush.bf16.msra.mxu0 %v2421
    %2539 = vmatmul.bf16.gmra.mxu0 %v2529
    %v2540 = vpop.f32.mrf.mxu0
    %v2541 = vadd.f32 %v2526, %v2540
    %v2542 = vpop.f32.mrf.mxu0
    %2543 = vdwg.mxu0
    %2544 = vmatpush.bf16.msra.mxu0 0
    %2545 = vmatpush.bf16.msra.mxu0 0
    %2546 = vmatpush.bf16.msra.mxu0 0
    %2547 = vmatpush.bf16.msra.mxu0 0
    %2548 = vmatpush.bf16.msra.mxu0 %v2428
    %2549 = vmatpush.bf16.msra.mxu0 %v2426
    %2550 = vmatpush.bf16.msra.mxu0 %v2424
    %2551 = vmatpush.bf16.msra.mxu0 %v2422
    %2552 = vmatmul.bf16.gmra.mxu0 %v2529
    %v2553 = vpop.f32.mrf.mxu0
    %v2554 = vadd.f32 %v2527, %v2553
    %v2555 = vpop.f32.mrf.mxu0
    %2556 = vdwg.mxu0
    %v2557 = vxor.u32 %v2541, 2147483648
    %v2558 = vxor.u32 %v2554, 2147483648
    %v2559 = vmul.f32 %v2557, 1.442695
    %v2560 = vpow.pop %v2559
    %v2561 = vmul.f32 %v2558, 1.442695
    %v2562 = vpow.pop %v2561
    %v2563 = vadd.f32 %v2560, 1.0
    %v2564 = vadd.f32 %v2562, 1.0
    %v2565 = vrcp.pop %v2563
    %v2566 = vmul.f32 %v2563, %v2565
    %v2567 = vsub.f32 1.0, %v2566
    %v2568 = vmul.f32 %v2565, %v2567
    %v2569 = vadd.f32 %v2565, %v2568
    %vm2570 = vweird.f32 %v2563
    %vm2571 = vweird.f32 %v2565
    %vm2572 = vmor %vm2570, %vm2571
    %v2573 = vsel %vm2572, %v2565, %v2569
    %v2574 = vand.u32 2147483647, %v2563
    %vm2575 = vcmp.eq.f32.partialorder %v2574, 8.507059e+37
    %v2576 = vand.u32 %v2563, 2147483648
    %v2577 = vor.u32 1.1754944e-38, %v2576
    %v2578 = vsel %vm2575, %v2577, %v2573
    %v2579 = vmul.f32 1.0, %v2578
    %v2580 = vrcp.pop %v2564
    %v2581 = vmul.f32 %v2564, %v2580
    %v2582 = vsub.f32 1.0, %v2581
    %v2583 = vmul.f32 %v2580, %v2582
    %v2584 = vadd.f32 %v2580, %v2583
    %vm2585 = vweird.f32 %v2564
    %vm2586 = vweird.f32 %v2580
    %vm2587 = vmor %vm2585, %vm2586
    %v2588 = vsel %vm2587, %v2580, %v2584
    %v2589 = vand.u32 2147483647, %v2564
    %vm2590 = vcmp.eq.f32.partialorder %v2589, 8.507059e+37
    %v2591 = vand.u32 %v2564, 2147483648
    %v2592 = vor.u32 1.1754944e-38, %v2591
    %v2593 = vsel %vm2590, %v2592, %v2588
    %v2594 = vmul.f32 1.0, %v2593
    %v2595 = vtanh.pop %v2554
    %v2596 = vmul.f32 %v2579, %v2512
    %2598 = vrot.lane.b32.xlu0 %v2595, 64
    %v2599 = vpop.permute.xlu0 %2598
    %v2601 = vmul.f32 %v2579, %v2599
    %2603 = vrot.lane.b32.xlu0 %v2601, 64
    %v2604 = vpop.permute.xlu0 %2603
    %v2606 = vadd.f32 %v2596, %v2604
    %v2607 = vtanh.pop %v2606
    %2609 = vrot.lane.b32.xlu0 %v2607, 64
    %v2610 = vpop.permute.xlu0 %2609
    %v2612 = vmul.f32 %v2594, %v2610
    %2613 = vst.msk [vmem:[%s470] sm:$0xff] %vm374, %v2612
    %2615 = vrot.lane.b32.xlu0 %v2612, 96
    %v2616 = vpop.permute.xlu0 %2615
    %2618 = vst.msk [vmem:[%s476] sm:$0xff] %vm374, %v2616
    %v2619 = vpack.c.bf16 %v2612, %v2612
    %v2620 = vld [vmem:[%s210] sm:$0xff]
    %v2621 = vld [vmem:[%s210 + $0x8] sm:$0xff]
    %v2623 = vsel %vm288, %v2619, 0
    %2625 = vmatpush.bf16.msra.mxu0 0
    %2626 = vmatpush.bf16.msra.mxu0 0
    %2627 = vmatpush.bf16.msra.mxu0 0
    %2628 = vmatpush.bf16.msra.mxu0 0
    %2629 = vmatpush.bf16.msra.mxu0 %v2427
    %2630 = vmatpush.bf16.msra.mxu0 %v2425
    %2631 = vmatpush.bf16.msra.mxu0 %v2423
    %2632 = vmatpush.bf16.msra.mxu0 %v2421
    %2633 = vmatmul.bf16.gmra.mxu0 %v2623
    %v2634 = vpop.f32.mrf.mxu0
    %v2635 = vadd.f32 %v2620, %v2634
    %v2636 = vpop.f32.mrf.mxu0
    %2637 = vdwg.mxu0
    %2638 = vmatpush.bf16.msra.mxu0 0
    %2639 = vmatpush.bf16.msra.mxu0 0
    %2640 = vmatpush.bf16.msra.mxu0 0
    %2641 = vmatpush.bf16.msra.mxu0 0
    %2642 = vmatpush.bf16.msra.mxu0 %v2428
    %2643 = vmatpush.bf16.msra.mxu0 %v2426
    %2644 = vmatpush.bf16.msra.mxu0 %v2424
    %2645 = vmatpush.bf16.msra.mxu0 %v2422
    %2646 = vmatmul.bf16.gmra.mxu0 %v2623
    %v2647 = vpop.f32.mrf.mxu0
    %v2648 = vadd.f32 %v2621, %v2647
    %v2649 = vpop.f32.mrf.mxu0
    %2650 = vdwg.mxu0
    %v2651 = vxor.u32 %v2635, 2147483648
    %v2652 = vxor.u32 %v2648, 2147483648
    %v2653 = vmul.f32 %v2651, 1.442695
    %v2654 = vpow.pop %v2653
    %v2655 = vmul.f32 %v2652, 1.442695
    %v2656 = vpow.pop %v2655
    %v2657 = vadd.f32 %v2654, 1.0
    %v2658 = vadd.f32 %v2656, 1.0
    %v2659 = vrcp.pop %v2657
    %v2660 = vmul.f32 %v2657, %v2659
    %v2661 = vsub.f32 1.0, %v2660
    %v2662 = vmul.f32 %v2659, %v2661
    %v2663 = vadd.f32 %v2659, %v2662
    %vm2664 = vweird.f32 %v2657
    %vm2665 = vweird.f32 %v2659
    %vm2666 = vmor %vm2664, %vm2665
    %v2667 = vsel %vm2666, %v2659, %v2663
    %v2668 = vand.u32 2147483647, %v2657
    %vm2669 = vcmp.eq.f32.partialorder %v2668, 8.507059e+37
    %v2670 = vand.u32 %v2657, 2147483648
    %v2671 = vor.u32 1.1754944e-38, %v2670
    %v2672 = vsel %vm2669, %v2671, %v2667
    %v2673 = vmul.f32 1.0, %v2672
    %v2674 = vrcp.pop %v2658
    %v2675 = vmul.f32 %v2658, %v2674
    %v2676 = vsub.f32 1.0, %v2675
    %v2677 = vmul.f32 %v2674, %v2676
    %v2678 = vadd.f32 %v2674, %v2677
    %vm2679 = vweird.f32 %v2658
    %vm2680 = vweird.f32 %v2674
    %vm2681 = vmor %vm2679, %vm2680
    %v2682 = vsel %vm2681, %v2674, %v2678
    %v2683 = vand.u32 2147483647, %v2658
    %vm2684 = vcmp.eq.f32.partialorder %v2683, 8.507059e+37
    %v2685 = vand.u32 %v2658, 2147483648
    %v2686 = vor.u32 1.1754944e-38, %v2685
    %v2687 = vsel %vm2684, %v2686, %v2682
    %v2688 = vmul.f32 1.0, %v2687
    %v2689 = vtanh.pop %v2648
    %v2690 = vmul.f32 %v2673, %v2606
    %2692 = vrot.lane.b32.xlu0 %v2689, 64
    %v2693 = vpop.permute.xlu0 %2692
    %v2695 = vmul.f32 %v2673, %v2693
    %2697 = vrot.lane.b32.xlu0 %v2695, 64
    %v2698 = vpop.permute.xlu0 %2697
    %v2700 = vadd.f32 %v2690, %v2698
    %v2701 = vtanh.pop %v2700
    %2703 = vrot.lane.b32.xlu0 %v2701, 64
    %v2704 = vpop.permute.xlu0 %2703
    %v2706 = vmul.f32 %v2688, %v2704
    %2707 = vst.msk [vmem:[%s566] sm:$0xff] %vm374, %v2706
    %2709 = vrot.lane.b32.xlu0 %v2706, 96
    %v2710 = vpop.permute.xlu0 %2709
    %2712 = vst.msk [vmem:[%s572] sm:$0xff] %vm374, %v2710
    %v2713 = vpack.c.bf16 %v2706, %v2706
    %v2714 = vld [vmem:[%s215] sm:$0xff]
    %v2715 = vld [vmem:[%s215 + $0x8] sm:$0xff]
    %v2717 = vsel %vm288, %v2713, 0
    %2719 = vmatpush.bf16.msra.mxu0 0
    %2720 = vmatpush.bf16.msra.mxu0 0
    %2721 = vmatpush.bf16.msra.mxu0 0
    %2722 = vmatpush.bf16.msra.mxu0 0
    %2723 = vmatpush.bf16.msra.mxu0 %v2427
    %2724 = vmatpush.bf16.msra.mxu0 %v2425
    %2725 = vmatpush.bf16.msra.mxu0 %v2423
    %2726 = vmatpush.bf16.msra.mxu0 %v2421
    %2727 = vmatmul.bf16.gmra.mxu0 %v2717
    %v2728 = vpop.f32.mrf.mxu0
    %v2729 = vadd.f32 %v2714, %v2728
    %v2730 = vpop.f32.mrf.mxu0
    %2731 = vdwg.mxu0
    %2732 = vmatpush.bf16.msra.mxu0 0
    %2733 = vmatpush.bf16.msra.mxu0 0
    %2734 = vmatpush.bf16.msra.mxu0 0
    %2735 = vmatpush.bf16.msra.mxu0 0
    %2736 = vmatpush.bf16.msra.mxu0 %v2428
    %2737 = vmatpush.bf16.msra.mxu0 %v2426
    %2738 = vmatpush.bf16.msra.mxu0 %v2424
    %2739 = vmatpush.bf16.msra.mxu0 %v2422
    %2740 = vmatmul.bf16.gmra.mxu0 %v2717
    %v2741 = vpop.f32.mrf.mxu0
    %v2742 = vadd.f32 %v2715, %v2741
    %v2743 = vpop.f32.mrf.mxu0
    %2744 = vdwg.mxu0
    %v2745 = vxor.u32 %v2729, 2147483648
    %v2746 = vxor.u32 %v2742, 2147483648
    %v2747 = vmul.f32 %v2745, 1.442695
    %v2748 = vpow.pop %v2747
    %v2749 = vmul.f32 %v2746, 1.442695
    %v2750 = vpow.pop %v2749
    %v2751 = vadd.f32 %v2748, 1.0
    %v2752 = vadd.f32 %v2750, 1.0
    %v2753 = vrcp.pop %v2751
    %v2754 = vmul.f32 %v2751, %v2753
    %v2755 = vsub.f32 1.0, %v2754
    %v2756 = vmul.f32 %v2753, %v2755
    %v2757 = vadd.f32 %v2753, %v2756
    %vm2758 = vweird.f32 %v2751
    %vm2759 = vweird.f32 %v2753
    %vm2760 = vmor %vm2758, %vm2759
    %v2761 = vsel %vm2760, %v2753, %v2757
    %v2762 = vand.u32 2147483647, %v2751
    %vm2763 = vcmp.eq.f32.partialorder %v2762, 8.507059e+37
    %v2764 = vand.u32 %v2751, 2147483648
    %v2765 = vor.u32 1.1754944e-38, %v2764
    %v2766 = vsel %vm2763, %v2765, %v2761
    %v2767 = vmul.f32 1.0, %v2766
    %v2768 = vrcp.pop %v2752
    %v2769 = vmul.f32 %v2752, %v2768
    %v2770 = vsub.f32 1.0, %v2769
    %v2771 = vmul.f32 %v2768, %v2770
    %v2772 = vadd.f32 %v2768, %v2771
    %vm2773 = vweird.f32 %v2752
    %vm2774 = vweird.f32 %v2768
    %vm2775 = vmor %vm2773, %vm2774
    %v2776 = vsel %vm2775, %v2768, %v2772
    %v2777 = vand.u32 2147483647, %v2752
    %vm2778 = vcmp.eq.f32.partialorder %v2777, 8.507059e+37
    %v2779 = vand.u32 %v2752, 2147483648
    %v2780 = vor.u32 1.1754944e-38, %v2779
    %v2781 = vsel %vm2778, %v2780, %v2776
    %v2782 = vmul.f32 1.0, %v2781
    %v2783 = vtanh.pop %v2742
    %v2784 = vmul.f32 %v2767, %v2700
    %2786 = vrot.lane.b32.xlu0 %v2783, 64
    %v2787 = vpop.permute.xlu0 %2786
    %v2789 = vmul.f32 %v2767, %v2787
    %2791 = vrot.lane.b32.xlu0 %v2789, 64
    %v2792 = vpop.permute.xlu0 %2791
    %v2794 = vadd.f32 %v2784, %v2792
    %v2795 = vtanh.pop %v2794
    %2797 = vrot.lane.b32.xlu0 %v2795, 64
    %v2798 = vpop.permute.xlu0 %2797
    %v2800 = vmul.f32 %v2782, %v2798
    %2801 = vst.msk [vmem:[%s662] sm:$0xff] %vm374, %v2800
    %2803 = vrot.lane.b32.xlu0 %v2800, 96
    %v2804 = vpop.permute.xlu0 %2803
    %2806 = vst.msk [vmem:[%s668] sm:$0xff] %vm374, %v2804
    %v2807 = vpack.c.bf16 %v2800, %v2800
    %v2808 = vld [vmem:[%s220] sm:$0xff]
    %v2809 = vld [vmem:[%s220 + $0x8] sm:$0xff]
    %v2811 = vsel %vm288, %v2807, 0
    %2813 = vmatpush.bf16.msra.mxu0 0
    %2814 = vmatpush.bf16.msra.mxu0 0
    %2815 = vmatpush.bf16.msra.mxu0 0
    %2816 = vmatpush.bf16.msra.mxu0 0
    %2817 = vmatpush.bf16.msra.mxu0 %v2427
    %2818 = vmatpush.bf16.msra.mxu0 %v2425
    %2819 = vmatpush.bf16.msra.mxu0 %v2423
    %2820 = vmatpush.bf16.msra.mxu0 %v2421
    %2821 = vmatmul.bf16.gmra.mxu0 %v2811
    %v2822 = vpop.f32.mrf.mxu0
    %v2823 = vadd.f32 %v2808, %v2822
    %v2824 = vpop.f32.mrf.mxu0
    %2825 = vdwg.mxu0
    %2826 = vmatpush.bf16.msra.mxu0 0
    %2827 = vmatpush.bf16.msra.mxu0 0
    %2828 = vmatpush.bf16.msra.mxu0 0
    %2829 = vmatpush.bf16.msra.mxu0 0
    %2830 = vmatpush.bf16.msra.mxu0 %v2428
    %2831 = vmatpush.bf16.msra.mxu0 %v2426
    %2832 = vmatpush.bf16.msra.mxu0 %v2424
    %2833 = vmatpush.bf16.msra.mxu0 %v2422
    %2834 = vmatmul.bf16.gmra.mxu0 %v2811
    %v2835 = vpop.f32.mrf.mxu0
    %v2836 = vadd.f32 %v2809, %v2835
    %v2837 = vpop.f32.mrf.mxu0
    %2838 = vdwg.mxu0
    %v2839 = vxor.u32 %v2823, 2147483648
    %v2840 = vxor.u32 %v2836, 2147483648
    %v2841 = vmul.f32 %v2839, 1.442695
    %v2842 = vpow.pop %v2841
    %v2843 = vmul.f32 %v2840, 1.442695
    %v2844 = vpow.pop %v2843
    %v2845 = vadd.f32 %v2842, 1.0
    %v2846 = vadd.f32 %v2844, 1.0
    %v2847 = vrcp.pop %v2845
    %v2848 = vmul.f32 %v2845, %v2847
    %v2849 = vsub.f32 1.0, %v2848
    %v2850 = vmul.f32 %v2847, %v2849
    %v2851 = vadd.f32 %v2847, %v2850
    %vm2852 = vweird.f32 %v2845
    %vm2853 = vweird.f32 %v2847
    %vm2854 = vmor %vm2852, %vm2853
    %v2855 = vsel %vm2854, %v2847, %v2851
    %v2856 = vand.u32 2147483647, %v2845
    %vm2857 = vcmp.eq.f32.partialorder %v2856, 8.507059e+37
    %v2858 = vand.u32 %v2845, 2147483648
    %v2859 = vor.u32 1.1754944e-38, %v2858
    %v2860 = vsel %vm2857, %v2859, %v2855
    %v2861 = vmul.f32 1.0, %v2860
    %v2862 = vrcp.pop %v2846
    %v2863 = vmul.f32 %v2846, %v2862
    %v2864 = vsub.f32 1.0, %v2863
    %v2865 = vmul.f32 %v2862, %v2864
    %v2866 = vadd.f32 %v2862, %v2865
    %vm2867 = vweird.f32 %v2846
    %vm2868 = vweird.f32 %v2862
    %vm2869 = vmor %vm2867, %vm2868
    %v2870 = vsel %vm2869, %v2862, %v2866
    %v2871 = vand.u32 2147483647, %v2846
    %vm2872 = vcmp.eq.f32.partialorder %v2871, 8.507059e+37
    %v2873 = vand.u32 %v2846, 2147483648
    %v2874 = vor.u32 1.1754944e-38, %v2873
    %v2875 = vsel %vm2872, %v2874, %v2870
    %v2876 = vmul.f32 1.0, %v2875
    %v2877 = vtanh.pop %v2836
    %v2878 = vmul.f32 %v2861, %v2794
    %2880 = vrot.lane.b32.xlu0 %v2877, 64
    %v2881 = vpop.permute.xlu0 %2880
    %v2883 = vmul.f32 %v2861, %v2881
    %2885 = vrot.lane.b32.xlu0 %v2883, 64
    %v2886 = vpop.permute.xlu0 %2885
    %v2888 = vadd.f32 %v2878, %v2886
    %v2889 = vtanh.pop %v2888
    %2891 = vrot.lane.b32.xlu0 %v2889, 64
    %v2892 = vpop.permute.xlu0 %2891
    %v2894 = vmul.f32 %v2876, %v2892
    %2895 = vst.msk [vmem:[%s758] sm:$0xff] %vm374, %v2894
    %2897 = vrot.lane.b32.xlu0 %v2894, 96
    %v2898 = vpop.permute.xlu0 %2897
    %2900 = vst.msk [vmem:[%s764] sm:$0xff] %vm374, %v2898
    %v2901 = vpack.c.bf16 %v2894, %v2894
    %v2902 = vld [vmem:[%s225] sm:$0xff]
    %v2903 = vld [vmem:[%s225 + $0x8] sm:$0xff]
    %v2905 = vsel %vm288, %v2901, 0
    %2907 = vmatpush.bf16.msra.mxu0 0
    %2908 = vmatpush.bf16.msra.mxu0 0
    %2909 = vmatpush.bf16.msra.mxu0 0
    %2910 = vmatpush.bf16.msra.mxu0 0
    %2911 = vmatpush.bf16.msra.mxu0 %v2427
    %2912 = vmatpush.bf16.msra.mxu0 %v2425
    %2913 = vmatpush.bf16.msra.mxu0 %v2423
    %2914 = vmatpush.bf16.msra.mxu0 %v2421
    %2915 = vmatmul.bf16.gmra.mxu0 %v2905
    %v2916 = vpop.f32.mrf.mxu0
    %v2917 = vadd.f32 %v2902, %v2916
    %v2918 = vpop.f32.mrf.mxu0
    %2919 = vdwg.mxu0
    %2920 = vmatpush.bf16.msra.mxu0 0
    %2921 = vmatpush.bf16.msra.mxu0 0
    %2922 = vmatpush.bf16.msra.mxu0 0
    %2923 = vmatpush.bf16.msra.mxu0 0
    %2924 = vmatpush.bf16.msra.mxu0 %v2428
    %2925 = vmatpush.bf16.msra.mxu0 %v2426
    %2926 = vmatpush.bf16.msra.mxu0 %v2424
    %2927 = vmatpush.bf16.msra.mxu0 %v2422
    %2928 = vmatmul.bf16.gmra.mxu0 %v2905
    %v2929 = vpop.f32.mrf.mxu0
    %v2930 = vadd.f32 %v2903, %v2929
    %v2931 = vpop.f32.mrf.mxu0
    %2932 = vdwg.mxu0
    %v2933 = vxor.u32 %v2917, 2147483648
    %v2934 = vxor.u32 %v2930, 2147483648
    %v2935 = vmul.f32 %v2933, 1.442695
    %v2936 = vpow.pop %v2935
    %v2937 = vmul.f32 %v2934, 1.442695
    %v2938 = vpow.pop %v2937
    %v2939 = vadd.f32 %v2936, 1.0
    %v2940 = vadd.f32 %v2938, 1.0
    %v2941 = vrcp.pop %v2939
    %v2942 = vmul.f32 %v2939, %v2941
    %v2943 = vsub.f32 1.0, %v2942
    %v2944 = vmul.f32 %v2941, %v2943
    %v2945 = vadd.f32 %v2941, %v2944
    %vm2946 = vweird.f32 %v2939
    %vm2947 = vweird.f32 %v2941
    %vm2948 = vmor %vm2946, %vm2947
    %v2949 = vsel %vm2948, %v2941, %v2945
    %v2950 = vand.u32 2147483647, %v2939
    %vm2951 = vcmp.eq.f32.partialorder %v2950, 8.507059e+37
    %v2952 = vand.u32 %v2939, 2147483648
    %v2953 = vor.u32 1.1754944e-38, %v2952
    %v2954 = vsel %vm2951, %v2953, %v2949
    %v2955 = vmul.f32 1.0, %v2954
    %v2956 = vrcp.pop %v2940
    %v2957 = vmul.f32 %v2940, %v2956
    %v2958 = vsub.f32 1.0, %v2957
    %v2959 = vmul.f32 %v2956, %v2958
    %v2960 = vadd.f32 %v2956, %v2959
    %vm2961 = vweird.f32 %v2940
    %vm2962 = vweird.f32 %v2956
    %vm2963 = vmor %vm2961, %vm2962
    %v2964 = vsel %vm2963, %v2956, %v2960
    %v2965 = vand.u32 2147483647, %v2940
    %vm2966 = vcmp.eq.f32.partialorder %v2965, 8.507059e+37
    %v2967 = vand.u32 %v2940, 2147483648
    %v2968 = vor.u32 1.1754944e-38, %v2967
    %v2969 = vsel %vm2966, %v2968, %v2964
    %v2970 = vmul.f32 1.0, %v2969
    %v2971 = vtanh.pop %v2930
    %v2972 = vmul.f32 %v2955, %v2888
    %2974 = vrot.lane.b32.xlu0 %v2971, 64
    %v2975 = vpop.permute.xlu0 %2974
    %v2977 = vmul.f32 %v2955, %v2975
    %2979 = vrot.lane.b32.xlu0 %v2977, 64
    %v2980 = vpop.permute.xlu0 %2979
    %v2982 = vadd.f32 %v2972, %v2980
    %v2983 = vtanh.pop %v2982
    %2985 = vrot.lane.b32.xlu0 %v2983, 64
    %v2986 = vpop.permute.xlu0 %2985
    %v2988 = vmul.f32 %v2970, %v2986
    %2989 = vst.msk [vmem:[%s854] sm:$0xff] %vm374, %v2988
    %2991 = vrot.lane.b32.xlu0 %v2988, 96
    %v2992 = vpop.permute.xlu0 %2991
    %2994 = vst.msk [vmem:[%s860] sm:$0xff] %vm374, %v2992
    %v2995 = vpack.c.bf16 %v2988, %v2988
    %v2996 = vld [vmem:[%s230] sm:$0xff]
    %v2997 = vld [vmem:[%s230 + $0x8] sm:$0xff]
    %v2999 = vsel %vm288, %v2995, 0
    %3001 = vmatpush.bf16.msra.mxu0 0
    %3002 = vmatpush.bf16.msra.mxu0 0
    %3003 = vmatpush.bf16.msra.mxu0 0
    %3004 = vmatpush.bf16.msra.mxu0 0
    %3005 = vmatpush.bf16.msra.mxu0 %v2427
    %3006 = vmatpush.bf16.msra.mxu0 %v2425
    %3007 = vmatpush.bf16.msra.mxu0 %v2423
    %3008 = vmatpush.bf16.msra.mxu0 %v2421
    %3009 = vmatmul.bf16.gmra.mxu0 %v2999
    %v3010 = vpop.f32.mrf.mxu0
    %v3011 = vadd.f32 %v2996, %v3010
    %v3012 = vpop.f32.mrf.mxu0
    %3013 = vdwg.mxu0
    %3014 = vmatpush.bf16.msra.mxu0 0
    %3015 = vmatpush.bf16.msra.mxu0 0
    %3016 = vmatpush.bf16.msra.mxu0 0
    %3017 = vmatpush.bf16.msra.mxu0 0
    %3018 = vmatpush.bf16.msra.mxu0 %v2428
    %3019 = vmatpush.bf16.msra.mxu0 %v2426
    %3020 = vmatpush.bf16.msra.mxu0 %v2424
    %3021 = vmatpush.bf16.msra.mxu0 %v2422
    %3022 = vmatmul.bf16.gmra.mxu0 %v2999
    %v3023 = vpop.f32.mrf.mxu0
    %v3024 = vadd.f32 %v2997, %v3023
    %v3025 = vpop.f32.mrf.mxu0
    %3026 = vdwg.mxu0
    %v3027 = vxor.u32 %v3011, 2147483648
    %v3028 = vxor.u32 %v3024, 2147483648
    %v3029 = vmul.f32 %v3027, 1.442695
    %v3030 = vpow.pop %v3029
    %v3031 = vmul.f32 %v3028, 1.442695
    %v3032 = vpow.pop %v3031
    %v3033 = vadd.f32 %v3030, 1.0
    %v3034 = vadd.f32 %v3032, 1.0
    %v3035 = vrcp.pop %v3033
    %v3036 = vmul.f32 %v3033, %v3035
    %v3037 = vsub.f32 1.0, %v3036
    %v3038 = vmul.f32 %v3035, %v3037
    %v3039 = vadd.f32 %v3035, %v3038
    %vm3040 = vweird.f32 %v3033
    %vm3041 = vweird.f32 %v3035
    %vm3042 = vmor %vm3040, %vm3041
    %v3043 = vsel %vm3042, %v3035, %v3039
    %v3044 = vand.u32 2147483647, %v3033
    %vm3045 = vcmp.eq.f32.partialorder %v3044, 8.507059e+37
    %v3046 = vand.u32 %v3033, 2147483648
    %v3047 = vor.u32 1.1754944e-38, %v3046
    %v3048 = vsel %vm3045, %v3047, %v3043
    %v3049 = vmul.f32 1.0, %v3048
    %v3050 = vrcp.pop %v3034
    %v3051 = vmul.f32 %v3034, %v3050
    %v3052 = vsub.f32 1.0, %v3051
    %v3053 = vmul.f32 %v3050, %v3052
    %v3054 = vadd.f32 %v3050, %v3053
    %vm3055 = vweird.f32 %v3034
    %vm3056 = vweird.f32 %v3050
    %vm3057 = vmor %vm3055, %vm3056
    %v3058 = vsel %vm3057, %v3050, %v3054
    %v3059 = vand.u32 2147483647, %v3034
    %vm3060 = vcmp.eq.f32.partialorder %v3059, 8.507059e+37
    %v3061 = vand.u32 %v3034, 2147483648
    %v3062 = vor.u32 1.1754944e-38, %v3061
    %v3063 = vsel %vm3060, %v3062, %v3058
    %v3064 = vmul.f32 1.0, %v3063
    %v3065 = vtanh.pop %v3024
    %v3066 = vmul.f32 %v3049, %v2982
    %3068 = vrot.lane.b32.xlu0 %v3065, 64
    %v3069 = vpop.permute.xlu0 %3068
    %v3071 = vmul.f32 %v3049, %v3069
    %3073 = vrot.lane.b32.xlu0 %v3071, 64
    %v3074 = vpop.permute.xlu0 %3073
    %v3076 = vadd.f32 %v3066, %v3074
    %v3077 = vtanh.pop %v3076
    %3079 = vrot.lane.b32.xlu0 %v3077, 64
    %v3080 = vpop.permute.xlu0 %3079
    %v3082 = vmul.f32 %v3064, %v3080
    %3083 = vst.msk [vmem:[%s950] sm:$0xff] %vm374, %v3082
    %3085 = vrot.lane.b32.xlu0 %v3082, 96
    %v3086 = vpop.permute.xlu0 %3085
    %3088 = vst.msk [vmem:[%s956] sm:$0xff] %vm374, %v3086
    %v3089 = vpack.c.bf16 %v3082, %v3082
    %v3090 = vld [vmem:[%s235] sm:$0xff]
    %v3091 = vld [vmem:[%s235 + $0x8] sm:$0xff]
    %v3093 = vsel %vm288, %v3089, 0
    %3095 = vmatpush.bf16.msra.mxu0 0
    %3096 = vmatpush.bf16.msra.mxu0 0
    %3097 = vmatpush.bf16.msra.mxu0 0
    %3098 = vmatpush.bf16.msra.mxu0 0
    %3099 = vmatpush.bf16.msra.mxu0 %v2427
    %3100 = vmatpush.bf16.msra.mxu0 %v2425
    %3101 = vmatpush.bf16.msra.mxu0 %v2423
    %3102 = vmatpush.bf16.msra.mxu0 %v2421
    %3103 = vmatmul.bf16.gmra.mxu0 %v3093
    %v3104 = vpop.f32.mrf.mxu0
    %v3105 = vadd.f32 %v3090, %v3104
    %v3106 = vpop.f32.mrf.mxu0
    %3107 = vdwg.mxu0
    %3108 = vmatpush.bf16.msra.mxu0 0
    %3109 = vmatpush.bf16.msra.mxu0 0
    %3110 = vmatpush.bf16.msra.mxu0 0
    %3111 = vmatpush.bf16.msra.mxu0 0
    %3112 = vmatpush.bf16.msra.mxu0 %v2428
    %3113 = vmatpush.bf16.msra.mxu0 %v2426
    %3114 = vmatpush.bf16.msra.mxu0 %v2424
    %3115 = vmatpush.bf16.msra.mxu0 %v2422
    %3116 = vmatmul.bf16.gmra.mxu0 %v3093
    %v3117 = vpop.f32.mrf.mxu0
    %v3118 = vadd.f32 %v3091, %v3117
    %v3119 = vpop.f32.mrf.mxu0
    %3120 = vdwg.mxu0
    %v3121 = vxor.u32 %v3105, 2147483648
    %v3122 = vxor.u32 %v3118, 2147483648
    %v3123 = vmul.f32 %v3121, 1.442695
    %v3124 = vpow.pop %v3123
    %v3125 = vmul.f32 %v3122, 1.442695
    %v3126 = vpow.pop %v3125
    %v3127 = vadd.f32 %v3124, 1.0
    %v3128 = vadd.f32 %v3126, 1.0
    %v3129 = vrcp.pop %v3127
    %v3130 = vmul.f32 %v3127, %v3129
    %v3131 = vsub.f32 1.0, %v3130
    %v3132 = vmul.f32 %v3129, %v3131
    %v3133 = vadd.f32 %v3129, %v3132
    %vm3134 = vweird.f32 %v3127
    %vm3135 = vweird.f32 %v3129
    %vm3136 = vmor %vm3134, %vm3135
    %v3137 = vsel %vm3136, %v3129, %v3133
    %v3138 = vand.u32 2147483647, %v3127
    %vm3139 = vcmp.eq.f32.partialorder %v3138, 8.507059e+37
    %v3140 = vand.u32 %v3127, 2147483648
    %v3141 = vor.u32 1.1754944e-38, %v3140
    %v3142 = vsel %vm3139, %v3141, %v3137
    %v3143 = vmul.f32 1.0, %v3142
    %v3144 = vrcp.pop %v3128
    %v3145 = vmul.f32 %v3128, %v3144
    %v3146 = vsub.f32 1.0, %v3145
    %v3147 = vmul.f32 %v3144, %v3146
    %v3148 = vadd.f32 %v3144, %v3147
    %vm3149 = vweird.f32 %v3128
    %vm3150 = vweird.f32 %v3144
    %vm3151 = vmor %vm3149, %vm3150
    %v3152 = vsel %vm3151, %v3144, %v3148
    %v3153 = vand.u32 2147483647, %v3128
    %vm3154 = vcmp.eq.f32.partialorder %v3153, 8.507059e+37
    %v3155 = vand.u32 %v3128, 2147483648
    %v3156 = vor.u32 1.1754944e-38, %v3155
    %v3157 = vsel %vm3154, %v3156, %v3152
    %v3158 = vmul.f32 1.0, %v3157
    %v3159 = vtanh.pop %v3118
    %v3160 = vmul.f32 %v3143, %v3076
    %3162 = vrot.lane.b32.xlu0 %v3159, 64
    %v3163 = vpop.permute.xlu0 %3162
    %v3165 = vmul.f32 %v3143, %v3163
    %3167 = vrot.lane.b32.xlu0 %v3165, 64
    %v3168 = vpop.permute.xlu0 %3167
    %v3170 = vadd.f32 %v3160, %v3168
    %v3171 = vtanh.pop %v3170
    %3173 = vrot.lane.b32.xlu0 %v3171, 64
    %v3174 = vpop.permute.xlu0 %3173
    %v3176 = vmul.f32 %v3158, %v3174
    %3177 = vst.msk [vmem:[%s1046] sm:$0xff] %vm374, %v3176
    %3179 = vrot.lane.b32.xlu0 %v3176, 96
    %v3180 = vpop.permute.xlu0 %3179
    %3182 = vst.msk [vmem:[#allocation4] sm:$0xff] %vm374, %v3180
    %v3183 = vld [vmem:[#allocation3] sm:$0xff]
    %v3184 = vld [vmem:[#allocation3 + $0x8] sm:$0xff]
    %v3185 = vld [vmem:[#allocation3 + $0x10] sm:$0xff]
    %v3186 = vld [vmem:[#allocation3 + $0x18] sm:$0xff]
    %v3187 = vld [vmem:[#allocation3 + $0x20] sm:$0xff]
    %v3188 = vld [vmem:[#allocation3 + $0x28] sm:$0xff]
    %v3189 = vld [vmem:[#allocation3 + $0x30] sm:$0xff]
    %v3190 = vld [vmem:[#allocation3 + $0x38] sm:$0xff]
    %v3191 = vpack.c.bf16 %v3184, %v3183
    %v3192 = vpack.c.bf16 %v3186, %v3185
    %v3193 = vpack.c.bf16 %v3188, %v3187
    %v3194 = vpack.c.bf16 %v3190, %v3189
    %v3195 = vld [vmem:[#allocation4] sm:$0xff]
    %v3196 = vld [vmem:[#allocation4 + $0x8] sm:$0xff]
    %v3197 = vld [vmem:[#allocation4 + $0x10] sm:$0xff]
    %v3198 = vld [vmem:[#allocation4 + $0x18] sm:$0xff]
    %v3199 = vld [vmem:[#allocation4 + $0x20] sm:$0xff]
    %v3200 = vld [vmem:[#allocation4 + $0x28] sm:$0xff]
    %v3201 = vld [vmem:[#allocation4 + $0x30] sm:$0xff]
    %v3202 = vld [vmem:[#allocation4 + $0x38] sm:$0xff]
    %v3203 = vpack.c.bf16 %v3196, %v3195
    %v3204 = vpack.c.bf16 %v3198, %v3197
    %v3205 = vpack.c.bf16 %v3200, %v3199
    %v3206 = vpack.c.bf16 %v3202, %v3201
    %s3207 = scalar_lea.vmem %s2, 64
    %v3208 = vld [vmem:[%s3207] sm:$0xff]
    %v3209 = vld [vmem:[%s3207 + $0x8] sm:$0xff]
    %v3210 = vld [vmem:[%s3207 + $0x10] sm:$0xff]
    %v3211 = vld [vmem:[%s3207 + $0x18] sm:$0xff]
    %s3212 = scalar_lea.vmem [#allocation5], 64
    %v3213 = vld [vmem:[%s3212] sm:$0xff]
    %v3214 = vld [vmem:[%s3212 + $0x8] sm:$0xff]
    %v3215 = vld [vmem:[%s3212 + $0x10] sm:$0xff]
    %v3216 = vld [vmem:[%s3212 + $0x18] sm:$0xff]
    %v3221 = vunpack.c.l.b16 %v3213
    %v3222 = vunpack.c.h.b16 %v3213
    %v3223 = vunpack.c.l.b16 %v3214
    %v3224 = vunpack.c.h.b16 %v3214
    %v3225 = vunpack.c.l.b16 %v3215
    %v3226 = vunpack.c.h.b16 %v3215
    %v3227 = vunpack.c.l.b16 %v3216
    %v3228 = vunpack.c.h.b16 %v3216
    %v3229 = vpack.c.b16 %v3223, %v3221
    %v3230 = vpack.c.b16 %v3224, %v3222
    %v3231 = vpack.c.b16 %v3227, %v3225
    %v3232 = vpack.c.b16 %v3228, %v3226
    %v3238 = vsel %vm374, %v3203, 0
    %v3241 = vsel %vm374, %v3204, 0
    %v3244 = vsel %vm374, %v3205, 0
    %v3247 = vsel %vm374, %v3206, 0
    %3249 = vmatpush.bf16.msra.mxu0 0
    %3250 = vmatpush.bf16.msra.mxu0 0
    %3251 = vmatpush.bf16.msra.mxu0 0
    %3252 = vmatpush.bf16.msra.mxu0 0
    %3253 = vmatpush.bf16.msra.mxu0 0
    %3254 = vmatpush.bf16.msra.mxu0 0
    %3255 = vmatpush.bf16.msra.mxu0 %v3231
    %3256 = vmatpush.bf16.msra.mxu0 %v3229
    %3257 = vmatmul.bf16.gmra.mxu0 %v3238
    %v3258 = vpop.f32.mrf.mxu0
    %v3259 = vadd.f32 0.0, %v3258
    %v3260 = vpop.f32.mrf.mxu0
    %v3261 = vadd.f32 0.0, %v3260
    %3262 = vmatmul.bf16.gmra.mxu0 %v3241
    %v3263 = vpop.f32.mrf.mxu0
    %v3264 = vadd.f32 0.0, %v3263
    %v3265 = vpop.f32.mrf.mxu0
    %v3266 = vadd.f32 0.0, %v3265
    %3267 = vmatmul.bf16.gmra.mxu0 %v3244
    %v3268 = vpop.f32.mrf.mxu0
    %v3269 = vadd.f32 0.0, %v3268
    %v3270 = vpop.f32.mrf.mxu0
    %v3271 = vadd.f32 0.0, %v3270
    %3272 = vmatmul.bf16.gmra.mxu0 %v3247
    %v3273 = vpop.f32.mrf.mxu0
    %v3274 = vadd.f32 0.0, %v3273
    %v3275 = vpop.f32.mrf.mxu0
    %v3276 = vadd.f32 0.0, %v3275
    %3277 = vdwg.mxu0
    %3278 = vmatpush.bf16.msra.mxu0 0
    %3279 = vmatpush.bf16.msra.mxu0 0
    %3280 = vmatpush.bf16.msra.mxu0 0
    %3281 = vmatpush.bf16.msra.mxu0 0
    %3282 = vmatpush.bf16.msra.mxu0 0
    %3283 = vmatpush.bf16.msra.mxu0 0
    %3284 = vmatpush.bf16.msra.mxu0 %v3232
    %3285 = vmatpush.bf16.msra.mxu0 %v3230
    %3286 = vmatmul.bf16.gmra.mxu0 %v3238
    %v3287 = vpop.f32.mrf.mxu0
    %v3288 = vadd.f32 0.0, %v3287
    %v3289 = vpop.f32.mrf.mxu0
    %v3290 = vadd.f32 0.0, %v3289
    %3291 = vmatmul.bf16.gmra.mxu0 %v3241
    %v3292 = vpop.f32.mrf.mxu0
    %v3293 = vadd.f32 0.0, %v3292
    %v3294 = vpop.f32.mrf.mxu0
    %v3295 = vadd.f32 0.0, %v3294
    %3296 = vmatmul.bf16.gmra.mxu0 %v3244
    %v3297 = vpop.f32.mrf.mxu0
    %v3298 = vadd.f32 0.0, %v3297
    %v3299 = vpop.f32.mrf.mxu0
    %v3300 = vadd.f32 0.0, %v3299
    %3301 = vmatmul.bf16.gmra.mxu0 %v3247
    %v3302 = vpop.f32.mrf.mxu0
    %v3303 = vadd.f32 0.0, %v3302
    %v3304 = vpop.f32.mrf.mxu0
    %v3305 = vadd.f32 0.0, %v3304
    %3306 = vdwg.mxu0
    %v3311 = vunpack.c.l.b16 %v3208
    %v3312 = vunpack.c.h.b16 %v3208
    %v3313 = vunpack.c.l.b16 %v3209
    %v3314 = vunpack.c.h.b16 %v3209
    %v3315 = vunpack.c.l.b16 %v3210
    %v3316 = vunpack.c.h.b16 %v3210
    %v3317 = vunpack.c.l.b16 %v3211
    %v3318 = vunpack.c.h.b16 %v3211
    %v3319 = vpack.c.b16 %v3313, %v3311
    %v3320 = vpack.c.b16 %v3314, %v3312
    %v3321 = vpack.c.b16 %v3317, %v3315
    %v3322 = vpack.c.b16 %v3318, %v3316
    %v3328 = vsel %vm374, %v3191, 0
    %v3331 = vsel %vm374, %v3192, 0
    %v3334 = vsel %vm374, %v3193, 0
    %v3337 = vsel %vm374, %v3194, 0
    %3339 = vmatpush.bf16.msra.mxu0 0
    %3340 = vmatpush.bf16.msra.mxu0 0
    %3341 = vmatpush.bf16.msra.mxu0 0
    %3342 = vmatpush.bf16.msra.mxu0 0
    %3343 = vmatpush.bf16.msra.mxu0 0
    %3344 = vmatpush.bf16.msra.mxu0 0
    %3345 = vmatpush.bf16.msra.mxu0 %v3321
    %3346 = vmatpush.bf16.msra.mxu0 %v3319
    %3347 = vmatmul.bf16.gmra.mxu0 %v3328
    %v3348 = vpop.f32.mrf.mxu0
    %v3349 = vadd.f32 %v3259, %v3348
    %v3350 = vpop.f32.mrf.mxu0
    %v3351 = vadd.f32 %v3261, %v3350
    %3352 = vmatmul.bf16.gmra.mxu0 %v3331
    %v3353 = vpop.f32.mrf.mxu0
    %v3354 = vadd.f32 %v3264, %v3353
    %v3355 = vpop.f32.mrf.mxu0
    %v3356 = vadd.f32 %v3266, %v3355
    %3357 = vmatmul.bf16.gmra.mxu0 %v3334
    %v3358 = vpop.f32.mrf.mxu0
    %v3359 = vadd.f32 %v3269, %v3358
    %v3360 = vpop.f32.mrf.mxu0
    %v3361 = vadd.f32 %v3271, %v3360
    %3362 = vmatmul.bf16.gmra.mxu0 %v3337
    %v3363 = vpop.f32.mrf.mxu0
    %v3364 = vadd.f32 %v3274, %v3363
    %v3365 = vpop.f32.mrf.mxu0
    %v3366 = vadd.f32 %v3276, %v3365
    %3367 = vdwg.mxu0
    %3368 = vmatpush.bf16.msra.mxu0 0
    %3369 = vmatpush.bf16.msra.mxu0 0
    %3370 = vmatpush.bf16.msra.mxu0 0
    %3371 = vmatpush.bf16.msra.mxu0 0
    %3372 = vmatpush.bf16.msra.mxu0 0
    %3373 = vmatpush.bf16.msra.mxu0 0
    %3374 = vmatpush.bf16.msra.mxu0 %v3322
    %3375 = vmatpush.bf16.msra.mxu0 %v3320
    %3376 = vmatmul.bf16.gmra.mxu0 %v3328
    %v3377 = vpop.f32.mrf.mxu0
    %v3378 = vadd.f32 %v3288, %v3377
    %v3379 = vpop.f32.mrf.mxu0
    %v3380 = vadd.f32 %v3290, %v3379
    %3381 = vmatmul.bf16.gmra.mxu0 %v3331
    %v3382 = vpop.f32.mrf.mxu0
    %v3383 = vadd.f32 %v3293, %v3382
    %v3384 = vpop.f32.mrf.mxu0
    %v3385 = vadd.f32 %v3295, %v3384
    %3386 = vmatmul.bf16.gmra.mxu0 %v3334
    %v3387 = vpop.f32.mrf.mxu0
    %v3388 = vadd.f32 %v3298, %v3387
    %v3389 = vpop.f32.mrf.mxu0
    %v3390 = vadd.f32 %v3300, %v3389
    %3391 = vmatmul.bf16.gmra.mxu0 %v3337
    %v3392 = vpop.f32.mrf.mxu0
    %v3393 = vadd.f32 %v3303, %v3392
    %v3394 = vpop.f32.mrf.mxu0
    %v3395 = vadd.f32 %v3305, %v3394
    %3396 = vdwg.mxu0
    %s3397 = scalar_lea.vmem %s5, 6
    %v3398 = vld [vmem:[%s3397] sm:$0x3]
    %v3400 = vperm.slane %v3398, 0
    %v3401 = vperm.slane %v3398, 1
    %v3404 = vadd.f32 %v3349, %v3400
    %v3405 = vadd.f32 %v3378, %v3401
    %v3406 = vadd.f32 %v3351, %v3400
    %v3407 = vadd.f32 %v3380, %v3401
    %v3408 = vadd.f32 %v3354, %v3400
    %v3409 = vadd.f32 %v3383, %v3401
    %v3410 = vadd.f32 %v3356, %v3400
    %v3411 = vadd.f32 %v3385, %v3401
    %v3412 = vadd.f32 %v3359, %v3400
    %v3413 = vadd.f32 %v3388, %v3401
    %v3414 = vadd.f32 %v3361, %v3400
    %v3415 = vadd.f32 %v3390, %v3401
    %v3416 = vadd.f32 %v3364, %v3400
    %v3417 = vadd.f32 %v3393, %v3401
    %v3418 = vadd.f32 %v3366, %v3400
    %v3419 = vadd.f32 %v3395, %v3401
    %v3420 = vsel %vm96, %v3404, %v3418
    %v3421 = vsel %vm97, %v3405, %v3419
    %3422 = vst [vmem:[#allocation2] sm:$0xff] %v3420
    %3423 = vst [vmem:[#allocation2 + $0x8] sm:$0xff] %v3421
    %v3424 = vsel %vm96, %v3406, %v3416
    %v3425 = vsel %vm97, %v3407, %v3417
    %3426 = vst [vmem:[%s205] sm:$0xff] %v3424
    %3427 = vst [vmem:[%s205 + $0x8] sm:$0xff] %v3425
    %v3428 = vsel %vm96, %v3408, %v3414
    %v3429 = vsel %vm97, %v3409, %v3415
    %3430 = vst [vmem:[%s210] sm:$0xff] %v3428
    %3431 = vst [vmem:[%s210 + $0x8] sm:$0xff] %v3429
    %v3432 = vsel %vm96, %v3410, %v3412
    %v3433 = vsel %vm97, %v3411, %v3413
    %3434 = vst [vmem:[%s215] sm:$0xff] %v3432
    %3435 = vst [vmem:[%s215 + $0x8] sm:$0xff] %v3433
    %v3436 = vsel %vm96, %v3412, %v3410
    %v3437 = vsel %vm97, %v3413, %v3411
    %3438 = vst [vmem:[%s220] sm:$0xff] %v3436
    %3439 = vst [vmem:[%s220 + $0x8] sm:$0xff] %v3437
    %v3440 = vsel %vm96, %v3414, %v3408
    %v3441 = vsel %vm97, %v3415, %v3409
    %3442 = vst [vmem:[%s225] sm:$0xff] %v3440
    %3443 = vst [vmem:[%s225 + $0x8] sm:$0xff] %v3441
    %v3444 = vsel %vm96, %v3416, %v3406
    %v3445 = vsel %vm97, %v3417, %v3407
    %3446 = vst [vmem:[%s230] sm:$0xff] %v3444
    %3447 = vst [vmem:[%s230 + $0x8] sm:$0xff] %v3445
    %v3448 = vsel %vm96, %v3418, %v3404
    %v3449 = vsel %vm97, %v3419, %v3405
    %3450 = vst [vmem:[%s235] sm:$0xff] %v3448
    %3451 = vst [vmem:[%s235 + $0x8] sm:$0xff] %v3449
    %s3452 = scalar_lea.vmem [#allocation8], 192
    %v3453 = vld [vmem:[%s3452] sm:$0xff]
    %v3454 = vld [vmem:[%s3452 + $0x8] sm:$0xff]
    %v3455 = vld [vmem:[%s3452 + $0x10] sm:$0xff]
    %v3456 = vld [vmem:[%s3452 + $0x18] sm:$0xff]
    %v3457 = vld [vmem:[%s3452 + $0x20] sm:$0xff]
    %v3458 = vld [vmem:[%s3452 + $0x28] sm:$0xff]
    %v3459 = vld [vmem:[%s3452 + $0x30] sm:$0xff]
    %v3460 = vld [vmem:[%s3452 + $0x38] sm:$0xff]
    %v3461 = vld [vmem:[#allocation2] sm:$0xff]
    %v3462 = vld [vmem:[#allocation2 + $0x8] sm:$0xff]
    %v3471 = vunpack.c.l.b16 %v3453
    %v3472 = vunpack.c.h.b16 %v3453
    %v3473 = vunpack.c.l.b16 %v3454
    %v3474 = vunpack.c.h.b16 %v3454
    %v3475 = vunpack.c.l.b16 %v3455
    %v3476 = vunpack.c.h.b16 %v3455
    %v3477 = vunpack.c.l.b16 %v3456
    %v3478 = vunpack.c.h.b16 %v3456
    %v3479 = vunpack.c.l.b16 %v3457
    %v3480 = vunpack.c.h.b16 %v3457
    %v3481 = vunpack.c.l.b16 %v3458
    %v3482 = vunpack.c.h.b16 %v3458
    %v3483 = vunpack.c.l.b16 %v3459
    %v3484 = vunpack.c.h.b16 %v3459
    %v3485 = vunpack.c.l.b16 %v3460
    %v3486 = vunpack.c.h.b16 %v3460
    %v3487 = vpack.c.b16 %v3473, %v3471
    %v3488 = vpack.c.b16 %v3474, %v3472
    %v3489 = vpack.c.b16 %v3477, %v3475
    %v3490 = vpack.c.b16 %v3478, %v3476
    %v3491 = vpack.c.b16 %v3481, %v3479
    %v3492 = vpack.c.b16 %v3482, %v3480
    %v3493 = vpack.c.b16 %v3485, %v3483
    %v3494 = vpack.c.b16 %v3486, %v3484
    %3503 = vmatpush.bf16.msra.mxu0 0
    %3504 = vmatpush.bf16.msra.mxu0 0
    %3505 = vmatpush.bf16.msra.mxu0 0
    %3506 = vmatpush.bf16.msra.mxu0 0
    %3507 = vmatpush.bf16.msra.mxu0 %v3493
    %3508 = vmatpush.bf16.msra.mxu0 %v3491
    %3509 = vmatpush.bf16.msra.mxu0 %v3489
    %3510 = vmatpush.bf16.msra.mxu0 %v3487
    %3511 = vmatmul.bf16.gmra.mxu0 %v290
    %v3512 = vpop.f32.mrf.mxu0
    %v3513 = vadd.f32 %v3461, %v3512
    %v3514 = vpop.f32.mrf.mxu0
    %3515 = vdwg.mxu0
    %3516 = vmatpush.bf16.msra.mxu0 0
    %3517 = vmatpush.bf16.msra.mxu0 0
    %3518 = vmatpush.bf16.msra.mxu0 0
    %3519 = vmatpush.bf16.msra.mxu0 0
    %3520 = vmatpush.bf16.msra.mxu0 %v3494
    %3521 = vmatpush.bf16.msra.mxu0 %v3492
    %3522 = vmatpush.bf16.msra.mxu0 %v3490
    %3523 = vmatpush.bf16.msra.mxu0 %v3488
    %3524 = vmatmul.bf16.gmra.mxu0 %v290
    %v3525 = vpop.f32.mrf.mxu0
    %v3526 = vadd.f32 %v3462, %v3525
    %v3527 = vpop.f32.mrf.mxu0
    %3528 = vdwg.mxu0
    %v3529 = vxor.u32 %v3513, 2147483648
    %v3530 = vxor.u32 %v3526, 2147483648
    %v3531 = vmul.f32 %v3529, 1.442695
    %v3532 = vpow.pop %v3531
    %v3533 = vmul.f32 %v3530, 1.442695
    %v3534 = vpow.pop %v3533
    %v3535 = vadd.f32 %v3532, 1.0
    %v3536 = vadd.f32 %v3534, 1.0
    %v3537 = vrcp.pop %v3535
    %v3538 = vmul.f32 %v3535, %v3537
    %v3539 = vsub.f32 1.0, %v3538
    %v3540 = vmul.f32 %v3537, %v3539
    %v3541 = vadd.f32 %v3537, %v3540
    %vm3542 = vweird.f32 %v3535
    %vm3543 = vweird.f32 %v3537
    %vm3544 = vmor %vm3542, %vm3543
    %v3545 = vsel %vm3544, %v3537, %v3541
    %v3546 = vand.u32 2147483647, %v3535
    %vm3547 = vcmp.eq.f32.partialorder %v3546, 8.507059e+37
    %v3548 = vand.u32 %v3535, 2147483648
    %v3549 = vor.u32 1.1754944e-38, %v3548
    %v3550 = vsel %vm3547, %v3549, %v3545
    %v3551 = vmul.f32 1.0, %v3550
    %v3552 = vrcp.pop %v3536
    %v3553 = vmul.f32 %v3536, %v3552
    %v3554 = vsub.f32 1.0, %v3553
    %v3555 = vmul.f32 %v3552, %v3554
    %v3556 = vadd.f32 %v3552, %v3555
    %vm3557 = vweird.f32 %v3536
    %vm3558 = vweird.f32 %v3552
    %vm3559 = vmor %vm3557, %vm3558
    %v3560 = vsel %vm3559, %v3552, %v3556
    %v3561 = vand.u32 2147483647, %v3536
    %vm3562 = vcmp.eq.f32.partialorder %v3561, 8.507059e+37
    %v3563 = vand.u32 %v3536, 2147483648
    %v3564 = vor.u32 1.1754944e-38, %v3563
    %v3565 = vsel %vm3562, %v3564, %v3560
    %v3566 = vmul.f32 1.0, %v3565
    %v3567 = vtanh.pop %v3526
    %v3568 = vmul.f32 %v3551, 0.0
    %3570 = vrot.lane.b32.xlu0 %v3567, 64
    %v3571 = vpop.permute.xlu0 %3570
    %v3573 = vmul.f32 %v3551, %v3571
    %3575 = vrot.lane.b32.xlu0 %v3573, 64
    %v3576 = vpop.permute.xlu0 %3575
    %v3578 = vadd.f32 %v3568, %v3576
    %v3579 = vtanh.pop %v3578
    %3581 = vrot.lane.b32.xlu0 %v3579, 64
    %v3582 = vpop.permute.xlu0 %3581
    %v3584 = vmul.f32 %v3566, %v3582
    %3585 = vst.msk [vmem:[#allocation3] sm:$0xff] %vm374, %v3584
    %3587 = vrot.lane.b32.xlu0 %v3584, 96
    %v3588 = vpop.permute.xlu0 %3587
    %3590 = vst.msk [vmem:[%s380] sm:$0xff] %vm374, %v3588
    %v3591 = vpack.c.bf16 %v3584, %v3584
    %v3592 = vld [vmem:[%s205] sm:$0xff]
    %v3593 = vld [vmem:[%s205 + $0x8] sm:$0xff]
    %v3595 = vsel %vm288, %v3591, 0
    %3597 = vmatpush.bf16.msra.mxu0 0
    %3598 = vmatpush.bf16.msra.mxu0 0
    %3599 = vmatpush.bf16.msra.mxu0 0
    %3600 = vmatpush.bf16.msra.mxu0 0
    %3601 = vmatpush.bf16.msra.mxu0 %v3493
    %3602 = vmatpush.bf16.msra.mxu0 %v3491
    %3603 = vmatpush.bf16.msra.mxu0 %v3489
    %3604 = vmatpush.bf16.msra.mxu0 %v3487
    %3605 = vmatmul.bf16.gmra.mxu0 %v3595
    %v3606 = vpop.f32.mrf.mxu0
    %v3607 = vadd.f32 %v3592, %v3606
    %v3608 = vpop.f32.mrf.mxu0
    %3609 = vdwg.mxu0
    %3610 = vmatpush.bf16.msra.mxu0 0
    %3611 = vmatpush.bf16.msra.mxu0 0
    %3612 = vmatpush.bf16.msra.mxu0 0
    %3613 = vmatpush.bf16.msra.mxu0 0
    %3614 = vmatpush.bf16.msra.mxu0 %v3494
    %3615 = vmatpush.bf16.msra.mxu0 %v3492
    %3616 = vmatpush.bf16.msra.mxu0 %v3490
    %3617 = vmatpush.bf16.msra.mxu0 %v3488
    %3618 = vmatmul.bf16.gmra.mxu0 %v3595
    %v3619 = vpop.f32.mrf.mxu0
    %v3620 = vadd.f32 %v3593, %v3619
    %v3621 = vpop.f32.mrf.mxu0
    %3622 = vdwg.mxu0
    %v3623 = vxor.u32 %v3607, 2147483648
    %v3624 = vxor.u32 %v3620, 2147483648
    %v3625 = vmul.f32 %v3623, 1.442695
    %v3626 = vpow.pop %v3625
    %v3627 = vmul.f32 %v3624, 1.442695
    %v3628 = vpow.pop %v3627
    %v3629 = vadd.f32 %v3626, 1.0
    %v3630 = vadd.f32 %v3628, 1.0
    %v3631 = vrcp.pop %v3629
    %v3632 = vmul.f32 %v3629, %v3631
    %v3633 = vsub.f32 1.0, %v3632
    %v3634 = vmul.f32 %v3631, %v3633
    %v3635 = vadd.f32 %v3631, %v3634
    %vm3636 = vweird.f32 %v3629
    %vm3637 = vweird.f32 %v3631
    %vm3638 = vmor %vm3636, %vm3637
    %v3639 = vsel %vm3638, %v3631, %v3635
    %v3640 = vand.u32 2147483647, %v3629
    %vm3641 = vcmp.eq.f32.partialorder %v3640, 8.507059e+37
    %v3642 = vand.u32 %v3629, 2147483648
    %v3643 = vor.u32 1.1754944e-38, %v3642
    %v3644 = vsel %vm3641, %v3643, %v3639
    %v3645 = vmul.f32 1.0, %v3644
    %v3646 = vrcp.pop %v3630
    %v3647 = vmul.f32 %v3630, %v3646
    %v3648 = vsub.f32 1.0, %v3647
    %v3649 = vmul.f32 %v3646, %v3648
    %v3650 = vadd.f32 %v3646, %v3649
    %vm3651 = vweird.f32 %v3630
    %vm3652 = vweird.f32 %v3646
    %vm3653 = vmor %vm3651, %vm3652
    %v3654 = vsel %vm3653, %v3646, %v3650
    %v3655 = vand.u32 2147483647, %v3630
    %vm3656 = vcmp.eq.f32.partialorder %v3655, 8.507059e+37
    %v3657 = vand.u32 %v3630, 2147483648
    %v3658 = vor.u32 1.1754944e-38, %v3657
    %v3659 = vsel %vm3656, %v3658, %v3654
    %v3660 = vmul.f32 1.0, %v3659
    %v3661 = vtanh.pop %v3620
    %v3662 = vmul.f32 %v3645, %v3578
    %3664 = vrot.lane.b32.xlu0 %v3661, 64
    %v3665 = vpop.permute.xlu0 %3664
    %v3667 = vmul.f32 %v3645, %v3665
    %3669 = vrot.lane.b32.xlu0 %v3667, 64
    %v3670 = vpop.permute.xlu0 %3669
    %v3672 = vadd.f32 %v3662, %v3670
    %v3673 = vtanh.pop %v3672
    %3675 = vrot.lane.b32.xlu0 %v3673, 64
    %v3676 = vpop.permute.xlu0 %3675
    %v3678 = vmul.f32 %v3660, %v3676
    %3679 = vst.msk [vmem:[%s470] sm:$0xff] %vm374, %v3678
    %3681 = vrot.lane.b32.xlu0 %v3678, 96
    %v3682 = vpop.permute.xlu0 %3681
    %3684 = vst.msk [vmem:[%s476] sm:$0xff] %vm374, %v3682
    %v3685 = vpack.c.bf16 %v3678, %v3678
    %v3686 = vld [vmem:[%s210] sm:$0xff]
    %v3687 = vld [vmem:[%s210 + $0x8] sm:$0xff]
    %v3689 = vsel %vm288, %v3685, 0
    %3691 = vmatpush.bf16.msra.mxu0 0
    %3692 = vmatpush.bf16.msra.mxu0 0
    %3693 = vmatpush.bf16.msra.mxu0 0
    %3694 = vmatpush.bf16.msra.mxu0 0
    %3695 = vmatpush.bf16.msra.mxu0 %v3493
    %3696 = vmatpush.bf16.msra.mxu0 %v3491
    %3697 = vmatpush.bf16.msra.mxu0 %v3489
    %3698 = vmatpush.bf16.msra.mxu0 %v3487
    %3699 = vmatmul.bf16.gmra.mxu0 %v3689
    %v3700 = vpop.f32.mrf.mxu0
    %v3701 = vadd.f32 %v3686, %v3700
    %v3702 = vpop.f32.mrf.mxu0
    %3703 = vdwg.mxu0
    %3704 = vmatpush.bf16.msra.mxu0 0
    %3705 = vmatpush.bf16.msra.mxu0 0
    %3706 = vmatpush.bf16.msra.mxu0 0
    %3707 = vmatpush.bf16.msra.mxu0 0
    %3708 = vmatpush.bf16.msra.mxu0 %v3494
    %3709 = vmatpush.bf16.msra.mxu0 %v3492
    %3710 = vmatpush.bf16.msra.mxu0 %v3490
    %3711 = vmatpush.bf16.msra.mxu0 %v3488
    %3712 = vmatmul.bf16.gmra.mxu0 %v3689
    %v3713 = vpop.f32.mrf.mxu0
    %v3714 = vadd.f32 %v3687, %v3713
    %v3715 = vpop.f32.mrf.mxu0
    %3716 = vdwg.mxu0
    %v3717 = vxor.u32 %v3701, 2147483648
    %v3718 = vxor.u32 %v3714, 2147483648
    %v3719 = vmul.f32 %v3717, 1.442695
    %v3720 = vpow.pop %v3719
    %v3721 = vmul.f32 %v3718, 1.442695
    %v3722 = vpow.pop %v3721
    %v3723 = vadd.f32 %v3720, 1.0
    %v3724 = vadd.f32 %v3722, 1.0
    %v3725 = vrcp.pop %v3723
    %v3726 = vmul.f32 %v3723, %v3725
    %v3727 = vsub.f32 1.0, %v3726
    %v3728 = vmul.f32 %v3725, %v3727
    %v3729 = vadd.f32 %v3725, %v3728
    %vm3730 = vweird.f32 %v3723
    %vm3731 = vweird.f32 %v3725
    %vm3732 = vmor %vm3730, %vm3731
    %v3733 = vsel %vm3732, %v3725, %v3729
    %v3734 = vand.u32 2147483647, %v3723
    %vm3735 = vcmp.eq.f32.partialorder %v3734, 8.507059e+37
    %v3736 = vand.u32 %v3723, 2147483648
    %v3737 = vor.u32 1.1754944e-38, %v3736
    %v3738 = vsel %vm3735, %v3737, %v3733
    %v3739 = vmul.f32 1.0, %v3738
    %v3740 = vrcp.pop %v3724
    %v3741 = vmul.f32 %v3724, %v3740
    %v3742 = vsub.f32 1.0, %v3741
    %v3743 = vmul.f32 %v3740, %v3742
    %v3744 = vadd.f32 %v3740, %v3743
    %vm3745 = vweird.f32 %v3724
    %vm3746 = vweird.f32 %v3740
    %vm3747 = vmor %vm3745, %vm3746
    %v3748 = vsel %vm3747, %v3740, %v3744
    %v3749 = vand.u32 2147483647, %v3724
    %vm3750 = vcmp.eq.f32.partialorder %v3749, 8.507059e+37
    %v3751 = vand.u32 %v3724, 2147483648
    %v3752 = vor.u32 1.1754944e-38, %v3751
    %v3753 = vsel %vm3750, %v3752, %v3748
    %v3754 = vmul.f32 1.0, %v3753
    %v3755 = vtanh.pop %v3714
    %v3756 = vmul.f32 %v3739, %v3672
    %3758 = vrot.lane.b32.xlu0 %v3755, 64
    %v3759 = vpop.permute.xlu0 %3758
    %v3761 = vmul.f32 %v3739, %v3759
    %3763 = vrot.lane.b32.xlu0 %v3761, 64
    %v3764 = vpop.permute.xlu0 %3763
    %v3766 = vadd.f32 %v3756, %v3764
    %v3767 = vtanh.pop %v3766
    %3769 = vrot.lane.b32.xlu0 %v3767, 64
    %v3770 = vpop.permute.xlu0 %3769
    %v3772 = vmul.f32 %v3754, %v3770
    %3773 = vst.msk [vmem:[%s566] sm:$0xff] %vm374, %v3772
    %3775 = vrot.lane.b32.xlu0 %v3772, 96
    %v3776 = vpop.permute.xlu0 %3775
    %3778 = vst.msk [vmem:[%s572] sm:$0xff] %vm374, %v3776
    %v3779 = vpack.c.bf16 %v3772, %v3772
    %v3780 = vld [vmem:[%s215] sm:$0xff]
    %v3781 = vld [vmem:[%s215 + $0x8] sm:$0xff]
    %v3783 = vsel %vm288, %v3779, 0
    %3785 = vmatpush.bf16.msra.mxu0 0
    %3786 = vmatpush.bf16.msra.mxu0 0
    %3787 = vmatpush.bf16.msra.mxu0 0
    %3788 = vmatpush.bf16.msra.mxu0 0
    %3789 = vmatpush.bf16.msra.mxu0 %v3493
    %3790 = vmatpush.bf16.msra.mxu0 %v3491
    %3791 = vmatpush.bf16.msra.mxu0 %v3489
    %3792 = vmatpush.bf16.msra.mxu0 %v3487
    %3793 = vmatmul.bf16.gmra.mxu0 %v3783
    %v3794 = vpop.f32.mrf.mxu0
    %v3795 = vadd.f32 %v3780, %v3794
    %v3796 = vpop.f32.mrf.mxu0
    %3797 = vdwg.mxu0
    %3798 = vmatpush.bf16.msra.mxu0 0
    %3799 = vmatpush.bf16.msra.mxu0 0
    %3800 = vmatpush.bf16.msra.mxu0 0
    %3801 = vmatpush.bf16.msra.mxu0 0
    %3802 = vmatpush.bf16.msra.mxu0 %v3494
    %3803 = vmatpush.bf16.msra.mxu0 %v3492
    %3804 = vmatpush.bf16.msra.mxu0 %v3490
    %3805 = vmatpush.bf16.msra.mxu0 %v3488
    %3806 = vmatmul.bf16.gmra.mxu0 %v3783
    %v3807 = vpop.f32.mrf.mxu0
    %v3808 = vadd.f32 %v3781, %v3807
    %v3809 = vpop.f32.mrf.mxu0
    %3810 = vdwg.mxu0
    %v3811 = vxor.u32 %v3795, 2147483648
    %v3812 = vxor.u32 %v3808, 2147483648
    %v3813 = vmul.f32 %v3811, 1.442695
    %v3814 = vpow.pop %v3813
    %v3815 = vmul.f32 %v3812, 1.442695
    %v3816 = vpow.pop %v3815
    %v3817 = vadd.f32 %v3814, 1.0
    %v3818 = vadd.f32 %v3816, 1.0
    %v3819 = vrcp.pop %v3817
    %v3820 = vmul.f32 %v3817, %v3819
    %v3821 = vsub.f32 1.0, %v3820
    %v3822 = vmul.f32 %v3819, %v3821
    %v3823 = vadd.f32 %v3819, %v3822
    %vm3824 = vweird.f32 %v3817
    %vm3825 = vweird.f32 %v3819
    %vm3826 = vmor %vm3824, %vm3825
    %v3827 = vsel %vm3826, %v3819, %v3823
    %v3828 = vand.u32 2147483647, %v3817
    %vm3829 = vcmp.eq.f32.partialorder %v3828, 8.507059e+37
    %v3830 = vand.u32 %v3817, 2147483648
    %v3831 = vor.u32 1.1754944e-38, %v3830
    %v3832 = vsel %vm3829, %v3831, %v3827
    %v3833 = vmul.f32 1.0, %v3832
    %v3834 = vrcp.pop %v3818
    %v3835 = vmul.f32 %v3818, %v3834
    %v3836 = vsub.f32 1.0, %v3835
    %v3837 = vmul.f32 %v3834, %v3836
    %v3838 = vadd.f32 %v3834, %v3837
    %vm3839 = vweird.f32 %v3818
    %vm3840 = vweird.f32 %v3834
    %vm3841 = vmor %vm3839, %vm3840
    %v3842 = vsel %vm3841, %v3834, %v3838
    %v3843 = vand.u32 2147483647, %v3818
    %vm3844 = vcmp.eq.f32.partialorder %v3843, 8.507059e+37
    %v3845 = vand.u32 %v3818, 2147483648
    %v3846 = vor.u32 1.1754944e-38, %v3845
    %v3847 = vsel %vm3844, %v3846, %v3842
    %v3848 = vmul.f32 1.0, %v3847
    %v3849 = vtanh.pop %v3808
    %v3850 = vmul.f32 %v3833, %v3766
    %3852 = vrot.lane.b32.xlu0 %v3849, 64
    %v3853 = vpop.permute.xlu0 %3852
    %v3855 = vmul.f32 %v3833, %v3853
    %3857 = vrot.lane.b32.xlu0 %v3855, 64
    %v3858 = vpop.permute.xlu0 %3857
    %v3860 = vadd.f32 %v3850, %v3858
    %v3861 = vtanh.pop %v3860
    %3863 = vrot.lane.b32.xlu0 %v3861, 64
    %v3864 = vpop.permute.xlu0 %3863
    %v3866 = vmul.f32 %v3848, %v3864
    %3867 = vst.msk [vmem:[%s662] sm:$0xff] %vm374, %v3866
    %3869 = vrot.lane.b32.xlu0 %v3866, 96
    %v3870 = vpop.permute.xlu0 %3869
    %3872 = vst.msk [vmem:[%s668] sm:$0xff] %vm374, %v3870
    %v3873 = vpack.c.bf16 %v3866, %v3866
    %v3874 = vld [vmem:[%s220] sm:$0xff]
    %v3875 = vld [vmem:[%s220 + $0x8] sm:$0xff]
    %v3877 = vsel %vm288, %v3873, 0
    %3879 = vmatpush.bf16.msra.mxu0 0
    %3880 = vmatpush.bf16.msra.mxu0 0
    %3881 = vmatpush.bf16.msra.mxu0 0
    %3882 = vmatpush.bf16.msra.mxu0 0
    %3883 = vmatpush.bf16.msra.mxu0 %v3493
    %3884 = vmatpush.bf16.msra.mxu0 %v3491
    %3885 = vmatpush.bf16.msra.mxu0 %v3489
    %3886 = vmatpush.bf16.msra.mxu0 %v3487
    %3887 = vmatmul.bf16.gmra.mxu0 %v3877
    %v3888 = vpop.f32.mrf.mxu0
    %v3889 = vadd.f32 %v3874, %v3888
    %v3890 = vpop.f32.mrf.mxu0
    %3891 = vdwg.mxu0
    %3892 = vmatpush.bf16.msra.mxu0 0
    %3893 = vmatpush.bf16.msra.mxu0 0
    %3894 = vmatpush.bf16.msra.mxu0 0
    %3895 = vmatpush.bf16.msra.mxu0 0
    %3896 = vmatpush.bf16.msra.mxu0 %v3494
    %3897 = vmatpush.bf16.msra.mxu0 %v3492
    %3898 = vmatpush.bf16.msra.mxu0 %v3490
    %3899 = vmatpush.bf16.msra.mxu0 %v3488
    %3900 = vmatmul.bf16.gmra.mxu0 %v3877
    %v3901 = vpop.f32.mrf.mxu0
    %v3902 = vadd.f32 %v3875, %v3901
    %v3903 = vpop.f32.mrf.mxu0
    %3904 = vdwg.mxu0
    %v3905 = vxor.u32 %v3889, 2147483648
    %v3906 = vxor.u32 %v3902, 2147483648
    %v3907 = vmul.f32 %v3905, 1.442695
    %v3908 = vpow.pop %v3907
    %v3909 = vmul.f32 %v3906, 1.442695
    %v3910 = vpow.pop %v3909
    %v3911 = vadd.f32 %v3908, 1.0
    %v3912 = vadd.f32 %v3910, 1.0
    %v3913 = vrcp.pop %v3911
    %v3914 = vmul.f32 %v3911, %v3913
    %v3915 = vsub.f32 1.0, %v3914
    %v3916 = vmul.f32 %v3913, %v3915
    %v3917 = vadd.f32 %v3913, %v3916
    %vm3918 = vweird.f32 %v3911
    %vm3919 = vweird.f32 %v3913
    %vm3920 = vmor %vm3918, %vm3919
    %v3921 = vsel %vm3920, %v3913, %v3917
    %v3922 = vand.u32 2147483647, %v3911
    %vm3923 = vcmp.eq.f32.partialorder %v3922, 8.507059e+37
    %v3924 = vand.u32 %v3911, 2147483648
    %v3925 = vor.u32 1.1754944e-38, %v3924
    %v3926 = vsel %vm3923, %v3925, %v3921
    %v3927 = vmul.f32 1.0, %v3926
    %v3928 = vrcp.pop %v3912
    %v3929 = vmul.f32 %v3912, %v3928
    %v3930 = vsub.f32 1.0, %v3929
    %v3931 = vmul.f32 %v3928, %v3930
    %v3932 = vadd.f32 %v3928, %v3931
    %vm3933 = vweird.f32 %v3912
    %vm3934 = vweird.f32 %v3928
    %vm3935 = vmor %vm3933, %vm3934
    %v3936 = vsel %vm3935, %v3928, %v3932
    %v3937 = vand.u32 2147483647, %v3912
    %vm3938 = vcmp.eq.f32.partialorder %v3937, 8.507059e+37
    %v3939 = vand.u32 %v3912, 2147483648
    %v3940 = vor.u32 1.1754944e-38, %v3939
    %v3941 = vsel %vm3938, %v3940, %v3936
    %v3942 = vmul.f32 1.0, %v3941
    %v3943 = vtanh.pop %v3902
    %v3944 = vmul.f32 %v3927, %v3860
    %3946 = vrot.lane.b32.xlu0 %v3943, 64
    %v3947 = vpop.permute.xlu0 %3946
    %v3949 = vmul.f32 %v3927, %v3947
    %3951 = vrot.lane.b32.xlu0 %v3949, 64
    %v3952 = vpop.permute.xlu0 %3951
    %v3954 = vadd.f32 %v3944, %v3952
    %v3955 = vtanh.pop %v3954
    %3957 = vrot.lane.b32.xlu0 %v3955, 64
    %v3958 = vpop.permute.xlu0 %3957
    %v3960 = vmul.f32 %v3942, %v3958
    %3961 = vst.msk [vmem:[%s758] sm:$0xff] %vm374, %v3960
    %3963 = vrot.lane.b32.xlu0 %v3960, 96
    %v3964 = vpop.permute.xlu0 %3963
    %3966 = vst.msk [vmem:[%s764] sm:$0xff] %vm374, %v3964
    %v3967 = vpack.c.bf16 %v3960, %v3960
    %v3968 = vld [vmem:[%s225] sm:$0xff]
    %v3969 = vld [vmem:[%s225 + $0x8] sm:$0xff]
    %v3971 = vsel %vm288, %v3967, 0
    %3973 = vmatpush.bf16.msra.mxu0 0
    %3974 = vmatpush.bf16.msra.mxu0 0
    %3975 = vmatpush.bf16.msra.mxu0 0
    %3976 = vmatpush.bf16.msra.mxu0 0
    %3977 = vmatpush.bf16.msra.mxu0 %v3493
    %3978 = vmatpush.bf16.msra.mxu0 %v3491
    %3979 = vmatpush.bf16.msra.mxu0 %v3489
    %3980 = vmatpush.bf16.msra.mxu0 %v3487
    %3981 = vmatmul.bf16.gmra.mxu0 %v3971
    %v3982 = vpop.f32.mrf.mxu0
    %v3983 = vadd.f32 %v3968, %v3982
    %v3984 = vpop.f32.mrf.mxu0
    %3985 = vdwg.mxu0
    %3986 = vmatpush.bf16.msra.mxu0 0
    %3987 = vmatpush.bf16.msra.mxu0 0
    %3988 = vmatpush.bf16.msra.mxu0 0
    %3989 = vmatpush.bf16.msra.mxu0 0
    %3990 = vmatpush.bf16.msra.mxu0 %v3494
    %3991 = vmatpush.bf16.msra.mxu0 %v3492
    %3992 = vmatpush.bf16.msra.mxu0 %v3490
    %3993 = vmatpush.bf16.msra.mxu0 %v3488
    %3994 = vmatmul.bf16.gmra.mxu0 %v3971
    %v3995 = vpop.f32.mrf.mxu0
    %v3996 = vadd.f32 %v3969, %v3995
    %v3997 = vpop.f32.mrf.mxu0
    %3998 = vdwg.mxu0
    %v3999 = vxor.u32 %v3983, 2147483648
    %v4000 = vxor.u32 %v3996, 2147483648
    %v4001 = vmul.f32 %v3999, 1.442695
    %v4002 = vpow.pop %v4001
    %v4003 = vmul.f32 %v4000, 1.442695
    %v4004 = vpow.pop %v4003
    %v4005 = vadd.f32 %v4002, 1.0
    %v4006 = vadd.f32 %v4004, 1.0
    %v4007 = vrcp.pop %v4005
    %v4008 = vmul.f32 %v4005, %v4007
    %v4009 = vsub.f32 1.0, %v4008
    %v4010 = vmul.f32 %v4007, %v4009
    %v4011 = vadd.f32 %v4007, %v4010
    %vm4012 = vweird.f32 %v4005
    %vm4013 = vweird.f32 %v4007
    %vm4014 = vmor %vm4012, %vm4013
    %v4015 = vsel %vm4014, %v4007, %v4011
    %v4016 = vand.u32 2147483647, %v4005
    %vm4017 = vcmp.eq.f32.partialorder %v4016, 8.507059e+37
    %v4018 = vand.u32 %v4005, 2147483648
    %v4019 = vor.u32 1.1754944e-38, %v4018
    %v4020 = vsel %vm4017, %v4019, %v4015
    %v4021 = vmul.f32 1.0, %v4020
    %v4022 = vrcp.pop %v4006
    %v4023 = vmul.f32 %v4006, %v4022
    %v4024 = vsub.f32 1.0, %v4023
    %v4025 = vmul.f32 %v4022, %v4024
    %v4026 = vadd.f32 %v4022, %v4025
    %vm4027 = vweird.f32 %v4006
    %vm4028 = vweird.f32 %v4022
    %vm4029 = vmor %vm4027, %vm4028
    %v4030 = vsel %vm4029, %v4022, %v4026
    %v4031 = vand.u32 2147483647, %v4006
    %vm4032 = vcmp.eq.f32.partialorder %v4031, 8.507059e+37
    %v4033 = vand.u32 %v4006, 2147483648
    %v4034 = vor.u32 1.1754944e-38, %v4033
    %v4035 = vsel %vm4032, %v4034, %v4030
    %v4036 = vmul.f32 1.0, %v4035
    %v4037 = vtanh.pop %v3996
    %v4038 = vmul.f32 %v4021, %v3954
    %4040 = vrot.lane.b32.xlu0 %v4037, 64
    %v4041 = vpop.permute.xlu0 %4040
    %v4043 = vmul.f32 %v4021, %v4041
    %4045 = vrot.lane.b32.xlu0 %v4043, 64
    %v4046 = vpop.permute.xlu0 %4045
    %v4048 = vadd.f32 %v4038, %v4046
    %v4049 = vtanh.pop %v4048
    %4051 = vrot.lane.b32.xlu0 %v4049, 64
    %v4052 = vpop.permute.xlu0 %4051
    %v4054 = vmul.f32 %v4036, %v4052
    %4055 = vst.msk [vmem:[%s854] sm:$0xff] %vm374, %v4054
    %4057 = vrot.lane.b32.xlu0 %v4054, 96
    %v4058 = vpop.permute.xlu0 %4057
    %4060 = vst.msk [vmem:[%s860] sm:$0xff] %vm374, %v4058
    %v4061 = vpack.c.bf16 %v4054, %v4054
    %v4062 = vld [vmem:[%s230] sm:$0xff]
    %v4063 = vld [vmem:[%s230 + $0x8] sm:$0xff]
    %v4065 = vsel %vm288, %v4061, 0
    %4067 = vmatpush.bf16.msra.mxu0 0
    %4068 = vmatpush.bf16.msra.mxu0 0
    %4069 = vmatpush.bf16.msra.mxu0 0
    %4070 = vmatpush.bf16.msra.mxu0 0
    %4071 = vmatpush.bf16.msra.mxu0 %v3493
    %4072 = vmatpush.bf16.msra.mxu0 %v3491
    %4073 = vmatpush.bf16.msra.mxu0 %v3489
    %4074 = vmatpush.bf16.msra.mxu0 %v3487
    %4075 = vmatmul.bf16.gmra.mxu0 %v4065
    %v4076 = vpop.f32.mrf.mxu0
    %v4077 = vadd.f32 %v4062, %v4076
    %v4078 = vpop.f32.mrf.mxu0
    %4079 = vdwg.mxu0
    %4080 = vmatpush.bf16.msra.mxu0 0
    %4081 = vmatpush.bf16.msra.mxu0 0
    %4082 = vmatpush.bf16.msra.mxu0 0
    %4083 = vmatpush.bf16.msra.mxu0 0
    %4084 = vmatpush.bf16.msra.mxu0 %v3494
    %4085 = vmatpush.bf16.msra.mxu0 %v3492
    %4086 = vmatpush.bf16.msra.mxu0 %v3490
    %4087 = vmatpush.bf16.msra.mxu0 %v3488
    %4088 = vmatmul.bf16.gmra.mxu0 %v4065
    %v4089 = vpop.f32.mrf.mxu0
    %v4090 = vadd.f32 %v4063, %v4089
    %v4091 = vpop.f32.mrf.mxu0
    %4092 = vdwg.mxu0
    %v4093 = vxor.u32 %v4077, 2147483648
    %v4094 = vxor.u32 %v4090, 2147483648
    %v4095 = vmul.f32 %v4093, 1.442695
    %v4096 = vpow.pop %v4095
    %v4097 = vmul.f32 %v4094, 1.442695
    %v4098 = vpow.pop %v4097
    %v4099 = vadd.f32 %v4096, 1.0
    %v4100 = vadd.f32 %v4098, 1.0
    %v4101 = vrcp.pop %v4099
    %v4102 = vmul.f32 %v4099, %v4101
    %v4103 = vsub.f32 1.0, %v4102
    %v4104 = vmul.f32 %v4101, %v4103
    %v4105 = vadd.f32 %v4101, %v4104
    %vm4106 = vweird.f32 %v4099
    %vm4107 = vweird.f32 %v4101
    %vm4108 = vmor %vm4106, %vm4107
    %v4109 = vsel %vm4108, %v4101, %v4105
    %v4110 = vand.u32 2147483647, %v4099
    %vm4111 = vcmp.eq.f32.partialorder %v4110, 8.507059e+37
    %v4112 = vand.u32 %v4099, 2147483648
    %v4113 = vor.u32 1.1754944e-38, %v4112
    %v4114 = vsel %vm4111, %v4113, %v4109
    %v4115 = vmul.f32 1.0, %v4114
    %v4116 = vrcp.pop %v4100
    %v4117 = vmul.f32 %v4100, %v4116
    %v4118 = vsub.f32 1.0, %v4117
    %v4119 = vmul.f32 %v4116, %v4118
    %v4120 = vadd.f32 %v4116, %v4119
    %vm4121 = vweird.f32 %v4100
    %vm4122 = vweird.f32 %v4116
    %vm4123 = vmor %vm4121, %vm4122
    %v4124 = vsel %vm4123, %v4116, %v4120
    %v4125 = vand.u32 2147483647, %v4100
    %vm4126 = vcmp.eq.f32.partialorder %v4125, 8.507059e+37
    %v4127 = vand.u32 %v4100, 2147483648
    %v4128 = vor.u32 1.1754944e-38, %v4127
    %v4129 = vsel %vm4126, %v4128, %v4124
    %v4130 = vmul.f32 1.0, %v4129
    %v4131 = vtanh.pop %v4090
    %v4132 = vmul.f32 %v4115, %v4048
    %4134 = vrot.lane.b32.xlu0 %v4131, 64
    %v4135 = vpop.permute.xlu0 %4134
    %v4137 = vmul.f32 %v4115, %v4135
    %4139 = vrot.lane.b32.xlu0 %v4137, 64
    %v4140 = vpop.permute.xlu0 %4139
    %v4142 = vadd.f32 %v4132, %v4140
    %v4143 = vtanh.pop %v4142
    %4145 = vrot.lane.b32.xlu0 %v4143, 64
    %v4146 = vpop.permute.xlu0 %4145
    %v4148 = vmul.f32 %v4130, %v4146
    %4149 = vst.msk [vmem:[%s950] sm:$0xff] %vm374, %v4148
    %4151 = vrot.lane.b32.xlu0 %v4148, 96
    %v4152 = vpop.permute.xlu0 %4151
    %4154 = vst.msk [vmem:[%s956] sm:$0xff] %vm374, %v4152
    %v4155 = vpack.c.bf16 %v4148, %v4148
    %v4156 = vld [vmem:[%s235] sm:$0xff]
    %v4157 = vld [vmem:[%s235 + $0x8] sm:$0xff]
    %v4159 = vsel %vm288, %v4155, 0
    %4161 = vmatpush.bf16.msra.mxu0 0
    %4162 = vmatpush.bf16.msra.mxu0 0
    %4163 = vmatpush.bf16.msra.mxu0 0
    %4164 = vmatpush.bf16.msra.mxu0 0
    %4165 = vmatpush.bf16.msra.mxu0 %v3493
    %4166 = vmatpush.bf16.msra.mxu0 %v3491
    %4167 = vmatpush.bf16.msra.mxu0 %v3489
    %4168 = vmatpush.bf16.msra.mxu0 %v3487
    %4169 = vmatmul.bf16.gmra.mxu0 %v4159
    %v4170 = vpop.f32.mrf.mxu0
    %v4171 = vadd.f32 %v4156, %v4170
    %v4172 = vpop.f32.mrf.mxu0
    %4173 = vdwg.mxu0
    %4174 = vmatpush.bf16.msra.mxu0 0
    %4175 = vmatpush.bf16.msra.mxu0 0
    %4176 = vmatpush.bf16.msra.mxu0 0
    %4177 = vmatpush.bf16.msra.mxu0 0
    %4178 = vmatpush.bf16.msra.mxu0 %v3494
    %4179 = vmatpush.bf16.msra.mxu0 %v3492
    %4180 = vmatpush.bf16.msra.mxu0 %v3490
    %4181 = vmatpush.bf16.msra.mxu0 %v3488
    %4182 = vmatmul.bf16.gmra.mxu0 %v4159
    %v4183 = vpop.f32.mrf.mxu0
    %v4184 = vadd.f32 %v4157, %v4183
    %v4185 = vpop.f32.mrf.mxu0
    %4186 = vdwg.mxu0
    %v4187 = vxor.u32 %v4171, 2147483648
    %v4188 = vxor.u32 %v4184, 2147483648
    %v4189 = vmul.f32 %v4187, 1.442695
    %v4190 = vpow.pop %v4189
    %v4191 = vmul.f32 %v4188, 1.442695
    %v4192 = vpow.pop %v4191
    %v4193 = vadd.f32 %v4190, 1.0
    %v4194 = vadd.f32 %v4192, 1.0
    %v4195 = vrcp.pop %v4193
    %v4196 = vmul.f32 %v4193, %v4195
    %v4197 = vsub.f32 1.0, %v4196
    %v4198 = vmul.f32 %v4195, %v4197
    %v4199 = vadd.f32 %v4195, %v4198
    %vm4200 = vweird.f32 %v4193
    %vm4201 = vweird.f32 %v4195
    %vm4202 = vmor %vm4200, %vm4201
    %v4203 = vsel %vm4202, %v4195, %v4199
    %v4204 = vand.u32 2147483647, %v4193
    %vm4205 = vcmp.eq.f32.partialorder %v4204, 8.507059e+37
    %v4206 = vand.u32 %v4193, 2147483648
    %v4207 = vor.u32 1.1754944e-38, %v4206
    %v4208 = vsel %vm4205, %v4207, %v4203
    %v4209 = vmul.f32 1.0, %v4208
    %v4210 = vrcp.pop %v4194
    %v4211 = vmul.f32 %v4194, %v4210
    %v4212 = vsub.f32 1.0, %v4211
    %v4213 = vmul.f32 %v4210, %v4212
    %v4214 = vadd.f32 %v4210, %v4213
    %vm4215 = vweird.f32 %v4194
    %vm4216 = vweird.f32 %v4210
    %vm4217 = vmor %vm4215, %vm4216
    %v4218 = vsel %vm4217, %v4210, %v4214
    %v4219 = vand.u32 2147483647, %v4194
    %vm4220 = vcmp.eq.f32.partialorder %v4219, 8.507059e+37
    %v4221 = vand.u32 %v4194, 2147483648
    %v4222 = vor.u32 1.1754944e-38, %v4221
    %v4223 = vsel %vm4220, %v4222, %v4218
    %v4224 = vmul.f32 1.0, %v4223
    %v4225 = vtanh.pop %v4184
    %v4226 = vmul.f32 %v4209, %v4142
    %4228 = vrot.lane.b32.xlu0 %v4225, 64
    %v4229 = vpop.permute.xlu0 %4228
    %v4231 = vmul.f32 %v4209, %v4229
    %4233 = vrot.lane.b32.xlu0 %v4231, 64
    %v4234 = vpop.permute.xlu0 %4233
    %v4236 = vadd.f32 %v4226, %v4234
    %v4237 = vtanh.pop %v4236
    %4239 = vrot.lane.b32.xlu0 %v4237, 64
    %v4240 = vpop.permute.xlu0 %4239
    %v4242 = vmul.f32 %v4224, %v4240
    %4243 = vst.msk [vmem:[%s1046] sm:$0xff] %vm374, %v4242
    %4245 = vrot.lane.b32.xlu0 %v4242, 96
    %v4246 = vpop.permute.xlu0 %4245
    %4248 = vst.msk [vmem:[#allocation4] sm:$0xff] %vm374, %v4246
    %v4249 = vld [vmem:[%s1046] sm:$0xff]
    %v4250 = vld [vmem:[%s380] sm:$0xff]
    %4252 = vrot.lane.b32.xlu0 %v4250, 32
    %v4253 = vpop.permute.xlu0 %4252
    %v4255 = vsel %vm374, %v4249, %v4253
    %v4256 = vmax.f32 %v4255, 0.0
    %v4257 = vld [vmem:[%s6] sm:$0x1]
    %v4259 = vperm.slane %v4257, 0
    %v4261 = vmul.f32 %v4256, %v4259
    %v4262 = vld [vmem:[%s7] sm:$0x1]
    %v4264 = vperm.slane %v4262, 0
    %v4266 = vadd.f32 %v4261, %v4264
    %v4267 = vpack.c.bf16 %v4266, %v4266
    %v4268 = vld [vmem:[%s8] sm:$0xf]
    %v4269 = vld [vmem:[%s8 + $0x4] sm:$0xf]
    %v4270 = vld [vmem:[%s8 + $0x8] sm:$0xf]
    %v4271 = vld [vmem:[%s8 + $0xc] sm:$0xf]
    %v4272 = vld [vmem:[%s8 + $0x10] sm:$0xf]
    %v4273 = vld [vmem:[%s8 + $0x14] sm:$0xf]
    %v4274 = vld [vmem:[%s8 + $0x18] sm:$0xf]
    %v4275 = vld [vmem:[%s8 + $0x1c] sm:$0xf]
    %v4276 = vld [vmem:[%s9] sm:$0x1]
    %v4278 = vperm.slane %v4276, 0
    %v4288 = vunpack.c.l.b16 %v4268
    %v4289 = vunpack.c.l.b16 %v4269
    %v4290 = vunpack.c.l.b16 %v4270
    %v4291 = vunpack.c.l.b16 %v4271
    %v4292 = vunpack.c.l.b16 %v4272
    %v4293 = vunpack.c.l.b16 %v4273
    %v4294 = vunpack.c.l.b16 %v4274
    %v4295 = vunpack.c.l.b16 %v4275
    %v4296 = vpack.c.b16 %v4289, %v4288
    %v4297 = vpack.c.b16 %v4291, %v4290
    %v4298 = vpack.c.b16 %v4293, %v4292
    %v4299 = vpack.c.b16 %v4295, %v4294
    %v4305 = vsel %vm288, %v4267, 0
    %4307 = vmatpush.bf16.msra.mxu0 0
    %4308 = vmatpush.bf16.msra.mxu0 0
    %4309 = vmatpush.bf16.msra.mxu0 0
    %4310 = vmatpush.bf16.msra.mxu0 0
    %4311 = vmatpush.bf16.msra.mxu0 %v4299
    %4312 = vmatpush.bf16.msra.mxu0 %v4298
    %4313 = vmatpush.bf16.msra.mxu0 %v4297
    %4314 = vmatpush.bf16.msra.mxu0 %v4296
    %4315 = vmatmul.bf16.gmra.mxu0 %v4305
    %v4316 = vpop.f32.mrf.mxu0
    %v4317 = vadd.f32 %v4278, %v4316
    %v4318 = vpop.f32.mrf.mxu0
    %4319 = vdwg.mxu0
    %vm4320 = vcmask 80896
    %v4321 = vsel %vm4320, %v4317, -inf
    %4322 = vmax.xlane.f32.xlu0 %v4321
    %v4323 = vpop.xlane.xlu0 %4322
    %v4324 = vsub.f32 %v4317, %v4323
    %v4325 = vmul.f32 %v4324, 1.442695
    %v4326 = vpow.pop %v4325
    %v4327 = vsel %vm4320, %v4326, 0.0
    %4328 = vadd.xlane.f32.xlu0 %v4327
    %v4329 = vpop.xlane.xlu0 %4328
    %v4330 = vrcp.pop %v4329
    %v4331 = vmul.f32 %v4329, %v4330
    %v4332 = vsub.f32 1.0, %v4331
    %v4333 = vmul.f32 %v4330, %v4332
    %v4334 = vadd.f32 %v4330, %v4333
    %vm4335 = vweird.f32 %v4329
    %vm4336 = vweird.f32 %v4330
    %vm4337 = vmor %vm4335, %vm4336
    %v4338 = vsel %vm4337, %v4330, %v4334
    %v4339 = vand.u32 2147483647, %v4329
    %vm4340 = vcmp.eq.f32.partialorder %v4339, 8.507059e+37
    %v4341 = vand.u32 %v4329, 2147483648
    %v4342 = vor.u32 1.1754944e-38, %v4341
    %v4343 = vsel %vm4340, %v4342, %v4338
    %v4344 = vmul.f32 %v4326, %v4343
    %4345 = vst.msk [vmem:[#allocation10] sm:$0xff] %vm4320, %v4344
    // Predicated region
    $region50: #{sequence_classifier_forward.1} parent=1 // pred_check
      _
    $region51: #{sequence_classifier_forward.1} parent=1 // pred_check_branch
      %4347 = sbr.rel (0) target = $region53
    $region52: #{sequence_classifier_forward.1} parent=1 // pred_region
      %4349 = vsyncadd [#allocation7], 0
      %s4351 = sshll.u32 [#allocation10], 4
      %s4352 = int_to_ptr.vmem [resolvable:$true] %s4351
      %s4353 = sshll.u32 %s10, 4
      %s4354 = int_to_ptr.hbm [resolvable:$true] %s4353
      %4356 = dma.vmem_to_hbm [thread:$0]  %s4352, 128, %s4354, [#allocation7]
    $region53: #{sequence_classifier_forward.1} parent=1 // pred_fallthru
      _
    // Predicated region
    $region54: #{sequence_classifier_forward.1} parent=1 // pred_check
      _
    $region55: #{sequence_classifier_forward.1} parent=1 // pred_check_branch
      %4358 = sbr.rel (0) target = $region57
    $region56: #{sequence_classifier_forward.1} parent=1 // pred_region
      %4360 = dma.done [#allocation7], 128
    $region57: #{sequence_classifier_forward.1} parent=1 // pred_fallthru
      _
    %4361 = vsyncpa [#allocation6], 1
    %4362 = vsyncpa [#allocation9], 1
    %4363 = vsyncpa [#allocation7], 1

</llo_original>
